<compile_context>
chip_gen: v6e
topology: v6e:2x2x1
jax: 0.10.0
libtpu: 0.0.40
codegen_flags: <defaults>
</compile_context>

<pallas_src>
import functools

import numpy as np
import jax
import jax.numpy as jnp
from jax.experimental import pallas as pl
from jax.experimental.pallas import tpu as pltpu

PAD = 32       # padded feature width (>= every layer width in this model)
W_ROWS = 40    # rows per packed Linear block: 32 weight rows + 1 bias row, 8-aligned
LN_ROWS = 8    # rows per packed LayerNorm block: gamma / beta / lane-mask rows
LN_EPS = 1e-5
NEG_INF = -1e30


# ----------------------------------------------------------------------------
# Parameter packing: everything into one (rows, PAD) f32 slab with static offsets
# ----------------------------------------------------------------------------

class _ParamPacker:
    """Linear(d_in, d_out) -> W_ROWS rows:
         rows [0, d_in): weight, placed at columns [col_off, col_off + d_out)
         row  PAD      : bias (same column range); everything else zeros.
       LayerNorm(d) -> LN_ROWS rows:
         row 0: gamma (ones over first d cols), row 1: beta, row 2: lane mask.
       Zero padding keeps the padded (M, PAD) activations exact: padded lanes stay 0
       through every matmul / residual / layernorm inside the kernel."""

    def __init__(self):
        self._blocks = []
        self._rows = 0

    def _push(self, blk):
        off = self._rows
        self._blocks.append(blk)
        self._rows += blk.shape[0]
        return off

    def linear(self, key, d_in, d_out, col_off=0):
        assert d_in <= PAD and col_off + d_out <= PAD
        k_w, k_b = jax.random.split(key)
        bound = 1.0 / float(d_in) ** 0.5
        w = np.asarray(jax.random.uniform(k_w, (d_in, d_out), jnp.float32, -bound, bound))
        b = np.asarray(jax.random.uniform(k_b, (d_out,), jnp.float32, -bound, bound))
        blk = np.zeros((W_ROWS, PAD), np.float32)
        blk[:d_in, col_off:col_off + d_out] = w
        blk[PAD, col_off:col_off + d_out] = b
        return self._push(blk)

    def feedforward(self, key, d_in, d_out, widths, col_off_last=0):
        sizes = [d_in] + list(widths) + [d_out]
        keys = jax.random.split(key, len(sizes) - 1)
        offs = []
        for i in range(len(sizes) - 1):
            co = col_off_last if i == len(sizes) - 2 else 0
            offs.append(self.linear(keys[i], sizes[i], sizes[i + 1], col_off=co))
        return offs

    def layernorm(self, d):
        blk = np.zeros((LN_ROWS, PAD), np.float32)
        blk[0, :d] = 1.0   # gamma
        blk[2, :d] = 1.0   # lane mask (which columns are "real")
        return self._push(blk)

    def mha(self, key, d_model, d_att):
        k_qkv, k_o = jax.random.split(key)
        # fused Q/K/V projection: one (d_model, 3*d_att) weight (same init as 3 separate)
        return dict(qkv=self.linear(k_qkv, d_model, 3 * d_att),
                    wo=self.linear(k_o, d_att, d_model))

    def encoder(self, key, d_model, d_att):
        k1, k2, k3 = jax.random.split(key, 3)
        return dict(mha=self.mha(k1, d_model, d_att),
                    ff1=self.linear(k2, d_model, 2 * d_model),
                    ff2=self.linear(k3, 2 * d_model, d_model),
                    ln1=self.layernorm(d_model),
                    ln2=self.layernorm(d_model))

    def decoder(self, key, d_model, d_att):
        k1, k2, k3, k4 = jax.random.split(key, 4)
        return dict(self_mha=self.mha(k1, d_model, d_att),
                    cross_mha=self.mha(k2, d_model, d_att),
                    ff1=self.linear(k3, d_model, 2 * d_model),
                    ff2=self.linear(k4, 2 * d_model, d_model),
                    ln1=self.layernorm(d_model),
                    ln2=self.layernorm(d_model),
                    ln3=self.layernorm(d_model))

    def finalize(self):
        return jnp.asarray(np.concatenate(self._blocks, axis=0))


# ----------------------------------------------------------------------------
# The single fused Pallas kernel: whole forward pass, activations resident in VMEM
# ----------------------------------------------------------------------------

def _forward_kernel(src_ref, trg_ref, p_ref, out_ref, *, cfg):
    B, Ls, Lt = cfg["B"], cfg["Ls"], cfg["Lt"]
    H, d_att = cfg["num_heads"], cfg["d_att"]
    Dh = d_att // H
    d_enc, d_dec = cfg["d_enc"], cfg["d_dec"]
    d_src_in, d_trg_in = cfg["d_src_in"], cfg["d_trg_in"]
    offs = cfg["offsets"]
    scale = 1.0 / float(Dh) ** 0.5

    # ---- parameter helpers (all offsets are static Python ints) ----
    def linear(x, off, d_in=PAD, relu=False):
        # d_in < PAD only for the raw-width embedding inputs and the concat-heads Wo;
        # the weight slice then starts at an 8-aligned row offset (blocks are 8-aligned).
        w = p_ref[off:off + d_in, :]                   # (d_in, PAD), zero-padded block
        b = p_ref[off + PAD:off + PAD + 1, :]          # (1, PAD)
        y = jnp.dot(x, w, preferred_element_type=jnp.float32) + b
        return jnp.maximum(y, 0.0) if relu else y

    def feedforward(x, lin_offs, d_in0=PAD):
        n = len(lin_offs)
        for i, off in enumerate(lin_offs):
            x = linear(x, off, d_in=(d_in0 if i == 0 else PAD), relu=(i < n - 1))
        return x

    def layer_norm(x, off, d):                          # residual already added by caller
        gamma = p_ref[off:off + 1, :]
        beta = p_ref[off + 1:off + 2, :]
        lane_mask = p_ref[off + 2:off + 3, :]
        mean = jnp.sum(x, axis=-1, keepdims=True) * (1.0 / d)   # padded lanes are 0
        c = (x - mean) * lane_mask                       # kill padded lanes before var
        var = jnp.sum(c * c, axis=-1, keepdims=True) * (1.0 / d)
        return c * jax.lax.rsqrt(var + LN_EPS) * gamma + beta   # padded gamma/beta -> 0

    # ---- block-diagonal batch bias, built once per (s_q, s_kv) and reused ----
    bias_cache = {}

    def batch_bias(s_q, s_kv):
        if B == 1:
            return None
        key = (s_q, s_kv)
        if key not in bias_cache:
            r = jax.lax.broadcasted_iota(jnp.int32, (B * s_q, B * s_kv), 0)
            c = jax.lax.broadcasted_iota(jnp.int32, (B * s_q, B * s_kv), 1)
            same = None
            for b in range(B):                           # static unroll, B tiny
                blk = ((r >= b * s_q) & (r < (b + 1) * s_q)
                       & (c >= b * s_kv) & (c < (b + 1) * s_kv))
                same = blk if same is None else (same | blk)
            bias_cache[key] = jnp.where(same, 0.0, NEG_INF)
        return bias_cache[key]

    def mha(x_q, x_kv, s_q, s_kv, prm):
        # ONE fused QKV matmul per distinct input; batch stays folded along rows.
        qkv_q = linear(x_q, prm["qkv"])
        qkv_kv = qkv_q if x_kv is x_q else linear(x_kv, prm["qkv"])
        bias = batch_bias(s_q, s_kv)
        heads = []
        for h in range(H):        # independent per-head chains (no cross-head accumulate)
            qh = qkv_q[:, h * Dh:(h + 1) * Dh]
            kh = qkv_kv[:, d_att + h * Dh:d_att + (h + 1) * Dh]
            vh = qkv_kv[:, 2 * d_att + h * Dh:2 * d_att + (h + 1) * Dh]
            # scores for ALL batch rows at once; contract last axes (no explicit k.T)
            s = jax.lax.dot_general(qh, kh, (((1,), (1,)), ((), ())),
                                    preferred_element_type=jnp.float32) * scale
            if bias is not None:
                s = s + bias                 # -1e30 on cross-batch entries -> prob 0
            m = jnp.max(s, axis=-1, keepdims=True)
            e = jnp.exp(s - m)
            p = e / jnp.sum(e, axis=-1, keepdims=True)          # exact softmax
            heads.append(jnp.dot(p, vh, preferred_element_type=jnp.float32))
        o = heads[0] if H == 1 else jnp.concatenate(heads, axis=-1)   # (B*s_q, d_att)
        # ONE concat-heads output projection (no per-head Wo slices / MRF add chain)
        return linear(o, prm["wo"], d_in=d_att)

    def encoder_layer(x, prm):
        a = mha(x, x, Ls, Ls, prm["mha"])
        x = layer_norm(x + a, prm["ln1"], d_enc)         # residual fused into LN
        h = linear(x, prm["ff1"], relu=True)
        h = linear(h, prm["ff2"])
        return layer_norm(x + h, prm["ln2"], d_enc)

    def decoder_layer(t, s, prm):
        a = mha(t, t, Lt, Lt, prm["self_mha"])
        t = layer_norm(t + a, prm["ln1"], d_dec)
        c = mha(t, s, Lt, Ls, prm["cross_mha"])
        t = layer_norm(t + c, prm["ln2"], d_dec)
        h = linear(t, prm["ff1"], relu=True)
        h = linear(h, prm["ff2"])
        return layer_norm(t + h, prm["ln3"], d_dec)

    # ---- whole forward pass (raw-width inputs; first matmul does the padding) ----
    src = feedforward(src_ref[...], offs["src_emb"], d_in0=d_src_in)
    trg = feedforward(trg_ref[...], offs["trg_emb"], d_in0=d_trg_in)
    for prm in offs["encoders"]:
        src = encoder_layer(src, prm)
    for prm in offs["decoders"]:
        trg = decoder_layer(trg, src, prm)

    # prediction heads write disjoint column ranges -> one lane-dense output slab
    physic = feedforward(trg, offs["phys"])      # columns [0, d_target)
    flags = feedforward(trg, offs["flags"])      # columns [d_target, d_target+num_flags)
    action = feedforward(trg, offs["action"])    # column  [d_target+num_flags]
    out_ref[...] = physic + flags + action


# ----------------------------------------------------------------------------
# TransformerTranslator
# ----------------------------------------------------------------------------

class TransformerTranslatorPallas:
    def __init__(self, d_source, d_target, d_input_Enc=10, d_input_Dec=10, d_att=10,
                 num_heads=2, num_encoders=3, RPR_len_decoder=32, num_decoders=3,
                 NbPDWsMemory=10, target_len=80, num_flags=4, eps_end=1 - 0.1,
                 FPIC=False, key=jax.random.PRNGKey(0)):
        assert not FPIC, "FPIC branch not used here (matches default)"
        assert d_att % num_heads == 0
        widest = max(d_source, d_target + num_flags, d_input_Enc, d_input_Dec,
                     3 * d_att, 2 * d_input_Enc, 2 * d_input_Dec, 32)
        assert widest <= PAD, f"model width {widest} exceeds packed width {PAD}"
        assert d_target + num_flags + 1 <= PAD

        self.d_source = d_source
        self.d_target = d_target
        self.num_flags = num_flags
        self.num_heads = num_heads
        self.d_att = d_att
        self.d_input_Enc = d_input_Enc
        self.d_input_Dec = d_input_Dec
        self.target_len = target_len
        self.NbPDWsMemory = NbPDWsMemory
        self.eps_end = eps_end
        self.FPIC = FPIC

        keys = jax.random.split(key, 8)
        # unused in forward() but part of the module's parameters
        self.targetStart = jax.random.normal(keys[0], (1, d_target + num_flags), jnp.float32)

        pk = _ParamPacker()
        self.offsets = dict(
            src_emb=pk.feedforward(keys[1], d_source, d_input_Enc, [16]),
            trg_emb=pk.feedforward(keys[2], d_target + num_flags, d_input_Dec, [16]),
            phys=pk.feedforward(keys[3], d_input_Dec, d_target, [16, 32, 16],
                                col_off_last=0),
            flags=pk.feedforward(keys[4], d_input_Dec, num_flags, [32, 8],
                                 col_off_last=d_target),
            action=pk.feedforward(keys[5], d_input_Dec, 1, [32, 8],
                                  col_off_last=d_target + num_flags),
            encoders=[pk.encoder(k, d_input_Enc, d_att)
                      for k in jax.random.split(keys[6], num_encoders)],
            decoders=[pk.decoder(k, d_input_Dec, d_att)
                      for k in jax.random.split(keys[7], num_decoders)],
        )
        self.param_slab = pk.finalize()     # one (rows, PAD) f32 slab, ~240 KB in VMEM

    def forward(self, source, target):
        """source: (B, Ls, d_source)   target: (B, Lt, d_target + num_flags)."""
        B, Ls, ds = source.shape
        Bt, Lt, dt = target.shape
        assert Bt == B

        # raw-width inputs go straight to the kernel (no wrapper-side zero-pad);
        # the first embedding matmul contracts over only the first `ds`/`dt` rows.
        src2 = source.reshape(B * Ls, ds).astype(jnp.float32)
        trg2 = target.reshape(B * Lt, dt).astype(jnp.float32)

        cfg = dict(B=B, Ls=Ls, Lt=Lt, num_heads=self.num_heads, d_att=self.d_att,
                   d_enc=self.d_input_Enc, d_dec=self.d_input_Dec,
                   d_src_in=ds, d_trg_in=dt, offsets=self.offsets)
        kernel = functools.partial(_forward_kernel, cfg=cfg)
        n_rows = self.param_slab.shape[0]

        # advisory cost so XLA schedules around the custom call (not load-bearing)
        n_mm = (len(self.offsets["src_emb"]) + len(self.offsets["trg_emb"])
                + len(self.offsets["phys"]) + len(self.offsets["flags"])
                + len(self.offsets["action"])
                + sum(4 + 2 * self.num_heads for _ in self.offsets["encoders"])
                + sum(7 + 4 * self.num_heads for _ in self.offsets["decoders"]))
        n_mha = len(self.offsets["encoders"]) + 2 * len(self.offsets["decoders"])
        ce = pl.CostEstimate(
            flops=int(2 * (B * max(Ls, Lt)) * PAD * PAD * n_mm),
            transcendentals=int(n_mha * self.num_heads * (B * Lt) * (B * max(Ls, Lt))),
            bytes_accessed=int(4 * (src2.size + trg2.size + self.param_slab.size
                                    + B * Lt * PAD)))

        out = pl.pallas_call(
            kernel,
            out_shape=jax.ShapeDtypeStruct((B * Lt, PAD), jnp.float32),
            grid=(1,),
            in_specs=[
                pl.BlockSpec((B * Ls, ds), lambda i: (0, 0)),
                pl.BlockSpec((B * Lt, dt), lambda i: (0, 0)),
                pl.BlockSpec((n_rows, PAD), lambda i: (0, 0)),
            ],
            out_specs=pl.BlockSpec((B * Lt, PAD), lambda i: (0, 0)),
            compiler_params=pltpu.CompilerParams(dimension_semantics=("arbitrary",)),
            cost_estimate=ce,
        )(src2, trg2, self.param_slab)

        out = out.reshape(B, Lt, PAD)
        d_pf = self.d_target + self.num_flags
        PDW = out[..., :d_pf]                 # = cat(Physic, Flags)
        Action = out[..., d_pf:d_pf + 1]
        return PDW, Action

    # TODO(synk): translate() is a host-side autoregressive python loop with
    #             data-dependent termination; it is not a kernel and is not ported.


# ----------------------------------------------------------------------------
# Demo
# ----------------------------------------------------------------------------

if __name__ == "__main__":
    B, Ls, Lt = 2, 8, 8
    d_source, d_target, num_flags = 6, 5, 4

    key = jax.random.PRNGKey(0)
    k_src, k_trg, k_model = jax.random.split(key, 3)
    source = jax.random.normal(k_src, (B, Ls, d_source), jnp.float32)
    target = jax.random.normal(k_trg, (B, Lt, d_target + num_flags), jnp.float32)

    model = TransformerTranslatorPallas(
        d_source=d_source, d_target=d_target,
        d_input_Enc=10, d_input_Dec=10, d_att=10,
        num_heads=2, num_encoders=3, num_decoders=3,
        num_flags=num_flags, key=k_model,
    )

    fwd = jax.jit(model.forward)
    PDW, Action = fwd(source, target)
    jax.block_until_ready((PDW, Action))

    assert PDW.shape == (B, Lt, d_target + num_flags), PDW.shape
    assert Action.shape == (B, Lt, 1), Action.shape
    assert bool(jnp.all(jnp.isfinite(PDW))) and bool(jnp.all(jnp.isfinite(Action)))

    print("KERNEL_OK")
</pallas_src>

<mosaic_0001>
module attributes {stable_mosaic.version = 11 : i64} {
  func.func @_forward_kernel(%arg0: i32, %arg1: memref<16x6xf32, #tpu.memory_space<vmem>>, %arg2: memref<16x9xf32, #tpu.memory_space<vmem>>, %arg3: memref<1880x32xf32, #tpu.memory_space<vmem>>, %arg4: memref<16x32xf32, #tpu.memory_space<vmem>>) attributes {dimension_semantics = [#tpu.dimension_semantics<arbitrary>], iteration_bounds = array<i64: 1>, scalar_prefetch = 0 : i64, scratch_operands = 0 : i64, tpu.core_type = #tpu.core_type<tc>, window_params = [{pipeline_mode = #tpu.pipeline_mode<synchronous>, transform_indices = @transform_0, window_bounds = array<i64: 16, 6>}, {pipeline_mode = #tpu.pipeline_mode<synchronous>, transform_indices = @transform_1, window_bounds = array<i64: 16, 9>}, {pipeline_mode = #tpu.pipeline_mode<synchronous>, transform_indices = @transform_2, window_bounds = array<i64: 1880, 32>}, {pipeline_mode = #tpu.pipeline_mode<synchronous>, transform_indices = @transform_3, window_bounds = array<i64: 16, 32>}]} {
    %c0 = arith.constant 0 : index
    %c0_0 = arith.constant 0 : index
    %0 = vector.load %arg1[%c0, %c0_0] : memref<16x6xf32, #tpu.memory_space<vmem>>, vector<16x6xf32>
    %c0_1 = arith.constant 0 : index
    %c0_2 = arith.constant 0 : index
    %1 = vector.load %arg3[%c0_1, %c0_2] : memref<1880x32xf32, #tpu.memory_space<vmem>>, vector<6x32xf32>
    %c32 = arith.constant 32 : index
    %c0_3 = arith.constant 0 : index
    %2 = vector.load %arg3[%c32, %c0_3] : memref<1880x32xf32, #tpu.memory_space<vmem>>, vector<1x32xf32>
    %cst = arith.constant dense<0.000000e+00> : vector<16x32xf32>
    %3 = tpu.matmul %0, %1, %cst {dimension_numbers = #tpu.dot_dimension_numbers<[1], [0], [0], [1], [0, 0, 1, 1], [], []>} : vector<16x6xf32>, vector<6x32xf32>, vector<16x32xf32> -> vector<16x32xf32>
    %4 = vector.broadcast %2 : vector<1x32xf32> to vector<16x32xf32>
    %5 = arith.addf %3, %4 : vector<16x32xf32>
    %cst_4 = arith.constant 0.000000e+00 : f32
    %6 = vector.broadcast %cst_4 : f32 to vector<16x32xf32>
    %7 = arith.maximumf %5, %6 : vector<16x32xf32>
    %c40 = arith.constant 40 : index
    %c0_5 = arith.constant 0 : index
    %8 = vector.load %arg3[%c40, %c0_5] : memref<1880x32xf32, #tpu.memory_space<vmem>>, vector<32x32xf32>
    %c72 = arith.constant 72 : index
    %c0_6 = arith.constant 0 : index
    %9 = vector.load %arg3[%c72, %c0_6] : memref<1880x32xf32, #tpu.memory_space<vmem>>, vector<1x32xf32>
    %cst_7 = arith.constant dense<0.000000e+00> : vector<16x32xf32>
    %10 = tpu.matmul %7, %8, %cst_7 {dimension_numbers = #tpu.dot_dimension_numbers<[1], [0], [0], [1], [0, 0, 1, 1], [], []>} : vector<16x32xf32>, vector<32x32xf32>, vector<16x32xf32> -> vector<16x32xf32>
    %11 = vector.broadcast %9 : vector<1x32xf32> to vector<16x32xf32>
    %12 = arith.addf %10, %11 : vector<16x32xf32>
    %c0_8 = arith.constant 0 : index
    %c0_9 = arith.constant 0 : index
    %13 = vector.load %arg2[%c0_8, %c0_9] : memref<16x9xf32, #tpu.memory_space<vmem>>, vector<16x9xf32>
    %c80 = arith.constant 80 : index
    %c0_10 = arith.constant 0 : index
    %14 = vector.load %arg3[%c80, %c0_10] : memref<1880x32xf32, #tpu.memory_space<vmem>>, vector<9x32xf32>
    %c112 = arith.constant 112 : index
    %c0_11 = arith.constant 0 : index
    %15 = vector.load %arg3[%c112, %c0_11] : memref<1880x32xf32, #tpu.memory_space<vmem>>, vector<1x32xf32>
    %cst_12 = arith.constant dense<0.000000e+00> : vector<16x32xf32>
    %16 = tpu.matmul %13, %14, %cst_12 {dimension_numbers = #tpu.dot_dimension_numbers<[1], [0], [0], [1], [0, 0, 1, 1], [], []>} : vector<16x9xf32>, vector<9x32xf32>, vector<16x32xf32> -> vector<16x32xf32>
    %17 = vector.broadcast %15 : vector<1x32xf32> to vector<16x32xf32>
    %18 = arith.addf %16, %17 : vector<16x32xf32>
    %cst_13 = arith.constant 0.000000e+00 : f32
    %19 = vector.broadcast %cst_13 : f32 to vector<16x32xf32>
    %20 = arith.maximumf %18, %19 : vector<16x32xf32>
    %c120 = arith.constant 120 : index
    %c0_14 = arith.constant 0 : index
    %21 = vector.load %arg3[%c120, %c0_14] : memref<1880x32xf32, #tpu.memory_space<vmem>>, vector<32x32xf32>
    %c152 = arith.constant 152 : index
    %c0_15 = arith.constant 0 : index
    %22 = vector.load %arg3[%c152, %c0_15] : memref<1880x32xf32, #tpu.memory_space<vmem>>, vector<1x32xf32>
    %cst_16 = arith.constant dense<0.000000e+00> : vector<16x32xf32>
    %23 = tpu.matmul %20, %21, %cst_16 {dimension_numbers = #tpu.dot_dimension_numbers<[1], [0], [0], [1], [0, 0, 1, 1], [], []>} : vector<16x32xf32>, vector<32x32xf32>, vector<16x32xf32> -> vector<16x32xf32>
    %24 = vector.broadcast %22 : vector<1x32xf32> to vector<16x32xf32>
    %25 = arith.addf %23, %24 : vector<16x32xf32>
    %c560 = arith.constant 560 : index
    %c0_17 = arith.constant 0 : index
    %26 = vector.load %arg3[%c560, %c0_17] : memref<1880x32xf32, #tpu.memory_space<vmem>>, vector<32x32xf32>
    %c592 = arith.constant 592 : index
    %c0_18 = arith.constant 0 : index
    %27 = vector.load %arg3[%c592, %c0_18] : memref<1880x32xf32, #tpu.memory_space<vmem>>, vector<1x32xf32>
    %cst_19 = arith.constant dense<0.000000e+00> : vector<16x32xf32>
    %28 = tpu.matmul %12, %26, %cst_19 {dimension_numbers = #tpu.dot_dimension_numbers<[1], [0], [0], [1], [0, 0, 1, 1], [], []>} : vector<16x32xf32>, vector<32x32xf32>, vector<16x32xf32> -> vector<16x32xf32>
    %29 = vector.broadcast %27 : vector<1x32xf32> to vector<16x32xf32>
    %30 = arith.addf %28, %29 : vector<16x32xf32>
    %31 = tpu.iota {dimensions = array<i32: 0>} : vector<16x16xi32>
    %32 = tpu.iota {dimensions = array<i32: 1>} : vector<16x16xi32>
    %c0_i32 = arith.constant 0 : i32
    %33 = vector.broadcast %c0_i32 : i32 to vector<16x16xi32>
    %34 = arith.cmpi sge, %31, %33 : vector<16x16xi32>
    %c8_i32 = arith.constant 8 : i32
    %35 = vector.broadcast %c8_i32 : i32 to vector<16x16xi32>
    %36 = arith.cmpi slt, %31, %35 : vector<16x16xi32>
    %37 = arith.andi %34, %36 : vector<16x16xi1>
    %c0_i32_20 = arith.constant 0 : i32
    %38 = vector.broadcast %c0_i32_20 : i32 to vector<16x16xi32>
    %39 = arith.cmpi sge, %32, %38 : vector<16x16xi32>
    %40 = arith.andi %37, %39 : vector<16x16xi1>
    %c8_i32_21 = arith.constant 8 : i32
    %41 = vector.broadcast %c8_i32_21 : i32 to vector<16x16xi32>
    %42 = arith.cmpi slt, %32, %41 : vector<16x16xi32>
    %43 = arith.andi %40, %42 : vector<16x16xi1>
    %c8_i32_22 = arith.constant 8 : i32
    %44 = vector.broadcast %c8_i32_22 : i32 to vector<16x16xi32>
    %45 = arith.cmpi sge, %31, %44 : vector<16x16xi32>
    %c16_i32 = arith.constant 16 : i32
    %46 = vector.broadcast %c16_i32 : i32 to vector<16x16xi32>
    %47 = arith.cmpi slt, %31, %46 : vector<16x16xi32>
    %48 = arith.andi %45, %47 : vector<16x16xi1>
    %c8_i32_23 = arith.constant 8 : i32
    %49 = vector.broadcast %c8_i32_23 : i32 to vector<16x16xi32>
    %50 = arith.cmpi sge, %32, %49 : vector<16x16xi32>
    %51 = arith.andi %48, %50 : vector<16x16xi1>
    %c16_i32_24 = arith.constant 16 : i32
    %52 = vector.broadcast %c16_i32_24 : i32 to vector<16x16xi32>
    %53 = arith.cmpi slt, %32, %52 : vector<16x16xi32>
    %54 = arith.andi %51, %53 : vector<16x16xi1>
    %55 = arith.ori %43, %54 : vector<16x16xi1>
    %cst_25 = arith.constant 0.000000e+00 : f32
    %cst_26 = arith.constant -1.000000e+30 : f32
    %56 = vector.broadcast %cst_25 : f32 to vector<16x16xf32>
    %57 = vector.broadcast %cst_26 : f32 to vector<16x16xf32>
    %58 = arith.select %55, %56, %57 : vector<16x16xi1>, vector<16x16xf32>
    %59 = vector.extract_strided_slice %30 {offsets = [0, 0], sizes = [16, 5], strides = [1, 1]} : vector<16x32xf32> to vector<16x5xf32>
    %60 = vector.extract_strided_slice %30 {offsets = [0, 10], sizes = [16, 5], strides = [1, 1]} : vector<16x32xf32> to vector<16x5xf32>
    %61 = vector.extract_strided_slice %30 {offsets = [0, 20], sizes = [16, 5], strides = [1, 1]} : vector<16x32xf32> to vector<16x5xf32>
    %cst_27 = arith.constant dense<0.000000e+00> : vector<16x16xf32>
    %62 = tpu.matmul %59, %60, %cst_27 {dimension_numbers = #tpu.dot_dimension_numbers<[1], [1], [0], [0], [0, 0, 1, 0], [], []>} : vector<16x5xf32>, vector<16x5xf32>, vector<16x16xf32> -> vector<16x16xf32>
    %cst_28 = arith.constant 0.44721359 : f32
    %63 = vector.broadcast %cst_28 : f32 to vector<16x16xf32>
    %64 = arith.mulf %62, %63 : vector<16x16xf32>
    %65 = arith.addf %64, %58 : vector<16x16xf32>
    %cst_29 = arith.constant dense<0xFF800000> : vector<16xf32>
    %66 = vector.multi_reduction <maximumf>, %65, %cst_29 [1] : vector<16x16xf32> to vector<16xf32>
    %67 = vector.shape_cast %66 : vector<16xf32> to vector<16x1xf32>
    %68 = vector.broadcast %67 : vector<16x1xf32> to vector<16x16xf32>
    %69 = arith.subf %65, %68 : vector<16x16xf32>
    %70 = math.exp %69 : vector<16x16xf32>
    %cst_30 = arith.constant dense<0.000000e+00> : vector<16xf32>
    %71 = vector.multi_reduction <add>, %70, %cst_30 [1] : vector<16x16xf32> to vector<16xf32>
    %72 = vector.shape_cast %71 : vector<16xf32> to vector<16x1xf32>
    %73 = vector.broadcast %72 : vector<16x1xf32> to vector<16x16xf32>
    %74 = arith.divf %70, %73 : vector<16x16xf32>
    %cst_31 = arith.constant dense<0.000000e+00> : vector<16x5xf32>
    %75 = tpu.matmul %74, %61, %cst_31 {dimension_numbers = #tpu.dot_dimension_numbers<[1], [0], [0], [1], [0, 0, 1, 1], [], []>} : vector<16x16xf32>, vector<16x5xf32>, vector<16x5xf32> -> vector<16x5xf32>
    %76 = vector.extract_strided_slice %30 {offsets = [0, 5], sizes = [16, 5], strides = [1, 1]} : vector<16x32xf32> to vector<16x5xf32>
    %77 = vector.extract_strided_slice %30 {offsets = [0, 15], sizes = [16, 5], strides = [1, 1]} : vector<16x32xf32> to vector<16x5xf32>
    %78 = vector.extract_strided_slice %30 {offsets = [0, 25], sizes = [16, 5], strides = [1, 1]} : vector<16x32xf32> to vector<16x5xf32>
    %cst_32 = arith.constant dense<0.000000e+00> : vector<16x16xf32>
    %79 = tpu.matmul %76, %77, %cst_32 {dimension_numbers = #tpu.dot_dimension_numbers<[1], [1], [0], [0], [0, 0, 1, 0], [], []>} : vector<16x5xf32>, vector<16x5xf32>, vector<16x16xf32> -> vector<16x16xf32>
    %cst_33 = arith.constant 0.44721359 : f32
    %80 = vector.broadcast %cst_33 : f32 to vector<16x16xf32>
    %81 = arith.mulf %79, %80 : vector<16x16xf32>
    %82 = arith.addf %81, %58 : vector<16x16xf32>
    %cst_34 = arith.constant dense<0xFF800000> : vector<16xf32>
    %83 = vector.multi_reduction <maximumf>, %82, %cst_34 [1] : vector<16x16xf32> to vector<16xf32>
    %84 = vector.shape_cast %83 : vector<16xf32> to vector<16x1xf32>
    %85 = vector.broadcast %84 : vector<16x1xf32> to vector<16x16xf32>
    %86 = arith.subf %82, %85 : vector<16x16xf32>
    %87 = math.exp %86 : vector<16x16xf32>
    %cst_35 = arith.constant dense<0.000000e+00> : vector<16xf32>
    %88 = vector.multi_reduction <add>, %87, %cst_35 [1] : vector<16x16xf32> to vector<16xf32>
    %89 = vector.shape_cast %88 : vector<16xf32> to vector<16x1xf32>
    %90 = vector.broadcast %89 : vector<16x1xf32> to vector<16x16xf32>
    %91 = arith.divf %87, %90 : vector<16x16xf32>
    %cst_36 = arith.constant dense<0.000000e+00> : vector<16x5xf32>
    %92 = tpu.matmul %91, %78, %cst_36 {dimension_numbers = #tpu.dot_dimension_numbers<[1], [0], [0], [1], [0, 0, 1, 1], [], []>} : vector<16x16xf32>, vector<16x5xf32>, vector<16x5xf32> -> vector<16x5xf32>
    %93 = tpu.concatenate %75, %92 in 1 : vector<16x5xf32>, vector<16x5xf32> -> vector<16x10xf32>
    %c600 = arith.constant 600 : index
    %c0_37 = arith.constant 0 : index
    %94 = vector.load %arg3[%c600, %c0_37] : memref<1880x32xf32, #tpu.memory_space<vmem>>, vector<10x32xf32>
    %c632 = arith.constant 632 : index
    %c0_38 = arith.constant 0 : index
    %95 = vector.load %arg3[%c632, %c0_38] : memref<1880x32xf32, #tpu.memory_space<vmem>>, vector<1x32xf32>
    %cst_39 = arith.constant dense<0.000000e+00> : vector<16x32xf32>
    %96 = tpu.matmul %93, %94, %cst_39 {dimension_numbers = #tpu.dot_dimension_numbers<[1], [0], [0], [1], [0, 0, 1, 1], [], []>} : vector<16x10xf32>, vector<10x32xf32>, vector<16x32xf32> -> vector<16x32xf32>
    %97 = vector.broadcast %95 : vector<1x32xf32> to vector<16x32xf32>
    %98 = arith.addf %96, %97 : vector<16x32xf32>
    %99 = arith.addf %12, %98 : vector<16x32xf32>
    %c720 = arith.constant 720 : index
    %c0_40 = arith.constant 0 : index
    %100 = vector.load %arg3[%c720, %c0_40] : memref<1880x32xf32, #tpu.memory_space<vmem>>, vector<1x32xf32>
    %c721 = arith.constant 721 : index
    %c0_41 = arith.constant 0 : index
    %101 = vector.load %arg3[%c721, %c0_41] : memref<1880x32xf32, #tpu.memory_space<vmem>>, vector<1x32xf32>
    %c722 = arith.constant 722 : index
    %c0_42 = arith.constant 0 : index
    %102 = vector.load %arg3[%c722, %c0_42] : memref<1880x32xf32, #tpu.memory_space<vmem>>, vector<1x32xf32>
    %cst_43 = arith.constant dense<0.000000e+00> : vector<16xf32>
    %103 = vector.multi_reduction <add>, %99, %cst_43 [1] : vector<16x32xf32> to vector<16xf32>
    %104 = vector.shape_cast %103 : vector<16xf32> to vector<16x1xf32>
    %cst_44 = arith.constant 1.000000e-01 : f32
    %105 = vector.broadcast %cst_44 : f32 to vector<16x1xf32>
    %106 = arith.mulf %104, %105 : vector<16x1xf32>
    %107 = vector.broadcast %106 : vector<16x1xf32> to vector<16x32xf32>
    %108 = arith.subf %99, %107 : vector<16x32xf32>
    %109 = vector.broadcast %102 : vector<1x32xf32> to vector<16x32xf32>
    %110 = arith.mulf %108, %109 : vector<16x32xf32>
    %111 = arith.mulf %110, %110 : vector<16x32xf32>
    %cst_45 = arith.constant dense<0.000000e+00> : vector<16xf32>
    %112 = vector.multi_reduction <add>, %111, %cst_45 [1] : vector<16x32xf32> to vector<16xf32>
    %113 = vector.shape_cast %112 : vector<16xf32> to vector<16x1xf32>
    %cst_46 = arith.constant 1.000000e-01 : f32
    %114 = vector.broadcast %cst_46 : f32 to vector<16x1xf32>
    %115 = arith.mulf %113, %114 : vector<16x1xf32>
    %cst_47 = arith.constant 9.99999974E-6 : f32
    %116 = vector.broadcast %cst_47 : f32 to vector<16x1xf32>
    %117 = arith.addf %115, %116 : vector<16x1xf32>
    %118 = math.rsqrt %117 : vector<16x1xf32>
    %119 = vector.broadcast %118 : vector<16x1xf32> to vector<16x32xf32>
    %120 = arith.mulf %110, %119 : vector<16x32xf32>
    %121 = vector.broadcast %100 : vector<1x32xf32> to vector<16x32xf32>
    %122 = arith.mulf %120, %121 : vector<16x32xf32>
    %123 = vector.broadcast %101 : vector<1x32xf32> to vector<16x32xf32>
    %124 = arith.addf %122, %123 : vector<16x32xf32>
    %c640 = arith.constant 640 : index
    %c0_48 = arith.constant 0 : index
    %125 = vector.load %arg3[%c640, %c0_48] : memref<1880x32xf32, #tpu.memory_space<vmem>>, vector<32x32xf32>
    %c672 = arith.constant 672 : index
    %c0_49 = arith.constant 0 : index
    %126 = vector.load %arg3[%c672, %c0_49] : memref<1880x32xf32, #tpu.memory_space<vmem>>, vector<1x32xf32>
    %cst_50 = arith.constant dense<0.000000e+00> : vector<16x32xf32>
    %127 = tpu.matmul %124, %125, %cst_50 {dimension_numbers = #tpu.dot_dimension_numbers<[1], [0], [0], [1], [0, 0, 1, 1], [], []>} : vector<16x32xf32>, vector<32x32xf32>, vector<16x32xf32> -> vector<16x32xf32>
    %128 = vector.broadcast %126 : vector<1x32xf32> to vector<16x32xf32>
    %129 = arith.addf %127, %128 : vector<16x32xf32>
    %cst_51 = arith.constant 0.000000e+00 : f32
    %130 = vector.broadcast %cst_51 : f32 to vector<16x32xf32>
    %131 = arith.maximumf %129, %130 : vector<16x32xf32>
    %c680 = arith.constant 680 : index
    %c0_52 = arith.constant 0 : index
    %132 = vector.load %arg3[%c680, %c0_52] : memref<1880x32xf32, #tpu.memory_space<vmem>>, vector<32x32xf32>
    %c712 = arith.constant 712 : index
    %c0_53 = arith.constant 0 : index
    %133 = vector.load %arg3[%c712, %c0_53] : memref<1880x32xf32, #tpu.memory_space<vmem>>, vector<1x32xf32>
    %cst_54 = arith.constant dense<0.000000e+00> : vector<16x32xf32>
    %134 = tpu.matmul %131, %132, %cst_54 {dimension_numbers = #tpu.dot_dimension_numbers<[1], [0], [0], [1], [0, 0, 1, 1], [], []>} : vector<16x32xf32>, vector<32x32xf32>, vector<16x32xf32> -> vector<16x32xf32>
    %135 = vector.broadcast %133 : vector<1x32xf32> to vector<16x32xf32>
    %136 = arith.addf %134, %135 : vector<16x32xf32>
    %137 = arith.addf %124, %136 : vector<16x32xf32>
    %c728 = arith.constant 728 : index
    %c0_55 = arith.constant 0 : index
    %138 = vector.load %arg3[%c728, %c0_55] : memref<1880x32xf32, #tpu.memory_space<vmem>>, vector<1x32xf32>
    %c729 = arith.constant 729 : index
    %c0_56 = arith.constant 0 : index
    %139 = vector.load %arg3[%c729, %c0_56] : memref<1880x32xf32, #tpu.memory_space<vmem>>, vector<1x32xf32>
    %c730 = arith.constant 730 : index
    %c0_57 = arith.constant 0 : index
    %140 = vector.load %arg3[%c730, %c0_57] : memref<1880x32xf32, #tpu.memory_space<vmem>>, vector<1x32xf32>
    %cst_58 = arith.constant dense<0.000000e+00> : vector<16xf32>
    %141 = vector.multi_reduction <add>, %137, %cst_58 [1] : vector<16x32xf32> to vector<16xf32>
    %142 = vector.shape_cast %141 : vector<16xf32> to vector<16x1xf32>
    %cst_59 = arith.constant 1.000000e-01 : f32
    %143 = vector.broadcast %cst_59 : f32 to vector<16x1xf32>
    %144 = arith.mulf %142, %143 : vector<16x1xf32>
    %145 = vector.broadcast %144 : vector<16x1xf32> to vector<16x32xf32>
    %146 = arith.subf %137, %145 : vector<16x32xf32>
    %147 = vector.broadcast %140 : vector<1x32xf32> to vector<16x32xf32>
    %148 = arith.mulf %146, %147 : vector<16x32xf32>
    %149 = arith.mulf %148, %148 : vector<16x32xf32>
    %cst_60 = arith.constant dense<0.000000e+00> : vector<16xf32>
    %150 = vector.multi_reduction <add>, %149, %cst_60 [1] : vector<16x32xf32> to vector<16xf32>
    %151 = vector.shape_cast %150 : vector<16xf32> to vector<16x1xf32>
    %cst_61 = arith.constant 1.000000e-01 : f32
    %152 = vector.broadcast %cst_61 : f32 to vector<16x1xf32>
    %153 = arith.mulf %151, %152 : vector<16x1xf32>
    %cst_62 = arith.constant 9.99999974E-6 : f32
    %154 = vector.broadcast %cst_62 : f32 to vector<16x1xf32>
    %155 = arith.addf %153, %154 : vector<16x1xf32>
    %156 = math.rsqrt %155 : vector<16x1xf32>
    %157 = vector.broadcast %156 : vector<16x1xf32> to vector<16x32xf32>
    %158 = arith.mulf %148, %157 : vector<16x32xf32>
    %159 = vector.broadcast %138 : vector<1x32xf32> to vector<16x32xf32>
    %160 = arith.mulf %158, %159 : vector<16x32xf32>
    %161 = vector.broadcast %139 : vector<1x32xf32> to vector<16x32xf32>
    %162 = arith.addf %160, %161 : vector<16x32xf32>
    %c736 = arith.constant 736 : index
    %c0_63 = arith.constant 0 : index
    %163 = vector.load %arg3[%c736, %c0_63] : memref<1880x32xf32, #tpu.memory_space<vmem>>, vector<32x32xf32>
    %c768 = arith.constant 768 : index
    %c0_64 = arith.constant 0 : index
    %164 = vector.load %arg3[%c768, %c0_64] : memref<1880x32xf32, #tpu.memory_space<vmem>>, vector<1x32xf32>
    %cst_65 = arith.constant dense<0.000000e+00> : vector<16x32xf32>
    %165 = tpu.matmul %162, %163, %cst_65 {dimension_numbers = #tpu.dot_dimension_numbers<[1], [0], [0], [1], [0, 0, 1, 1], [], []>} : vector<16x32xf32>, vector<32x32xf32>, vector<16x32xf32> -> vector<16x32xf32>
    %166 = vector.broadcast %164 : vector<1x32xf32> to vector<16x32xf32>
    %167 = arith.addf %165, %166 : vector<16x32xf32>
    %168 = vector.extract_strided_slice %167 {offsets = [0, 0], sizes = [16, 5], strides = [1, 1]} : vector<16x32xf32> to vector<16x5xf32>
    %169 = vector.extract_strided_slice %167 {offsets = [0, 10], sizes = [16, 5], strides = [1, 1]} : vector<16x32xf32> to vector<16x5xf32>
    %170 = vector.extract_strided_slice %167 {offsets = [0, 20], sizes = [16, 5], strides = [1, 1]} : vector<16x32xf32> to vector<16x5xf32>
    %cst_66 = arith.constant dense<0.000000e+00> : vector<16x16xf32>
    %171 = tpu.matmul %168, %169, %cst_66 {dimension_numbers = #tpu.dot_dimension_numbers<[1], [1], [0], [0], [0, 0, 1, 0], [], []>} : vector<16x5xf32>, vector<16x5xf32>, vector<16x16xf32> -> vector<16x16xf32>
    %cst_67 = arith.constant 0.44721359 : f32
    %172 = vector.broadcast %cst_67 : f32 to vector<16x16xf32>
    %173 = arith.mulf %171, %172 : vector<16x16xf32>
    %174 = arith.addf %173, %58 : vector<16x16xf32>
    %cst_68 = arith.constant dense<0xFF800000> : vector<16xf32>
    %175 = vector.multi_reduction <maximumf>, %174, %cst_68 [1] : vector<16x16xf32> to vector<16xf32>
    %176 = vector.shape_cast %175 : vector<16xf32> to vector<16x1xf32>
    %177 = vector.broadcast %176 : vector<16x1xf32> to vector<16x16xf32>
    %178 = arith.subf %174, %177 : vector<16x16xf32>
    %179 = math.exp %178 : vector<16x16xf32>
    %cst_69 = arith.constant dense<0.000000e+00> : vector<16xf32>
    %180 = vector.multi_reduction <add>, %179, %cst_69 [1] : vector<16x16xf32> to vector<16xf32>
    %181 = vector.shape_cast %180 : vector<16xf32> to vector<16x1xf32>
    %182 = vector.broadcast %181 : vector<16x1xf32> to vector<16x16xf32>
    %183 = arith.divf %179, %182 : vector<16x16xf32>
    %cst_70 = arith.constant dense<0.000000e+00> : vector<16x5xf32>
    %184 = tpu.matmul %183, %170, %cst_70 {dimension_numbers = #tpu.dot_dimension_numbers<[1], [0], [0], [1], [0, 0, 1, 1], [], []>} : vector<16x16xf32>, vector<16x5xf32>, vector<16x5xf32> -> vector<16x5xf32>
    %185 = vector.extract_strided_slice %167 {offsets = [0, 5], sizes = [16, 5], strides = [1, 1]} : vector<16x32xf32> to vector<16x5xf32>
    %186 = vector.extract_strided_slice %167 {offsets = [0, 15], sizes = [16, 5], strides = [1, 1]} : vector<16x32xf32> to vector<16x5xf32>
    %187 = vector.extract_strided_slice %167 {offsets = [0, 25], sizes = [16, 5], strides = [1, 1]} : vector<16x32xf32> to vector<16x5xf32>
    %cst_71 = arith.constant dense<0.000000e+00> : vector<16x16xf32>
    %188 = tpu.matmul %185, %186, %cst_71 {dimension_numbers = #tpu.dot_dimension_numbers<[1], [1], [0], [0], [0, 0, 1, 0], [], []>} : vector<16x5xf32>, vector<16x5xf32>, vector<16x16xf32> -> vector<16x16xf32>
    %cst_72 = arith.constant 0.44721359 : f32
    %189 = vector.broadcast %cst_72 : f32 to vector<16x16xf32>
    %190 = arith.mulf %188, %189 : vector<16x16xf32>
    %191 = arith.addf %190, %58 : vector<16x16xf32>
    %cst_73 = arith.constant dense<0xFF800000> : vector<16xf32>
    %192 = vector.multi_reduction <maximumf>, %191, %cst_73 [1] : vector<16x16xf32> to vector<16xf32>
    %193 = vector.shape_cast %192 : vector<16xf32> to vector<16x1xf32>
    %194 = vector.broadcast %193 : vector<16x1xf32> to vector<16x16xf32>
    %195 = arith.subf %191, %194 : vector<16x16xf32>
    %196 = math.exp %195 : vector<16x16xf32>
    %cst_74 = arith.constant dense<0.000000e+00> : vector<16xf32>
    %197 = vector.multi_reduction <add>, %196, %cst_74 [1] : vector<16x16xf32> to vector<16xf32>
    %198 = vector.shape_cast %197 : vector<16xf32> to vector<16x1xf32>
    %199 = vector.broadcast %198 : vector<16x1xf32> to vector<16x16xf32>
    %200 = arith.divf %196, %199 : vector<16x16xf32>
    %cst_75 = arith.constant dense<0.000000e+00> : vector<16x5xf32>
    %201 = tpu.matmul %200, %187, %cst_75 {dimension_numbers = #tpu.dot_dimension_numbers<[1], [0], [0], [1], [0, 0, 1, 1], [], []>} : vector<16x16xf32>, vector<16x5xf32>, vector<16x5xf32> -> vector<16x5xf32>
    %202 = tpu.concatenate %184, %201 in 1 : vector<16x5xf32>, vector<16x5xf32> -> vector<16x10xf32>
    %c776 = arith.constant 776 : index
    %c0_76 = arith.constant 0 : index
    %203 = vector.load %arg3[%c776, %c0_76] : memref<1880x32xf32, #tpu.memory_space<vmem>>, vector<10x32xf32>
    %c808 = arith.constant 808 : index
    %c0_77 = arith.constant 0 : index
    %204 = vector.load %arg3[%c808, %c0_77] : memref<1880x32xf32, #tpu.memory_space<vmem>>, vector<1x32xf32>
    %cst_78 = arith.constant dense<0.000000e+00> : vector<16x32xf32>
    %205 = tpu.matmul %202, %203, %cst_78 {dimension_numbers = #tpu.dot_dimension_numbers<[1], [0], [0], [1], [0, 0, 1, 1], [], []>} : vector<16x10xf32>, vector<10x32xf32>, vector<16x32xf32> -> vector<16x32xf32>
    %206 = vector.broadcast %204 : vector<1x32xf32> to vector<16x32xf32>
    %207 = arith.addf %205, %206 : vector<16x32xf32>
    %208 = arith.addf %162, %207 : vector<16x32xf32>
    %c896 = arith.constant 896 : index
    %c0_79 = arith.constant 0 : index
    %209 = vector.load %arg3[%c896, %c0_79] : memref<1880x32xf32, #tpu.memory_space<vmem>>, vector<1x32xf32>
    %c897 = arith.constant 897 : index
    %c0_80 = arith.constant 0 : index
    %210 = vector.load %arg3[%c897, %c0_80] : memref<1880x32xf32, #tpu.memory_space<vmem>>, vector<1x32xf32>
    %c898 = arith.constant 898 : index
    %c0_81 = arith.constant 0 : index
    %211 = vector.load %arg3[%c898, %c0_81] : memref<1880x32xf32, #tpu.memory_space<vmem>>, vector<1x32xf32>
    %cst_82 = arith.constant dense<0.000000e+00> : vector<16xf32>
    %212 = vector.multi_reduction <add>, %208, %cst_82 [1] : vector<16x32xf32> to vector<16xf32>
    %213 = vector.shape_cast %212 : vector<16xf32> to vector<16x1xf32>
    %cst_83 = arith.constant 1.000000e-01 : f32
    %214 = vector.broadcast %cst_83 : f32 to vector<16x1xf32>
    %215 = arith.mulf %213, %214 : vector<16x1xf32>
    %216 = vector.broadcast %215 : vector<16x1xf32> to vector<16x32xf32>
    %217 = arith.subf %208, %216 : vector<16x32xf32>
    %218 = vector.broadcast %211 : vector<1x32xf32> to vector<16x32xf32>
    %219 = arith.mulf %217, %218 : vector<16x32xf32>
    %220 = arith.mulf %219, %219 : vector<16x32xf32>
    %cst_84 = arith.constant dense<0.000000e+00> : vector<16xf32>
    %221 = vector.multi_reduction <add>, %220, %cst_84 [1] : vector<16x32xf32> to vector<16xf32>
    %222 = vector.shape_cast %221 : vector<16xf32> to vector<16x1xf32>
    %cst_85 = arith.constant 1.000000e-01 : f32
    %223 = vector.broadcast %cst_85 : f32 to vector<16x1xf32>
    %224 = arith.mulf %222, %223 : vector<16x1xf32>
    %cst_86 = arith.constant 9.99999974E-6 : f32
    %225 = vector.broadcast %cst_86 : f32 to vector<16x1xf32>
    %226 = arith.addf %224, %225 : vector<16x1xf32>
    %227 = math.rsqrt %226 : vector<16x1xf32>
    %228 = vector.broadcast %227 : vector<16x1xf32> to vector<16x32xf32>
    %229 = arith.mulf %219, %228 : vector<16x32xf32>
    %230 = vector.broadcast %209 : vector<1x32xf32> to vector<16x32xf32>
    %231 = arith.mulf %229, %230 : vector<16x32xf32>
    %232 = vector.broadcast %210 : vector<1x32xf32> to vector<16x32xf32>
    %233 = arith.addf %231, %232 : vector<16x32xf32>
    %c816 = arith.constant 816 : index
    %c0_87 = arith.constant 0 : index
    %234 = vector.load %arg3[%c816, %c0_87] : memref<1880x32xf32, #tpu.memory_space<vmem>>, vector<32x32xf32>
    %c848 = arith.constant 848 : index
    %c0_88 = arith.constant 0 : index
    %235 = vector.load %arg3[%c848, %c0_88] : memref<1880x32xf32, #tpu.memory_space<vmem>>, vector<1x32xf32>
    %cst_89 = arith.constant dense<0.000000e+00> : vector<16x32xf32>
    %236 = tpu.matmul %233, %234, %cst_89 {dimension_numbers = #tpu.dot_dimension_numbers<[1], [0], [0], [1], [0, 0, 1, 1], [], []>} : vector<16x32xf32>, vector<32x32xf32>, vector<16x32xf32> -> vector<16x32xf32>
    %237 = vector.broadcast %235 : vector<1x32xf32> to vector<16x32xf32>
    %238 = arith.addf %236, %237 : vector<16x32xf32>
    %cst_90 = arith.constant 0.000000e+00 : f32
    %239 = vector.broadcast %cst_90 : f32 to vector<16x32xf32>
    %240 = arith.maximumf %238, %239 : vector<16x32xf32>
    %c856 = arith.constant 856 : index
    %c0_91 = arith.constant 0 : index
    %241 = vector.load %arg3[%c856, %c0_91] : memref<1880x32xf32, #tpu.memory_space<vmem>>, vector<32x32xf32>
    %c888 = arith.constant 888 : index
    %c0_92 = arith.constant 0 : index
    %242 = vector.load %arg3[%c888, %c0_92] : memref<1880x32xf32, #tpu.memory_space<vmem>>, vector<1x32xf32>
    %cst_93 = arith.constant dense<0.000000e+00> : vector<16x32xf32>
    %243 = tpu.matmul %240, %241, %cst_93 {dimension_numbers = #tpu.dot_dimension_numbers<[1], [0], [0], [1], [0, 0, 1, 1], [], []>} : vector<16x32xf32>, vector<32x32xf32>, vector<16x32xf32> -> vector<16x32xf32>
    %244 = vector.broadcast %242 : vector<1x32xf32> to vector<16x32xf32>
    %245 = arith.addf %243, %244 : vector<16x32xf32>
    %246 = arith.addf %233, %245 : vector<16x32xf32>
    %c904 = arith.constant 904 : index
    %c0_94 = arith.constant 0 : index
    %247 = vector.load %arg3[%c904, %c0_94] : memref<1880x32xf32, #tpu.memory_space<vmem>>, vector<1x32xf32>
    %c905 = arith.constant 905 : index
    %c0_95 = arith.constant 0 : index
    %248 = vector.load %arg3[%c905, %c0_95] : memref<1880x32xf32, #tpu.memory_space<vmem>>, vector<1x32xf32>
    %c906 = arith.constant 906 : index
    %c0_96 = arith.constant 0 : index
    %249 = vector.load %arg3[%c906, %c0_96] : memref<1880x32xf32, #tpu.memory_space<vmem>>, vector<1x32xf32>
    %cst_97 = arith.constant dense<0.000000e+00> : vector<16xf32>
    %250 = vector.multi_reduction <add>, %246, %cst_97 [1] : vector<16x32xf32> to vector<16xf32>
    %251 = vector.shape_cast %250 : vector<16xf32> to vector<16x1xf32>
    %cst_98 = arith.constant 1.000000e-01 : f32
    %252 = vector.broadcast %cst_98 : f32 to vector<16x1xf32>
    %253 = arith.mulf %251, %252 : vector<16x1xf32>
    %254 = vector.broadcast %253 : vector<16x1xf32> to vector<16x32xf32>
    %255 = arith.subf %246, %254 : vector<16x32xf32>
    %256 = vector.broadcast %249 : vector<1x32xf32> to vector<16x32xf32>
    %257 = arith.mulf %255, %256 : vector<16x32xf32>
    %258 = arith.mulf %257, %257 : vector<16x32xf32>
    %cst_99 = arith.constant dense<0.000000e+00> : vector<16xf32>
    %259 = vector.multi_reduction <add>, %258, %cst_99 [1] : vector<16x32xf32> to vector<16xf32>
    %260 = vector.shape_cast %259 : vector<16xf32> to vector<16x1xf32>
    %cst_100 = arith.constant 1.000000e-01 : f32
    %261 = vector.broadcast %cst_100 : f32 to vector<16x1xf32>
    %262 = arith.mulf %260, %261 : vector<16x1xf32>
    %cst_101 = arith.constant 9.99999974E-6 : f32
    %263 = vector.broadcast %cst_101 : f32 to vector<16x1xf32>
    %264 = arith.addf %262, %263 : vector<16x1xf32>
    %265 = math.rsqrt %264 : vector<16x1xf32>
    %266 = vector.broadcast %265 : vector<16x1xf32> to vector<16x32xf32>
    %267 = arith.mulf %257, %266 : vector<16x32xf32>
    %268 = vector.broadcast %247 : vector<1x32xf32> to vector<16x32xf32>
    %269 = arith.mulf %267, %268 : vector<16x32xf32>
    %270 = vector.broadcast %248 : vector<1x32xf32> to vector<16x32xf32>
    %271 = arith.addf %269, %270 : vector<16x32xf32>
    %c912 = arith.constant 912 : index
    %c0_102 = arith.constant 0 : index
    %272 = vector.load %arg3[%c912, %c0_102] : memref<1880x32xf32, #tpu.memory_space<vmem>>, vector<32x32xf32>
    %c944 = arith.constant 944 : index
    %c0_103 = arith.constant 0 : index
    %273 = vector.load %arg3[%c944, %c0_103] : memref<1880x32xf32, #tpu.memory_space<vmem>>, vector<1x32xf32>
    %cst_104 = arith.constant dense<0.000000e+00> : vector<16x32xf32>
    %274 = tpu.matmul %271, %272, %cst_104 {dimension_numbers = #tpu.dot_dimension_numbers<[1], [0], [0], [1], [0, 0, 1, 1], [], []>} : vector<16x32xf32>, vector<32x32xf32>, vector<16x32xf32> -> vector<16x32xf32>
    %275 = vector.broadcast %273 : vector<1x32xf32> to vector<16x32xf32>
    %276 = arith.addf %274, %275 : vector<16x32xf32>
    %277 = vector.extract_strided_slice %276 {offsets = [0, 0], sizes = [16, 5], strides = [1, 1]} : vector<16x32xf32> to vector<16x5xf32>
    %278 = vector.extract_strided_slice %276 {offsets = [0, 10], sizes = [16, 5], strides = [1, 1]} : vector<16x32xf32> to vector<16x5xf32>
    %279 = vector.extract_strided_slice %276 {offsets = [0, 20], sizes = [16, 5], strides = [1, 1]} : vector<16x32xf32> to vector<16x5xf32>
    %cst_105 = arith.constant dense<0.000000e+00> : vector<16x16xf32>
    %280 = tpu.matmul %277, %278, %cst_105 {dimension_numbers = #tpu.dot_dimension_numbers<[1], [1], [0], [0], [0, 0, 1, 0], [], []>} : vector<16x5xf32>, vector<16x5xf32>, vector<16x16xf32> -> vector<16x16xf32>
    %cst_106 = arith.constant 0.44721359 : f32
    %281 = vector.broadcast %cst_106 : f32 to vector<16x16xf32>
    %282 = arith.mulf %280, %281 : vector<16x16xf32>
    %283 = arith.addf %282, %58 : vector<16x16xf32>
    %cst_107 = arith.constant dense<0xFF800000> : vector<16xf32>
    %284 = vector.multi_reduction <maximumf>, %283, %cst_107 [1] : vector<16x16xf32> to vector<16xf32>
    %285 = vector.shape_cast %284 : vector<16xf32> to vector<16x1xf32>
    %286 = vector.broadcast %285 : vector<16x1xf32> to vector<16x16xf32>
    %287 = arith.subf %283, %286 : vector<16x16xf32>
    %288 = math.exp %287 : vector<16x16xf32>
    %cst_108 = arith.constant dense<0.000000e+00> : vector<16xf32>
    %289 = vector.multi_reduction <add>, %288, %cst_108 [1] : vector<16x16xf32> to vector<16xf32>
    %290 = vector.shape_cast %289 : vector<16xf32> to vector<16x1xf32>
    %291 = vector.broadcast %290 : vector<16x1xf32> to vector<16x16xf32>
    %292 = arith.divf %288, %291 : vector<16x16xf32>
    %cst_109 = arith.constant dense<0.000000e+00> : vector<16x5xf32>
    %293 = tpu.matmul %292, %279, %cst_109 {dimension_numbers = #tpu.dot_dimension_numbers<[1], [0], [0], [1], [0, 0, 1, 1], [], []>} : vector<16x16xf32>, vector<16x5xf32>, vector<16x5xf32> -> vector<16x5xf32>
    %294 = vector.extract_strided_slice %276 {offsets = [0, 5], sizes = [16, 5], strides = [1, 1]} : vector<16x32xf32> to vector<16x5xf32>
    %295 = vector.extract_strided_slice %276 {offsets = [0, 15], sizes = [16, 5], strides = [1, 1]} : vector<16x32xf32> to vector<16x5xf32>
    %296 = vector.extract_strided_slice %276 {offsets = [0, 25], sizes = [16, 5], strides = [1, 1]} : vector<16x32xf32> to vector<16x5xf32>
    %cst_110 = arith.constant dense<0.000000e+00> : vector<16x16xf32>
    %297 = tpu.matmul %294, %295, %cst_110 {dimension_numbers = #tpu.dot_dimension_numbers<[1], [1], [0], [0], [0, 0, 1, 0], [], []>} : vector<16x5xf32>, vector<16x5xf32>, vector<16x16xf32> -> vector<16x16xf32>
    %cst_111 = arith.constant 0.44721359 : f32
    %298 = vector.broadcast %cst_111 : f32 to vector<16x16xf32>
    %299 = arith.mulf %297, %298 : vector<16x16xf32>
    %300 = arith.addf %299, %58 : vector<16x16xf32>
    %cst_112 = arith.constant dense<0xFF800000> : vector<16xf32>
    %301 = vector.multi_reduction <maximumf>, %300, %cst_112 [1] : vector<16x16xf32> to vector<16xf32>
    %302 = vector.shape_cast %301 : vector<16xf32> to vector<16x1xf32>
    %303 = vector.broadcast %302 : vector<16x1xf32> to vector<16x16xf32>
    %304 = arith.subf %300, %303 : vector<16x16xf32>
    %305 = math.exp %304 : vector<16x16xf32>
    %cst_113 = arith.constant dense<0.000000e+00> : vector<16xf32>
    %306 = vector.multi_reduction <add>, %305, %cst_113 [1] : vector<16x16xf32> to vector<16xf32>
    %307 = vector.shape_cast %306 : vector<16xf32> to vector<16x1xf32>
    %308 = vector.broadcast %307 : vector<16x1xf32> to vector<16x16xf32>
    %309 = arith.divf %305, %308 : vector<16x16xf32>
    %cst_114 = arith.constant dense<0.000000e+00> : vector<16x5xf32>
    %310 = tpu.matmul %309, %296, %cst_114 {dimension_numbers = #tpu.dot_dimension_numbers<[1], [0], [0], [1], [0, 0, 1, 1], [], []>} : vector<16x16xf32>, vector<16x5xf32>, vector<16x5xf32> -> vector<16x5xf32>
    %311 = tpu.concatenate %293, %310 in 1 : vector<16x5xf32>, vector<16x5xf32> -> vector<16x10xf32>
    %c952 = arith.constant 952 : index
    %c0_115 = arith.constant 0 : index
    %312 = vector.load %arg3[%c952, %c0_115] : memref<1880x32xf32, #tpu.memory_space<vmem>>, vector<10x32xf32>
    %c984 = arith.constant 984 : index
    %c0_116 = arith.constant 0 : index
    %313 = vector.load %arg3[%c984, %c0_116] : memref<1880x32xf32, #tpu.memory_space<vmem>>, vector<1x32xf32>
    %cst_117 = arith.constant dense<0.000000e+00> : vector<16x32xf32>
    %314 = tpu.matmul %311, %312, %cst_117 {dimension_numbers = #tpu.dot_dimension_numbers<[1], [0], [0], [1], [0, 0, 1, 1], [], []>} : vector<16x10xf32>, vector<10x32xf32>, vector<16x32xf32> -> vector<16x32xf32>
    %315 = vector.broadcast %313 : vector<1x32xf32> to vector<16x32xf32>
    %316 = arith.addf %314, %315 : vector<16x32xf32>
    %317 = arith.addf %271, %316 : vector<16x32xf32>
    %c1072 = arith.constant 1072 : index
    %c0_118 = arith.constant 0 : index
    %318 = vector.load %arg3[%c1072, %c0_118] : memref<1880x32xf32, #tpu.memory_space<vmem>>, vector<1x32xf32>
    %c1073 = arith.constant 1073 : index
    %c0_119 = arith.constant 0 : index
    %319 = vector.load %arg3[%c1073, %c0_119] : memref<1880x32xf32, #tpu.memory_space<vmem>>, vector<1x32xf32>
    %c1074 = arith.constant 1074 : index
    %c0_120 = arith.constant 0 : index
    %320 = vector.load %arg3[%c1074, %c0_120] : memref<1880x32xf32, #tpu.memory_space<vmem>>, vector<1x32xf32>
    %cst_121 = arith.constant dense<0.000000e+00> : vector<16xf32>
    %321 = vector.multi_reduction <add>, %317, %cst_121 [1] : vector<16x32xf32> to vector<16xf32>
    %322 = vector.shape_cast %321 : vector<16xf32> to vector<16x1xf32>
    %cst_122 = arith.constant 1.000000e-01 : f32
    %323 = vector.broadcast %cst_122 : f32 to vector<16x1xf32>
    %324 = arith.mulf %322, %323 : vector<16x1xf32>
    %325 = vector.broadcast %324 : vector<16x1xf32> to vector<16x32xf32>
    %326 = arith.subf %317, %325 : vector<16x32xf32>
    %327 = vector.broadcast %320 : vector<1x32xf32> to vector<16x32xf32>
    %328 = arith.mulf %326, %327 : vector<16x32xf32>
    %329 = arith.mulf %328, %328 : vector<16x32xf32>
    %cst_123 = arith.constant dense<0.000000e+00> : vector<16xf32>
    %330 = vector.multi_reduction <add>, %329, %cst_123 [1] : vector<16x32xf32> to vector<16xf32>
    %331 = vector.shape_cast %330 : vector<16xf32> to vector<16x1xf32>
    %cst_124 = arith.constant 1.000000e-01 : f32
    %332 = vector.broadcast %cst_124 : f32 to vector<16x1xf32>
    %333 = arith.mulf %331, %332 : vector<16x1xf32>
    %cst_125 = arith.constant 9.99999974E-6 : f32
    %334 = vector.broadcast %cst_125 : f32 to vector<16x1xf32>
    %335 = arith.addf %333, %334 : vector<16x1xf32>
    %336 = math.rsqrt %335 : vector<16x1xf32>
    %337 = vector.broadcast %336 : vector<16x1xf32> to vector<16x32xf32>
    %338 = arith.mulf %328, %337 : vector<16x32xf32>
    %339 = vector.broadcast %318 : vector<1x32xf32> to vector<16x32xf32>
    %340 = arith.mulf %338, %339 : vector<16x32xf32>
    %341 = vector.broadcast %319 : vector<1x32xf32> to vector<16x32xf32>
    %342 = arith.addf %340, %341 : vector<16x32xf32>
    %c992 = arith.constant 992 : index
    %c0_126 = arith.constant 0 : index
    %343 = vector.load %arg3[%c992, %c0_126] : memref<1880x32xf32, #tpu.memory_space<vmem>>, vector<32x32xf32>
    %c1024 = arith.constant 1024 : index
    %c0_127 = arith.constant 0 : index
    %344 = vector.load %arg3[%c1024, %c0_127] : memref<1880x32xf32, #tpu.memory_space<vmem>>, vector<1x32xf32>
    %cst_128 = arith.constant dense<0.000000e+00> : vector<16x32xf32>
    %345 = tpu.matmul %342, %343, %cst_128 {dimension_numbers = #tpu.dot_dimension_numbers<[1], [0], [0], [1], [0, 0, 1, 1], [], []>} : vector<16x32xf32>, vector<32x32xf32>, vector<16x32xf32> -> vector<16x32xf32>
    %346 = vector.broadcast %344 : vector<1x32xf32> to vector<16x32xf32>
    %347 = arith.addf %345, %346 : vector<16x32xf32>
    %cst_129 = arith.constant 0.000000e+00 : f32
    %348 = vector.broadcast %cst_129 : f32 to vector<16x32xf32>
    %349 = arith.maximumf %347, %348 : vector<16x32xf32>
    %c1032 = arith.constant 1032 : index
    %c0_130 = arith.constant 0 : index
    %350 = vector.load %arg3[%c1032, %c0_130] : memref<1880x32xf32, #tpu.memory_space<vmem>>, vector<32x32xf32>
    %c1064 = arith.constant 1064 : index
    %c0_131 = arith.constant 0 : index
    %351 = vector.load %arg3[%c1064, %c0_131] : memref<1880x32xf32, #tpu.memory_space<vmem>>, vector<1x32xf32>
    %cst_132 = arith.constant dense<0.000000e+00> : vector<16x32xf32>
    %352 = tpu.matmul %349, %350, %cst_132 {dimension_numbers = #tpu.dot_dimension_numbers<[1], [0], [0], [1], [0, 0, 1, 1], [], []>} : vector<16x32xf32>, vector<32x32xf32>, vector<16x32xf32> -> vector<16x32xf32>
    %353 = vector.broadcast %351 : vector<1x32xf32> to vector<16x32xf32>
    %354 = arith.addf %352, %353 : vector<16x32xf32>
    %355 = arith.addf %342, %354 : vector<16x32xf32>
    %c1080 = arith.constant 1080 : index
    %c0_133 = arith.constant 0 : index
    %356 = vector.load %arg3[%c1080, %c0_133] : memref<1880x32xf32, #tpu.memory_space<vmem>>, vector<1x32xf32>
    %c1081 = arith.constant 1081 : index
    %c0_134 = arith.constant 0 : index
    %357 = vector.load %arg3[%c1081, %c0_134] : memref<1880x32xf32, #tpu.memory_space<vmem>>, vector<1x32xf32>
    %c1082 = arith.constant 1082 : index
    %c0_135 = arith.constant 0 : index
    %358 = vector.load %arg3[%c1082, %c0_135] : memref<1880x32xf32, #tpu.memory_space<vmem>>, vector<1x32xf32>
    %cst_136 = arith.constant dense<0.000000e+00> : vector<16xf32>
    %359 = vector.multi_reduction <add>, %355, %cst_136 [1] : vector<16x32xf32> to vector<16xf32>
    %360 = vector.shape_cast %359 : vector<16xf32> to vector<16x1xf32>
    %cst_137 = arith.constant 1.000000e-01 : f32
    %361 = vector.broadcast %cst_137 : f32 to vector<16x1xf32>
    %362 = arith.mulf %360, %361 : vector<16x1xf32>
    %363 = vector.broadcast %362 : vector<16x1xf32> to vector<16x32xf32>
    %364 = arith.subf %355, %363 : vector<16x32xf32>
    %365 = vector.broadcast %358 : vector<1x32xf32> to vector<16x32xf32>
    %366 = arith.mulf %364, %365 : vector<16x32xf32>
    %367 = arith.mulf %366, %366 : vector<16x32xf32>
    %cst_138 = arith.constant dense<0.000000e+00> : vector<16xf32>
    %368 = vector.multi_reduction <add>, %367, %cst_138 [1] : vector<16x32xf32> to vector<16xf32>
    %369 = vector.shape_cast %368 : vector<16xf32> to vector<16x1xf32>
    %cst_139 = arith.constant 1.000000e-01 : f32
    %370 = vector.broadcast %cst_139 : f32 to vector<16x1xf32>
    %371 = arith.mulf %369, %370 : vector<16x1xf32>
    %cst_140 = arith.constant 9.99999974E-6 : f32
    %372 = vector.broadcast %cst_140 : f32 to vector<16x1xf32>
    %373 = arith.addf %371, %372 : vector<16x1xf32>
    %374 = math.rsqrt %373 : vector<16x1xf32>
    %375 = vector.broadcast %374 : vector<16x1xf32> to vector<16x32xf32>
    %376 = arith.mulf %366, %375 : vector<16x32xf32>
    %377 = vector.broadcast %356 : vector<1x32xf32> to vector<16x32xf32>
    %378 = arith.mulf %376, %377 : vector<16x32xf32>
    %379 = vector.broadcast %357 : vector<1x32xf32> to vector<16x32xf32>
    %380 = arith.addf %378, %379 : vector<16x32xf32>
    %c1088 = arith.constant 1088 : index
    %c0_141 = arith.constant 0 : index
    %381 = vector.load %arg3[%c1088, %c0_141] : memref<1880x32xf32, #tpu.memory_space<vmem>>, vector<32x32xf32>
    %c1120 = arith.constant 1120 : index
    %c0_142 = arith.constant 0 : index
    %382 = vector.load %arg3[%c1120, %c0_142] : memref<1880x32xf32, #tpu.memory_space<vmem>>, vector<1x32xf32>
    %cst_143 = arith.constant dense<0.000000e+00> : vector<16x32xf32>
    %383 = tpu.matmul %25, %381, %cst_143 {dimension_numbers = #tpu.dot_dimension_numbers<[1], [0], [0], [1], [0, 0, 1, 1], [], []>} : vector<16x32xf32>, vector<32x32xf32>, vector<16x32xf32> -> vector<16x32xf32>
    %384 = vector.broadcast %382 : vector<1x32xf32> to vector<16x32xf32>
    %385 = arith.addf %383, %384 : vector<16x32xf32>
    %386 = vector.extract_strided_slice %385 {offsets = [0, 0], sizes = [16, 5], strides = [1, 1]} : vector<16x32xf32> to vector<16x5xf32>
    %387 = vector.extract_strided_slice %385 {offsets = [0, 10], sizes = [16, 5], strides = [1, 1]} : vector<16x32xf32> to vector<16x5xf32>
    %388 = vector.extract_strided_slice %385 {offsets = [0, 20], sizes = [16, 5], strides = [1, 1]} : vector<16x32xf32> to vector<16x5xf32>
    %cst_144 = arith.constant dense<0.000000e+00> : vector<16x16xf32>
    %389 = tpu.matmul %386, %387, %cst_144 {dimension_numbers = #tpu.dot_dimension_numbers<[1], [1], [0], [0], [0, 0, 1, 0], [], []>} : vector<16x5xf32>, vector<16x5xf32>, vector<16x16xf32> -> vector<16x16xf32>
    %cst_145 = arith.constant 0.44721359 : f32
    %390 = vector.broadcast %cst_145 : f32 to vector<16x16xf32>
    %391 = arith.mulf %389, %390 : vector<16x16xf32>
    %392 = arith.addf %391, %58 : vector<16x16xf32>
    %cst_146 = arith.constant dense<0xFF800000> : vector<16xf32>
    %393 = vector.multi_reduction <maximumf>, %392, %cst_146 [1] : vector<16x16xf32> to vector<16xf32>
    %394 = vector.shape_cast %393 : vector<16xf32> to vector<16x1xf32>
    %395 = vector.broadcast %394 : vector<16x1xf32> to vector<16x16xf32>
    %396 = arith.subf %392, %395 : vector<16x16xf32>
    %397 = math.exp %396 : vector<16x16xf32>
    %cst_147 = arith.constant dense<0.000000e+00> : vector<16xf32>
    %398 = vector.multi_reduction <add>, %397, %cst_147 [1] : vector<16x16xf32> to vector<16xf32>
    %399 = vector.shape_cast %398 : vector<16xf32> to vector<16x1xf32>
    %400 = vector.broadcast %399 : vector<16x1xf32> to vector<16x16xf32>
    %401 = arith.divf %397, %400 : vector<16x16xf32>
    %cst_148 = arith.constant dense<0.000000e+00> : vector<16x5xf32>
    %402 = tpu.matmul %401, %388, %cst_148 {dimension_numbers = #tpu.dot_dimension_numbers<[1], [0], [0], [1], [0, 0, 1, 1], [], []>} : vector<16x16xf32>, vector<16x5xf32>, vector<16x5xf32> -> vector<16x5xf32>
    %403 = vector.extract_strided_slice %385 {offsets = [0, 5], sizes = [16, 5], strides = [1, 1]} : vector<16x32xf32> to vector<16x5xf32>
    %404 = vector.extract_strided_slice %385 {offsets = [0, 15], sizes = [16, 5], strides = [1, 1]} : vector<16x32xf32> to vector<16x5xf32>
    %405 = vector.extract_strided_slice %385 {offsets = [0, 25], sizes = [16, 5], strides = [1, 1]} : vector<16x32xf32> to vector<16x5xf32>
    %cst_149 = arith.constant dense<0.000000e+00> : vector<16x16xf32>
    %406 = tpu.matmul %403, %404, %cst_149 {dimension_numbers = #tpu.dot_dimension_numbers<[1], [1], [0], [0], [0, 0, 1, 0], [], []>} : vector<16x5xf32>, vector<16x5xf32>, vector<16x16xf32> -> vector<16x16xf32>
    %cst_150 = arith.constant 0.44721359 : f32
    %407 = vector.broadcast %cst_150 : f32 to vector<16x16xf32>
    %408 = arith.mulf %406, %407 : vector<16x16xf32>
    %409 = arith.addf %408, %58 : vector<16x16xf32>
    %cst_151 = arith.constant dense<0xFF800000> : vector<16xf32>
    %410 = vector.multi_reduction <maximumf>, %409, %cst_151 [1] : vector<16x16xf32> to vector<16xf32>
    %411 = vector.shape_cast %410 : vector<16xf32> to vector<16x1xf32>
    %412 = vector.broadcast %411 : vector<16x1xf32> to vector<16x16xf32>
    %413 = arith.subf %409, %412 : vector<16x16xf32>
    %414 = math.exp %413 : vector<16x16xf32>
    %cst_152 = arith.constant dense<0.000000e+00> : vector<16xf32>
    %415 = vector.multi_reduction <add>, %414, %cst_152 [1] : vector<16x16xf32> to vector<16xf32>
    %416 = vector.shape_cast %415 : vector<16xf32> to vector<16x1xf32>
    %417 = vector.broadcast %416 : vector<16x1xf32> to vector<16x16xf32>
    %418 = arith.divf %414, %417 : vector<16x16xf32>
    %cst_153 = arith.constant dense<0.000000e+00> : vector<16x5xf32>
    %419 = tpu.matmul %418, %405, %cst_153 {dimension_numbers = #tpu.dot_dimension_numbers<[1], [0], [0], [1], [0, 0, 1, 1], [], []>} : vector<16x16xf32>, vector<16x5xf32>, vector<16x5xf32> -> vector<16x5xf32>
    %420 = tpu.concatenate %402, %419 in 1 : vector<16x5xf32>, vector<16x5xf32> -> vector<16x10xf32>
    %c1128 = arith.constant 1128 : index
    %c0_154 = arith.constant 0 : index
    %421 = vector.load %arg3[%c1128, %c0_154] : memref<1880x32xf32, #tpu.memory_space<vmem>>, vector<10x32xf32>
    %c1160 = arith.constant 1160 : index
    %c0_155 = arith.constant 0 : index
    %422 = vector.load %arg3[%c1160, %c0_155] : memref<1880x32xf32, #tpu.memory_space<vmem>>, vector<1x32xf32>
    %cst_156 = arith.constant dense<0.000000e+00> : vector<16x32xf32>
    %423 = tpu.matmul %420, %421, %cst_156 {dimension_numbers = #tpu.dot_dimension_numbers<[1], [0], [0], [1], [0, 0, 1, 1], [], []>} : vector<16x10xf32>, vector<10x32xf32>, vector<16x32xf32> -> vector<16x32xf32>
    %424 = vector.broadcast %422 : vector<1x32xf32> to vector<16x32xf32>
    %425 = arith.addf %423, %424 : vector<16x32xf32>
    %426 = arith.addf %25, %425 : vector<16x32xf32>
    %c1328 = arith.constant 1328 : index
    %c0_157 = arith.constant 0 : index
    %427 = vector.load %arg3[%c1328, %c0_157] : memref<1880x32xf32, #tpu.memory_space<vmem>>, vector<1x32xf32>
    %c1329 = arith.constant 1329 : index
    %c0_158 = arith.constant 0 : index
    %428 = vector.load %arg3[%c1329, %c0_158] : memref<1880x32xf32, #tpu.memory_space<vmem>>, vector<1x32xf32>
    %c1330 = arith.constant 1330 : index
    %c0_159 = arith.constant 0 : index
    %429 = vector.load %arg3[%c1330, %c0_159] : memref<1880x32xf32, #tpu.memory_space<vmem>>, vector<1x32xf32>
    %cst_160 = arith.constant dense<0.000000e+00> : vector<16xf32>
    %430 = vector.multi_reduction <add>, %426, %cst_160 [1] : vector<16x32xf32> to vector<16xf32>
    %431 = vector.shape_cast %430 : vector<16xf32> to vector<16x1xf32>
    %cst_161 = arith.constant 1.000000e-01 : f32
    %432 = vector.broadcast %cst_161 : f32 to vector<16x1xf32>
    %433 = arith.mulf %431, %432 : vector<16x1xf32>
    %434 = vector.broadcast %433 : vector<16x1xf32> to vector<16x32xf32>
    %435 = arith.subf %426, %434 : vector<16x32xf32>
    %436 = vector.broadcast %429 : vector<1x32xf32> to vector<16x32xf32>
    %437 = arith.mulf %435, %436 : vector<16x32xf32>
    %438 = arith.mulf %437, %437 : vector<16x32xf32>
    %cst_162 = arith.constant dense<0.000000e+00> : vector<16xf32>
    %439 = vector.multi_reduction <add>, %438, %cst_162 [1] : vector<16x32xf32> to vector<16xf32>
    %440 = vector.shape_cast %439 : vector<16xf32> to vector<16x1xf32>
    %cst_163 = arith.constant 1.000000e-01 : f32
    %441 = vector.broadcast %cst_163 : f32 to vector<16x1xf32>
    %442 = arith.mulf %440, %441 : vector<16x1xf32>
    %cst_164 = arith.constant 9.99999974E-6 : f32
    %443 = vector.broadcast %cst_164 : f32 to vector<16x1xf32>
    %444 = arith.addf %442, %443 : vector<16x1xf32>
    %445 = math.rsqrt %444 : vector<16x1xf32>
    %446 = vector.broadcast %445 : vector<16x1xf32> to vector<16x32xf32>
    %447 = arith.mulf %437, %446 : vector<16x32xf32>
    %448 = vector.broadcast %427 : vector<1x32xf32> to vector<16x32xf32>
    %449 = arith.mulf %447, %448 : vector<16x32xf32>
    %450 = vector.broadcast %428 : vector<1x32xf32> to vector<16x32xf32>
    %451 = arith.addf %449, %450 : vector<16x32xf32>
    %c1168 = arith.constant 1168 : index
    %c0_165 = arith.constant 0 : index
    %452 = vector.load %arg3[%c1168, %c0_165] : memref<1880x32xf32, #tpu.memory_space<vmem>>, vector<32x32xf32>
    %c1200 = arith.constant 1200 : index
    %c0_166 = arith.constant 0 : index
    %453 = vector.load %arg3[%c1200, %c0_166] : memref<1880x32xf32, #tpu.memory_space<vmem>>, vector<1x32xf32>
    %cst_167 = arith.constant dense<0.000000e+00> : vector<16x32xf32>
    %454 = tpu.matmul %451, %452, %cst_167 {dimension_numbers = #tpu.dot_dimension_numbers<[1], [0], [0], [1], [0, 0, 1, 1], [], []>} : vector<16x32xf32>, vector<32x32xf32>, vector<16x32xf32> -> vector<16x32xf32>
    %455 = vector.broadcast %453 : vector<1x32xf32> to vector<16x32xf32>
    %456 = arith.addf %454, %455 : vector<16x32xf32>
    %c1168_168 = arith.constant 1168 : index
    %c0_169 = arith.constant 0 : index
    %457 = vector.load %arg3[%c1168_168, %c0_169] : memref<1880x32xf32, #tpu.memory_space<vmem>>, vector<32x32xf32>
    %c1200_170 = arith.constant 1200 : index
    %c0_171 = arith.constant 0 : index
    %458 = vector.load %arg3[%c1200_170, %c0_171] : memref<1880x32xf32, #tpu.memory_space<vmem>>, vector<1x32xf32>
    %cst_172 = arith.constant dense<0.000000e+00> : vector<16x32xf32>
    %459 = tpu.matmul %380, %457, %cst_172 {dimension_numbers = #tpu.dot_dimension_numbers<[1], [0], [0], [1], [0, 0, 1, 1], [], []>} : vector<16x32xf32>, vector<32x32xf32>, vector<16x32xf32> -> vector<16x32xf32>
    %460 = vector.broadcast %458 : vector<1x32xf32> to vector<16x32xf32>
    %461 = arith.addf %459, %460 : vector<16x32xf32>
    %462 = vector.extract_strided_slice %456 {offsets = [0, 0], sizes = [16, 5], strides = [1, 1]} : vector<16x32xf32> to vector<16x5xf32>
    %463 = vector.extract_strided_slice %461 {offsets = [0, 10], sizes = [16, 5], strides = [1, 1]} : vector<16x32xf32> to vector<16x5xf32>
    %464 = vector.extract_strided_slice %461 {offsets = [0, 20], sizes = [16, 5], strides = [1, 1]} : vector<16x32xf32> to vector<16x5xf32>
    %cst_173 = arith.constant dense<0.000000e+00> : vector<16x16xf32>
    %465 = tpu.matmul %462, %463, %cst_173 {dimension_numbers = #tpu.dot_dimension_numbers<[1], [1], [0], [0], [0, 0, 1, 0], [], []>} : vector<16x5xf32>, vector<16x5xf32>, vector<16x16xf32> -> vector<16x16xf32>
    %cst_174 = arith.constant 0.44721359 : f32
    %466 = vector.broadcast %cst_174 : f32 to vector<16x16xf32>
    %467 = arith.mulf %465, %466 : vector<16x16xf32>
    %468 = arith.addf %467, %58 : vector<16x16xf32>
    %cst_175 = arith.constant dense<0xFF800000> : vector<16xf32>
    %469 = vector.multi_reduction <maximumf>, %468, %cst_175 [1] : vector<16x16xf32> to vector<16xf32>
    %470 = vector.shape_cast %469 : vector<16xf32> to vector<16x1xf32>
    %471 = vector.broadcast %470 : vector<16x1xf32> to vector<16x16xf32>
    %472 = arith.subf %468, %471 : vector<16x16xf32>
    %473 = math.exp %472 : vector<16x16xf32>
    %cst_176 = arith.constant dense<0.000000e+00> : vector<16xf32>
    %474 = vector.multi_reduction <add>, %473, %cst_176 [1] : vector<16x16xf32> to vector<16xf32>
    %475 = vector.shape_cast %474 : vector<16xf32> to vector<16x1xf32>
    %476 = vector.broadcast %475 : vector<16x1xf32> to vector<16x16xf32>
    %477 = arith.divf %473, %476 : vector<16x16xf32>
    %cst_177 = arith.constant dense<0.000000e+00> : vector<16x5xf32>
    %478 = tpu.matmul %477, %464, %cst_177 {dimension_numbers = #tpu.dot_dimension_numbers<[1], [0], [0], [1], [0, 0, 1, 1], [], []>} : vector<16x16xf32>, vector<16x5xf32>, vector<16x5xf32> -> vector<16x5xf32>
    %479 = vector.extract_strided_slice %456 {offsets = [0, 5], sizes = [16, 5], strides = [1, 1]} : vector<16x32xf32> to vector<16x5xf32>
    %480 = vector.extract_strided_slice %461 {offsets = [0, 15], sizes = [16, 5], strides = [1, 1]} : vector<16x32xf32> to vector<16x5xf32>
    %481 = vector.extract_strided_slice %461 {offsets = [0, 25], sizes = [16, 5], strides = [1, 1]} : vector<16x32xf32> to vector<16x5xf32>
    %cst_178 = arith.constant dense<0.000000e+00> : vector<16x16xf32>
    %482 = tpu.matmul %479, %480, %cst_178 {dimension_numbers = #tpu.dot_dimension_numbers<[1], [1], [0], [0], [0, 0, 1, 0], [], []>} : vector<16x5xf32>, vector<16x5xf32>, vector<16x16xf32> -> vector<16x16xf32>
    %cst_179 = arith.constant 0.44721359 : f32
    %483 = vector.broadcast %cst_179 : f32 to vector<16x16xf32>
    %484 = arith.mulf %482, %483 : vector<16x16xf32>
    %485 = arith.addf %484, %58 : vector<16x16xf32>
    %cst_180 = arith.constant dense<0xFF800000> : vector<16xf32>
    %486 = vector.multi_reduction <maximumf>, %485, %cst_180 [1] : vector<16x16xf32> to vector<16xf32>
    %487 = vector.shape_cast %486 : vector<16xf32> to vector<16x1xf32>
    %488 = vector.broadcast %487 : vector<16x1xf32> to vector<16x16xf32>
    %489 = arith.subf %485, %488 : vector<16x16xf32>
    %490 = math.exp %489 : vector<16x16xf32>
    %cst_181 = arith.constant dense<0.000000e+00> : vector<16xf32>
    %491 = vector.multi_reduction <add>, %490, %cst_181 [1] : vector<16x16xf32> to vector<16xf32>
    %492 = vector.shape_cast %491 : vector<16xf32> to vector<16x1xf32>
    %493 = vector.broadcast %492 : vector<16x1xf32> to vector<16x16xf32>
    %494 = arith.divf %490, %493 : vector<16x16xf32>
    %cst_182 = arith.constant dense<0.000000e+00> : vector<16x5xf32>
    %495 = tpu.matmul %494, %481, %cst_182 {dimension_numbers = #tpu.dot_dimension_numbers<[1], [0], [0], [1], [0, 0, 1, 1], [], []>} : vector<16x16xf32>, vector<16x5xf32>, vector<16x5xf32> -> vector<16x5xf32>
    %496 = tpu.concatenate %478, %495 in 1 : vector<16x5xf32>, vector<16x5xf32> -> vector<16x10xf32>
    %c1208 = arith.constant 1208 : index
    %c0_183 = arith.constant 0 : index
    %497 = vector.load %arg3[%c1208, %c0_183] : memref<1880x32xf32, #tpu.memory_space<vmem>>, vector<10x32xf32>
    %c1240 = arith.constant 1240 : index
    %c0_184 = arith.constant 0 : index
    %498 = vector.load %arg3[%c1240, %c0_184] : memref<1880x32xf32, #tpu.memory_space<vmem>>, vector<1x32xf32>
    %cst_185 = arith.constant dense<0.000000e+00> : vector<16x32xf32>
    %499 = tpu.matmul %496, %497, %cst_185 {dimension_numbers = #tpu.dot_dimension_numbers<[1], [0], [0], [1], [0, 0, 1, 1], [], []>} : vector<16x10xf32>, vector<10x32xf32>, vector<16x32xf32> -> vector<16x32xf32>
    %500 = vector.broadcast %498 : vector<1x32xf32> to vector<16x32xf32>
    %501 = arith.addf %499, %500 : vector<16x32xf32>
    %502 = arith.addf %451, %501 : vector<16x32xf32>
    %c1336 = arith.constant 1336 : index
    %c0_186 = arith.constant 0 : index
    %503 = vector.load %arg3[%c1336, %c0_186] : memref<1880x32xf32, #tpu.memory_space<vmem>>, vector<1x32xf32>
    %c1337 = arith.constant 1337 : index
    %c0_187 = arith.constant 0 : index
    %504 = vector.load %arg3[%c1337, %c0_187] : memref<1880x32xf32, #tpu.memory_space<vmem>>, vector<1x32xf32>
    %c1338 = arith.constant 1338 : index
    %c0_188 = arith.constant 0 : index
    %505 = vector.load %arg3[%c1338, %c0_188] : memref<1880x32xf32, #tpu.memory_space<vmem>>, vector<1x32xf32>
    %cst_189 = arith.constant dense<0.000000e+00> : vector<16xf32>
    %506 = vector.multi_reduction <add>, %502, %cst_189 [1] : vector<16x32xf32> to vector<16xf32>
    %507 = vector.shape_cast %506 : vector<16xf32> to vector<16x1xf32>
    %cst_190 = arith.constant 1.000000e-01 : f32
    %508 = vector.broadcast %cst_190 : f32 to vector<16x1xf32>
    %509 = arith.mulf %507, %508 : vector<16x1xf32>
    %510 = vector.broadcast %509 : vector<16x1xf32> to vector<16x32xf32>
    %511 = arith.subf %502, %510 : vector<16x32xf32>
    %512 = vector.broadcast %505 : vector<1x32xf32> to vector<16x32xf32>
    %513 = arith.mulf %511, %512 : vector<16x32xf32>
    %514 = arith.mulf %513, %513 : vector<16x32xf32>
    %cst_191 = arith.constant dense<0.000000e+00> : vector<16xf32>
    %515 = vector.multi_reduction <add>, %514, %cst_191 [1] : vector<16x32xf32> to vector<16xf32>
    %516 = vector.shape_cast %515 : vector<16xf32> to vector<16x1xf32>
    %cst_192 = arith.constant 1.000000e-01 : f32
    %517 = vector.broadcast %cst_192 : f32 to vector<16x1xf32>
    %518 = arith.mulf %516, %517 : vector<16x1xf32>
    %cst_193 = arith.constant 9.99999974E-6 : f32
    %519 = vector.broadcast %cst_193 : f32 to vector<16x1xf32>
    %520 = arith.addf %518, %519 : vector<16x1xf32>
    %521 = math.rsqrt %520 : vector<16x1xf32>
    %522 = vector.broadcast %521 : vector<16x1xf32> to vector<16x32xf32>
    %523 = arith.mulf %513, %522 : vector<16x32xf32>
    %524 = vector.broadcast %503 : vector<1x32xf32> to vector<16x32xf32>
    %525 = arith.mulf %523, %524 : vector<16x32xf32>
    %526 = vector.broadcast %504 : vector<1x32xf32> to vector<16x32xf32>
    %527 = arith.addf %525, %526 : vector<16x32xf32>
    %c1248 = arith.constant 1248 : index
    %c0_194 = arith.constant 0 : index
    %528 = vector.load %arg3[%c1248, %c0_194] : memref<1880x32xf32, #tpu.memory_space<vmem>>, vector<32x32xf32>
    %c1280 = arith.constant 1280 : index
    %c0_195 = arith.constant 0 : index
    %529 = vector.load %arg3[%c1280, %c0_195] : memref<1880x32xf32, #tpu.memory_space<vmem>>, vector<1x32xf32>
    %cst_196 = arith.constant dense<0.000000e+00> : vector<16x32xf32>
    %530 = tpu.matmul %527, %528, %cst_196 {dimension_numbers = #tpu.dot_dimension_numbers<[1], [0], [0], [1], [0, 0, 1, 1], [], []>} : vector<16x32xf32>, vector<32x32xf32>, vector<16x32xf32> -> vector<16x32xf32>
    %531 = vector.broadcast %529 : vector<1x32xf32> to vector<16x32xf32>
    %532 = arith.addf %530, %531 : vector<16x32xf32>
    %cst_197 = arith.constant 0.000000e+00 : f32
    %533 = vector.broadcast %cst_197 : f32 to vector<16x32xf32>
    %534 = arith.maximumf %532, %533 : vector<16x32xf32>
    %c1288 = arith.constant 1288 : index
    %c0_198 = arith.constant 0 : index
    %535 = vector.load %arg3[%c1288, %c0_198] : memref<1880x32xf32, #tpu.memory_space<vmem>>, vector<32x32xf32>
    %c1320 = arith.constant 1320 : index
    %c0_199 = arith.constant 0 : index
    %536 = vector.load %arg3[%c1320, %c0_199] : memref<1880x32xf32, #tpu.memory_space<vmem>>, vector<1x32xf32>
    %cst_200 = arith.constant dense<0.000000e+00> : vector<16x32xf32>
    %537 = tpu.matmul %534, %535, %cst_200 {dimension_numbers = #tpu.dot_dimension_numbers<[1], [0], [0], [1], [0, 0, 1, 1], [], []>} : vector<16x32xf32>, vector<32x32xf32>, vector<16x32xf32> -> vector<16x32xf32>
    %538 = vector.broadcast %536 : vector<1x32xf32> to vector<16x32xf32>
    %539 = arith.addf %537, %538 : vector<16x32xf32>
    %540 = arith.addf %527, %539 : vector<16x32xf32>
    %c1344 = arith.constant 1344 : index
    %c0_201 = arith.constant 0 : index
    %541 = vector.load %arg3[%c1344, %c0_201] : memref<1880x32xf32, #tpu.memory_space<vmem>>, vector<1x32xf32>
    %c1345 = arith.constant 1345 : index
    %c0_202 = arith.constant 0 : index
    %542 = vector.load %arg3[%c1345, %c0_202] : memref<1880x32xf32, #tpu.memory_space<vmem>>, vector<1x32xf32>
    %c1346 = arith.constant 1346 : index
    %c0_203 = arith.constant 0 : index
    %543 = vector.load %arg3[%c1346, %c0_203] : memref<1880x32xf32, #tpu.memory_space<vmem>>, vector<1x32xf32>
    %cst_204 = arith.constant dense<0.000000e+00> : vector<16xf32>
    %544 = vector.multi_reduction <add>, %540, %cst_204 [1] : vector<16x32xf32> to vector<16xf32>
    %545 = vector.shape_cast %544 : vector<16xf32> to vector<16x1xf32>
    %cst_205 = arith.constant 1.000000e-01 : f32
    %546 = vector.broadcast %cst_205 : f32 to vector<16x1xf32>
    %547 = arith.mulf %545, %546 : vector<16x1xf32>
    %548 = vector.broadcast %547 : vector<16x1xf32> to vector<16x32xf32>
    %549 = arith.subf %540, %548 : vector<16x32xf32>
    %550 = vector.broadcast %543 : vector<1x32xf32> to vector<16x32xf32>
    %551 = arith.mulf %549, %550 : vector<16x32xf32>
    %552 = arith.mulf %551, %551 : vector<16x32xf32>
    %cst_206 = arith.constant dense<0.000000e+00> : vector<16xf32>
    %553 = vector.multi_reduction <add>, %552, %cst_206 [1] : vector<16x32xf32> to vector<16xf32>
    %554 = vector.shape_cast %553 : vector<16xf32> to vector<16x1xf32>
    %cst_207 = arith.constant 1.000000e-01 : f32
    %555 = vector.broadcast %cst_207 : f32 to vector<16x1xf32>
    %556 = arith.mulf %554, %555 : vector<16x1xf32>
    %cst_208 = arith.constant 9.99999974E-6 : f32
    %557 = vector.broadcast %cst_208 : f32 to vector<16x1xf32>
    %558 = arith.addf %556, %557 : vector<16x1xf32>
    %559 = math.rsqrt %558 : vector<16x1xf32>
    %560 = vector.broadcast %559 : vector<16x1xf32> to vector<16x32xf32>
    %561 = arith.mulf %551, %560 : vector<16x32xf32>
    %562 = vector.broadcast %541 : vector<1x32xf32> to vector<16x32xf32>
    %563 = arith.mulf %561, %562 : vector<16x32xf32>
    %564 = vector.broadcast %542 : vector<1x32xf32> to vector<16x32xf32>
    %565 = arith.addf %563, %564 : vector<16x32xf32>
    %c1352 = arith.constant 1352 : index
    %c0_209 = arith.constant 0 : index
    %566 = vector.load %arg3[%c1352, %c0_209] : memref<1880x32xf32, #tpu.memory_space<vmem>>, vector<32x32xf32>
    %c1384 = arith.constant 1384 : index
    %c0_210 = arith.constant 0 : index
    %567 = vector.load %arg3[%c1384, %c0_210] : memref<1880x32xf32, #tpu.memory_space<vmem>>, vector<1x32xf32>
    %cst_211 = arith.constant dense<0.000000e+00> : vector<16x32xf32>
    %568 = tpu.matmul %565, %566, %cst_211 {dimension_numbers = #tpu.dot_dimension_numbers<[1], [0], [0], [1], [0, 0, 1, 1], [], []>} : vector<16x32xf32>, vector<32x32xf32>, vector<16x32xf32> -> vector<16x32xf32>
    %569 = vector.broadcast %567 : vector<1x32xf32> to vector<16x32xf32>
    %570 = arith.addf %568, %569 : vector<16x32xf32>
    %571 = vector.extract_strided_slice %570 {offsets = [0, 0], sizes = [16, 5], strides = [1, 1]} : vector<16x32xf32> to vector<16x5xf32>
    %572 = vector.extract_strided_slice %570 {offsets = [0, 10], sizes = [16, 5], strides = [1, 1]} : vector<16x32xf32> to vector<16x5xf32>
    %573 = vector.extract_strided_slice %570 {offsets = [0, 20], sizes = [16, 5], strides = [1, 1]} : vector<16x32xf32> to vector<16x5xf32>
    %cst_212 = arith.constant dense<0.000000e+00> : vector<16x16xf32>
    %574 = tpu.matmul %571, %572, %cst_212 {dimension_numbers = #tpu.dot_dimension_numbers<[1], [1], [0], [0], [0, 0, 1, 0], [], []>} : vector<16x5xf32>, vector<16x5xf32>, vector<16x16xf32> -> vector<16x16xf32>
    %cst_213 = arith.constant 0.44721359 : f32
    %575 = vector.broadcast %cst_213 : f32 to vector<16x16xf32>
    %576 = arith.mulf %574, %575 : vector<16x16xf32>
    %577 = arith.addf %576, %58 : vector<16x16xf32>
    %cst_214 = arith.constant dense<0xFF800000> : vector<16xf32>
    %578 = vector.multi_reduction <maximumf>, %577, %cst_214 [1] : vector<16x16xf32> to vector<16xf32>
    %579 = vector.shape_cast %578 : vector<16xf32> to vector<16x1xf32>
    %580 = vector.broadcast %579 : vector<16x1xf32> to vector<16x16xf32>
    %581 = arith.subf %577, %580 : vector<16x16xf32>
    %582 = math.exp %581 : vector<16x16xf32>
    %cst_215 = arith.constant dense<0.000000e+00> : vector<16xf32>
    %583 = vector.multi_reduction <add>, %582, %cst_215 [1] : vector<16x16xf32> to vector<16xf32>
    %584 = vector.shape_cast %583 : vector<16xf32> to vector<16x1xf32>
    %585 = vector.broadcast %584 : vector<16x1xf32> to vector<16x16xf32>
    %586 = arith.divf %582, %585 : vector<16x16xf32>
    %cst_216 = arith.constant dense<0.000000e+00> : vector<16x5xf32>
    %587 = tpu.matmul %586, %573, %cst_216 {dimension_numbers = #tpu.dot_dimension_numbers<[1], [0], [0], [1], [0, 0, 1, 1], [], []>} : vector<16x16xf32>, vector<16x5xf32>, vector<16x5xf32> -> vector<16x5xf32>
    %588 = vector.extract_strided_slice %570 {offsets = [0, 5], sizes = [16, 5], strides = [1, 1]} : vector<16x32xf32> to vector<16x5xf32>
    %589 = vector.extract_strided_slice %570 {offsets = [0, 15], sizes = [16, 5], strides = [1, 1]} : vector<16x32xf32> to vector<16x5xf32>
    %590 = vector.extract_strided_slice %570 {offsets = [0, 25], sizes = [16, 5], strides = [1, 1]} : vector<16x32xf32> to vector<16x5xf32>
    %cst_217 = arith.constant dense<0.000000e+00> : vector<16x16xf32>
    %591 = tpu.matmul %588, %589, %cst_217 {dimension_numbers = #tpu.dot_dimension_numbers<[1], [1], [0], [0], [0, 0, 1, 0], [], []>} : vector<16x5xf32>, vector<16x5xf32>, vector<16x16xf32> -> vector<16x16xf32>
    %cst_218 = arith.constant 0.44721359 : f32
    %592 = vector.broadcast %cst_218 : f32 to vector<16x16xf32>
    %593 = arith.mulf %591, %592 : vector<16x16xf32>
    %594 = arith.addf %593, %58 : vector<16x16xf32>
    %cst_219 = arith.constant dense<0xFF800000> : vector<16xf32>
    %595 = vector.multi_reduction <maximumf>, %594, %cst_219 [1] : vector<16x16xf32> to vector<16xf32>
    %596 = vector.shape_cast %595 : vector<16xf32> to vector<16x1xf32>
    %597 = vector.broadcast %596 : vector<16x1xf32> to vector<16x16xf32>
    %598 = arith.subf %594, %597 : vector<16x16xf32>
    %599 = math.exp %598 : vector<16x16xf32>
    %cst_220 = arith.constant dense<0.000000e+00> : vector<16xf32>
    %600 = vector.multi_reduction <add>, %599, %cst_220 [1] : vector<16x16xf32> to vector<16xf32>
    %601 = vector.shape_cast %600 : vector<16xf32> to vector<16x1xf32>
    %602 = vector.broadcast %601 : vector<16x1xf32> to vector<16x16xf32>
    %603 = arith.divf %599, %602 : vector<16x16xf32>
    %cst_221 = arith.constant dense<0.000000e+00> : vector<16x5xf32>
    %604 = tpu.matmul %603, %590, %cst_221 {dimension_numbers = #tpu.dot_dimension_numbers<[1], [0], [0], [1], [0, 0, 1, 1], [], []>} : vector<16x16xf32>, vector<16x5xf32>, vector<16x5xf32> -> vector<16x5xf32>
    %605 = tpu.concatenate %587, %604 in 1 : vector<16x5xf32>, vector<16x5xf32> -> vector<16x10xf32>
    %c1392 = arith.constant 1392 : index
    %c0_222 = arith.constant 0 : index
    %606 = vector.load %arg3[%c1392, %c0_222] : memref<1880x32xf32, #tpu.memory_space<vmem>>, vector<10x32xf32>
    %c1424 = arith.constant 1424 : index
    %c0_223 = arith.constant 0 : index
    %607 = vector.load %arg3[%c1424, %c0_223] : memref<1880x32xf32, #tpu.memory_space<vmem>>, vector<1x32xf32>
    %cst_224 = arith.constant dense<0.000000e+00> : vector<16x32xf32>
    %608 = tpu.matmul %605, %606, %cst_224 {dimension_numbers = #tpu.dot_dimension_numbers<[1], [0], [0], [1], [0, 0, 1, 1], [], []>} : vector<16x10xf32>, vector<10x32xf32>, vector<16x32xf32> -> vector<16x32xf32>
    %609 = vector.broadcast %607 : vector<1x32xf32> to vector<16x32xf32>
    %610 = arith.addf %608, %609 : vector<16x32xf32>
    %611 = arith.addf %565, %610 : vector<16x32xf32>
    %c1592 = arith.constant 1592 : index
    %c0_225 = arith.constant 0 : index
    %612 = vector.load %arg3[%c1592, %c0_225] : memref<1880x32xf32, #tpu.memory_space<vmem>>, vector<1x32xf32>
    %c1593 = arith.constant 1593 : index
    %c0_226 = arith.constant 0 : index
    %613 = vector.load %arg3[%c1593, %c0_226] : memref<1880x32xf32, #tpu.memory_space<vmem>>, vector<1x32xf32>
    %c1594 = arith.constant 1594 : index
    %c0_227 = arith.constant 0 : index
    %614 = vector.load %arg3[%c1594, %c0_227] : memref<1880x32xf32, #tpu.memory_space<vmem>>, vector<1x32xf32>
    %cst_228 = arith.constant dense<0.000000e+00> : vector<16xf32>
    %615 = vector.multi_reduction <add>, %611, %cst_228 [1] : vector<16x32xf32> to vector<16xf32>
    %616 = vector.shape_cast %615 : vector<16xf32> to vector<16x1xf32>
    %cst_229 = arith.constant 1.000000e-01 : f32
    %617 = vector.broadcast %cst_229 : f32 to vector<16x1xf32>
    %618 = arith.mulf %616, %617 : vector<16x1xf32>
    %619 = vector.broadcast %618 : vector<16x1xf32> to vector<16x32xf32>
    %620 = arith.subf %611, %619 : vector<16x32xf32>
    %621 = vector.broadcast %614 : vector<1x32xf32> to vector<16x32xf32>
    %622 = arith.mulf %620, %621 : vector<16x32xf32>
    %623 = arith.mulf %622, %622 : vector<16x32xf32>
    %cst_230 = arith.constant dense<0.000000e+00> : vector<16xf32>
    %624 = vector.multi_reduction <add>, %623, %cst_230 [1] : vector<16x32xf32> to vector<16xf32>
    %625 = vector.shape_cast %624 : vector<16xf32> to vector<16x1xf32>
    %cst_231 = arith.constant 1.000000e-01 : f32
    %626 = vector.broadcast %cst_231 : f32 to vector<16x1xf32>
    %627 = arith.mulf %625, %626 : vector<16x1xf32>
    %cst_232 = arith.constant 9.99999974E-6 : f32
    %628 = vector.broadcast %cst_232 : f32 to vector<16x1xf32>
    %629 = arith.addf %627, %628 : vector<16x1xf32>
    %630 = math.rsqrt %629 : vector<16x1xf32>
    %631 = vector.broadcast %630 : vector<16x1xf32> to vector<16x32xf32>
    %632 = arith.mulf %622, %631 : vector<16x32xf32>
    %633 = vector.broadcast %612 : vector<1x32xf32> to vector<16x32xf32>
    %634 = arith.mulf %632, %633 : vector<16x32xf32>
    %635 = vector.broadcast %613 : vector<1x32xf32> to vector<16x32xf32>
    %636 = arith.addf %634, %635 : vector<16x32xf32>
    %c1432 = arith.constant 1432 : index
    %c0_233 = arith.constant 0 : index
    %637 = vector.load %arg3[%c1432, %c0_233] : memref<1880x32xf32, #tpu.memory_space<vmem>>, vector<32x32xf32>
    %c1464 = arith.constant 1464 : index
    %c0_234 = arith.constant 0 : index
    %638 = vector.load %arg3[%c1464, %c0_234] : memref<1880x32xf32, #tpu.memory_space<vmem>>, vector<1x32xf32>
    %cst_235 = arith.constant dense<0.000000e+00> : vector<16x32xf32>
    %639 = tpu.matmul %636, %637, %cst_235 {dimension_numbers = #tpu.dot_dimension_numbers<[1], [0], [0], [1], [0, 0, 1, 1], [], []>} : vector<16x32xf32>, vector<32x32xf32>, vector<16x32xf32> -> vector<16x32xf32>
    %640 = vector.broadcast %638 : vector<1x32xf32> to vector<16x32xf32>
    %641 = arith.addf %639, %640 : vector<16x32xf32>
    %c1432_236 = arith.constant 1432 : index
    %c0_237 = arith.constant 0 : index
    %642 = vector.load %arg3[%c1432_236, %c0_237] : memref<1880x32xf32, #tpu.memory_space<vmem>>, vector<32x32xf32>
    %c1464_238 = arith.constant 1464 : index
    %c0_239 = arith.constant 0 : index
    %643 = vector.load %arg3[%c1464_238, %c0_239] : memref<1880x32xf32, #tpu.memory_space<vmem>>, vector<1x32xf32>
    %cst_240 = arith.constant dense<0.000000e+00> : vector<16x32xf32>
    %644 = tpu.matmul %380, %642, %cst_240 {dimension_numbers = #tpu.dot_dimension_numbers<[1], [0], [0], [1], [0, 0, 1, 1], [], []>} : vector<16x32xf32>, vector<32x32xf32>, vector<16x32xf32> -> vector<16x32xf32>
    %645 = vector.broadcast %643 : vector<1x32xf32> to vector<16x32xf32>
    %646 = arith.addf %644, %645 : vector<16x32xf32>
    %647 = vector.extract_strided_slice %641 {offsets = [0, 0], sizes = [16, 5], strides = [1, 1]} : vector<16x32xf32> to vector<16x5xf32>
    %648 = vector.extract_strided_slice %646 {offsets = [0, 10], sizes = [16, 5], strides = [1, 1]} : vector<16x32xf32> to vector<16x5xf32>
    %649 = vector.extract_strided_slice %646 {offsets = [0, 20], sizes = [16, 5], strides = [1, 1]} : vector<16x32xf32> to vector<16x5xf32>
    %cst_241 = arith.constant dense<0.000000e+00> : vector<16x16xf32>
    %650 = tpu.matmul %647, %648, %cst_241 {dimension_numbers = #tpu.dot_dimension_numbers<[1], [1], [0], [0], [0, 0, 1, 0], [], []>} : vector<16x5xf32>, vector<16x5xf32>, vector<16x16xf32> -> vector<16x16xf32>
    %cst_242 = arith.constant 0.44721359 : f32
    %651 = vector.broadcast %cst_242 : f32 to vector<16x16xf32>
    %652 = arith.mulf %650, %651 : vector<16x16xf32>
    %653 = arith.addf %652, %58 : vector<16x16xf32>
    %cst_243 = arith.constant dense<0xFF800000> : vector<16xf32>
    %654 = vector.multi_reduction <maximumf>, %653, %cst_243 [1] : vector<16x16xf32> to vector<16xf32>
    %655 = vector.shape_cast %654 : vector<16xf32> to vector<16x1xf32>
    %656 = vector.broadcast %655 : vector<16x1xf32> to vector<16x16xf32>
    %657 = arith.subf %653, %656 : vector<16x16xf32>
    %658 = math.exp %657 : vector<16x16xf32>
    %cst_244 = arith.constant dense<0.000000e+00> : vector<16xf32>
    %659 = vector.multi_reduction <add>, %658, %cst_244 [1] : vector<16x16xf32> to vector<16xf32>
    %660 = vector.shape_cast %659 : vector<16xf32> to vector<16x1xf32>
    %661 = vector.broadcast %660 : vector<16x1xf32> to vector<16x16xf32>
    %662 = arith.divf %658, %661 : vector<16x16xf32>
    %cst_245 = arith.constant dense<0.000000e+00> : vector<16x5xf32>
    %663 = tpu.matmul %662, %649, %cst_245 {dimension_numbers = #tpu.dot_dimension_numbers<[1], [0], [0], [1], [0, 0, 1, 1], [], []>} : vector<16x16xf32>, vector<16x5xf32>, vector<16x5xf32> -> vector<16x5xf32>
    %664 = vector.extract_strided_slice %641 {offsets = [0, 5], sizes = [16, 5], strides = [1, 1]} : vector<16x32xf32> to vector<16x5xf32>
    %665 = vector.extract_strided_slice %646 {offsets = [0, 15], sizes = [16, 5], strides = [1, 1]} : vector<16x32xf32> to vector<16x5xf32>
    %666 = vector.extract_strided_slice %646 {offsets = [0, 25], sizes = [16, 5], strides = [1, 1]} : vector<16x32xf32> to vector<16x5xf32>
    %cst_246 = arith.constant dense<0.000000e+00> : vector<16x16xf32>
    %667 = tpu.matmul %664, %665, %cst_246 {dimension_numbers = #tpu.dot_dimension_numbers<[1], [1], [0], [0], [0, 0, 1, 0], [], []>} : vector<16x5xf32>, vector<16x5xf32>, vector<16x16xf32> -> vector<16x16xf32>
    %cst_247 = arith.constant 0.44721359 : f32
    %668 = vector.broadcast %cst_247 : f32 to vector<16x16xf32>
    %669 = arith.mulf %667, %668 : vector<16x16xf32>
    %670 = arith.addf %669, %58 : vector<16x16xf32>
    %cst_248 = arith.constant dense<0xFF800000> : vector<16xf32>
    %671 = vector.multi_reduction <maximumf>, %670, %cst_248 [1] : vector<16x16xf32> to vector<16xf32>
    %672 = vector.shape_cast %671 : vector<16xf32> to vector<16x1xf32>
    %673 = vector.broadcast %672 : vector<16x1xf32> to vector<16x16xf32>
    %674 = arith.subf %670, %673 : vector<16x16xf32>
    %675 = math.exp %674 : vector<16x16xf32>
    %cst_249 = arith.constant dense<0.000000e+00> : vector<16xf32>
    %676 = vector.multi_reduction <add>, %675, %cst_249 [1] : vector<16x16xf32> to vector<16xf32>
    %677 = vector.shape_cast %676 : vector<16xf32> to vector<16x1xf32>
    %678 = vector.broadcast %677 : vector<16x1xf32> to vector<16x16xf32>
    %679 = arith.divf %675, %678 : vector<16x16xf32>
    %cst_250 = arith.constant dense<0.000000e+00> : vector<16x5xf32>
    %680 = tpu.matmul %679, %666, %cst_250 {dimension_numbers = #tpu.dot_dimension_numbers<[1], [0], [0], [1], [0, 0, 1, 1], [], []>} : vector<16x16xf32>, vector<16x5xf32>, vector<16x5xf32> -> vector<16x5xf32>
    %681 = tpu.concatenate %663, %680 in 1 : vector<16x5xf32>, vector<16x5xf32> -> vector<16x10xf32>
    %c1472 = arith.constant 1472 : index
    %c0_251 = arith.constant 0 : index
    %682 = vector.load %arg3[%c1472, %c0_251] : memref<1880x32xf32, #tpu.memory_space<vmem>>, vector<10x32xf32>
    %c1504 = arith.constant 1504 : index
    %c0_252 = arith.constant 0 : index
    %683 = vector.load %arg3[%c1504, %c0_252] : memref<1880x32xf32, #tpu.memory_space<vmem>>, vector<1x32xf32>
    %cst_253 = arith.constant dense<0.000000e+00> : vector<16x32xf32>
    %684 = tpu.matmul %681, %682, %cst_253 {dimension_numbers = #tpu.dot_dimension_numbers<[1], [0], [0], [1], [0, 0, 1, 1], [], []>} : vector<16x10xf32>, vector<10x32xf32>, vector<16x32xf32> -> vector<16x32xf32>
    %685 = vector.broadcast %683 : vector<1x32xf32> to vector<16x32xf32>
    %686 = arith.addf %684, %685 : vector<16x32xf32>
    %687 = arith.addf %636, %686 : vector<16x32xf32>
    %c1600 = arith.constant 1600 : index
    %c0_254 = arith.constant 0 : index
    %688 = vector.load %arg3[%c1600, %c0_254] : memref<1880x32xf32, #tpu.memory_space<vmem>>, vector<1x32xf32>
    %c1601 = arith.constant 1601 : index
    %c0_255 = arith.constant 0 : index
    %689 = vector.load %arg3[%c1601, %c0_255] : memref<1880x32xf32, #tpu.memory_space<vmem>>, vector<1x32xf32>
    %c1602 = arith.constant 1602 : index
    %c0_256 = arith.constant 0 : index
    %690 = vector.load %arg3[%c1602, %c0_256] : memref<1880x32xf32, #tpu.memory_space<vmem>>, vector<1x32xf32>
    %cst_257 = arith.constant dense<0.000000e+00> : vector<16xf32>
    %691 = vector.multi_reduction <add>, %687, %cst_257 [1] : vector<16x32xf32> to vector<16xf32>
    %692 = vector.shape_cast %691 : vector<16xf32> to vector<16x1xf32>
    %cst_258 = arith.constant 1.000000e-01 : f32
    %693 = vector.broadcast %cst_258 : f32 to vector<16x1xf32>
    %694 = arith.mulf %692, %693 : vector<16x1xf32>
    %695 = vector.broadcast %694 : vector<16x1xf32> to vector<16x32xf32>
    %696 = arith.subf %687, %695 : vector<16x32xf32>
    %697 = vector.broadcast %690 : vector<1x32xf32> to vector<16x32xf32>
    %698 = arith.mulf %696, %697 : vector<16x32xf32>
    %699 = arith.mulf %698, %698 : vector<16x32xf32>
    %cst_259 = arith.constant dense<0.000000e+00> : vector<16xf32>
    %700 = vector.multi_reduction <add>, %699, %cst_259 [1] : vector<16x32xf32> to vector<16xf32>
    %701 = vector.shape_cast %700 : vector<16xf32> to vector<16x1xf32>
    %cst_260 = arith.constant 1.000000e-01 : f32
    %702 = vector.broadcast %cst_260 : f32 to vector<16x1xf32>
    %703 = arith.mulf %701, %702 : vector<16x1xf32>
    %cst_261 = arith.constant 9.99999974E-6 : f32
    %704 = vector.broadcast %cst_261 : f32 to vector<16x1xf32>
    %705 = arith.addf %703, %704 : vector<16x1xf32>
    %706 = math.rsqrt %705 : vector<16x1xf32>
    %707 = vector.broadcast %706 : vector<16x1xf32> to vector<16x32xf32>
    %708 = arith.mulf %698, %707 : vector<16x32xf32>
    %709 = vector.broadcast %688 : vector<1x32xf32> to vector<16x32xf32>
    %710 = arith.mulf %708, %709 : vector<16x32xf32>
    %711 = vector.broadcast %689 : vector<1x32xf32> to vector<16x32xf32>
    %712 = arith.addf %710, %711 : vector<16x32xf32>
    %c1512 = arith.constant 1512 : index
    %c0_262 = arith.constant 0 : index
    %713 = vector.load %arg3[%c1512, %c0_262] : memref<1880x32xf32, #tpu.memory_space<vmem>>, vector<32x32xf32>
    %c1544 = arith.constant 1544 : index
    %c0_263 = arith.constant 0 : index
    %714 = vector.load %arg3[%c1544, %c0_263] : memref<1880x32xf32, #tpu.memory_space<vmem>>, vector<1x32xf32>
    %cst_264 = arith.constant dense<0.000000e+00> : vector<16x32xf32>
    %715 = tpu.matmul %712, %713, %cst_264 {dimension_numbers = #tpu.dot_dimension_numbers<[1], [0], [0], [1], [0, 0, 1, 1], [], []>} : vector<16x32xf32>, vector<32x32xf32>, vector<16x32xf32> -> vector<16x32xf32>
    %716 = vector.broadcast %714 : vector<1x32xf32> to vector<16x32xf32>
    %717 = arith.addf %715, %716 : vector<16x32xf32>
    %cst_265 = arith.constant 0.000000e+00 : f32
    %718 = vector.broadcast %cst_265 : f32 to vector<16x32xf32>
    %719 = arith.maximumf %717, %718 : vector<16x32xf32>
    %c1552 = arith.constant 1552 : index
    %c0_266 = arith.constant 0 : index
    %720 = vector.load %arg3[%c1552, %c0_266] : memref<1880x32xf32, #tpu.memory_space<vmem>>, vector<32x32xf32>
    %c1584 = arith.constant 1584 : index
    %c0_267 = arith.constant 0 : index
    %721 = vector.load %arg3[%c1584, %c0_267] : memref<1880x32xf32, #tpu.memory_space<vmem>>, vector<1x32xf32>
    %cst_268 = arith.constant dense<0.000000e+00> : vector<16x32xf32>
    %722 = tpu.matmul %719, %720, %cst_268 {dimension_numbers = #tpu.dot_dimension_numbers<[1], [0], [0], [1], [0, 0, 1, 1], [], []>} : vector<16x32xf32>, vector<32x32xf32>, vector<16x32xf32> -> vector<16x32xf32>
    %723 = vector.broadcast %721 : vector<1x32xf32> to vector<16x32xf32>
    %724 = arith.addf %722, %723 : vector<16x32xf32>
    %725 = arith.addf %712, %724 : vector<16x32xf32>
    %c1608 = arith.constant 1608 : index
    %c0_269 = arith.constant 0 : index
    %726 = vector.load %arg3[%c1608, %c0_269] : memref<1880x32xf32, #tpu.memory_space<vmem>>, vector<1x32xf32>
    %c1609 = arith.constant 1609 : index
    %c0_270 = arith.constant 0 : index
    %727 = vector.load %arg3[%c1609, %c0_270] : memref<1880x32xf32, #tpu.memory_space<vmem>>, vector<1x32xf32>
    %c1610 = arith.constant 1610 : index
    %c0_271 = arith.constant 0 : index
    %728 = vector.load %arg3[%c1610, %c0_271] : memref<1880x32xf32, #tpu.memory_space<vmem>>, vector<1x32xf32>
    %cst_272 = arith.constant dense<0.000000e+00> : vector<16xf32>
    %729 = vector.multi_reduction <add>, %725, %cst_272 [1] : vector<16x32xf32> to vector<16xf32>
    %730 = vector.shape_cast %729 : vector<16xf32> to vector<16x1xf32>
    %cst_273 = arith.constant 1.000000e-01 : f32
    %731 = vector.broadcast %cst_273 : f32 to vector<16x1xf32>
    %732 = arith.mulf %730, %731 : vector<16x1xf32>
    %733 = vector.broadcast %732 : vector<16x1xf32> to vector<16x32xf32>
    %734 = arith.subf %725, %733 : vector<16x32xf32>
    %735 = vector.broadcast %728 : vector<1x32xf32> to vector<16x32xf32>
    %736 = arith.mulf %734, %735 : vector<16x32xf32>
    %737 = arith.mulf %736, %736 : vector<16x32xf32>
    %cst_274 = arith.constant dense<0.000000e+00> : vector<16xf32>
    %738 = vector.multi_reduction <add>, %737, %cst_274 [1] : vector<16x32xf32> to vector<16xf32>
    %739 = vector.shape_cast %738 : vector<16xf32> to vector<16x1xf32>
    %cst_275 = arith.constant 1.000000e-01 : f32
    %740 = vector.broadcast %cst_275 : f32 to vector<16x1xf32>
    %741 = arith.mulf %739, %740 : vector<16x1xf32>
    %cst_276 = arith.constant 9.99999974E-6 : f32
    %742 = vector.broadcast %cst_276 : f32 to vector<16x1xf32>
    %743 = arith.addf %741, %742 : vector<16x1xf32>
    %744 = math.rsqrt %743 : vector<16x1xf32>
    %745 = vector.broadcast %744 : vector<16x1xf32> to vector<16x32xf32>
    %746 = arith.mulf %736, %745 : vector<16x32xf32>
    %747 = vector.broadcast %726 : vector<1x32xf32> to vector<16x32xf32>
    %748 = arith.mulf %746, %747 : vector<16x32xf32>
    %749 = vector.broadcast %727 : vector<1x32xf32> to vector<16x32xf32>
    %750 = arith.addf %748, %749 : vector<16x32xf32>
    %c1616 = arith.constant 1616 : index
    %c0_277 = arith.constant 0 : index
    %751 = vector.load %arg3[%c1616, %c0_277] : memref<1880x32xf32, #tpu.memory_space<vmem>>, vector<32x32xf32>
    %c1648 = arith.constant 1648 : index
    %c0_278 = arith.constant 0 : index
    %752 = vector.load %arg3[%c1648, %c0_278] : memref<1880x32xf32, #tpu.memory_space<vmem>>, vector<1x32xf32>
    %cst_279 = arith.constant dense<0.000000e+00> : vector<16x32xf32>
    %753 = tpu.matmul %750, %751, %cst_279 {dimension_numbers = #tpu.dot_dimension_numbers<[1], [0], [0], [1], [0, 0, 1, 1], [], []>} : vector<16x32xf32>, vector<32x32xf32>, vector<16x32xf32> -> vector<16x32xf32>
    %754 = vector.broadcast %752 : vector<1x32xf32> to vector<16x32xf32>
    %755 = arith.addf %753, %754 : vector<16x32xf32>
    %756 = vector.extract_strided_slice %755 {offsets = [0, 0], sizes = [16, 5], strides = [1, 1]} : vector<16x32xf32> to vector<16x5xf32>
    %757 = vector.extract_strided_slice %755 {offsets = [0, 10], sizes = [16, 5], strides = [1, 1]} : vector<16x32xf32> to vector<16x5xf32>
    %758 = vector.extract_strided_slice %755 {offsets = [0, 20], sizes = [16, 5], strides = [1, 1]} : vector<16x32xf32> to vector<16x5xf32>
    %cst_280 = arith.constant dense<0.000000e+00> : vector<16x16xf32>
    %759 = tpu.matmul %756, %757, %cst_280 {dimension_numbers = #tpu.dot_dimension_numbers<[1], [1], [0], [0], [0, 0, 1, 0], [], []>} : vector<16x5xf32>, vector<16x5xf32>, vector<16x16xf32> -> vector<16x16xf32>
    %cst_281 = arith.constant 0.44721359 : f32
    %760 = vector.broadcast %cst_281 : f32 to vector<16x16xf32>
    %761 = arith.mulf %759, %760 : vector<16x16xf32>
    %762 = arith.addf %761, %58 : vector<16x16xf32>
    %cst_282 = arith.constant dense<0xFF800000> : vector<16xf32>
    %763 = vector.multi_reduction <maximumf>, %762, %cst_282 [1] : vector<16x16xf32> to vector<16xf32>
    %764 = vector.shape_cast %763 : vector<16xf32> to vector<16x1xf32>
    %765 = vector.broadcast %764 : vector<16x1xf32> to vector<16x16xf32>
    %766 = arith.subf %762, %765 : vector<16x16xf32>
    %767 = math.exp %766 : vector<16x16xf32>
    %cst_283 = arith.constant dense<0.000000e+00> : vector<16xf32>
    %768 = vector.multi_reduction <add>, %767, %cst_283 [1] : vector<16x16xf32> to vector<16xf32>
    %769 = vector.shape_cast %768 : vector<16xf32> to vector<16x1xf32>
    %770 = vector.broadcast %769 : vector<16x1xf32> to vector<16x16xf32>
    %771 = arith.divf %767, %770 : vector<16x16xf32>
    %cst_284 = arith.constant dense<0.000000e+00> : vector<16x5xf32>
    %772 = tpu.matmul %771, %758, %cst_284 {dimension_numbers = #tpu.dot_dimension_numbers<[1], [0], [0], [1], [0, 0, 1, 1], [], []>} : vector<16x16xf32>, vector<16x5xf32>, vector<16x5xf32> -> vector<16x5xf32>
    %773 = vector.extract_strided_slice %755 {offsets = [0, 5], sizes = [16, 5], strides = [1, 1]} : vector<16x32xf32> to vector<16x5xf32>
    %774 = vector.extract_strided_slice %755 {offsets = [0, 15], sizes = [16, 5], strides = [1, 1]} : vector<16x32xf32> to vector<16x5xf32>
    %775 = vector.extract_strided_slice %755 {offsets = [0, 25], sizes = [16, 5], strides = [1, 1]} : vector<16x32xf32> to vector<16x5xf32>
    %cst_285 = arith.constant dense<0.000000e+00> : vector<16x16xf32>
    %776 = tpu.matmul %773, %774, %cst_285 {dimension_numbers = #tpu.dot_dimension_numbers<[1], [1], [0], [0], [0, 0, 1, 0], [], []>} : vector<16x5xf32>, vector<16x5xf32>, vector<16x16xf32> -> vector<16x16xf32>
    %cst_286 = arith.constant 0.44721359 : f32
    %777 = vector.broadcast %cst_286 : f32 to vector<16x16xf32>
    %778 = arith.mulf %776, %777 : vector<16x16xf32>
    %779 = arith.addf %778, %58 : vector<16x16xf32>
    %cst_287 = arith.constant dense<0xFF800000> : vector<16xf32>
    %780 = vector.multi_reduction <maximumf>, %779, %cst_287 [1] : vector<16x16xf32> to vector<16xf32>
    %781 = vector.shape_cast %780 : vector<16xf32> to vector<16x1xf32>
    %782 = vector.broadcast %781 : vector<16x1xf32> to vector<16x16xf32>
    %783 = arith.subf %779, %782 : vector<16x16xf32>
    %784 = math.exp %783 : vector<16x16xf32>
    %cst_288 = arith.constant dense<0.000000e+00> : vector<16xf32>
    %785 = vector.multi_reduction <add>, %784, %cst_288 [1] : vector<16x16xf32> to vector<16xf32>
    %786 = vector.shape_cast %785 : vector<16xf32> to vector<16x1xf32>
    %787 = vector.broadcast %786 : vector<16x1xf32> to vector<16x16xf32>
    %788 = arith.divf %784, %787 : vector<16x16xf32>
    %cst_289 = arith.constant dense<0.000000e+00> : vector<16x5xf32>
    %789 = tpu.matmul %788, %775, %cst_289 {dimension_numbers = #tpu.dot_dimension_numbers<[1], [0], [0], [1], [0, 0, 1, 1], [], []>} : vector<16x16xf32>, vector<16x5xf32>, vector<16x5xf32> -> vector<16x5xf32>
    %790 = tpu.concatenate %772, %789 in 1 : vector<16x5xf32>, vector<16x5xf32> -> vector<16x10xf32>
    %c1656 = arith.constant 1656 : index
    %c0_290 = arith.constant 0 : index
    %791 = vector.load %arg3[%c1656, %c0_290] : memref<1880x32xf32, #tpu.memory_space<vmem>>, vector<10x32xf32>
    %c1688 = arith.constant 1688 : index
    %c0_291 = arith.constant 0 : index
    %792 = vector.load %arg3[%c1688, %c0_291] : memref<1880x32xf32, #tpu.memory_space<vmem>>, vector<1x32xf32>
    %cst_292 = arith.constant dense<0.000000e+00> : vector<16x32xf32>
    %793 = tpu.matmul %790, %791, %cst_292 {dimension_numbers = #tpu.dot_dimension_numbers<[1], [0], [0], [1], [0, 0, 1, 1], [], []>} : vector<16x10xf32>, vector<10x32xf32>, vector<16x32xf32> -> vector<16x32xf32>
    %794 = vector.broadcast %792 : vector<1x32xf32> to vector<16x32xf32>
    %795 = arith.addf %793, %794 : vector<16x32xf32>
    %796 = arith.addf %750, %795 : vector<16x32xf32>
    %c1856 = arith.constant 1856 : index
    %c0_293 = arith.constant 0 : index
    %797 = vector.load %arg3[%c1856, %c0_293] : memref<1880x32xf32, #tpu.memory_space<vmem>>, vector<1x32xf32>
    %c1857 = arith.constant 1857 : index
    %c0_294 = arith.constant 0 : index
    %798 = vector.load %arg3[%c1857, %c0_294] : memref<1880x32xf32, #tpu.memory_space<vmem>>, vector<1x32xf32>
    %c1858 = arith.constant 1858 : index
    %c0_295 = arith.constant 0 : index
    %799 = vector.load %arg3[%c1858, %c0_295] : memref<1880x32xf32, #tpu.memory_space<vmem>>, vector<1x32xf32>
    %cst_296 = arith.constant dense<0.000000e+00> : vector<16xf32>
    %800 = vector.multi_reduction <add>, %796, %cst_296 [1] : vector<16x32xf32> to vector<16xf32>
    %801 = vector.shape_cast %800 : vector<16xf32> to vector<16x1xf32>
    %cst_297 = arith.constant 1.000000e-01 : f32
    %802 = vector.broadcast %cst_297 : f32 to vector<16x1xf32>
    %803 = arith.mulf %801, %802 : vector<16x1xf32>
    %804 = vector.broadcast %803 : vector<16x1xf32> to vector<16x32xf32>
    %805 = arith.subf %796, %804 : vector<16x32xf32>
    %806 = vector.broadcast %799 : vector<1x32xf32> to vector<16x32xf32>
    %807 = arith.mulf %805, %806 : vector<16x32xf32>
    %808 = arith.mulf %807, %807 : vector<16x32xf32>
    %cst_298 = arith.constant dense<0.000000e+00> : vector<16xf32>
    %809 = vector.multi_reduction <add>, %808, %cst_298 [1] : vector<16x32xf32> to vector<16xf32>
    %810 = vector.shape_cast %809 : vector<16xf32> to vector<16x1xf32>
    %cst_299 = arith.constant 1.000000e-01 : f32
    %811 = vector.broadcast %cst_299 : f32 to vector<16x1xf32>
    %812 = arith.mulf %810, %811 : vector<16x1xf32>
    %cst_300 = arith.constant 9.99999974E-6 : f32
    %813 = vector.broadcast %cst_300 : f32 to vector<16x1xf32>
    %814 = arith.addf %812, %813 : vector<16x1xf32>
    %815 = math.rsqrt %814 : vector<16x1xf32>
    %816 = vector.broadcast %815 : vector<16x1xf32> to vector<16x32xf32>
    %817 = arith.mulf %807, %816 : vector<16x32xf32>
    %818 = vector.broadcast %797 : vector<1x32xf32> to vector<16x32xf32>
    %819 = arith.mulf %817, %818 : vector<16x32xf32>
    %820 = vector.broadcast %798 : vector<1x32xf32> to vector<16x32xf32>
    %821 = arith.addf %819, %820 : vector<16x32xf32>
    %c1696 = arith.constant 1696 : index
    %c0_301 = arith.constant 0 : index
    %822 = vector.load %arg3[%c1696, %c0_301] : memref<1880x32xf32, #tpu.memory_space<vmem>>, vector<32x32xf32>
    %c1728 = arith.constant 1728 : index
    %c0_302 = arith.constant 0 : index
    %823 = vector.load %arg3[%c1728, %c0_302] : memref<1880x32xf32, #tpu.memory_space<vmem>>, vector<1x32xf32>
    %cst_303 = arith.constant dense<0.000000e+00> : vector<16x32xf32>
    %824 = tpu.matmul %821, %822, %cst_303 {dimension_numbers = #tpu.dot_dimension_numbers<[1], [0], [0], [1], [0, 0, 1, 1], [], []>} : vector<16x32xf32>, vector<32x32xf32>, vector<16x32xf32> -> vector<16x32xf32>
    %825 = vector.broadcast %823 : vector<1x32xf32> to vector<16x32xf32>
    %826 = arith.addf %824, %825 : vector<16x32xf32>
    %c1696_304 = arith.constant 1696 : index
    %c0_305 = arith.constant 0 : index
    %827 = vector.load %arg3[%c1696_304, %c0_305] : memref<1880x32xf32, #tpu.memory_space<vmem>>, vector<32x32xf32>
    %c1728_306 = arith.constant 1728 : index
    %c0_307 = arith.constant 0 : index
    %828 = vector.load %arg3[%c1728_306, %c0_307] : memref<1880x32xf32, #tpu.memory_space<vmem>>, vector<1x32xf32>
    %cst_308 = arith.constant dense<0.000000e+00> : vector<16x32xf32>
    %829 = tpu.matmul %380, %827, %cst_308 {dimension_numbers = #tpu.dot_dimension_numbers<[1], [0], [0], [1], [0, 0, 1, 1], [], []>} : vector<16x32xf32>, vector<32x32xf32>, vector<16x32xf32> -> vector<16x32xf32>
    %830 = vector.broadcast %828 : vector<1x32xf32> to vector<16x32xf32>
    %831 = arith.addf %829, %830 : vector<16x32xf32>
    %832 = vector.extract_strided_slice %826 {offsets = [0, 0], sizes = [16, 5], strides = [1, 1]} : vector<16x32xf32> to vector<16x5xf32>
    %833 = vector.extract_strided_slice %831 {offsets = [0, 10], sizes = [16, 5], strides = [1, 1]} : vector<16x32xf32> to vector<16x5xf32>
    %834 = vector.extract_strided_slice %831 {offsets = [0, 20], sizes = [16, 5], strides = [1, 1]} : vector<16x32xf32> to vector<16x5xf32>
    %cst_309 = arith.constant dense<0.000000e+00> : vector<16x16xf32>
    %835 = tpu.matmul %832, %833, %cst_309 {dimension_numbers = #tpu.dot_dimension_numbers<[1], [1], [0], [0], [0, 0, 1, 0], [], []>} : vector<16x5xf32>, vector<16x5xf32>, vector<16x16xf32> -> vector<16x16xf32>
    %cst_310 = arith.constant 0.44721359 : f32
    %836 = vector.broadcast %cst_310 : f32 to vector<16x16xf32>
    %837 = arith.mulf %835, %836 : vector<16x16xf32>
    %838 = arith.addf %837, %58 : vector<16x16xf32>
    %cst_311 = arith.constant dense<0xFF800000> : vector<16xf32>
    %839 = vector.multi_reduction <maximumf>, %838, %cst_311 [1] : vector<16x16xf32> to vector<16xf32>
    %840 = vector.shape_cast %839 : vector<16xf32> to vector<16x1xf32>
    %841 = vector.broadcast %840 : vector<16x1xf32> to vector<16x16xf32>
    %842 = arith.subf %838, %841 : vector<16x16xf32>
    %843 = math.exp %842 : vector<16x16xf32>
    %cst_312 = arith.constant dense<0.000000e+00> : vector<16xf32>
    %844 = vector.multi_reduction <add>, %843, %cst_312 [1] : vector<16x16xf32> to vector<16xf32>
    %845 = vector.shape_cast %844 : vector<16xf32> to vector<16x1xf32>
    %846 = vector.broadcast %845 : vector<16x1xf32> to vector<16x16xf32>
    %847 = arith.divf %843, %846 : vector<16x16xf32>
    %cst_313 = arith.constant dense<0.000000e+00> : vector<16x5xf32>
    %848 = tpu.matmul %847, %834, %cst_313 {dimension_numbers = #tpu.dot_dimension_numbers<[1], [0], [0], [1], [0, 0, 1, 1], [], []>} : vector<16x16xf32>, vector<16x5xf32>, vector<16x5xf32> -> vector<16x5xf32>
    %849 = vector.extract_strided_slice %826 {offsets = [0, 5], sizes = [16, 5], strides = [1, 1]} : vector<16x32xf32> to vector<16x5xf32>
    %850 = vector.extract_strided_slice %831 {offsets = [0, 15], sizes = [16, 5], strides = [1, 1]} : vector<16x32xf32> to vector<16x5xf32>
    %851 = vector.extract_strided_slice %831 {offsets = [0, 25], sizes = [16, 5], strides = [1, 1]} : vector<16x32xf32> to vector<16x5xf32>
    %cst_314 = arith.constant dense<0.000000e+00> : vector<16x16xf32>
    %852 = tpu.matmul %849, %850, %cst_314 {dimension_numbers = #tpu.dot_dimension_numbers<[1], [1], [0], [0], [0, 0, 1, 0], [], []>} : vector<16x5xf32>, vector<16x5xf32>, vector<16x16xf32> -> vector<16x16xf32>
    %cst_315 = arith.constant 0.44721359 : f32
    %853 = vector.broadcast %cst_315 : f32 to vector<16x16xf32>
    %854 = arith.mulf %852, %853 : vector<16x16xf32>
    %855 = arith.addf %854, %58 : vector<16x16xf32>
    %cst_316 = arith.constant dense<0xFF800000> : vector<16xf32>
    %856 = vector.multi_reduction <maximumf>, %855, %cst_316 [1] : vector<16x16xf32> to vector<16xf32>
    %857 = vector.shape_cast %856 : vector<16xf32> to vector<16x1xf32>
    %858 = vector.broadcast %857 : vector<16x1xf32> to vector<16x16xf32>
    %859 = arith.subf %855, %858 : vector<16x16xf32>
    %860 = math.exp %859 : vector<16x16xf32>
    %cst_317 = arith.constant dense<0.000000e+00> : vector<16xf32>
    %861 = vector.multi_reduction <add>, %860, %cst_317 [1] : vector<16x16xf32> to vector<16xf32>
    %862 = vector.shape_cast %861 : vector<16xf32> to vector<16x1xf32>
    %863 = vector.broadcast %862 : vector<16x1xf32> to vector<16x16xf32>
    %864 = arith.divf %860, %863 : vector<16x16xf32>
    %cst_318 = arith.constant dense<0.000000e+00> : vector<16x5xf32>
    %865 = tpu.matmul %864, %851, %cst_318 {dimension_numbers = #tpu.dot_dimension_numbers<[1], [0], [0], [1], [0, 0, 1, 1], [], []>} : vector<16x16xf32>, vector<16x5xf32>, vector<16x5xf32> -> vector<16x5xf32>
    %866 = tpu.concatenate %848, %865 in 1 : vector<16x5xf32>, vector<16x5xf32> -> vector<16x10xf32>
    %c1736 = arith.constant 1736 : index
    %c0_319 = arith.constant 0 : index
    %867 = vector.load %arg3[%c1736, %c0_319] : memref<1880x32xf32, #tpu.memory_space<vmem>>, vector<10x32xf32>
    %c1768 = arith.constant 1768 : index
    %c0_320 = arith.constant 0 : index
    %868 = vector.load %arg3[%c1768, %c0_320] : memref<1880x32xf32, #tpu.memory_space<vmem>>, vector<1x32xf32>
    %cst_321 = arith.constant dense<0.000000e+00> : vector<16x32xf32>
    %869 = tpu.matmul %866, %867, %cst_321 {dimension_numbers = #tpu.dot_dimension_numbers<[1], [0], [0], [1], [0, 0, 1, 1], [], []>} : vector<16x10xf32>, vector<10x32xf32>, vector<16x32xf32> -> vector<16x32xf32>
    %870 = vector.broadcast %868 : vector<1x32xf32> to vector<16x32xf32>
    %871 = arith.addf %869, %870 : vector<16x32xf32>
    %872 = arith.addf %821, %871 : vector<16x32xf32>
    %c1864 = arith.constant 1864 : index
    %c0_322 = arith.constant 0 : index
    %873 = vector.load %arg3[%c1864, %c0_322] : memref<1880x32xf32, #tpu.memory_space<vmem>>, vector<1x32xf32>
    %c1865 = arith.constant 1865 : index
    %c0_323 = arith.constant 0 : index
    %874 = vector.load %arg3[%c1865, %c0_323] : memref<1880x32xf32, #tpu.memory_space<vmem>>, vector<1x32xf32>
    %c1866 = arith.constant 1866 : index
    %c0_324 = arith.constant 0 : index
    %875 = vector.load %arg3[%c1866, %c0_324] : memref<1880x32xf32, #tpu.memory_space<vmem>>, vector<1x32xf32>
    %cst_325 = arith.constant dense<0.000000e+00> : vector<16xf32>
    %876 = vector.multi_reduction <add>, %872, %cst_325 [1] : vector<16x32xf32> to vector<16xf32>
    %877 = vector.shape_cast %876 : vector<16xf32> to vector<16x1xf32>
    %cst_326 = arith.constant 1.000000e-01 : f32
    %878 = vector.broadcast %cst_326 : f32 to vector<16x1xf32>
    %879 = arith.mulf %877, %878 : vector<16x1xf32>
    %880 = vector.broadcast %879 : vector<16x1xf32> to vector<16x32xf32>
    %881 = arith.subf %872, %880 : vector<16x32xf32>
    %882 = vector.broadcast %875 : vector<1x32xf32> to vector<16x32xf32>
    %883 = arith.mulf %881, %882 : vector<16x32xf32>
    %884 = arith.mulf %883, %883 : vector<16x32xf32>
    %cst_327 = arith.constant dense<0.000000e+00> : vector<16xf32>
    %885 = vector.multi_reduction <add>, %884, %cst_327 [1] : vector<16x32xf32> to vector<16xf32>
    %886 = vector.shape_cast %885 : vector<16xf32> to vector<16x1xf32>
    %cst_328 = arith.constant 1.000000e-01 : f32
    %887 = vector.broadcast %cst_328 : f32 to vector<16x1xf32>
    %888 = arith.mulf %886, %887 : vector<16x1xf32>
    %cst_329 = arith.constant 9.99999974E-6 : f32
    %889 = vector.broadcast %cst_329 : f32 to vector<16x1xf32>
    %890 = arith.addf %888, %889 : vector<16x1xf32>
    %891 = math.rsqrt %890 : vector<16x1xf32>
    %892 = vector.broadcast %891 : vector<16x1xf32> to vector<16x32xf32>
    %893 = arith.mulf %883, %892 : vector<16x32xf32>
    %894 = vector.broadcast %873 : vector<1x32xf32> to vector<16x32xf32>
    %895 = arith.mulf %893, %894 : vector<16x32xf32>
    %896 = vector.broadcast %874 : vector<1x32xf32> to vector<16x32xf32>
    %897 = arith.addf %895, %896 : vector<16x32xf32>
    %c1776 = arith.constant 1776 : index
    %c0_330 = arith.constant 0 : index
    %898 = vector.load %arg3[%c1776, %c0_330] : memref<1880x32xf32, #tpu.memory_space<vmem>>, vector<32x32xf32>
    %c1808 = arith.constant 1808 : index
    %c0_331 = arith.constant 0 : index
    %899 = vector.load %arg3[%c1808, %c0_331] : memref<1880x32xf32, #tpu.memory_space<vmem>>, vector<1x32xf32>
    %cst_332 = arith.constant dense<0.000000e+00> : vector<16x32xf32>
    %900 = tpu.matmul %897, %898, %cst_332 {dimension_numbers = #tpu.dot_dimension_numbers<[1], [0], [0], [1], [0, 0, 1, 1], [], []>} : vector<16x32xf32>, vector<32x32xf32>, vector<16x32xf32> -> vector<16x32xf32>
    %901 = vector.broadcast %899 : vector<1x32xf32> to vector<16x32xf32>
    %902 = arith.addf %900, %901 : vector<16x32xf32>
    %cst_333 = arith.constant 0.000000e+00 : f32
    %903 = vector.broadcast %cst_333 : f32 to vector<16x32xf32>
    %904 = arith.maximumf %902, %903 : vector<16x32xf32>
    %c1816 = arith.constant 1816 : index
    %c0_334 = arith.constant 0 : index
    %905 = vector.load %arg3[%c1816, %c0_334] : memref<1880x32xf32, #tpu.memory_space<vmem>>, vector<32x32xf32>
    %c1848 = arith.constant 1848 : index
    %c0_335 = arith.constant 0 : index
    %906 = vector.load %arg3[%c1848, %c0_335] : memref<1880x32xf32, #tpu.memory_space<vmem>>, vector<1x32xf32>
    %cst_336 = arith.constant dense<0.000000e+00> : vector<16x32xf32>
    %907 = tpu.matmul %904, %905, %cst_336 {dimension_numbers = #tpu.dot_dimension_numbers<[1], [0], [0], [1], [0, 0, 1, 1], [], []>} : vector<16x32xf32>, vector<32x32xf32>, vector<16x32xf32> -> vector<16x32xf32>
    %908 = vector.broadcast %906 : vector<1x32xf32> to vector<16x32xf32>
    %909 = arith.addf %907, %908 : vector<16x32xf32>
    %910 = arith.addf %897, %909 : vector<16x32xf32>
    %c1872 = arith.constant 1872 : index
    %c0_337 = arith.constant 0 : index
    %911 = vector.load %arg3[%c1872, %c0_337] : memref<1880x32xf32, #tpu.memory_space<vmem>>, vector<1x32xf32>
    %c1873 = arith.constant 1873 : index
    %c0_338 = arith.constant 0 : index
    %912 = vector.load %arg3[%c1873, %c0_338] : memref<1880x32xf32, #tpu.memory_space<vmem>>, vector<1x32xf32>
    %c1874 = arith.constant 1874 : index
    %c0_339 = arith.constant 0 : index
    %913 = vector.load %arg3[%c1874, %c0_339] : memref<1880x32xf32, #tpu.memory_space<vmem>>, vector<1x32xf32>
    %cst_340 = arith.constant dense<0.000000e+00> : vector<16xf32>
    %914 = vector.multi_reduction <add>, %910, %cst_340 [1] : vector<16x32xf32> to vector<16xf32>
    %915 = vector.shape_cast %914 : vector<16xf32> to vector<16x1xf32>
    %cst_341 = arith.constant 1.000000e-01 : f32
    %916 = vector.broadcast %cst_341 : f32 to vector<16x1xf32>
    %917 = arith.mulf %915, %916 : vector<16x1xf32>
    %918 = vector.broadcast %917 : vector<16x1xf32> to vector<16x32xf32>
    %919 = arith.subf %910, %918 : vector<16x32xf32>
    %920 = vector.broadcast %913 : vector<1x32xf32> to vector<16x32xf32>
    %921 = arith.mulf %919, %920 : vector<16x32xf32>
    %922 = arith.mulf %921, %921 : vector<16x32xf32>
    %cst_342 = arith.constant dense<0.000000e+00> : vector<16xf32>
    %923 = vector.multi_reduction <add>, %922, %cst_342 [1] : vector<16x32xf32> to vector<16xf32>
    %924 = vector.shape_cast %923 : vector<16xf32> to vector<16x1xf32>
    %cst_343 = arith.constant 1.000000e-01 : f32
    %925 = vector.broadcast %cst_343 : f32 to vector<16x1xf32>
    %926 = arith.mulf %924, %925 : vector<16x1xf32>
    %cst_344 = arith.constant 9.99999974E-6 : f32
    %927 = vector.broadcast %cst_344 : f32 to vector<16x1xf32>
    %928 = arith.addf %926, %927 : vector<16x1xf32>
    %929 = math.rsqrt %928 : vector<16x1xf32>
    %930 = vector.broadcast %929 : vector<16x1xf32> to vector<16x32xf32>
    %931 = arith.mulf %921, %930 : vector<16x32xf32>
    %932 = vector.broadcast %911 : vector<1x32xf32> to vector<16x32xf32>
    %933 = arith.mulf %931, %932 : vector<16x32xf32>
    %934 = vector.broadcast %912 : vector<1x32xf32> to vector<16x32xf32>
    %935 = arith.addf %933, %934 : vector<16x32xf32>
    %c160 = arith.constant 160 : index
    %c0_345 = arith.constant 0 : index
    %936 = vector.load %arg3[%c160, %c0_345] : memref<1880x32xf32, #tpu.memory_space<vmem>>, vector<32x32xf32>
    %c192 = arith.constant 192 : index
    %c0_346 = arith.constant 0 : index
    %937 = vector.load %arg3[%c192, %c0_346] : memref<1880x32xf32, #tpu.memory_space<vmem>>, vector<1x32xf32>
    %cst_347 = arith.constant dense<0.000000e+00> : vector<16x32xf32>
    %938 = tpu.matmul %935, %936, %cst_347 {dimension_numbers = #tpu.dot_dimension_numbers<[1], [0], [0], [1], [0, 0, 1, 1], [], []>} : vector<16x32xf32>, vector<32x32xf32>, vector<16x32xf32> -> vector<16x32xf32>
    %939 = vector.broadcast %937 : vector<1x32xf32> to vector<16x32xf32>
    %940 = arith.addf %938, %939 : vector<16x32xf32>
    %cst_348 = arith.constant 0.000000e+00 : f32
    %941 = vector.broadcast %cst_348 : f32 to vector<16x32xf32>
    %942 = arith.maximumf %940, %941 : vector<16x32xf32>
    %c200 = arith.constant 200 : index
    %c0_349 = arith.constant 0 : index
    %943 = vector.load %arg3[%c200, %c0_349] : memref<1880x32xf32, #tpu.memory_space<vmem>>, vector<32x32xf32>
    %c232 = arith.constant 232 : index
    %c0_350 = arith.constant 0 : index
    %944 = vector.load %arg3[%c232, %c0_350] : memref<1880x32xf32, #tpu.memory_space<vmem>>, vector<1x32xf32>
    %cst_351 = arith.constant dense<0.000000e+00> : vector<16x32xf32>
    %945 = tpu.matmul %942, %943, %cst_351 {dimension_numbers = #tpu.dot_dimension_numbers<[1], [0], [0], [1], [0, 0, 1, 1], [], []>} : vector<16x32xf32>, vector<32x32xf32>, vector<16x32xf32> -> vector<16x32xf32>
    %946 = vector.broadcast %944 : vector<1x32xf32> to vector<16x32xf32>
    %947 = arith.addf %945, %946 : vector<16x32xf32>
    %cst_352 = arith.constant 0.000000e+00 : f32
    %948 = vector.broadcast %cst_352 : f32 to vector<16x32xf32>
    %949 = arith.maximumf %947, %948 : vector<16x32xf32>
    %c240 = arith.constant 240 : index
    %c0_353 = arith.constant 0 : index
    %950 = vector.load %arg3[%c240, %c0_353] : memref<1880x32xf32, #tpu.memory_space<vmem>>, vector<32x32xf32>
    %c272 = arith.constant 272 : index
    %c0_354 = arith.constant 0 : index
    %951 = vector.load %arg3[%c272, %c0_354] : memref<1880x32xf32, #tpu.memory_space<vmem>>, vector<1x32xf32>
    %cst_355 = arith.constant dense<0.000000e+00> : vector<16x32xf32>
    %952 = tpu.matmul %949, %950, %cst_355 {dimension_numbers = #tpu.dot_dimension_numbers<[1], [0], [0], [1], [0, 0, 1, 1], [], []>} : vector<16x32xf32>, vector<32x32xf32>, vector<16x32xf32> -> vector<16x32xf32>
    %953 = vector.broadcast %951 : vector<1x32xf32> to vector<16x32xf32>
    %954 = arith.addf %952, %953 : vector<16x32xf32>
    %cst_356 = arith.constant 0.000000e+00 : f32
    %955 = vector.broadcast %cst_356 : f32 to vector<16x32xf32>
    %956 = arith.maximumf %954, %955 : vector<16x32xf32>
    %c280 = arith.constant 280 : index
    %c0_357 = arith.constant 0 : index
    %957 = vector.load %arg3[%c280, %c0_357] : memref<1880x32xf32, #tpu.memory_space<vmem>>, vector<32x32xf32>
    %c312 = arith.constant 312 : index
    %c0_358 = arith.constant 0 : index
    %958 = vector.load %arg3[%c312, %c0_358] : memref<1880x32xf32, #tpu.memory_space<vmem>>, vector<1x32xf32>
    %cst_359 = arith.constant dense<0.000000e+00> : vector<16x32xf32>
    %959 = tpu.matmul %956, %957, %cst_359 {dimension_numbers = #tpu.dot_dimension_numbers<[1], [0], [0], [1], [0, 0, 1, 1], [], []>} : vector<16x32xf32>, vector<32x32xf32>, vector<16x32xf32> -> vector<16x32xf32>
    %960 = vector.broadcast %958 : vector<1x32xf32> to vector<16x32xf32>
    %961 = arith.addf %959, %960 : vector<16x32xf32>
    %c320 = arith.constant 320 : index
    %c0_360 = arith.constant 0 : index
    %962 = vector.load %arg3[%c320, %c0_360] : memref<1880x32xf32, #tpu.memory_space<vmem>>, vector<32x32xf32>
    %c352 = arith.constant 352 : index
    %c0_361 = arith.constant 0 : index
    %963 = vector.load %arg3[%c352, %c0_361] : memref<1880x32xf32, #tpu.memory_space<vmem>>, vector<1x32xf32>
    %cst_362 = arith.constant dense<0.000000e+00> : vector<16x32xf32>
    %964 = tpu.matmul %935, %962, %cst_362 {dimension_numbers = #tpu.dot_dimension_numbers<[1], [0], [0], [1], [0, 0, 1, 1], [], []>} : vector<16x32xf32>, vector<32x32xf32>, vector<16x32xf32> -> vector<16x32xf32>
    %965 = vector.broadcast %963 : vector<1x32xf32> to vector<16x32xf32>
    %966 = arith.addf %964, %965 : vector<16x32xf32>
    %cst_363 = arith.constant 0.000000e+00 : f32
    %967 = vector.broadcast %cst_363 : f32 to vector<16x32xf32>
    %968 = arith.maximumf %966, %967 : vector<16x32xf32>
    %c360 = arith.constant 360 : index
    %c0_364 = arith.constant 0 : index
    %969 = vector.load %arg3[%c360, %c0_364] : memref<1880x32xf32, #tpu.memory_space<vmem>>, vector<32x32xf32>
    %c392 = arith.constant 392 : index
    %c0_365 = arith.constant 0 : index
    %970 = vector.load %arg3[%c392, %c0_365] : memref<1880x32xf32, #tpu.memory_space<vmem>>, vector<1x32xf32>
    %cst_366 = arith.constant dense<0.000000e+00> : vector<16x32xf32>
    %971 = tpu.matmul %968, %969, %cst_366 {dimension_numbers = #tpu.dot_dimension_numbers<[1], [0], [0], [1], [0, 0, 1, 1], [], []>} : vector<16x32xf32>, vector<32x32xf32>, vector<16x32xf32> -> vector<16x32xf32>
    %972 = vector.broadcast %970 : vector<1x32xf32> to vector<16x32xf32>
    %973 = arith.addf %971, %972 : vector<16x32xf32>
    %cst_367 = arith.constant 0.000000e+00 : f32
    %974 = vector.broadcast %cst_367 : f32 to vector<16x32xf32>
    %975 = arith.maximumf %973, %974 : vector<16x32xf32>
    %c400 = arith.constant 400 : index
    %c0_368 = arith.constant 0 : index
    %976 = vector.load %arg3[%c400, %c0_368] : memref<1880x32xf32, #tpu.memory_space<vmem>>, vector<32x32xf32>
    %c432 = arith.constant 432 : index
    %c0_369 = arith.constant 0 : index
    %977 = vector.load %arg3[%c432, %c0_369] : memref<1880x32xf32, #tpu.memory_space<vmem>>, vector<1x32xf32>
    %cst_370 = arith.constant dense<0.000000e+00> : vector<16x32xf32>
    %978 = tpu.matmul %975, %976, %cst_370 {dimension_numbers = #tpu.dot_dimension_numbers<[1], [0], [0], [1], [0, 0, 1, 1], [], []>} : vector<16x32xf32>, vector<32x32xf32>, vector<16x32xf32> -> vector<16x32xf32>
    %979 = vector.broadcast %977 : vector<1x32xf32> to vector<16x32xf32>
    %980 = arith.addf %978, %979 : vector<16x32xf32>
    %c440 = arith.constant 440 : index
    %c0_371 = arith.constant 0 : index
    %981 = vector.load %arg3[%c440, %c0_371] : memref<1880x32xf32, #tpu.memory_space<vmem>>, vector<32x32xf32>
    %c472 = arith.constant 472 : index
    %c0_372 = arith.constant 0 : index
    %982 = vector.load %arg3[%c472, %c0_372] : memref<1880x32xf32, #tpu.memory_space<vmem>>, vector<1x32xf32>
    %cst_373 = arith.constant dense<0.000000e+00> : vector<16x32xf32>
    %983 = tpu.matmul %935, %981, %cst_373 {dimension_numbers = #tpu.dot_dimension_numbers<[1], [0], [0], [1], [0, 0, 1, 1], [], []>} : vector<16x32xf32>, vector<32x32xf32>, vector<16x32xf32> -> vector<16x32xf32>
    %984 = vector.broadcast %982 : vector<1x32xf32> to vector<16x32xf32>
    %985 = arith.addf %983, %984 : vector<16x32xf32>
    %cst_374 = arith.constant 0.000000e+00 : f32
    %986 = vector.broadcast %cst_374 : f32 to vector<16x32xf32>
    %987 = arith.maximumf %985, %986 : vector<16x32xf32>
    %c480 = arith.constant 480 : index
    %c0_375 = arith.constant 0 : index
    %988 = vector.load %arg3[%c480, %c0_375] : memref<1880x32xf32, #tpu.memory_space<vmem>>, vector<32x32xf32>
    %c512 = arith.constant 512 : index
    %c0_376 = arith.constant 0 : index
    %989 = vector.load %arg3[%c512, %c0_376] : memref<1880x32xf32, #tpu.memory_space<vmem>>, vector<1x32xf32>
    %cst_377 = arith.constant dense<0.000000e+00> : vector<16x32xf32>
    %990 = tpu.matmul %987, %988, %cst_377 {dimension_numbers = #tpu.dot_dimension_numbers<[1], [0], [0], [1], [0, 0, 1, 1], [], []>} : vector<16x32xf32>, vector<32x32xf32>, vector<16x32xf32> -> vector<16x32xf32>
    %991 = vector.broadcast %989 : vector<1x32xf32> to vector<16x32xf32>
    %992 = arith.addf %990, %991 : vector<16x32xf32>
    %cst_378 = arith.constant 0.000000e+00 : f32
    %993 = vector.broadcast %cst_378 : f32 to vector<16x32xf32>
    %994 = arith.maximumf %992, %993 : vector<16x32xf32>
    %c520 = arith.constant 520 : index
    %c0_379 = arith.constant 0 : index
    %995 = vector.load %arg3[%c520, %c0_379] : memref<1880x32xf32, #tpu.memory_space<vmem>>, vector<32x32xf32>
    %c552 = arith.constant 552 : index
    %c0_380 = arith.constant 0 : index
    %996 = vector.load %arg3[%c552, %c0_380] : memref<1880x32xf32, #tpu.memory_space<vmem>>, vector<1x32xf32>
    %cst_381 = arith.constant dense<0.000000e+00> : vector<16x32xf32>
    %997 = tpu.matmul %994, %995, %cst_381 {dimension_numbers = #tpu.dot_dimension_numbers<[1], [0], [0], [1], [0, 0, 1, 1], [], []>} : vector<16x32xf32>, vector<32x32xf32>, vector<16x32xf32> -> vector<16x32xf32>
    %998 = vector.broadcast %996 : vector<1x32xf32> to vector<16x32xf32>
    %999 = arith.addf %997, %998 : vector<16x32xf32>
    %1000 = arith.addf %961, %980 : vector<16x32xf32>
    %1001 = arith.addf %1000, %999 : vector<16x32xf32>
    %c0_382 = arith.constant 0 : index
    %c0_383 = arith.constant 0 : index
    %1002 = vector.load %arg4[%c0_382, %c0_383] : memref<16x32xf32, #tpu.memory_space<vmem>>, vector<16x32xf32>
    tpu.vector_store %arg4[%c0_382, %c0_383], %1001 {strides = array<i32>} : memref<16x32xf32, #tpu.memory_space<vmem>>, vector<16x32xf32>,
    return
  }
  func.func @transform_0(%arg0: i32) -> (i32, i32) {
    %c0_i32 = arith.constant 0 : i32
    %c0_i32_0 = arith.constant 0 : i32
    %c0_i32_1 = arith.constant 0 : i32
    return %c0_i32, %c0_i32_0 : i32, i32
  }
  func.func @transform_1(%arg0: i32) -> (i32, i32) {
    %c0_i32 = arith.constant 0 : i32
    %c0_i32_0 = arith.constant 0 : i32
    %c0_i32_1 = arith.constant 0 : i32
    return %c0_i32, %c0_i32_0 : i32, i32
  }
  func.func @transform_2(%arg0: i32) -> (i32, i32) {
    %c0_i32 = arith.constant 0 : i32
    %c0_i32_0 = arith.constant 0 : i32
    %c0_i32_1 = arith.constant 0 : i32
    return %c0_i32, %c0_i32_0 : i32, i32
  }
  func.func @transform_3(%arg0: i32) -> (i32, i32) {
    %c0_i32 = arith.constant 0 : i32
    %c0_i32_0 = arith.constant 0 : i32
    %c0_i32_1 = arith.constant 0 : i32
    return %c0_i32, %c0_i32_0 : i32, i32
  }
}

</mosaic_0001>

<llo_original>
// kernel: forward.1
$region0: #{forward.1}
  #allocation0 [shape = 'u32[]', space=smem, size = 0x4, offset = 0x4, fixed_abs, tag = 'smem constant byte address 0x4 - core index']
  #allocation1 [shape = 'u32[144,128]{1,0:T(1,128)}', space=vmem, size = 0x12000, scoped, tag = 'internal scratch']
  %s0 = inlined_call_operand.vmem [shape: f32[16,6], index: 0, kind: input, shape index: {}]
  %s1 = inlined_call_operand.vmem [shape: f32[16,9], index: 1, kind: input, shape index: {}]
  %s2 = inlined_call_operand.hbm [shape: f32[1880,32], index: 2, kind: input, shape index: {}]
  %s3 = inlined_call_operand.vmem [shape: f32[16,32], index: 3, kind: output, shape index: {}]
  %s4 = sld [smem:[#allocation0]]
  $region26: #{forward.1} parent=0
    _
  %s6 = ssub.s32 1, %s4
  %s7 = scalar_select 0, %s6, %s4
  $region1: #{forward.1} parent=0
    #allocation2 [shape = 'u8[962560]{0}', space=vmem, size = 0xeb000, scoped, tag = 'input window, operand 2, single buffered']
    #allocation3 [shape = 's32[1]{0}', space=sflag, size = 0x4, scoped, tag = 'scoped memory for forward.1']
    %8 = vsyncpa [#allocation3], 0
    // Predicated region
    $region2: #{forward.1} parent=1 // pred_check
      _
    $region3: #{forward.1} parent=1 // pred_check_branch
      %10 = sbr.rel (0) target = $region5
    $region4: #{forward.1} parent=1 // pred_region
      _
    $region5: #{forward.1} parent=1 // pred_fallthru
      _
    // Predicated region
    $region6: #{forward.1} parent=1 // pred_check
      _
    $region7: #{forward.1} parent=1 // pred_check_branch
      %12 = sbr.rel (0) target = $region9
    $region8: #{forward.1} parent=1 // pred_region
      _
    $region9: #{forward.1} parent=1 // pred_fallthru
      _
    // Predicated region
    $region10: #{forward.1} parent=1 // pred_check
      _
    $region11: #{forward.1} parent=1 // pred_check_branch
      %14 = sbr.rel (0) target = $region13
    $region12: #{forward.1} parent=1 // pred_region
      %s16 = ssub.s32 30080, 30080
      %17 = vsyncadd [#allocation3], %s16
      %s18 = sshll.u32 [#allocation2], 4
      %s19 = int_to_ptr.vmem [resolvable:$true] %s18
      %24 = dma.hbm_to_vmem [thread:$0]  %s2, 30080, %s19, [#allocation3], 128, 128, 8
    $region13: #{forward.1} parent=1 // pred_fallthru
      _
    // Predicated region
    $region14: #{forward.1} parent=1 // pred_check
      _
    $region15: #{forward.1} parent=1 // pred_check_branch
      %26 = sbr.rel (0) target = $region17
    $region16: #{forward.1} parent=1 // pred_region
      %27 = dma.done [#allocation3], 30080
    $region17: #{forward.1} parent=1 // pred_fallthru
      _
    %v28 = vld [vmem:[%s0] sm:$0xff]
    %v29 = vld [vmem:[%s0 + $0x8] sm:$0xff]
    %v30 = vld [vmem:[#allocation2] sm:$0x3f]
    %v31 = vld [vmem:[#allocation2 + $0x20] sm:$0x1]
    %v32 = vlaneseq
    %v33 = vshrl.u32 %v32, 7
    %v34 = vsub.s32 0, %v33
    %v35 = vrot.slane %v31, %v34
    %vm36 = vcmask 48128
    %v38 = vsel %vm36, %v28, 0
    %v41 = vsel %vm36, %v29, 0
    %vm43 = vcmask 1045504
    %v45 = vsel %vm43, %v30, 0
    %47 = vmatprep.subr.mxu0 0.0
    %48 = vmatpush1.msra.mxu0 0.0
    %49 = vmatprep.subr.mxu0 0.0
    %50 = vmatpush1.msra.mxu0 0.0
    %51 = vmatprep.subr.mxu0 0.0
    %52 = vmatpush1.msra.mxu0 0.0
    %53 = vmatprep.subr.mxu0 0.0
    %54 = vmatpush1.msra.mxu0 0.0
    %55 = vmatprep.subr.mxu0 0.0
    %56 = vmatpush1.msra.mxu0 0.0
    %57 = vmatprep.subr.mxu0 0.0
    %58 = vmatpush1.msra.mxu0 0.0
    %59 = vmatprep.subr.mxu0 0.0
    %60 = vmatpush1.msra.mxu0 0.0
    %61 = vmatprep.subr.mxu0 0.0
    %62 = vmatpush1.msra.mxu0 0.0
    %63 = vmatprep.subr.mxu0 0.0
    %64 = vmatpush1.msra.mxu0 0.0
    %65 = vmatprep.subr.mxu0 0.0
    %66 = vmatpush1.msra.mxu0 0.0
    %67 = vmatprep.subr.mxu0 0.0
    %68 = vmatpush1.msra.mxu0 0.0
    %69 = vmatprep.subr.mxu0 0.0
    %70 = vmatpush1.msra.mxu0 0.0
    %71 = vmatprep.subr.mxu0 0.0
    %72 = vmatpush1.msra.mxu0 0.0
    %73 = vmatprep.subr.mxu0 0.0
    %74 = vmatpush1.msra.mxu0 0.0
    %75 = vmatprep.subr.mxu0 0.0
    %76 = vmatpush1.msra.mxu0 0.0
    %77 = vmatprep.subr.mxu0 0.0
    %78 = vmatpush1.msra.mxu0 %v45
    %79 = vmatprep.subr.mxu0 0.0
    %80 = vmatpush2.msra.mxu0 0.0
    %81 = vmatprep.subr.mxu0 0.0
    %82 = vmatpush2.msra.mxu0 0.0
    %83 = vmatprep.subr.mxu0 0.0
    %84 = vmatpush2.msra.mxu0 0.0
    %85 = vmatprep.subr.mxu0 0.0
    %86 = vmatpush2.msra.mxu0 0.0
    %87 = vmatprep.subr.mxu0 0.0
    %88 = vmatpush2.msra.mxu0 0.0
    %89 = vmatprep.subr.mxu0 0.0
    %90 = vmatpush2.msra.mxu0 0.0
    %91 = vmatprep.subr.mxu0 0.0
    %92 = vmatpush2.msra.mxu0 0.0
    %93 = vmatprep.subr.mxu0 0.0
    %94 = vmatpush2.msra.mxu0 0.0
    %95 = vmatprep.subr.mxu0 0.0
    %96 = vmatpush2.msra.mxu0 0.0
    %97 = vmatprep.subr.mxu0 0.0
    %98 = vmatpush2.msra.mxu0 0.0
    %99 = vmatprep.subr.mxu0 0.0
    %100 = vmatpush2.msra.mxu0 0.0
    %101 = vmatprep.subr.mxu0 0.0
    %102 = vmatpush2.msra.mxu0 0.0
    %103 = vmatprep.subr.mxu0 0.0
    %104 = vmatpush2.msra.mxu0 0.0
    %105 = vmatprep.subr.mxu0 0.0
    %106 = vmatpush2.msra.mxu0 0.0
    %107 = vmatprep.subr.mxu0 0.0
    %108 = vmatpush2.msra.mxu0 0.0
    %109 = vmatprep.subr.mxu0 0.0
    %110 = vmatpush2.msra.mxu0 0.0
    %111 = vmatprep.mubr.f32.mxu0 0.0
    %112 = vmatmul.mubr.f32.gmra.mxu0 %v38
    %v113 = vpop.f32.mrf.mxu0
    %v114 = vadd.f32 %v35, %v113
    %v115 = vpop.f32.mrf.mxu0
    %116 = vmatprep.mubr.f32.mxu0 0.0
    %117 = vmatmul.mubr.f32.gmra.mxu0 %v41
    %v118 = vpop.f32.mrf.mxu0
    %v119 = vadd.f32 %v35, %v118
    %v120 = vpop.f32.mrf.mxu0
    %121 = vdwg.mxu0
    %v122 = vmax.f32 %v114, 0.0
    %v123 = vmax.f32 %v119, 0.0
    %v124 = vld [vmem:[#allocation2 + $0x28] sm:$0xff]
    %v125 = vld [vmem:[#allocation2 + $0x30] sm:$0xff]
    %v126 = vld [vmem:[#allocation2 + $0x38] sm:$0xff]
    %v127 = vld [vmem:[#allocation2 + $0x40] sm:$0xff]
    %v128 = vld [vmem:[#allocation2 + $0x48] sm:$0x1]
    %v129 = vlaneseq
    %v130 = vshrl.u32 %v129, 7
    %v131 = vsub.s32 0, %v130
    %v132 = vrot.slane %v128, %v131
    %vm133 = vcmask 261120
    %v135 = vsel %vm133, %v122, 0
    %v138 = vsel %vm133, %v123, 0
    %140 = vmatprep.subr.mxu0 0.0
    %141 = vmatpush1.msra.mxu0 0.0
    %142 = vmatprep.subr.mxu0 0.0
    %143 = vmatpush1.msra.mxu0 0.0
    %144 = vmatprep.subr.mxu0 0.0
    %145 = vmatpush1.msra.mxu0 0.0
    %146 = vmatprep.subr.mxu0 0.0
    %147 = vmatpush1.msra.mxu0 0.0
    %148 = vmatprep.subr.mxu0 0.0
    %149 = vmatpush1.msra.mxu0 0.0
    %150 = vmatprep.subr.mxu0 0.0
    %151 = vmatpush1.msra.mxu0 0.0
    %152 = vmatprep.subr.mxu0 0.0
    %153 = vmatpush1.msra.mxu0 0.0
    %154 = vmatprep.subr.mxu0 0.0
    %155 = vmatpush1.msra.mxu0 0.0
    %156 = vmatprep.subr.mxu0 0.0
    %157 = vmatpush1.msra.mxu0 0.0
    %158 = vmatprep.subr.mxu0 0.0
    %159 = vmatpush1.msra.mxu0 0.0
    %160 = vmatprep.subr.mxu0 0.0
    %161 = vmatpush1.msra.mxu0 0.0
    %162 = vmatprep.subr.mxu0 0.0
    %163 = vmatpush1.msra.mxu0 0.0
    %164 = vmatprep.subr.mxu0 0.0
    %165 = vmatpush1.msra.mxu0 %v127
    %166 = vmatprep.subr.mxu0 0.0
    %167 = vmatpush1.msra.mxu0 %v126
    %168 = vmatprep.subr.mxu0 0.0
    %169 = vmatpush1.msra.mxu0 %v125
    %170 = vmatprep.subr.mxu0 0.0
    %171 = vmatpush1.msra.mxu0 %v124
    %172 = vmatprep.subr.mxu0 0.0
    %173 = vmatpush2.msra.mxu0 0.0
    %174 = vmatprep.subr.mxu0 0.0
    %175 = vmatpush2.msra.mxu0 0.0
    %176 = vmatprep.subr.mxu0 0.0
    %177 = vmatpush2.msra.mxu0 0.0
    %178 = vmatprep.subr.mxu0 0.0
    %179 = vmatpush2.msra.mxu0 0.0
    %180 = vmatprep.subr.mxu0 0.0
    %181 = vmatpush2.msra.mxu0 0.0
    %182 = vmatprep.subr.mxu0 0.0
    %183 = vmatpush2.msra.mxu0 0.0
    %184 = vmatprep.subr.mxu0 0.0
    %185 = vmatpush2.msra.mxu0 0.0
    %186 = vmatprep.subr.mxu0 0.0
    %187 = vmatpush2.msra.mxu0 0.0
    %188 = vmatprep.subr.mxu0 0.0
    %189 = vmatpush2.msra.mxu0 0.0
    %190 = vmatprep.subr.mxu0 0.0
    %191 = vmatpush2.msra.mxu0 0.0
    %192 = vmatprep.subr.mxu0 0.0
    %193 = vmatpush2.msra.mxu0 0.0
    %194 = vmatprep.subr.mxu0 0.0
    %195 = vmatpush2.msra.mxu0 0.0
    %196 = vmatprep.subr.mxu0 0.0
    %197 = vmatpush2.msra.mxu0 0.0
    %198 = vmatprep.subr.mxu0 0.0
    %199 = vmatpush2.msra.mxu0 0.0
    %200 = vmatprep.subr.mxu0 0.0
    %201 = vmatpush2.msra.mxu0 0.0
    %202 = vmatprep.subr.mxu0 0.0
    %203 = vmatpush2.msra.mxu0 0.0
    %204 = vmatprep.mubr.f32.mxu0 0.0
    %205 = vmatmul.mubr.f32.gmra.mxu0 %v135
    %v206 = vpop.f32.mrf.mxu0
    %v207 = vadd.f32 %v132, %v206
    %v208 = vpop.f32.mrf.mxu0
    %209 = vmatprep.mubr.f32.mxu0 0.0
    %210 = vmatmul.mubr.f32.gmra.mxu0 %v138
    %v211 = vpop.f32.mrf.mxu0
    %v212 = vadd.f32 %v132, %v211
    %v213 = vpop.f32.mrf.mxu0
    %214 = vdwg.mxu0
    %v215 = vld [vmem:[%s1] sm:$0xff]
    %v216 = vld [vmem:[%s1 + $0x8] sm:$0xff]
    %v217 = vld [vmem:[#allocation2 + $0x50] sm:$0xff]
    %v218 = vld [vmem:[#allocation2 + $0x58] sm:$0x1]
    %v219 = vld [vmem:[#allocation2 + $0x70] sm:$0x1]
    %v220 = vlaneseq
    %v221 = vshrl.u32 %v220, 7
    %v222 = vsub.s32 0, %v221
    %v223 = vrot.slane %v219, %v222
    %vm224 = vcmask 72704
    %v226 = vsel %vm224, %v215, 0
    %v229 = vsel %vm224, %v216, 0
    %vm231 = vcmask 1040384
    %v233 = vsel %vm231, %v218, 0
    %235 = vmatprep.subr.mxu0 0.0
    %236 = vmatpush1.msra.mxu0 0.0
    %237 = vmatprep.subr.mxu0 0.0
    %238 = vmatpush1.msra.mxu0 0.0
    %239 = vmatprep.subr.mxu0 0.0
    %240 = vmatpush1.msra.mxu0 0.0
    %241 = vmatprep.subr.mxu0 0.0
    %242 = vmatpush1.msra.mxu0 0.0
    %243 = vmatprep.subr.mxu0 0.0
    %244 = vmatpush1.msra.mxu0 0.0
    %245 = vmatprep.subr.mxu0 0.0
    %246 = vmatpush1.msra.mxu0 0.0
    %247 = vmatprep.subr.mxu0 0.0
    %248 = vmatpush1.msra.mxu0 0.0
    %249 = vmatprep.subr.mxu0 0.0
    %250 = vmatpush1.msra.mxu0 0.0
    %251 = vmatprep.subr.mxu0 0.0
    %252 = vmatpush1.msra.mxu0 0.0
    %253 = vmatprep.subr.mxu0 0.0
    %254 = vmatpush1.msra.mxu0 0.0
    %255 = vmatprep.subr.mxu0 0.0
    %256 = vmatpush1.msra.mxu0 0.0
    %257 = vmatprep.subr.mxu0 0.0
    %258 = vmatpush1.msra.mxu0 0.0
    %259 = vmatprep.subr.mxu0 0.0
    %260 = vmatpush1.msra.mxu0 0.0
    %261 = vmatprep.subr.mxu0 0.0
    %262 = vmatpush1.msra.mxu0 0.0
    %263 = vmatprep.subr.mxu0 0.0
    %264 = vmatpush1.msra.mxu0 %v233
    %265 = vmatprep.subr.mxu0 0.0
    %266 = vmatpush1.msra.mxu0 %v217
    %267 = vmatprep.subr.mxu0 0.0
    %268 = vmatpush2.msra.mxu0 0.0
    %269 = vmatprep.subr.mxu0 0.0
    %270 = vmatpush2.msra.mxu0 0.0
    %271 = vmatprep.subr.mxu0 0.0
    %272 = vmatpush2.msra.mxu0 0.0
    %273 = vmatprep.subr.mxu0 0.0
    %274 = vmatpush2.msra.mxu0 0.0
    %275 = vmatprep.subr.mxu0 0.0
    %276 = vmatpush2.msra.mxu0 0.0
    %277 = vmatprep.subr.mxu0 0.0
    %278 = vmatpush2.msra.mxu0 0.0
    %279 = vmatprep.subr.mxu0 0.0
    %280 = vmatpush2.msra.mxu0 0.0
    %281 = vmatprep.subr.mxu0 0.0
    %282 = vmatpush2.msra.mxu0 0.0
    %283 = vmatprep.subr.mxu0 0.0
    %284 = vmatpush2.msra.mxu0 0.0
    %285 = vmatprep.subr.mxu0 0.0
    %286 = vmatpush2.msra.mxu0 0.0
    %287 = vmatprep.subr.mxu0 0.0
    %288 = vmatpush2.msra.mxu0 0.0
    %289 = vmatprep.subr.mxu0 0.0
    %290 = vmatpush2.msra.mxu0 0.0
    %291 = vmatprep.subr.mxu0 0.0
    %292 = vmatpush2.msra.mxu0 0.0
    %293 = vmatprep.subr.mxu0 0.0
    %294 = vmatpush2.msra.mxu0 0.0
    %295 = vmatprep.subr.mxu0 0.0
    %296 = vmatpush2.msra.mxu0 0.0
    %297 = vmatprep.subr.mxu0 0.0
    %298 = vmatpush2.msra.mxu0 0.0
    %299 = vmatprep.mubr.f32.mxu0 0.0
    %300 = vmatmul.mubr.f32.gmra.mxu0 %v226
    %v301 = vpop.f32.mrf.mxu0
    %v302 = vadd.f32 %v223, %v301
    %v303 = vpop.f32.mrf.mxu0
    %304 = vmatprep.mubr.f32.mxu0 0.0
    %305 = vmatmul.mubr.f32.gmra.mxu0 %v229
    %v306 = vpop.f32.mrf.mxu0
    %v307 = vadd.f32 %v223, %v306
    %v308 = vpop.f32.mrf.mxu0
    %309 = vdwg.mxu0
    %v310 = vmax.f32 %v302, 0.0
    %v311 = vmax.f32 %v307, 0.0
    %v312 = vld [vmem:[#allocation2 + $0x78] sm:$0xff]
    %v313 = vld [vmem:[#allocation2 + $0x80] sm:$0xff]
    %v314 = vld [vmem:[#allocation2 + $0x88] sm:$0xff]
    %v315 = vld [vmem:[#allocation2 + $0x90] sm:$0xff]
    %v316 = vld [vmem:[#allocation2 + $0x98] sm:$0x1]
    %v317 = vlaneseq
    %v318 = vshrl.u32 %v317, 7
    %v319 = vsub.s32 0, %v318
    %v320 = vrot.slane %v316, %v319
    %v322 = vsel %vm133, %v310, 0
    %v325 = vsel %vm133, %v311, 0
    %327 = vmatprep.subr.mxu0 0.0
    %328 = vmatpush1.msra.mxu0 0.0
    %329 = vmatprep.subr.mxu0 0.0
    %330 = vmatpush1.msra.mxu0 0.0
    %331 = vmatprep.subr.mxu0 0.0
    %332 = vmatpush1.msra.mxu0 0.0
    %333 = vmatprep.subr.mxu0 0.0
    %334 = vmatpush1.msra.mxu0 0.0
    %335 = vmatprep.subr.mxu0 0.0
    %336 = vmatpush1.msra.mxu0 0.0
    %337 = vmatprep.subr.mxu0 0.0
    %338 = vmatpush1.msra.mxu0 0.0
    %339 = vmatprep.subr.mxu0 0.0
    %340 = vmatpush1.msra.mxu0 0.0
    %341 = vmatprep.subr.mxu0 0.0
    %342 = vmatpush1.msra.mxu0 0.0
    %343 = vmatprep.subr.mxu0 0.0
    %344 = vmatpush1.msra.mxu0 0.0
    %345 = vmatprep.subr.mxu0 0.0
    %346 = vmatpush1.msra.mxu0 0.0
    %347 = vmatprep.subr.mxu0 0.0
    %348 = vmatpush1.msra.mxu0 0.0
    %349 = vmatprep.subr.mxu0 0.0
    %350 = vmatpush1.msra.mxu0 0.0
    %351 = vmatprep.subr.mxu0 0.0
    %352 = vmatpush1.msra.mxu0 %v315
    %353 = vmatprep.subr.mxu0 0.0
    %354 = vmatpush1.msra.mxu0 %v314
    %355 = vmatprep.subr.mxu0 0.0
    %356 = vmatpush1.msra.mxu0 %v313
    %357 = vmatprep.subr.mxu0 0.0
    %358 = vmatpush1.msra.mxu0 %v312
    %359 = vmatprep.subr.mxu0 0.0
    %360 = vmatpush2.msra.mxu0 0.0
    %361 = vmatprep.subr.mxu0 0.0
    %362 = vmatpush2.msra.mxu0 0.0
    %363 = vmatprep.subr.mxu0 0.0
    %364 = vmatpush2.msra.mxu0 0.0
    %365 = vmatprep.subr.mxu0 0.0
    %366 = vmatpush2.msra.mxu0 0.0
    %367 = vmatprep.subr.mxu0 0.0
    %368 = vmatpush2.msra.mxu0 0.0
    %369 = vmatprep.subr.mxu0 0.0
    %370 = vmatpush2.msra.mxu0 0.0
    %371 = vmatprep.subr.mxu0 0.0
    %372 = vmatpush2.msra.mxu0 0.0
    %373 = vmatprep.subr.mxu0 0.0
    %374 = vmatpush2.msra.mxu0 0.0
    %375 = vmatprep.subr.mxu0 0.0
    %376 = vmatpush2.msra.mxu0 0.0
    %377 = vmatprep.subr.mxu0 0.0
    %378 = vmatpush2.msra.mxu0 0.0
    %379 = vmatprep.subr.mxu0 0.0
    %380 = vmatpush2.msra.mxu0 0.0
    %381 = vmatprep.subr.mxu0 0.0
    %382 = vmatpush2.msra.mxu0 0.0
    %383 = vmatprep.subr.mxu0 0.0
    %384 = vmatpush2.msra.mxu0 0.0
    %385 = vmatprep.subr.mxu0 0.0
    %386 = vmatpush2.msra.mxu0 0.0
    %387 = vmatprep.subr.mxu0 0.0
    %388 = vmatpush2.msra.mxu0 0.0
    %389 = vmatprep.subr.mxu0 0.0
    %390 = vmatpush2.msra.mxu0 0.0
    %391 = vmatprep.mubr.f32.mxu0 0.0
    %392 = vmatmul.mubr.f32.gmra.mxu0 %v322
    %v393 = vpop.f32.mrf.mxu0
    %v394 = vadd.f32 %v320, %v393
    %v395 = vpop.f32.mrf.mxu0
    %396 = vmatprep.mubr.f32.mxu0 0.0
    %397 = vmatmul.mubr.f32.gmra.mxu0 %v325
    %v398 = vpop.f32.mrf.mxu0
    %v399 = vadd.f32 %v320, %v398
    %v400 = vpop.f32.mrf.mxu0
    %401 = vdwg.mxu0
    %v402 = vld [vmem:[#allocation2 + $0x230] sm:$0xff]
    %v403 = vld [vmem:[#allocation2 + $0x238] sm:$0xff]
    %v404 = vld [vmem:[#allocation2 + $0x240] sm:$0xff]
    %v405 = vld [vmem:[#allocation2 + $0x248] sm:$0xff]
    %v406 = vld [vmem:[#allocation2 + $0x250] sm:$0x1]
    %v407 = vlaneseq
    %v408 = vshrl.u32 %v407, 7
    %v409 = vsub.s32 0, %v408
    %v410 = vrot.slane %v406, %v409
    %v412 = vsel %vm133, %v207, 0
    %v415 = vsel %vm133, %v212, 0
    %417 = vmatprep.subr.mxu0 0.0
    %418 = vmatpush1.msra.mxu0 0.0
    %419 = vmatprep.subr.mxu0 0.0
    %420 = vmatpush1.msra.mxu0 0.0
    %421 = vmatprep.subr.mxu0 0.0
    %422 = vmatpush1.msra.mxu0 0.0
    %423 = vmatprep.subr.mxu0 0.0
    %424 = vmatpush1.msra.mxu0 0.0
    %425 = vmatprep.subr.mxu0 0.0
    %426 = vmatpush1.msra.mxu0 0.0
    %427 = vmatprep.subr.mxu0 0.0
    %428 = vmatpush1.msra.mxu0 0.0
    %429 = vmatprep.subr.mxu0 0.0
    %430 = vmatpush1.msra.mxu0 0.0
    %431 = vmatprep.subr.mxu0 0.0
    %432 = vmatpush1.msra.mxu0 0.0
    %433 = vmatprep.subr.mxu0 0.0
    %434 = vmatpush1.msra.mxu0 0.0
    %435 = vmatprep.subr.mxu0 0.0
    %436 = vmatpush1.msra.mxu0 0.0
    %437 = vmatprep.subr.mxu0 0.0
    %438 = vmatpush1.msra.mxu0 0.0
    %439 = vmatprep.subr.mxu0 0.0
    %440 = vmatpush1.msra.mxu0 0.0
    %441 = vmatprep.subr.mxu0 0.0
    %442 = vmatpush1.msra.mxu0 %v405
    %443 = vmatprep.subr.mxu0 0.0
    %444 = vmatpush1.msra.mxu0 %v404
    %445 = vmatprep.subr.mxu0 0.0
    %446 = vmatpush1.msra.mxu0 %v403
    %447 = vmatprep.subr.mxu0 0.0
    %448 = vmatpush1.msra.mxu0 %v402
    %449 = vmatprep.subr.mxu0 0.0
    %450 = vmatpush2.msra.mxu0 0.0
    %451 = vmatprep.subr.mxu0 0.0
    %452 = vmatpush2.msra.mxu0 0.0
    %453 = vmatprep.subr.mxu0 0.0
    %454 = vmatpush2.msra.mxu0 0.0
    %455 = vmatprep.subr.mxu0 0.0
    %456 = vmatpush2.msra.mxu0 0.0
    %457 = vmatprep.subr.mxu0 0.0
    %458 = vmatpush2.msra.mxu0 0.0
    %459 = vmatprep.subr.mxu0 0.0
    %460 = vmatpush2.msra.mxu0 0.0
    %461 = vmatprep.subr.mxu0 0.0
    %462 = vmatpush2.msra.mxu0 0.0
    %463 = vmatprep.subr.mxu0 0.0
    %464 = vmatpush2.msra.mxu0 0.0
    %465 = vmatprep.subr.mxu0 0.0
    %466 = vmatpush2.msra.mxu0 0.0
    %467 = vmatprep.subr.mxu0 0.0
    %468 = vmatpush2.msra.mxu0 0.0
    %469 = vmatprep.subr.mxu0 0.0
    %470 = vmatpush2.msra.mxu0 0.0
    %471 = vmatprep.subr.mxu0 0.0
    %472 = vmatpush2.msra.mxu0 0.0
    %473 = vmatprep.subr.mxu0 0.0
    %474 = vmatpush2.msra.mxu0 0.0
    %475 = vmatprep.subr.mxu0 0.0
    %476 = vmatpush2.msra.mxu0 0.0
    %477 = vmatprep.subr.mxu0 0.0
    %478 = vmatpush2.msra.mxu0 0.0
    %479 = vmatprep.subr.mxu0 0.0
    %480 = vmatpush2.msra.mxu0 0.0
    %481 = vmatprep.mubr.f32.mxu0 0.0
    %482 = vmatmul.mubr.f32.gmra.mxu0 %v412
    %v483 = vpop.f32.mrf.mxu0
    %v484 = vadd.f32 %v410, %v483
    %v485 = vpop.f32.mrf.mxu0
    %486 = vmatprep.mubr.f32.mxu0 0.0
    %487 = vmatmul.mubr.f32.gmra.mxu0 %v415
    %v488 = vpop.f32.mrf.mxu0
    %v489 = vadd.f32 %v410, %v488
    %v490 = vpop.f32.mrf.mxu0
    %491 = vdwg.mxu0
    %v492 = vlaneseq
    %v493 = vshrl.u32 %v492, 7
    %v494 = vadd.s32 %v493, 8
    %v495 = vlaneseq
    %v496 = vand.u32 %v495, 127
    %vm497 = vcmp.ge.s32.totalorder %v493, 0
    %vm498 = vcmp.ge.s32.totalorder %v494, 0
    %vm499 = vcmp.lt.s32.totalorder %v493, 8
    %vm500 = vcmp.lt.s32.totalorder %v494, 8
    %vm501 = vmand %vm497, %vm499
    %vm502 = vmand %vm498, %vm500
    %vm503 = vcmp.ge.s32.totalorder %v496, 0
    %vm504 = vmand %vm501, %vm503
    %vm505 = vmand %vm502, %vm503
    %vm506 = vcmp.lt.s32.totalorder %v496, 8
    %vm507 = vmand %vm504, %vm506
    %vm508 = vmand %vm505, %vm506
    %vm509 = vcmp.ge.s32.totalorder %v493, 8
    %vm510 = vcmp.ge.s32.totalorder %v494, 8
    %vm511 = vcmp.lt.s32.totalorder %v493, 16
    %vm512 = vcmp.lt.s32.totalorder %v494, 16
    %vm513 = vmand %vm509, %vm511
    %vm514 = vmand %vm510, %vm512
    %vm515 = vcmp.ge.s32.totalorder %v496, 8
    %vm516 = vmand %vm513, %vm515
    %vm517 = vmand %vm514, %vm515
    %vm518 = vcmp.lt.s32.totalorder %v496, 16
    %vm519 = vmand %vm516, %vm518
    %vm520 = vmand %vm517, %vm518
    %vm521 = vmor %vm507, %vm519
    %vm522 = vmor %vm508, %vm520
    %v523 = vsel %vm521, 0.0, -1e+30
    %v524 = vsel %vm522, 0.0, -1e+30
    %527 = vrot.lane.b32.xlu0 %v484, 118
    %v528 = vpop.permute.xlu0 %527
    %529 = vrot.lane.b32.xlu0 %v489, 118
    %v530 = vpop.permute.xlu0 %529
    %vm531 = vcmask 39936
    %v532 = vsel %vm531, %v484, 0
    %v534 = vsel %vm531, %v489, 0
    %v536 = vsel %vm531, %v528, 0
    %v538 = vsel %vm531, %v530, 0
    %540 = vmatprep.subr.mxu0 0.0
    %541 = vmatpush1.xpose.msra.mxu0 0.0
    %542 = vmatprep.subr.mxu0 0.0
    %543 = vmatpush1.xpose.msra.mxu0 0.0
    %544 = vmatprep.subr.mxu0 0.0
    %545 = vmatpush1.xpose.msra.mxu0 0.0
    %546 = vmatprep.subr.mxu0 0.0
    %547 = vmatpush1.xpose.msra.mxu0 0.0
    %548 = vmatprep.subr.mxu0 0.0
    %549 = vmatpush1.xpose.msra.mxu0 0.0
    %550 = vmatprep.subr.mxu0 0.0
    %551 = vmatpush1.xpose.msra.mxu0 0.0
    %552 = vmatprep.subr.mxu0 0.0
    %553 = vmatpush1.xpose.msra.mxu0 0.0
    %554 = vmatprep.subr.mxu0 0.0
    %555 = vmatpush1.xpose.msra.mxu0 0.0
    %556 = vmatprep.subr.mxu0 0.0
    %557 = vmatpush1.xpose.msra.mxu0 0.0
    %558 = vmatprep.subr.mxu0 0.0
    %559 = vmatpush1.xpose.msra.mxu0 0.0
    %560 = vmatprep.subr.mxu0 0.0
    %561 = vmatpush1.xpose.msra.mxu0 0.0
    %562 = vmatprep.subr.mxu0 0.0
    %563 = vmatpush1.xpose.msra.mxu0 0.0
    %564 = vmatprep.subr.mxu0 0.0
    %565 = vmatpush1.xpose.msra.mxu0 0.0
    %566 = vmatprep.subr.mxu0 0.0
    %567 = vmatpush1.xpose.msra.mxu0 0.0
    %568 = vmatprep.subr.mxu0 0.0
    %569 = vmatpush1.xpose.msra.mxu0 %v538
    %570 = vmatprep.subr.mxu0 0.0
    %571 = vmatpush1.xpose.msra.mxu0 %v536
    %572 = vmatprep.subr.mxu0 0.0
    %573 = vmatpush2.xpose.msra.mxu0 0.0
    %574 = vmatprep.subr.mxu0 0.0
    %575 = vmatpush2.xpose.msra.mxu0 0.0
    %576 = vmatprep.subr.mxu0 0.0
    %577 = vmatpush2.xpose.msra.mxu0 0.0
    %578 = vmatprep.subr.mxu0 0.0
    %579 = vmatpush2.xpose.msra.mxu0 0.0
    %580 = vmatprep.subr.mxu0 0.0
    %581 = vmatpush2.xpose.msra.mxu0 0.0
    %582 = vmatprep.subr.mxu0 0.0
    %583 = vmatpush2.xpose.msra.mxu0 0.0
    %584 = vmatprep.subr.mxu0 0.0
    %585 = vmatpush2.xpose.msra.mxu0 0.0
    %586 = vmatprep.subr.mxu0 0.0
    %587 = vmatpush2.xpose.msra.mxu0 0.0
    %588 = vmatprep.subr.mxu0 0.0
    %589 = vmatpush2.xpose.msra.mxu0 0.0
    %590 = vmatprep.subr.mxu0 0.0
    %591 = vmatpush2.xpose.msra.mxu0 0.0
    %592 = vmatprep.subr.mxu0 0.0
    %593 = vmatpush2.xpose.msra.mxu0 0.0
    %594 = vmatprep.subr.mxu0 0.0
    %595 = vmatpush2.xpose.msra.mxu0 0.0
    %596 = vmatprep.subr.mxu0 0.0
    %597 = vmatpush2.xpose.msra.mxu0 0.0
    %598 = vmatprep.subr.mxu0 0.0
    %599 = vmatpush2.xpose.msra.mxu0 0.0
    %600 = vmatprep.subr.mxu0 0.0
    %601 = vmatpush2.xpose.msra.mxu0 0.0
    %602 = vmatprep.subr.mxu0 0.0
    %603 = vmatpush2.xpose.msra.mxu0 0.0
    %604 = vmatprep.mubr.f32.mxu0 0.0
    %605 = vmatmul.mubr.f32.gmra.mxu0 %v532
    %v606 = vpop.f32.mrf.mxu0
    %v607 = vadd.f32 0.0, %v606
    %v608 = vpop.f32.mrf.mxu0
    %609 = vmatprep.mubr.f32.mxu0 0.0
    %610 = vmatmul.mubr.f32.gmra.mxu0 %v534
    %v611 = vpop.f32.mrf.mxu0
    %v612 = vadd.f32 0.0, %v611
    %v613 = vpop.f32.mrf.mxu0
    %614 = vdwg.mxu0
    %v615 = vmul.f32 %v607, 0.4472136
    %v616 = vmul.f32 %v612, 0.4472136
    %v617 = vadd.f32 %v615, %v523
    %v618 = vadd.f32 %v616, %v524
    %vm619 = vcmask 130048
    %v620 = vsel %vm619, %v617, -inf
    %621 = vmax.xlane.f32.xlu0 %v620
    %v622 = vpop.xlane.xlu0 %621
    %v623 = vsel %vm619, %v618, -inf
    %624 = vmax.xlane.f32.xlu0 %v623
    %v625 = vpop.xlane.xlu0 %624
    %v626 = vsub.f32 %v617, %v622
    %v627 = vsub.f32 %v618, %v625
    %v628 = vmul.f32 %v626, 1.442695
    %v629 = vpow.pop %v628
    %v630 = vmul.f32 %v627, 1.442695
    %v631 = vpow.pop %v630
    %v632 = vsel %vm619, %v629, 0.0
    %633 = vadd.xlane.f32.xlu0 %v632
    %v634 = vpop.xlane.xlu0 %633
    %v635 = vsel %vm619, %v631, 0.0
    %636 = vadd.xlane.f32.xlu0 %v635
    %v637 = vpop.xlane.xlu0 %636
    %v638 = vrcp.pop %v634
    %v639 = vmul.f32 %v629, %v638
    %v640 = vrcp.pop %v637
    %v641 = vmul.f32 %v631, %v640
    %642 = vrot.lane.b32.xlu0 %v484, 108
    %v643 = vpop.permute.xlu0 %642
    %644 = vrot.lane.b32.xlu0 %v489, 108
    %v645 = vpop.permute.xlu0 %644
    %v649 = vsel %vm619, %v639, 0
    %v652 = vsel %vm619, %v641, 0
    %654 = vmatprep.subr.mxu0 0.0
    %655 = vmatpush1.msra.mxu0 0.0
    %656 = vmatprep.subr.mxu0 0.0
    %657 = vmatpush1.msra.mxu0 0.0
    %658 = vmatprep.subr.mxu0 0.0
    %659 = vmatpush1.msra.mxu0 0.0
    %660 = vmatprep.subr.mxu0 0.0
    %661 = vmatpush1.msra.mxu0 0.0
    %662 = vmatprep.subr.mxu0 0.0
    %663 = vmatpush1.msra.mxu0 0.0
    %664 = vmatprep.subr.mxu0 0.0
    %665 = vmatpush1.msra.mxu0 0.0
    %666 = vmatprep.subr.mxu0 0.0
    %667 = vmatpush1.msra.mxu0 0.0
    %668 = vmatprep.subr.mxu0 0.0
    %669 = vmatpush1.msra.mxu0 0.0
    %670 = vmatprep.subr.mxu0 0.0
    %671 = vmatpush1.msra.mxu0 0.0
    %672 = vmatprep.subr.mxu0 0.0
    %673 = vmatpush1.msra.mxu0 0.0
    %674 = vmatprep.subr.mxu0 0.0
    %675 = vmatpush1.msra.mxu0 0.0
    %676 = vmatprep.subr.mxu0 0.0
    %677 = vmatpush1.msra.mxu0 0.0
    %678 = vmatprep.subr.mxu0 0.0
    %679 = vmatpush1.msra.mxu0 0.0
    %680 = vmatprep.subr.mxu0 0.0
    %681 = vmatpush1.msra.mxu0 0.0
    %682 = vmatprep.subr.mxu0 0.0
    %683 = vmatpush1.msra.mxu0 %v645
    %684 = vmatprep.subr.mxu0 0.0
    %685 = vmatpush1.msra.mxu0 %v643
    %686 = vmatprep.subr.mxu0 0.0
    %687 = vmatpush2.msra.mxu0 0.0
    %688 = vmatprep.subr.mxu0 0.0
    %689 = vmatpush2.msra.mxu0 0.0
    %690 = vmatprep.subr.mxu0 0.0
    %691 = vmatpush2.msra.mxu0 0.0
    %692 = vmatprep.subr.mxu0 0.0
    %693 = vmatpush2.msra.mxu0 0.0
    %694 = vmatprep.subr.mxu0 0.0
    %695 = vmatpush2.msra.mxu0 0.0
    %696 = vmatprep.subr.mxu0 0.0
    %697 = vmatpush2.msra.mxu0 0.0
    %698 = vmatprep.subr.mxu0 0.0
    %699 = vmatpush2.msra.mxu0 0.0
    %700 = vmatprep.subr.mxu0 0.0
    %701 = vmatpush2.msra.mxu0 0.0
    %702 = vmatprep.subr.mxu0 0.0
    %703 = vmatpush2.msra.mxu0 0.0
    %704 = vmatprep.subr.mxu0 0.0
    %705 = vmatpush2.msra.mxu0 0.0
    %706 = vmatprep.subr.mxu0 0.0
    %707 = vmatpush2.msra.mxu0 0.0
    %708 = vmatprep.subr.mxu0 0.0
    %709 = vmatpush2.msra.mxu0 0.0
    %710 = vmatprep.subr.mxu0 0.0
    %711 = vmatpush2.msra.mxu0 0.0
    %712 = vmatprep.subr.mxu0 0.0
    %713 = vmatpush2.msra.mxu0 0.0
    %714 = vmatprep.subr.mxu0 0.0
    %715 = vmatpush2.msra.mxu0 0.0
    %716 = vmatprep.subr.mxu0 0.0
    %717 = vmatpush2.msra.mxu0 0.0
    %718 = vmatprep.mubr.f32.mxu0 0.0
    %719 = vmatmul.mubr.f32.gmra.mxu0 %v649
    %v720 = vpop.f32.mrf.mxu0
    %v721 = vadd.f32 0.0, %v720
    %v722 = vpop.f32.mrf.mxu0
    %723 = vmatprep.mubr.f32.mxu0 0.0
    %724 = vmatmul.mubr.f32.gmra.mxu0 %v652
    %v725 = vpop.f32.mrf.mxu0
    %v726 = vadd.f32 0.0, %v725
    %v727 = vpop.f32.mrf.mxu0
    %728 = vdwg.mxu0
    %729 = vrot.lane.b32.xlu0 %v484, 123
    %v730 = vpop.permute.xlu0 %729
    %731 = vrot.lane.b32.xlu0 %v489, 123
    %v732 = vpop.permute.xlu0 %731
    %733 = vrot.lane.b32.xlu0 %v484, 113
    %v734 = vpop.permute.xlu0 %733
    %735 = vrot.lane.b32.xlu0 %v489, 113
    %v736 = vpop.permute.xlu0 %735
    %v737 = vsel %vm531, %v730, 0
    %v739 = vsel %vm531, %v732, 0
    %v741 = vsel %vm531, %v734, 0
    %v743 = vsel %vm531, %v736, 0
    %745 = vmatprep.subr.mxu0 0.0
    %746 = vmatpush1.xpose.msra.mxu0 0.0
    %747 = vmatprep.subr.mxu0 0.0
    %748 = vmatpush1.xpose.msra.mxu0 0.0
    %749 = vmatprep.subr.mxu0 0.0
    %750 = vmatpush1.xpose.msra.mxu0 0.0
    %751 = vmatprep.subr.mxu0 0.0
    %752 = vmatpush1.xpose.msra.mxu0 0.0
    %753 = vmatprep.subr.mxu0 0.0
    %754 = vmatpush1.xpose.msra.mxu0 0.0
    %755 = vmatprep.subr.mxu0 0.0
    %756 = vmatpush1.xpose.msra.mxu0 0.0
    %757 = vmatprep.subr.mxu0 0.0
    %758 = vmatpush1.xpose.msra.mxu0 0.0
    %759 = vmatprep.subr.mxu0 0.0
    %760 = vmatpush1.xpose.msra.mxu0 0.0
    %761 = vmatprep.subr.mxu0 0.0
    %762 = vmatpush1.xpose.msra.mxu0 0.0
    %763 = vmatprep.subr.mxu0 0.0
    %764 = vmatpush1.xpose.msra.mxu0 0.0
    %765 = vmatprep.subr.mxu0 0.0
    %766 = vmatpush1.xpose.msra.mxu0 0.0
    %767 = vmatprep.subr.mxu0 0.0
    %768 = vmatpush1.xpose.msra.mxu0 0.0
    %769 = vmatprep.subr.mxu0 0.0
    %770 = vmatpush1.xpose.msra.mxu0 0.0
    %771 = vmatprep.subr.mxu0 0.0
    %772 = vmatpush1.xpose.msra.mxu0 0.0
    %773 = vmatprep.subr.mxu0 0.0
    %774 = vmatpush1.xpose.msra.mxu0 %v743
    %775 = vmatprep.subr.mxu0 0.0
    %776 = vmatpush1.xpose.msra.mxu0 %v741
    %777 = vmatprep.subr.mxu0 0.0
    %778 = vmatpush2.xpose.msra.mxu0 0.0
    %779 = vmatprep.subr.mxu0 0.0
    %780 = vmatpush2.xpose.msra.mxu0 0.0
    %781 = vmatprep.subr.mxu0 0.0
    %782 = vmatpush2.xpose.msra.mxu0 0.0
    %783 = vmatprep.subr.mxu0 0.0
    %784 = vmatpush2.xpose.msra.mxu0 0.0
    %785 = vmatprep.subr.mxu0 0.0
    %786 = vmatpush2.xpose.msra.mxu0 0.0
    %787 = vmatprep.subr.mxu0 0.0
    %788 = vmatpush2.xpose.msra.mxu0 0.0
    %789 = vmatprep.subr.mxu0 0.0
    %790 = vmatpush2.xpose.msra.mxu0 0.0
    %791 = vmatprep.subr.mxu0 0.0
    %792 = vmatpush2.xpose.msra.mxu0 0.0
    %793 = vmatprep.subr.mxu0 0.0
    %794 = vmatpush2.xpose.msra.mxu0 0.0
    %795 = vmatprep.subr.mxu0 0.0
    %796 = vmatpush2.xpose.msra.mxu0 0.0
    %797 = vmatprep.subr.mxu0 0.0
    %798 = vmatpush2.xpose.msra.mxu0 0.0
    %799 = vmatprep.subr.mxu0 0.0
    %800 = vmatpush2.xpose.msra.mxu0 0.0
    %801 = vmatprep.subr.mxu0 0.0
    %802 = vmatpush2.xpose.msra.mxu0 0.0
    %803 = vmatprep.subr.mxu0 0.0
    %804 = vmatpush2.xpose.msra.mxu0 0.0
    %805 = vmatprep.subr.mxu0 0.0
    %806 = vmatpush2.xpose.msra.mxu0 0.0
    %807 = vmatprep.subr.mxu0 0.0
    %808 = vmatpush2.xpose.msra.mxu0 0.0
    %809 = vmatprep.mubr.f32.mxu0 0.0
    %810 = vmatmul.mubr.f32.gmra.mxu0 %v737
    %v811 = vpop.f32.mrf.mxu0
    %v812 = vadd.f32 0.0, %v811
    %v813 = vpop.f32.mrf.mxu0
    %814 = vmatprep.mubr.f32.mxu0 0.0
    %815 = vmatmul.mubr.f32.gmra.mxu0 %v739
    %v816 = vpop.f32.mrf.mxu0
    %v817 = vadd.f32 0.0, %v816
    %v818 = vpop.f32.mrf.mxu0
    %819 = vdwg.mxu0
    %v820 = vmul.f32 %v812, 0.4472136
    %v821 = vmul.f32 %v817, 0.4472136
    %v822 = vadd.f32 %v820, %v523
    %v823 = vadd.f32 %v821, %v524
    %v824 = vsel %vm619, %v822, -inf
    %825 = vmax.xlane.f32.xlu0 %v824
    %v826 = vpop.xlane.xlu0 %825
    %v827 = vsel %vm619, %v823, -inf
    %828 = vmax.xlane.f32.xlu0 %v827
    %v829 = vpop.xlane.xlu0 %828
    %v830 = vsub.f32 %v822, %v826
    %v831 = vsub.f32 %v823, %v829
    %v832 = vmul.f32 %v830, 1.442695
    %v833 = vpow.pop %v832
    %v834 = vmul.f32 %v831, 1.442695
    %v835 = vpow.pop %v834
    %v836 = vsel %vm619, %v833, 0.0
    %837 = vadd.xlane.f32.xlu0 %v836
    %v838 = vpop.xlane.xlu0 %837
    %v839 = vsel %vm619, %v835, 0.0
    %840 = vadd.xlane.f32.xlu0 %v839
    %v841 = vpop.xlane.xlu0 %840
    %v842 = vrcp.pop %v838
    %v843 = vmul.f32 %v833, %v842
    %v844 = vrcp.pop %v841
    %v845 = vmul.f32 %v835, %v844
    %846 = vrot.lane.b32.xlu0 %v484, 103
    %v847 = vpop.permute.xlu0 %846
    %848 = vrot.lane.b32.xlu0 %v489, 103
    %v849 = vpop.permute.xlu0 %848
    %v853 = vsel %vm619, %v843, 0
    %v856 = vsel %vm619, %v845, 0
    %858 = vmatprep.subr.mxu0 0.0
    %859 = vmatpush1.msra.mxu0 0.0
    %860 = vmatprep.subr.mxu0 0.0
    %861 = vmatpush1.msra.mxu0 0.0
    %862 = vmatprep.subr.mxu0 0.0
    %863 = vmatpush1.msra.mxu0 0.0
    %864 = vmatprep.subr.mxu0 0.0
    %865 = vmatpush1.msra.mxu0 0.0
    %866 = vmatprep.subr.mxu0 0.0
    %867 = vmatpush1.msra.mxu0 0.0
    %868 = vmatprep.subr.mxu0 0.0
    %869 = vmatpush1.msra.mxu0 0.0
    %870 = vmatprep.subr.mxu0 0.0
    %871 = vmatpush1.msra.mxu0 0.0
    %872 = vmatprep.subr.mxu0 0.0
    %873 = vmatpush1.msra.mxu0 0.0
    %874 = vmatprep.subr.mxu0 0.0
    %875 = vmatpush1.msra.mxu0 0.0
    %876 = vmatprep.subr.mxu0 0.0
    %877 = vmatpush1.msra.mxu0 0.0
    %878 = vmatprep.subr.mxu0 0.0
    %879 = vmatpush1.msra.mxu0 0.0
    %880 = vmatprep.subr.mxu0 0.0
    %881 = vmatpush1.msra.mxu0 0.0
    %882 = vmatprep.subr.mxu0 0.0
    %883 = vmatpush1.msra.mxu0 0.0
    %884 = vmatprep.subr.mxu0 0.0
    %885 = vmatpush1.msra.mxu0 0.0
    %886 = vmatprep.subr.mxu0 0.0
    %887 = vmatpush1.msra.mxu0 %v849
    %888 = vmatprep.subr.mxu0 0.0
    %889 = vmatpush1.msra.mxu0 %v847
    %890 = vmatprep.subr.mxu0 0.0
    %891 = vmatpush2.msra.mxu0 0.0
    %892 = vmatprep.subr.mxu0 0.0
    %893 = vmatpush2.msra.mxu0 0.0
    %894 = vmatprep.subr.mxu0 0.0
    %895 = vmatpush2.msra.mxu0 0.0
    %896 = vmatprep.subr.mxu0 0.0
    %897 = vmatpush2.msra.mxu0 0.0
    %898 = vmatprep.subr.mxu0 0.0
    %899 = vmatpush2.msra.mxu0 0.0
    %900 = vmatprep.subr.mxu0 0.0
    %901 = vmatpush2.msra.mxu0 0.0
    %902 = vmatprep.subr.mxu0 0.0
    %903 = vmatpush2.msra.mxu0 0.0
    %904 = vmatprep.subr.mxu0 0.0
    %905 = vmatpush2.msra.mxu0 0.0
    %906 = vmatprep.subr.mxu0 0.0
    %907 = vmatpush2.msra.mxu0 0.0
    %908 = vmatprep.subr.mxu0 0.0
    %909 = vmatpush2.msra.mxu0 0.0
    %910 = vmatprep.subr.mxu0 0.0
    %911 = vmatpush2.msra.mxu0 0.0
    %912 = vmatprep.subr.mxu0 0.0
    %913 = vmatpush2.msra.mxu0 0.0
    %914 = vmatprep.subr.mxu0 0.0
    %915 = vmatpush2.msra.mxu0 0.0
    %916 = vmatprep.subr.mxu0 0.0
    %917 = vmatpush2.msra.mxu0 0.0
    %918 = vmatprep.subr.mxu0 0.0
    %919 = vmatpush2.msra.mxu0 0.0
    %920 = vmatprep.subr.mxu0 0.0
    %921 = vmatpush2.msra.mxu0 0.0
    %922 = vmatprep.mubr.f32.mxu0 0.0
    %923 = vmatmul.mubr.f32.gmra.mxu0 %v853
    %v924 = vpop.f32.mrf.mxu0
    %v925 = vadd.f32 0.0, %v924
    %v926 = vpop.f32.mrf.mxu0
    %927 = vmatprep.mubr.f32.mxu0 0.0
    %928 = vmatmul.mubr.f32.gmra.mxu0 %v856
    %v929 = vpop.f32.mrf.mxu0
    %v930 = vadd.f32 0.0, %v929
    %v931 = vpop.f32.mrf.mxu0
    %932 = vdwg.mxu0
    %935 = vrot.lane.b32.xlu0 %v925, 5
    %v936 = vpop.permute.xlu0 %935
    %937 = vrot.lane.b32.xlu0 %v930, 5
    %v938 = vpop.permute.xlu0 %937
    %v941 = vsel %vm531, %v721, %v936
    %v942 = vsel %vm531, %v726, %v938
    %v943 = vld [vmem:[#allocation2 + $0x258] sm:$0xff]
    %v944 = vld [vmem:[#allocation2 + $0x260] sm:$0x3]
    %v945 = vld [vmem:[#allocation2 + $0x278] sm:$0x1]
    %v946 = vlaneseq
    %v947 = vshrl.u32 %v946, 7
    %v948 = vsub.s32 0, %v947
    %v949 = vrot.slane %v945, %v948
    %vm950 = vcmask 80896
    %v952 = vsel %vm950, %v941, 0
    %v955 = vsel %vm950, %v942, 0
    %vm957 = vcmask 1041408
    %v959 = vsel %vm957, %v944, 0
    %961 = vmatprep.subr.mxu0 0.0
    %962 = vmatpush1.msra.mxu0 0.0
    %963 = vmatprep.subr.mxu0 0.0
    %964 = vmatpush1.msra.mxu0 0.0
    %965 = vmatprep.subr.mxu0 0.0
    %966 = vmatpush1.msra.mxu0 0.0
    %967 = vmatprep.subr.mxu0 0.0
    %968 = vmatpush1.msra.mxu0 0.0
    %969 = vmatprep.subr.mxu0 0.0
    %970 = vmatpush1.msra.mxu0 0.0
    %971 = vmatprep.subr.mxu0 0.0
    %972 = vmatpush1.msra.mxu0 0.0
    %973 = vmatprep.subr.mxu0 0.0
    %974 = vmatpush1.msra.mxu0 0.0
    %975 = vmatprep.subr.mxu0 0.0
    %976 = vmatpush1.msra.mxu0 0.0
    %977 = vmatprep.subr.mxu0 0.0
    %978 = vmatpush1.msra.mxu0 0.0
    %979 = vmatprep.subr.mxu0 0.0
    %980 = vmatpush1.msra.mxu0 0.0
    %981 = vmatprep.subr.mxu0 0.0
    %982 = vmatpush1.msra.mxu0 0.0
    %983 = vmatprep.subr.mxu0 0.0
    %984 = vmatpush1.msra.mxu0 0.0
    %985 = vmatprep.subr.mxu0 0.0
    %986 = vmatpush1.msra.mxu0 0.0
    %987 = vmatprep.subr.mxu0 0.0
    %988 = vmatpush1.msra.mxu0 0.0
    %989 = vmatprep.subr.mxu0 0.0
    %990 = vmatpush1.msra.mxu0 %v959
    %991 = vmatprep.subr.mxu0 0.0
    %992 = vmatpush1.msra.mxu0 %v943
    %993 = vmatprep.subr.mxu0 0.0
    %994 = vmatpush2.msra.mxu0 0.0
    %995 = vmatprep.subr.mxu0 0.0
    %996 = vmatpush2.msra.mxu0 0.0
    %997 = vmatprep.subr.mxu0 0.0
    %998 = vmatpush2.msra.mxu0 0.0
    %999 = vmatprep.subr.mxu0 0.0
    %1000 = vmatpush2.msra.mxu0 0.0
    %1001 = vmatprep.subr.mxu0 0.0
    %1002 = vmatpush2.msra.mxu0 0.0
    %1003 = vmatprep.subr.mxu0 0.0
    %1004 = vmatpush2.msra.mxu0 0.0
    %1005 = vmatprep.subr.mxu0 0.0
    %1006 = vmatpush2.msra.mxu0 0.0
    %1007 = vmatprep.subr.mxu0 0.0
    %1008 = vmatpush2.msra.mxu0 0.0
    %1009 = vmatprep.subr.mxu0 0.0
    %1010 = vmatpush2.msra.mxu0 0.0
    %1011 = vmatprep.subr.mxu0 0.0
    %1012 = vmatpush2.msra.mxu0 0.0
    %1013 = vmatprep.subr.mxu0 0.0
    %1014 = vmatpush2.msra.mxu0 0.0
    %1015 = vmatprep.subr.mxu0 0.0
    %1016 = vmatpush2.msra.mxu0 0.0
    %1017 = vmatprep.subr.mxu0 0.0
    %1018 = vmatpush2.msra.mxu0 0.0
    %1019 = vmatprep.subr.mxu0 0.0
    %1020 = vmatpush2.msra.mxu0 0.0
    %1021 = vmatprep.subr.mxu0 0.0
    %1022 = vmatpush2.msra.mxu0 0.0
    %1023 = vmatprep.subr.mxu0 0.0
    %1024 = vmatpush2.msra.mxu0 0.0
    %1025 = vmatprep.mubr.f32.mxu0 0.0
    %1026 = vmatmul.mubr.f32.gmra.mxu0 %v952
    %v1027 = vpop.f32.mrf.mxu0
    %v1028 = vadd.f32 %v949, %v1027
    %v1029 = vpop.f32.mrf.mxu0
    %1030 = vmatprep.mubr.f32.mxu0 0.0
    %1031 = vmatmul.mubr.f32.gmra.mxu0 %v955
    %v1032 = vpop.f32.mrf.mxu0
    %v1033 = vadd.f32 %v949, %v1032
    %v1034 = vpop.f32.mrf.mxu0
    %1035 = vdwg.mxu0
    %v1036 = vadd.f32 %v207, %v1028
    %v1037 = vadd.f32 %v212, %v1033
    %v1038 = vld [vmem:[#allocation2 + $0x2d0] sm:$0x1]
    %v1039 = vld [vmem:[#allocation2 + $0x2d1] sm:$0x1]
    %v1040 = vld [vmem:[#allocation2 + $0x2d2] sm:$0x1]
    %v1041 = vsel %vm133, %v1036, 0.0
    %1042 = vadd.xlane.f32.xlu0 %v1041
    %v1043 = vpop.xlane.xlu0 %1042
    %v1044 = vsel %vm133, %v1037, 0.0
    %1045 = vadd.xlane.f32.xlu0 %v1044
    %v1046 = vpop.xlane.xlu0 %1045
    %v1047 = vmul.f32 %v1043, 0.1
    %v1048 = vmul.f32 %v1046, 0.1
    %v1049 = vsub.f32 %v1036, %v1047
    %v1050 = vsub.f32 %v1037, %v1048
    %v1051 = vlaneseq
    %v1052 = vshrl.u32 %v1051, 7
    %v1053 = vsub.s32 0, %v1052
    %v1054 = vrot.slane %v1040, %v1053
    %v1055 = vmul.f32 %v1049, %v1054
    %v1056 = vmul.f32 %v1050, %v1054
    %v1057 = vmul.f32 %v1055, %v1055
    %v1058 = vmul.f32 %v1056, %v1056
    %v1059 = vsel %vm133, %v1057, 0.0
    %1060 = vadd.xlane.f32.xlu0 %v1059
    %v1061 = vpop.xlane.xlu0 %1060
    %v1062 = vsel %vm133, %v1058, 0.0
    %1063 = vadd.xlane.f32.xlu0 %v1062
    %v1064 = vpop.xlane.xlu0 %1063
    %v1065 = vmul.f32 %v1061, 0.1
    %v1066 = vmul.f32 %v1064, 0.1
    %v1067 = vadd.f32 %v1065, 1e-05
    %v1068 = vadd.f32 %v1066, 1e-05
    %v1069 = vrsqrt.pop %v1067
    %v1070 = vrsqrt.pop %v1068
    %v1071 = vmul.f32 %v1055, %v1069
    %v1072 = vmul.f32 %v1056, %v1070
    %v1073 = vlaneseq
    %v1074 = vshrl.u32 %v1073, 7
    %v1075 = vsub.s32 0, %v1074
    %v1076 = vrot.slane %v1038, %v1075
    %v1077 = vmul.f32 %v1071, %v1076
    %v1078 = vmul.f32 %v1072, %v1076
    %v1079 = vlaneseq
    %v1080 = vshrl.u32 %v1079, 7
    %v1081 = vsub.s32 0, %v1080
    %v1082 = vrot.slane %v1039, %v1081
    %v1083 = vadd.f32 %v1077, %v1082
    %v1084 = vadd.f32 %v1078, %v1082
    %v1085 = vld [vmem:[#allocation2 + $0x280] sm:$0xff]
    %v1086 = vld [vmem:[#allocation2 + $0x288] sm:$0xff]
    %v1087 = vld [vmem:[#allocation2 + $0x290] sm:$0xff]
    %v1088 = vld [vmem:[#allocation2 + $0x298] sm:$0xff]
    %v1089 = vld [vmem:[#allocation2 + $0x2a0] sm:$0x1]
    %v1090 = vlaneseq
    %v1091 = vshrl.u32 %v1090, 7
    %v1092 = vsub.s32 0, %v1091
    %v1093 = vrot.slane %v1089, %v1092
    %v1095 = vsel %vm133, %v1083, 0
    %v1098 = vsel %vm133, %v1084, 0
    %1100 = vmatprep.subr.mxu0 0.0
    %1101 = vmatpush1.msra.mxu0 0.0
    %1102 = vmatprep.subr.mxu0 0.0
    %1103 = vmatpush1.msra.mxu0 0.0
    %1104 = vmatprep.subr.mxu0 0.0
    %1105 = vmatpush1.msra.mxu0 0.0
    %1106 = vmatprep.subr.mxu0 0.0
    %1107 = vmatpush1.msra.mxu0 0.0
    %1108 = vmatprep.subr.mxu0 0.0
    %1109 = vmatpush1.msra.mxu0 0.0
    %1110 = vmatprep.subr.mxu0 0.0
    %1111 = vmatpush1.msra.mxu0 0.0
    %1112 = vmatprep.subr.mxu0 0.0
    %1113 = vmatpush1.msra.mxu0 0.0
    %1114 = vmatprep.subr.mxu0 0.0
    %1115 = vmatpush1.msra.mxu0 0.0
    %1116 = vmatprep.subr.mxu0 0.0
    %1117 = vmatpush1.msra.mxu0 0.0
    %1118 = vmatprep.subr.mxu0 0.0
    %1119 = vmatpush1.msra.mxu0 0.0
    %1120 = vmatprep.subr.mxu0 0.0
    %1121 = vmatpush1.msra.mxu0 0.0
    %1122 = vmatprep.subr.mxu0 0.0
    %1123 = vmatpush1.msra.mxu0 0.0
    %1124 = vmatprep.subr.mxu0 0.0
    %1125 = vmatpush1.msra.mxu0 %v1088
    %1126 = vmatprep.subr.mxu0 0.0
    %1127 = vmatpush1.msra.mxu0 %v1087
    %1128 = vmatprep.subr.mxu0 0.0
    %1129 = vmatpush1.msra.mxu0 %v1086
    %1130 = vmatprep.subr.mxu0 0.0
    %1131 = vmatpush1.msra.mxu0 %v1085
    %1132 = vmatprep.subr.mxu0 0.0
    %1133 = vmatpush2.msra.mxu0 0.0
    %1134 = vmatprep.subr.mxu0 0.0
    %1135 = vmatpush2.msra.mxu0 0.0
    %1136 = vmatprep.subr.mxu0 0.0
    %1137 = vmatpush2.msra.mxu0 0.0
    %1138 = vmatprep.subr.mxu0 0.0
    %1139 = vmatpush2.msra.mxu0 0.0
    %1140 = vmatprep.subr.mxu0 0.0
    %1141 = vmatpush2.msra.mxu0 0.0
    %1142 = vmatprep.subr.mxu0 0.0
    %1143 = vmatpush2.msra.mxu0 0.0
    %1144 = vmatprep.subr.mxu0 0.0
    %1145 = vmatpush2.msra.mxu0 0.0
    %1146 = vmatprep.subr.mxu0 0.0
    %1147 = vmatpush2.msra.mxu0 0.0
    %1148 = vmatprep.subr.mxu0 0.0
    %1149 = vmatpush2.msra.mxu0 0.0
    %1150 = vmatprep.subr.mxu0 0.0
    %1151 = vmatpush2.msra.mxu0 0.0
    %1152 = vmatprep.subr.mxu0 0.0
    %1153 = vmatpush2.msra.mxu0 0.0
    %1154 = vmatprep.subr.mxu0 0.0
    %1155 = vmatpush2.msra.mxu0 0.0
    %1156 = vmatprep.subr.mxu0 0.0
    %1157 = vmatpush2.msra.mxu0 0.0
    %1158 = vmatprep.subr.mxu0 0.0
    %1159 = vmatpush2.msra.mxu0 0.0
    %1160 = vmatprep.subr.mxu0 0.0
    %1161 = vmatpush2.msra.mxu0 0.0
    %1162 = vmatprep.subr.mxu0 0.0
    %1163 = vmatpush2.msra.mxu0 0.0
    %1164 = vmatprep.mubr.f32.mxu0 0.0
    %1165 = vmatmul.mubr.f32.gmra.mxu0 %v1095
    %v1166 = vpop.f32.mrf.mxu0
    %v1167 = vadd.f32 %v1093, %v1166
    %v1168 = vpop.f32.mrf.mxu0
    %1169 = vmatprep.mubr.f32.mxu0 0.0
    %1170 = vmatmul.mubr.f32.gmra.mxu0 %v1098
    %v1171 = vpop.f32.mrf.mxu0
    %v1172 = vadd.f32 %v1093, %v1171
    %v1173 = vpop.f32.mrf.mxu0
    %1174 = vdwg.mxu0
    %v1175 = vmax.f32 %v1167, 0.0
    %v1176 = vmax.f32 %v1172, 0.0
    %v1177 = vld [vmem:[#allocation2 + $0x2a8] sm:$0xff]
    %v1178 = vld [vmem:[#allocation2 + $0x2b0] sm:$0xff]
    %v1179 = vld [vmem:[#allocation2 + $0x2b8] sm:$0xff]
    %v1180 = vld [vmem:[#allocation2 + $0x2c0] sm:$0xff]
    %v1181 = vld [vmem:[#allocation2 + $0x2c8] sm:$0x1]
    %v1182 = vlaneseq
    %v1183 = vshrl.u32 %v1182, 7
    %v1184 = vsub.s32 0, %v1183
    %v1185 = vrot.slane %v1181, %v1184
    %v1187 = vsel %vm133, %v1175, 0
    %v1190 = vsel %vm133, %v1176, 0
    %1192 = vmatprep.subr.mxu0 0.0
    %1193 = vmatpush1.msra.mxu0 0.0
    %1194 = vmatprep.subr.mxu0 0.0
    %1195 = vmatpush1.msra.mxu0 0.0
    %1196 = vmatprep.subr.mxu0 0.0
    %1197 = vmatpush1.msra.mxu0 0.0
    %1198 = vmatprep.subr.mxu0 0.0
    %1199 = vmatpush1.msra.mxu0 0.0
    %1200 = vmatprep.subr.mxu0 0.0
    %1201 = vmatpush1.msra.mxu0 0.0
    %1202 = vmatprep.subr.mxu0 0.0
    %1203 = vmatpush1.msra.mxu0 0.0
    %1204 = vmatprep.subr.mxu0 0.0
    %1205 = vmatpush1.msra.mxu0 0.0
    %1206 = vmatprep.subr.mxu0 0.0
    %1207 = vmatpush1.msra.mxu0 0.0
    %1208 = vmatprep.subr.mxu0 0.0
    %1209 = vmatpush1.msra.mxu0 0.0
    %1210 = vmatprep.subr.mxu0 0.0
    %1211 = vmatpush1.msra.mxu0 0.0
    %1212 = vmatprep.subr.mxu0 0.0
    %1213 = vmatpush1.msra.mxu0 0.0
    %1214 = vmatprep.subr.mxu0 0.0
    %1215 = vmatpush1.msra.mxu0 0.0
    %1216 = vmatprep.subr.mxu0 0.0
    %1217 = vmatpush1.msra.mxu0 %v1180
    %1218 = vmatprep.subr.mxu0 0.0
    %1219 = vmatpush1.msra.mxu0 %v1179
    %1220 = vmatprep.subr.mxu0 0.0
    %1221 = vmatpush1.msra.mxu0 %v1178
    %1222 = vmatprep.subr.mxu0 0.0
    %1223 = vmatpush1.msra.mxu0 %v1177
    %1224 = vmatprep.subr.mxu0 0.0
    %1225 = vmatpush2.msra.mxu0 0.0
    %1226 = vmatprep.subr.mxu0 0.0
    %1227 = vmatpush2.msra.mxu0 0.0
    %1228 = vmatprep.subr.mxu0 0.0
    %1229 = vmatpush2.msra.mxu0 0.0
    %1230 = vmatprep.subr.mxu0 0.0
    %1231 = vmatpush2.msra.mxu0 0.0
    %1232 = vmatprep.subr.mxu0 0.0
    %1233 = vmatpush2.msra.mxu0 0.0
    %1234 = vmatprep.subr.mxu0 0.0
    %1235 = vmatpush2.msra.mxu0 0.0
    %1236 = vmatprep.subr.mxu0 0.0
    %1237 = vmatpush2.msra.mxu0 0.0
    %1238 = vmatprep.subr.mxu0 0.0
    %1239 = vmatpush2.msra.mxu0 0.0
    %1240 = vmatprep.subr.mxu0 0.0
    %1241 = vmatpush2.msra.mxu0 0.0
    %1242 = vmatprep.subr.mxu0 0.0
    %1243 = vmatpush2.msra.mxu0 0.0
    %1244 = vmatprep.subr.mxu0 0.0
    %1245 = vmatpush2.msra.mxu0 0.0
    %1246 = vmatprep.subr.mxu0 0.0
    %1247 = vmatpush2.msra.mxu0 0.0
    %1248 = vmatprep.subr.mxu0 0.0
    %1249 = vmatpush2.msra.mxu0 0.0
    %1250 = vmatprep.subr.mxu0 0.0
    %1251 = vmatpush2.msra.mxu0 0.0
    %1252 = vmatprep.subr.mxu0 0.0
    %1253 = vmatpush2.msra.mxu0 0.0
    %1254 = vmatprep.subr.mxu0 0.0
    %1255 = vmatpush2.msra.mxu0 0.0
    %1256 = vmatprep.mubr.f32.mxu0 0.0
    %1257 = vmatmul.mubr.f32.gmra.mxu0 %v1187
    %v1258 = vpop.f32.mrf.mxu0
    %v1259 = vadd.f32 %v1185, %v1258
    %v1260 = vpop.f32.mrf.mxu0
    %1261 = vmatprep.mubr.f32.mxu0 0.0
    %1262 = vmatmul.mubr.f32.gmra.mxu0 %v1190
    %v1263 = vpop.f32.mrf.mxu0
    %v1264 = vadd.f32 %v1185, %v1263
    %v1265 = vpop.f32.mrf.mxu0
    %1266 = vdwg.mxu0
    %v1267 = vadd.f32 %v1083, %v1259
    %v1268 = vadd.f32 %v1084, %v1264
    %v1269 = vld [vmem:[#allocation2 + $0x2d8] sm:$0x1]
    %v1270 = vld [vmem:[#allocation2 + $0x2d9] sm:$0x1]
    %v1271 = vld [vmem:[#allocation2 + $0x2da] sm:$0x1]
    %v1272 = vsel %vm133, %v1267, 0.0
    %1273 = vadd.xlane.f32.xlu0 %v1272
    %v1274 = vpop.xlane.xlu0 %1273
    %v1275 = vsel %vm133, %v1268, 0.0
    %1276 = vadd.xlane.f32.xlu0 %v1275
    %v1277 = vpop.xlane.xlu0 %1276
    %v1278 = vmul.f32 %v1274, 0.1
    %v1279 = vmul.f32 %v1277, 0.1
    %v1280 = vsub.f32 %v1267, %v1278
    %v1281 = vsub.f32 %v1268, %v1279
    %v1282 = vlaneseq
    %v1283 = vshrl.u32 %v1282, 7
    %v1284 = vsub.s32 0, %v1283
    %v1285 = vrot.slane %v1271, %v1284
    %v1286 = vmul.f32 %v1280, %v1285
    %v1287 = vmul.f32 %v1281, %v1285
    %v1288 = vmul.f32 %v1286, %v1286
    %v1289 = vmul.f32 %v1287, %v1287
    %v1290 = vsel %vm133, %v1288, 0.0
    %1291 = vadd.xlane.f32.xlu0 %v1290
    %v1292 = vpop.xlane.xlu0 %1291
    %v1293 = vsel %vm133, %v1289, 0.0
    %1294 = vadd.xlane.f32.xlu0 %v1293
    %v1295 = vpop.xlane.xlu0 %1294
    %v1296 = vmul.f32 %v1292, 0.1
    %v1297 = vmul.f32 %v1295, 0.1
    %v1298 = vadd.f32 %v1296, 1e-05
    %v1299 = vadd.f32 %v1297, 1e-05
    %v1300 = vrsqrt.pop %v1298
    %v1301 = vrsqrt.pop %v1299
    %v1302 = vmul.f32 %v1286, %v1300
    %v1303 = vmul.f32 %v1287, %v1301
    %v1304 = vlaneseq
    %v1305 = vshrl.u32 %v1304, 7
    %v1306 = vsub.s32 0, %v1305
    %v1307 = vrot.slane %v1269, %v1306
    %v1308 = vmul.f32 %v1302, %v1307
    %v1309 = vmul.f32 %v1303, %v1307
    %v1310 = vlaneseq
    %v1311 = vshrl.u32 %v1310, 7
    %v1312 = vsub.s32 0, %v1311
    %v1313 = vrot.slane %v1270, %v1312
    %v1314 = vadd.f32 %v1308, %v1313
    %v1315 = vadd.f32 %v1309, %v1313
    %v1316 = vld [vmem:[#allocation2 + $0x2e0] sm:$0xff]
    %v1317 = vld [vmem:[#allocation2 + $0x2e8] sm:$0xff]
    %v1318 = vld [vmem:[#allocation2 + $0x2f0] sm:$0xff]
    %v1319 = vld [vmem:[#allocation2 + $0x2f8] sm:$0xff]
    %v1320 = vld [vmem:[#allocation2 + $0x300] sm:$0x1]
    %v1321 = vlaneseq
    %v1322 = vshrl.u32 %v1321, 7
    %v1323 = vsub.s32 0, %v1322
    %v1324 = vrot.slane %v1320, %v1323
    %v1326 = vsel %vm133, %v1314, 0
    %v1329 = vsel %vm133, %v1315, 0
    %1331 = vmatprep.subr.mxu0 0.0
    %1332 = vmatpush1.msra.mxu0 0.0
    %1333 = vmatprep.subr.mxu0 0.0
    %1334 = vmatpush1.msra.mxu0 0.0
    %1335 = vmatprep.subr.mxu0 0.0
    %1336 = vmatpush1.msra.mxu0 0.0
    %1337 = vmatprep.subr.mxu0 0.0
    %1338 = vmatpush1.msra.mxu0 0.0
    %1339 = vmatprep.subr.mxu0 0.0
    %1340 = vmatpush1.msra.mxu0 0.0
    %1341 = vmatprep.subr.mxu0 0.0
    %1342 = vmatpush1.msra.mxu0 0.0
    %1343 = vmatprep.subr.mxu0 0.0
    %1344 = vmatpush1.msra.mxu0 0.0
    %1345 = vmatprep.subr.mxu0 0.0
    %1346 = vmatpush1.msra.mxu0 0.0
    %1347 = vmatprep.subr.mxu0 0.0
    %1348 = vmatpush1.msra.mxu0 0.0
    %1349 = vmatprep.subr.mxu0 0.0
    %1350 = vmatpush1.msra.mxu0 0.0
    %1351 = vmatprep.subr.mxu0 0.0
    %1352 = vmatpush1.msra.mxu0 0.0
    %1353 = vmatprep.subr.mxu0 0.0
    %1354 = vmatpush1.msra.mxu0 0.0
    %1355 = vmatprep.subr.mxu0 0.0
    %1356 = vmatpush1.msra.mxu0 %v1319
    %1357 = vmatprep.subr.mxu0 0.0
    %1358 = vmatpush1.msra.mxu0 %v1318
    %1359 = vmatprep.subr.mxu0 0.0
    %1360 = vmatpush1.msra.mxu0 %v1317
    %1361 = vmatprep.subr.mxu0 0.0
    %1362 = vmatpush1.msra.mxu0 %v1316
    %1363 = vmatprep.subr.mxu0 0.0
    %1364 = vmatpush2.msra.mxu0 0.0
    %1365 = vmatprep.subr.mxu0 0.0
    %1366 = vmatpush2.msra.mxu0 0.0
    %1367 = vmatprep.subr.mxu0 0.0
    %1368 = vmatpush2.msra.mxu0 0.0
    %1369 = vmatprep.subr.mxu0 0.0
    %1370 = vmatpush2.msra.mxu0 0.0
    %1371 = vmatprep.subr.mxu0 0.0
    %1372 = vmatpush2.msra.mxu0 0.0
    %1373 = vmatprep.subr.mxu0 0.0
    %1374 = vmatpush2.msra.mxu0 0.0
    %1375 = vmatprep.subr.mxu0 0.0
    %1376 = vmatpush2.msra.mxu0 0.0
    %1377 = vmatprep.subr.mxu0 0.0
    %1378 = vmatpush2.msra.mxu0 0.0
    %1379 = vmatprep.subr.mxu0 0.0
    %1380 = vmatpush2.msra.mxu0 0.0
    %1381 = vmatprep.subr.mxu0 0.0
    %1382 = vmatpush2.msra.mxu0 0.0
    %1383 = vmatprep.subr.mxu0 0.0
    %1384 = vmatpush2.msra.mxu0 0.0
    %1385 = vmatprep.subr.mxu0 0.0
    %1386 = vmatpush2.msra.mxu0 0.0
    %1387 = vmatprep.subr.mxu0 0.0
    %1388 = vmatpush2.msra.mxu0 0.0
    %1389 = vmatprep.subr.mxu0 0.0
    %1390 = vmatpush2.msra.mxu0 0.0
    %1391 = vmatprep.subr.mxu0 0.0
    %1392 = vmatpush2.msra.mxu0 0.0
    %1393 = vmatprep.subr.mxu0 0.0
    %1394 = vmatpush2.msra.mxu0 0.0
    %1395 = vmatprep.mubr.f32.mxu0 0.0
    %1396 = vmatmul.mubr.f32.gmra.mxu0 %v1326
    %v1397 = vpop.f32.mrf.mxu0
    %v1398 = vadd.f32 %v1324, %v1397
    %v1399 = vpop.f32.mrf.mxu0
    %1400 = vmatprep.mubr.f32.mxu0 0.0
    %1401 = vmatmul.mubr.f32.gmra.mxu0 %v1329
    %v1402 = vpop.f32.mrf.mxu0
    %v1403 = vadd.f32 %v1324, %v1402
    %v1404 = vpop.f32.mrf.mxu0
    %1405 = vdwg.mxu0
    %1408 = vrot.lane.b32.xlu0 %v1398, 118
    %v1409 = vpop.permute.xlu0 %1408
    %1410 = vrot.lane.b32.xlu0 %v1403, 118
    %v1411 = vpop.permute.xlu0 %1410
    %v1412 = vsel %vm531, %v1398, 0
    %v1414 = vsel %vm531, %v1403, 0
    %v1416 = vsel %vm531, %v1409, 0
    %v1418 = vsel %vm531, %v1411, 0
    %1420 = vmatprep.subr.mxu0 0.0
    %1421 = vmatpush1.xpose.msra.mxu0 0.0
    %1422 = vmatprep.subr.mxu0 0.0
    %1423 = vmatpush1.xpose.msra.mxu0 0.0
    %1424 = vmatprep.subr.mxu0 0.0
    %1425 = vmatpush1.xpose.msra.mxu0 0.0
    %1426 = vmatprep.subr.mxu0 0.0
    %1427 = vmatpush1.xpose.msra.mxu0 0.0
    %1428 = vmatprep.subr.mxu0 0.0
    %1429 = vmatpush1.xpose.msra.mxu0 0.0
    %1430 = vmatprep.subr.mxu0 0.0
    %1431 = vmatpush1.xpose.msra.mxu0 0.0
    %1432 = vmatprep.subr.mxu0 0.0
    %1433 = vmatpush1.xpose.msra.mxu0 0.0
    %1434 = vmatprep.subr.mxu0 0.0
    %1435 = vmatpush1.xpose.msra.mxu0 0.0
    %1436 = vmatprep.subr.mxu0 0.0
    %1437 = vmatpush1.xpose.msra.mxu0 0.0
    %1438 = vmatprep.subr.mxu0 0.0
    %1439 = vmatpush1.xpose.msra.mxu0 0.0
    %1440 = vmatprep.subr.mxu0 0.0
    %1441 = vmatpush1.xpose.msra.mxu0 0.0
    %1442 = vmatprep.subr.mxu0 0.0
    %1443 = vmatpush1.xpose.msra.mxu0 0.0
    %1444 = vmatprep.subr.mxu0 0.0
    %1445 = vmatpush1.xpose.msra.mxu0 0.0
    %1446 = vmatprep.subr.mxu0 0.0
    %1447 = vmatpush1.xpose.msra.mxu0 0.0
    %1448 = vmatprep.subr.mxu0 0.0
    %1449 = vmatpush1.xpose.msra.mxu0 %v1418
    %1450 = vmatprep.subr.mxu0 0.0
    %1451 = vmatpush1.xpose.msra.mxu0 %v1416
    %1452 = vmatprep.subr.mxu0 0.0
    %1453 = vmatpush2.xpose.msra.mxu0 0.0
    %1454 = vmatprep.subr.mxu0 0.0
    %1455 = vmatpush2.xpose.msra.mxu0 0.0
    %1456 = vmatprep.subr.mxu0 0.0
    %1457 = vmatpush2.xpose.msra.mxu0 0.0
    %1458 = vmatprep.subr.mxu0 0.0
    %1459 = vmatpush2.xpose.msra.mxu0 0.0
    %1460 = vmatprep.subr.mxu0 0.0
    %1461 = vmatpush2.xpose.msra.mxu0 0.0
    %1462 = vmatprep.subr.mxu0 0.0
    %1463 = vmatpush2.xpose.msra.mxu0 0.0
    %1464 = vmatprep.subr.mxu0 0.0
    %1465 = vmatpush2.xpose.msra.mxu0 0.0
    %1466 = vmatprep.subr.mxu0 0.0
    %1467 = vmatpush2.xpose.msra.mxu0 0.0
    %1468 = vmatprep.subr.mxu0 0.0
    %1469 = vmatpush2.xpose.msra.mxu0 0.0
    %1470 = vmatprep.subr.mxu0 0.0
    %1471 = vmatpush2.xpose.msra.mxu0 0.0
    %1472 = vmatprep.subr.mxu0 0.0
    %1473 = vmatpush2.xpose.msra.mxu0 0.0
    %1474 = vmatprep.subr.mxu0 0.0
    %1475 = vmatpush2.xpose.msra.mxu0 0.0
    %1476 = vmatprep.subr.mxu0 0.0
    %1477 = vmatpush2.xpose.msra.mxu0 0.0
    %1478 = vmatprep.subr.mxu0 0.0
    %1479 = vmatpush2.xpose.msra.mxu0 0.0
    %1480 = vmatprep.subr.mxu0 0.0
    %1481 = vmatpush2.xpose.msra.mxu0 0.0
    %1482 = vmatprep.subr.mxu0 0.0
    %1483 = vmatpush2.xpose.msra.mxu0 0.0
    %1484 = vmatprep.mubr.f32.mxu0 0.0
    %1485 = vmatmul.mubr.f32.gmra.mxu0 %v1412
    %v1486 = vpop.f32.mrf.mxu0
    %v1487 = vadd.f32 0.0, %v1486
    %v1488 = vpop.f32.mrf.mxu0
    %1489 = vmatprep.mubr.f32.mxu0 0.0
    %1490 = vmatmul.mubr.f32.gmra.mxu0 %v1414
    %v1491 = vpop.f32.mrf.mxu0
    %v1492 = vadd.f32 0.0, %v1491
    %v1493 = vpop.f32.mrf.mxu0
    %1494 = vdwg.mxu0
    %v1495 = vmul.f32 %v1487, 0.4472136
    %v1496 = vmul.f32 %v1492, 0.4472136
    %v1497 = vadd.f32 %v1495, %v523
    %v1498 = vadd.f32 %v1496, %v524
    %v1499 = vsel %vm619, %v1497, -inf
    %1500 = vmax.xlane.f32.xlu0 %v1499
    %v1501 = vpop.xlane.xlu0 %1500
    %v1502 = vsel %vm619, %v1498, -inf
    %1503 = vmax.xlane.f32.xlu0 %v1502
    %v1504 = vpop.xlane.xlu0 %1503
    %v1505 = vsub.f32 %v1497, %v1501
    %v1506 = vsub.f32 %v1498, %v1504
    %v1507 = vmul.f32 %v1505, 1.442695
    %v1508 = vpow.pop %v1507
    %v1509 = vmul.f32 %v1506, 1.442695
    %v1510 = vpow.pop %v1509
    %v1511 = vsel %vm619, %v1508, 0.0
    %1512 = vadd.xlane.f32.xlu0 %v1511
    %v1513 = vpop.xlane.xlu0 %1512
    %v1514 = vsel %vm619, %v1510, 0.0
    %1515 = vadd.xlane.f32.xlu0 %v1514
    %v1516 = vpop.xlane.xlu0 %1515
    %v1517 = vrcp.pop %v1513
    %v1518 = vmul.f32 %v1508, %v1517
    %v1519 = vrcp.pop %v1516
    %v1520 = vmul.f32 %v1510, %v1519
    %1521 = vrot.lane.b32.xlu0 %v1398, 108
    %v1522 = vpop.permute.xlu0 %1521
    %1523 = vrot.lane.b32.xlu0 %v1403, 108
    %v1524 = vpop.permute.xlu0 %1523
    %v1528 = vsel %vm619, %v1518, 0
    %v1531 = vsel %vm619, %v1520, 0
    %1533 = vmatprep.subr.mxu0 0.0
    %1534 = vmatpush1.msra.mxu0 0.0
    %1535 = vmatprep.subr.mxu0 0.0
    %1536 = vmatpush1.msra.mxu0 0.0
    %1537 = vmatprep.subr.mxu0 0.0
    %1538 = vmatpush1.msra.mxu0 0.0
    %1539 = vmatprep.subr.mxu0 0.0
    %1540 = vmatpush1.msra.mxu0 0.0
    %1541 = vmatprep.subr.mxu0 0.0
    %1542 = vmatpush1.msra.mxu0 0.0
    %1543 = vmatprep.subr.mxu0 0.0
    %1544 = vmatpush1.msra.mxu0 0.0
    %1545 = vmatprep.subr.mxu0 0.0
    %1546 = vmatpush1.msra.mxu0 0.0
    %1547 = vmatprep.subr.mxu0 0.0
    %1548 = vmatpush1.msra.mxu0 0.0
    %1549 = vmatprep.subr.mxu0 0.0
    %1550 = vmatpush1.msra.mxu0 0.0
    %1551 = vmatprep.subr.mxu0 0.0
    %1552 = vmatpush1.msra.mxu0 0.0
    %1553 = vmatprep.subr.mxu0 0.0
    %1554 = vmatpush1.msra.mxu0 0.0
    %1555 = vmatprep.subr.mxu0 0.0
    %1556 = vmatpush1.msra.mxu0 0.0
    %1557 = vmatprep.subr.mxu0 0.0
    %1558 = vmatpush1.msra.mxu0 0.0
    %1559 = vmatprep.subr.mxu0 0.0
    %1560 = vmatpush1.msra.mxu0 0.0
    %1561 = vmatprep.subr.mxu0 0.0
    %1562 = vmatpush1.msra.mxu0 %v1524
    %1563 = vmatprep.subr.mxu0 0.0
    %1564 = vmatpush1.msra.mxu0 %v1522
    %1565 = vmatprep.subr.mxu0 0.0
    %1566 = vmatpush2.msra.mxu0 0.0
    %1567 = vmatprep.subr.mxu0 0.0
    %1568 = vmatpush2.msra.mxu0 0.0
    %1569 = vmatprep.subr.mxu0 0.0
    %1570 = vmatpush2.msra.mxu0 0.0
    %1571 = vmatprep.subr.mxu0 0.0
    %1572 = vmatpush2.msra.mxu0 0.0
    %1573 = vmatprep.subr.mxu0 0.0
    %1574 = vmatpush2.msra.mxu0 0.0
    %1575 = vmatprep.subr.mxu0 0.0
    %1576 = vmatpush2.msra.mxu0 0.0
    %1577 = vmatprep.subr.mxu0 0.0
    %1578 = vmatpush2.msra.mxu0 0.0
    %1579 = vmatprep.subr.mxu0 0.0
    %1580 = vmatpush2.msra.mxu0 0.0
    %1581 = vmatprep.subr.mxu0 0.0
    %1582 = vmatpush2.msra.mxu0 0.0
    %1583 = vmatprep.subr.mxu0 0.0
    %1584 = vmatpush2.msra.mxu0 0.0
    %1585 = vmatprep.subr.mxu0 0.0
    %1586 = vmatpush2.msra.mxu0 0.0
    %1587 = vmatprep.subr.mxu0 0.0
    %1588 = vmatpush2.msra.mxu0 0.0
    %1589 = vmatprep.subr.mxu0 0.0
    %1590 = vmatpush2.msra.mxu0 0.0
    %1591 = vmatprep.subr.mxu0 0.0
    %1592 = vmatpush2.msra.mxu0 0.0
    %1593 = vmatprep.subr.mxu0 0.0
    %1594 = vmatpush2.msra.mxu0 0.0
    %1595 = vmatprep.subr.mxu0 0.0
    %1596 = vmatpush2.msra.mxu0 0.0
    %1597 = vmatprep.mubr.f32.mxu0 0.0
    %1598 = vmatmul.mubr.f32.gmra.mxu0 %v1528
    %v1599 = vpop.f32.mrf.mxu0
    %v1600 = vadd.f32 0.0, %v1599
    %v1601 = vpop.f32.mrf.mxu0
    %1602 = vmatprep.mubr.f32.mxu0 0.0
    %1603 = vmatmul.mubr.f32.gmra.mxu0 %v1531
    %v1604 = vpop.f32.mrf.mxu0
    %v1605 = vadd.f32 0.0, %v1604
    %v1606 = vpop.f32.mrf.mxu0
    %1607 = vdwg.mxu0
    %1608 = vrot.lane.b32.xlu0 %v1398, 123
    %v1609 = vpop.permute.xlu0 %1608
    %1610 = vrot.lane.b32.xlu0 %v1403, 123
    %v1611 = vpop.permute.xlu0 %1610
    %1612 = vrot.lane.b32.xlu0 %v1398, 113
    %v1613 = vpop.permute.xlu0 %1612
    %1614 = vrot.lane.b32.xlu0 %v1403, 113
    %v1615 = vpop.permute.xlu0 %1614
    %v1616 = vsel %vm531, %v1609, 0
    %v1618 = vsel %vm531, %v1611, 0
    %v1620 = vsel %vm531, %v1613, 0
    %v1622 = vsel %vm531, %v1615, 0
    %1624 = vmatprep.subr.mxu0 0.0
    %1625 = vmatpush1.xpose.msra.mxu0 0.0
    %1626 = vmatprep.subr.mxu0 0.0
    %1627 = vmatpush1.xpose.msra.mxu0 0.0
    %1628 = vmatprep.subr.mxu0 0.0
    %1629 = vmatpush1.xpose.msra.mxu0 0.0
    %1630 = vmatprep.subr.mxu0 0.0
    %1631 = vmatpush1.xpose.msra.mxu0 0.0
    %1632 = vmatprep.subr.mxu0 0.0
    %1633 = vmatpush1.xpose.msra.mxu0 0.0
    %1634 = vmatprep.subr.mxu0 0.0
    %1635 = vmatpush1.xpose.msra.mxu0 0.0
    %1636 = vmatprep.subr.mxu0 0.0
    %1637 = vmatpush1.xpose.msra.mxu0 0.0
    %1638 = vmatprep.subr.mxu0 0.0
    %1639 = vmatpush1.xpose.msra.mxu0 0.0
    %1640 = vmatprep.subr.mxu0 0.0
    %1641 = vmatpush1.xpose.msra.mxu0 0.0
    %1642 = vmatprep.subr.mxu0 0.0
    %1643 = vmatpush1.xpose.msra.mxu0 0.0
    %1644 = vmatprep.subr.mxu0 0.0
    %1645 = vmatpush1.xpose.msra.mxu0 0.0
    %1646 = vmatprep.subr.mxu0 0.0
    %1647 = vmatpush1.xpose.msra.mxu0 0.0
    %1648 = vmatprep.subr.mxu0 0.0
    %1649 = vmatpush1.xpose.msra.mxu0 0.0
    %1650 = vmatprep.subr.mxu0 0.0
    %1651 = vmatpush1.xpose.msra.mxu0 0.0
    %1652 = vmatprep.subr.mxu0 0.0
    %1653 = vmatpush1.xpose.msra.mxu0 %v1622
    %1654 = vmatprep.subr.mxu0 0.0
    %1655 = vmatpush1.xpose.msra.mxu0 %v1620
    %1656 = vmatprep.subr.mxu0 0.0
    %1657 = vmatpush2.xpose.msra.mxu0 0.0
    %1658 = vmatprep.subr.mxu0 0.0
    %1659 = vmatpush2.xpose.msra.mxu0 0.0
    %1660 = vmatprep.subr.mxu0 0.0
    %1661 = vmatpush2.xpose.msra.mxu0 0.0
    %1662 = vmatprep.subr.mxu0 0.0
    %1663 = vmatpush2.xpose.msra.mxu0 0.0
    %1664 = vmatprep.subr.mxu0 0.0
    %1665 = vmatpush2.xpose.msra.mxu0 0.0
    %1666 = vmatprep.subr.mxu0 0.0
    %1667 = vmatpush2.xpose.msra.mxu0 0.0
    %1668 = vmatprep.subr.mxu0 0.0
    %1669 = vmatpush2.xpose.msra.mxu0 0.0
    %1670 = vmatprep.subr.mxu0 0.0
    %1671 = vmatpush2.xpose.msra.mxu0 0.0
    %1672 = vmatprep.subr.mxu0 0.0
    %1673 = vmatpush2.xpose.msra.mxu0 0.0
    %1674 = vmatprep.subr.mxu0 0.0
    %1675 = vmatpush2.xpose.msra.mxu0 0.0
    %1676 = vmatprep.subr.mxu0 0.0
    %1677 = vmatpush2.xpose.msra.mxu0 0.0
    %1678 = vmatprep.subr.mxu0 0.0
    %1679 = vmatpush2.xpose.msra.mxu0 0.0
    %1680 = vmatprep.subr.mxu0 0.0
    %1681 = vmatpush2.xpose.msra.mxu0 0.0
    %1682 = vmatprep.subr.mxu0 0.0
    %1683 = vmatpush2.xpose.msra.mxu0 0.0
    %1684 = vmatprep.subr.mxu0 0.0
    %1685 = vmatpush2.xpose.msra.mxu0 0.0
    %1686 = vmatprep.subr.mxu0 0.0
    %1687 = vmatpush2.xpose.msra.mxu0 0.0
    %1688 = vmatprep.mubr.f32.mxu0 0.0
    %1689 = vmatmul.mubr.f32.gmra.mxu0 %v1616
    %v1690 = vpop.f32.mrf.mxu0
    %v1691 = vadd.f32 0.0, %v1690
    %v1692 = vpop.f32.mrf.mxu0
    %1693 = vmatprep.mubr.f32.mxu0 0.0
    %1694 = vmatmul.mubr.f32.gmra.mxu0 %v1618
    %v1695 = vpop.f32.mrf.mxu0
    %v1696 = vadd.f32 0.0, %v1695
    %v1697 = vpop.f32.mrf.mxu0
    %1698 = vdwg.mxu0
    %v1699 = vmul.f32 %v1691, 0.4472136
    %v1700 = vmul.f32 %v1696, 0.4472136
    %v1701 = vadd.f32 %v1699, %v523
    %v1702 = vadd.f32 %v1700, %v524
    %v1703 = vsel %vm619, %v1701, -inf
    %1704 = vmax.xlane.f32.xlu0 %v1703
    %v1705 = vpop.xlane.xlu0 %1704
    %v1706 = vsel %vm619, %v1702, -inf
    %1707 = vmax.xlane.f32.xlu0 %v1706
    %v1708 = vpop.xlane.xlu0 %1707
    %v1709 = vsub.f32 %v1701, %v1705
    %v1710 = vsub.f32 %v1702, %v1708
    %v1711 = vmul.f32 %v1709, 1.442695
    %v1712 = vpow.pop %v1711
    %v1713 = vmul.f32 %v1710, 1.442695
    %v1714 = vpow.pop %v1713
    %v1715 = vsel %vm619, %v1712, 0.0
    %1716 = vadd.xlane.f32.xlu0 %v1715
    %v1717 = vpop.xlane.xlu0 %1716
    %v1718 = vsel %vm619, %v1714, 0.0
    %1719 = vadd.xlane.f32.xlu0 %v1718
    %v1720 = vpop.xlane.xlu0 %1719
    %v1721 = vrcp.pop %v1717
    %v1722 = vmul.f32 %v1712, %v1721
    %v1723 = vrcp.pop %v1720
    %v1724 = vmul.f32 %v1714, %v1723
    %1725 = vrot.lane.b32.xlu0 %v1398, 103
    %v1726 = vpop.permute.xlu0 %1725
    %1727 = vrot.lane.b32.xlu0 %v1403, 103
    %v1728 = vpop.permute.xlu0 %1727
    %v1732 = vsel %vm619, %v1722, 0
    %v1735 = vsel %vm619, %v1724, 0
    %1737 = vmatprep.subr.mxu0 0.0
    %1738 = vmatpush1.msra.mxu0 0.0
    %1739 = vmatprep.subr.mxu0 0.0
    %1740 = vmatpush1.msra.mxu0 0.0
    %1741 = vmatprep.subr.mxu0 0.0
    %1742 = vmatpush1.msra.mxu0 0.0
    %1743 = vmatprep.subr.mxu0 0.0
    %1744 = vmatpush1.msra.mxu0 0.0
    %1745 = vmatprep.subr.mxu0 0.0
    %1746 = vmatpush1.msra.mxu0 0.0
    %1747 = vmatprep.subr.mxu0 0.0
    %1748 = vmatpush1.msra.mxu0 0.0
    %1749 = vmatprep.subr.mxu0 0.0
    %1750 = vmatpush1.msra.mxu0 0.0
    %1751 = vmatprep.subr.mxu0 0.0
    %1752 = vmatpush1.msra.mxu0 0.0
    %1753 = vmatprep.subr.mxu0 0.0
    %1754 = vmatpush1.msra.mxu0 0.0
    %1755 = vmatprep.subr.mxu0 0.0
    %1756 = vmatpush1.msra.mxu0 0.0
    %1757 = vmatprep.subr.mxu0 0.0
    %1758 = vmatpush1.msra.mxu0 0.0
    %1759 = vmatprep.subr.mxu0 0.0
    %1760 = vmatpush1.msra.mxu0 0.0
    %1761 = vmatprep.subr.mxu0 0.0
    %1762 = vmatpush1.msra.mxu0 0.0
    %1763 = vmatprep.subr.mxu0 0.0
    %1764 = vmatpush1.msra.mxu0 0.0
    %1765 = vmatprep.subr.mxu0 0.0
    %1766 = vmatpush1.msra.mxu0 %v1728
    %1767 = vmatprep.subr.mxu0 0.0
    %1768 = vmatpush1.msra.mxu0 %v1726
    %1769 = vmatprep.subr.mxu0 0.0
    %1770 = vmatpush2.msra.mxu0 0.0
    %1771 = vmatprep.subr.mxu0 0.0
    %1772 = vmatpush2.msra.mxu0 0.0
    %1773 = vmatprep.subr.mxu0 0.0
    %1774 = vmatpush2.msra.mxu0 0.0
    %1775 = vmatprep.subr.mxu0 0.0
    %1776 = vmatpush2.msra.mxu0 0.0
    %1777 = vmatprep.subr.mxu0 0.0
    %1778 = vmatpush2.msra.mxu0 0.0
    %1779 = vmatprep.subr.mxu0 0.0
    %1780 = vmatpush2.msra.mxu0 0.0
    %1781 = vmatprep.subr.mxu0 0.0
    %1782 = vmatpush2.msra.mxu0 0.0
    %1783 = vmatprep.subr.mxu0 0.0
    %1784 = vmatpush2.msra.mxu0 0.0
    %1785 = vmatprep.subr.mxu0 0.0
    %1786 = vmatpush2.msra.mxu0 0.0
    %1787 = vmatprep.subr.mxu0 0.0
    %1788 = vmatpush2.msra.mxu0 0.0
    %1789 = vmatprep.subr.mxu0 0.0
    %1790 = vmatpush2.msra.mxu0 0.0
    %1791 = vmatprep.subr.mxu0 0.0
    %1792 = vmatpush2.msra.mxu0 0.0
    %1793 = vmatprep.subr.mxu0 0.0
    %1794 = vmatpush2.msra.mxu0 0.0
    %1795 = vmatprep.subr.mxu0 0.0
    %1796 = vmatpush2.msra.mxu0 0.0
    %1797 = vmatprep.subr.mxu0 0.0
    %1798 = vmatpush2.msra.mxu0 0.0
    %1799 = vmatprep.subr.mxu0 0.0
    %1800 = vmatpush2.msra.mxu0 0.0
    %1801 = vmatprep.mubr.f32.mxu0 0.0
    %1802 = vmatmul.mubr.f32.gmra.mxu0 %v1732
    %v1803 = vpop.f32.mrf.mxu0
    %v1804 = vadd.f32 0.0, %v1803
    %v1805 = vpop.f32.mrf.mxu0
    %1806 = vmatprep.mubr.f32.mxu0 0.0
    %1807 = vmatmul.mubr.f32.gmra.mxu0 %v1735
    %v1808 = vpop.f32.mrf.mxu0
    %v1809 = vadd.f32 0.0, %v1808
    %v1810 = vpop.f32.mrf.mxu0
    %1811 = vdwg.mxu0
    %1814 = vrot.lane.b32.xlu0 %v1804, 5
    %v1815 = vpop.permute.xlu0 %1814
    %1816 = vrot.lane.b32.xlu0 %v1809, 5
    %v1817 = vpop.permute.xlu0 %1816
    %v1820 = vsel %vm531, %v1600, %v1815
    %v1821 = vsel %vm531, %v1605, %v1817
    %v1822 = vld [vmem:[#allocation2 + $0x308] sm:$0xff]
    %v1823 = vld [vmem:[#allocation2 + $0x310] sm:$0x3]
    %v1824 = vld [vmem:[#allocation2 + $0x328] sm:$0x1]
    %v1825 = vlaneseq
    %v1826 = vshrl.u32 %v1825, 7
    %v1827 = vsub.s32 0, %v1826
    %v1828 = vrot.slane %v1824, %v1827
    %v1830 = vsel %vm950, %v1820, 0
    %v1833 = vsel %vm950, %v1821, 0
    %v1836 = vsel %vm957, %v1823, 0
    %1838 = vmatprep.subr.mxu0 0.0
    %1839 = vmatpush1.msra.mxu0 0.0
    %1840 = vmatprep.subr.mxu0 0.0
    %1841 = vmatpush1.msra.mxu0 0.0
    %1842 = vmatprep.subr.mxu0 0.0
    %1843 = vmatpush1.msra.mxu0 0.0
    %1844 = vmatprep.subr.mxu0 0.0
    %1845 = vmatpush1.msra.mxu0 0.0
    %1846 = vmatprep.subr.mxu0 0.0
    %1847 = vmatpush1.msra.mxu0 0.0
    %1848 = vmatprep.subr.mxu0 0.0
    %1849 = vmatpush1.msra.mxu0 0.0
    %1850 = vmatprep.subr.mxu0 0.0
    %1851 = vmatpush1.msra.mxu0 0.0
    %1852 = vmatprep.subr.mxu0 0.0
    %1853 = vmatpush1.msra.mxu0 0.0
    %1854 = vmatprep.subr.mxu0 0.0
    %1855 = vmatpush1.msra.mxu0 0.0
    %1856 = vmatprep.subr.mxu0 0.0
    %1857 = vmatpush1.msra.mxu0 0.0
    %1858 = vmatprep.subr.mxu0 0.0
    %1859 = vmatpush1.msra.mxu0 0.0
    %1860 = vmatprep.subr.mxu0 0.0
    %1861 = vmatpush1.msra.mxu0 0.0
    %1862 = vmatprep.subr.mxu0 0.0
    %1863 = vmatpush1.msra.mxu0 0.0
    %1864 = vmatprep.subr.mxu0 0.0
    %1865 = vmatpush1.msra.mxu0 0.0
    %1866 = vmatprep.subr.mxu0 0.0
    %1867 = vmatpush1.msra.mxu0 %v1836
    %1868 = vmatprep.subr.mxu0 0.0
    %1869 = vmatpush1.msra.mxu0 %v1822
    %1870 = vmatprep.subr.mxu0 0.0
    %1871 = vmatpush2.msra.mxu0 0.0
    %1872 = vmatprep.subr.mxu0 0.0
    %1873 = vmatpush2.msra.mxu0 0.0
    %1874 = vmatprep.subr.mxu0 0.0
    %1875 = vmatpush2.msra.mxu0 0.0
    %1876 = vmatprep.subr.mxu0 0.0
    %1877 = vmatpush2.msra.mxu0 0.0
    %1878 = vmatprep.subr.mxu0 0.0
    %1879 = vmatpush2.msra.mxu0 0.0
    %1880 = vmatprep.subr.mxu0 0.0
    %1881 = vmatpush2.msra.mxu0 0.0
    %1882 = vmatprep.subr.mxu0 0.0
    %1883 = vmatpush2.msra.mxu0 0.0
    %1884 = vmatprep.subr.mxu0 0.0
    %1885 = vmatpush2.msra.mxu0 0.0
    %1886 = vmatprep.subr.mxu0 0.0
    %1887 = vmatpush2.msra.mxu0 0.0
    %1888 = vmatprep.subr.mxu0 0.0
    %1889 = vmatpush2.msra.mxu0 0.0
    %1890 = vmatprep.subr.mxu0 0.0
    %1891 = vmatpush2.msra.mxu0 0.0
    %1892 = vmatprep.subr.mxu0 0.0
    %1893 = vmatpush2.msra.mxu0 0.0
    %1894 = vmatprep.subr.mxu0 0.0
    %1895 = vmatpush2.msra.mxu0 0.0
    %1896 = vmatprep.subr.mxu0 0.0
    %1897 = vmatpush2.msra.mxu0 0.0
    %1898 = vmatprep.subr.mxu0 0.0
    %1899 = vmatpush2.msra.mxu0 0.0
    %1900 = vmatprep.subr.mxu0 0.0
    %1901 = vmatpush2.msra.mxu0 0.0
    %1902 = vmatprep.mubr.f32.mxu0 0.0
    %1903 = vmatmul.mubr.f32.gmra.mxu0 %v1830
    %v1904 = vpop.f32.mrf.mxu0
    %v1905 = vadd.f32 %v1828, %v1904
    %v1906 = vpop.f32.mrf.mxu0
    %1907 = vmatprep.mubr.f32.mxu0 0.0
    %1908 = vmatmul.mubr.f32.gmra.mxu0 %v1833
    %v1909 = vpop.f32.mrf.mxu0
    %v1910 = vadd.f32 %v1828, %v1909
    %v1911 = vpop.f32.mrf.mxu0
    %1912 = vdwg.mxu0
    %v1913 = vadd.f32 %v1314, %v1905
    %v1914 = vadd.f32 %v1315, %v1910
    %v1915 = vld [vmem:[#allocation2 + $0x380] sm:$0x1]
    %v1916 = vld [vmem:[#allocation2 + $0x381] sm:$0x1]
    %v1917 = vld [vmem:[#allocation2 + $0x382] sm:$0x1]
    %v1918 = vsel %vm133, %v1913, 0.0
    %1919 = vadd.xlane.f32.xlu0 %v1918
    %v1920 = vpop.xlane.xlu0 %1919
    %v1921 = vsel %vm133, %v1914, 0.0
    %1922 = vadd.xlane.f32.xlu0 %v1921
    %v1923 = vpop.xlane.xlu0 %1922
    %v1924 = vmul.f32 %v1920, 0.1
    %v1925 = vmul.f32 %v1923, 0.1
    %v1926 = vsub.f32 %v1913, %v1924
    %v1927 = vsub.f32 %v1914, %v1925
    %v1928 = vlaneseq
    %v1929 = vshrl.u32 %v1928, 7
    %v1930 = vsub.s32 0, %v1929
    %v1931 = vrot.slane %v1917, %v1930
    %v1932 = vmul.f32 %v1926, %v1931
    %v1933 = vmul.f32 %v1927, %v1931
    %v1934 = vmul.f32 %v1932, %v1932
    %v1935 = vmul.f32 %v1933, %v1933
    %v1936 = vsel %vm133, %v1934, 0.0
    %1937 = vadd.xlane.f32.xlu0 %v1936
    %v1938 = vpop.xlane.xlu0 %1937
    %v1939 = vsel %vm133, %v1935, 0.0
    %1940 = vadd.xlane.f32.xlu0 %v1939
    %v1941 = vpop.xlane.xlu0 %1940
    %v1942 = vmul.f32 %v1938, 0.1
    %v1943 = vmul.f32 %v1941, 0.1
    %v1944 = vadd.f32 %v1942, 1e-05
    %v1945 = vadd.f32 %v1943, 1e-05
    %v1946 = vrsqrt.pop %v1944
    %v1947 = vrsqrt.pop %v1945
    %v1948 = vmul.f32 %v1932, %v1946
    %v1949 = vmul.f32 %v1933, %v1947
    %v1950 = vlaneseq
    %v1951 = vshrl.u32 %v1950, 7
    %v1952 = vsub.s32 0, %v1951
    %v1953 = vrot.slane %v1915, %v1952
    %v1954 = vmul.f32 %v1948, %v1953
    %v1955 = vmul.f32 %v1949, %v1953
    %v1956 = vlaneseq
    %v1957 = vshrl.u32 %v1956, 7
    %v1958 = vsub.s32 0, %v1957
    %v1959 = vrot.slane %v1916, %v1958
    %v1960 = vadd.f32 %v1954, %v1959
    %v1961 = vadd.f32 %v1955, %v1959
    %v1962 = vld [vmem:[#allocation2 + $0x330] sm:$0xff]
    %v1963 = vld [vmem:[#allocation2 + $0x338] sm:$0xff]
    %v1964 = vld [vmem:[#allocation2 + $0x340] sm:$0xff]
    %v1965 = vld [vmem:[#allocation2 + $0x348] sm:$0xff]
    %v1966 = vld [vmem:[#allocation2 + $0x350] sm:$0x1]
    %v1967 = vlaneseq
    %v1968 = vshrl.u32 %v1967, 7
    %v1969 = vsub.s32 0, %v1968
    %v1970 = vrot.slane %v1966, %v1969
    %v1972 = vsel %vm133, %v1960, 0
    %v1975 = vsel %vm133, %v1961, 0
    %1977 = vmatprep.subr.mxu0 0.0
    %1978 = vmatpush1.msra.mxu0 0.0
    %1979 = vmatprep.subr.mxu0 0.0
    %1980 = vmatpush1.msra.mxu0 0.0
    %1981 = vmatprep.subr.mxu0 0.0
    %1982 = vmatpush1.msra.mxu0 0.0
    %1983 = vmatprep.subr.mxu0 0.0
    %1984 = vmatpush1.msra.mxu0 0.0
    %1985 = vmatprep.subr.mxu0 0.0
    %1986 = vmatpush1.msra.mxu0 0.0
    %1987 = vmatprep.subr.mxu0 0.0
    %1988 = vmatpush1.msra.mxu0 0.0
    %1989 = vmatprep.subr.mxu0 0.0
    %1990 = vmatpush1.msra.mxu0 0.0
    %1991 = vmatprep.subr.mxu0 0.0
    %1992 = vmatpush1.msra.mxu0 0.0
    %1993 = vmatprep.subr.mxu0 0.0
    %1994 = vmatpush1.msra.mxu0 0.0
    %1995 = vmatprep.subr.mxu0 0.0
    %1996 = vmatpush1.msra.mxu0 0.0
    %1997 = vmatprep.subr.mxu0 0.0
    %1998 = vmatpush1.msra.mxu0 0.0
    %1999 = vmatprep.subr.mxu0 0.0
    %2000 = vmatpush1.msra.mxu0 0.0
    %2001 = vmatprep.subr.mxu0 0.0
    %2002 = vmatpush1.msra.mxu0 %v1965
    %2003 = vmatprep.subr.mxu0 0.0
    %2004 = vmatpush1.msra.mxu0 %v1964
    %2005 = vmatprep.subr.mxu0 0.0
    %2006 = vmatpush1.msra.mxu0 %v1963
    %2007 = vmatprep.subr.mxu0 0.0
    %2008 = vmatpush1.msra.mxu0 %v1962
    %2009 = vmatprep.subr.mxu0 0.0
    %2010 = vmatpush2.msra.mxu0 0.0
    %2011 = vmatprep.subr.mxu0 0.0
    %2012 = vmatpush2.msra.mxu0 0.0
    %2013 = vmatprep.subr.mxu0 0.0
    %2014 = vmatpush2.msra.mxu0 0.0
    %2015 = vmatprep.subr.mxu0 0.0
    %2016 = vmatpush2.msra.mxu0 0.0
    %2017 = vmatprep.subr.mxu0 0.0
    %2018 = vmatpush2.msra.mxu0 0.0
    %2019 = vmatprep.subr.mxu0 0.0
    %2020 = vmatpush2.msra.mxu0 0.0
    %2021 = vmatprep.subr.mxu0 0.0
    %2022 = vmatpush2.msra.mxu0 0.0
    %2023 = vmatprep.subr.mxu0 0.0
    %2024 = vmatpush2.msra.mxu0 0.0
    %2025 = vmatprep.subr.mxu0 0.0
    %2026 = vmatpush2.msra.mxu0 0.0
    %2027 = vmatprep.subr.mxu0 0.0
    %2028 = vmatpush2.msra.mxu0 0.0
    %2029 = vmatprep.subr.mxu0 0.0
    %2030 = vmatpush2.msra.mxu0 0.0
    %2031 = vmatprep.subr.mxu0 0.0
    %2032 = vmatpush2.msra.mxu0 0.0
    %2033 = vmatprep.subr.mxu0 0.0
    %2034 = vmatpush2.msra.mxu0 0.0
    %2035 = vmatprep.subr.mxu0 0.0
    %2036 = vmatpush2.msra.mxu0 0.0
    %2037 = vmatprep.subr.mxu0 0.0
    %2038 = vmatpush2.msra.mxu0 0.0
    %2039 = vmatprep.subr.mxu0 0.0
    %2040 = vmatpush2.msra.mxu0 0.0
    %2041 = vmatprep.mubr.f32.mxu0 0.0
    %2042 = vmatmul.mubr.f32.gmra.mxu0 %v1972
    %v2043 = vpop.f32.mrf.mxu0
    %v2044 = vadd.f32 %v1970, %v2043
    %v2045 = vpop.f32.mrf.mxu0
    %2046 = vmatprep.mubr.f32.mxu0 0.0
    %2047 = vmatmul.mubr.f32.gmra.mxu0 %v1975
    %v2048 = vpop.f32.mrf.mxu0
    %v2049 = vadd.f32 %v1970, %v2048
    %v2050 = vpop.f32.mrf.mxu0
    %2051 = vdwg.mxu0
    %v2052 = vmax.f32 %v2044, 0.0
    %v2053 = vmax.f32 %v2049, 0.0
    %v2054 = vld [vmem:[#allocation2 + $0x358] sm:$0xff]
    %v2055 = vld [vmem:[#allocation2 + $0x360] sm:$0xff]
    %v2056 = vld [vmem:[#allocation2 + $0x368] sm:$0xff]
    %v2057 = vld [vmem:[#allocation2 + $0x370] sm:$0xff]
    %v2058 = vld [vmem:[#allocation2 + $0x378] sm:$0x1]
    %v2059 = vlaneseq
    %v2060 = vshrl.u32 %v2059, 7
    %v2061 = vsub.s32 0, %v2060
    %v2062 = vrot.slane %v2058, %v2061
    %v2064 = vsel %vm133, %v2052, 0
    %v2067 = vsel %vm133, %v2053, 0
    %2069 = vmatprep.subr.mxu0 0.0
    %2070 = vmatpush1.msra.mxu0 0.0
    %2071 = vmatprep.subr.mxu0 0.0
    %2072 = vmatpush1.msra.mxu0 0.0
    %2073 = vmatprep.subr.mxu0 0.0
    %2074 = vmatpush1.msra.mxu0 0.0
    %2075 = vmatprep.subr.mxu0 0.0
    %2076 = vmatpush1.msra.mxu0 0.0
    %2077 = vmatprep.subr.mxu0 0.0
    %2078 = vmatpush1.msra.mxu0 0.0
    %2079 = vmatprep.subr.mxu0 0.0
    %2080 = vmatpush1.msra.mxu0 0.0
    %2081 = vmatprep.subr.mxu0 0.0
    %2082 = vmatpush1.msra.mxu0 0.0
    %2083 = vmatprep.subr.mxu0 0.0
    %2084 = vmatpush1.msra.mxu0 0.0
    %2085 = vmatprep.subr.mxu0 0.0
    %2086 = vmatpush1.msra.mxu0 0.0
    %2087 = vmatprep.subr.mxu0 0.0
    %2088 = vmatpush1.msra.mxu0 0.0
    %2089 = vmatprep.subr.mxu0 0.0
    %2090 = vmatpush1.msra.mxu0 0.0
    %2091 = vmatprep.subr.mxu0 0.0
    %2092 = vmatpush1.msra.mxu0 0.0
    %2093 = vmatprep.subr.mxu0 0.0
    %2094 = vmatpush1.msra.mxu0 %v2057
    %2095 = vmatprep.subr.mxu0 0.0
    %2096 = vmatpush1.msra.mxu0 %v2056
    %2097 = vmatprep.subr.mxu0 0.0
    %2098 = vmatpush1.msra.mxu0 %v2055
    %2099 = vmatprep.subr.mxu0 0.0
    %2100 = vmatpush1.msra.mxu0 %v2054
    %2101 = vmatprep.subr.mxu0 0.0
    %2102 = vmatpush2.msra.mxu0 0.0
    %2103 = vmatprep.subr.mxu0 0.0
    %2104 = vmatpush2.msra.mxu0 0.0
    %2105 = vmatprep.subr.mxu0 0.0
    %2106 = vmatpush2.msra.mxu0 0.0
    %2107 = vmatprep.subr.mxu0 0.0
    %2108 = vmatpush2.msra.mxu0 0.0
    %2109 = vmatprep.subr.mxu0 0.0
    %2110 = vmatpush2.msra.mxu0 0.0
    %2111 = vmatprep.subr.mxu0 0.0
    %2112 = vmatpush2.msra.mxu0 0.0
    %2113 = vmatprep.subr.mxu0 0.0
    %2114 = vmatpush2.msra.mxu0 0.0
    %2115 = vmatprep.subr.mxu0 0.0
    %2116 = vmatpush2.msra.mxu0 0.0
    %2117 = vmatprep.subr.mxu0 0.0
    %2118 = vmatpush2.msra.mxu0 0.0
    %2119 = vmatprep.subr.mxu0 0.0
    %2120 = vmatpush2.msra.mxu0 0.0
    %2121 = vmatprep.subr.mxu0 0.0
    %2122 = vmatpush2.msra.mxu0 0.0
    %2123 = vmatprep.subr.mxu0 0.0
    %2124 = vmatpush2.msra.mxu0 0.0
    %2125 = vmatprep.subr.mxu0 0.0
    %2126 = vmatpush2.msra.mxu0 0.0
    %2127 = vmatprep.subr.mxu0 0.0
    %2128 = vmatpush2.msra.mxu0 0.0
    %2129 = vmatprep.subr.mxu0 0.0
    %2130 = vmatpush2.msra.mxu0 0.0
    %2131 = vmatprep.subr.mxu0 0.0
    %2132 = vmatpush2.msra.mxu0 0.0
    %2133 = vmatprep.mubr.f32.mxu0 0.0
    %2134 = vmatmul.mubr.f32.gmra.mxu0 %v2064
    %v2135 = vpop.f32.mrf.mxu0
    %v2136 = vadd.f32 %v2062, %v2135
    %v2137 = vpop.f32.mrf.mxu0
    %2138 = vmatprep.mubr.f32.mxu0 0.0
    %2139 = vmatmul.mubr.f32.gmra.mxu0 %v2067
    %v2140 = vpop.f32.mrf.mxu0
    %v2141 = vadd.f32 %v2062, %v2140
    %v2142 = vpop.f32.mrf.mxu0
    %2143 = vdwg.mxu0
    %v2144 = vadd.f32 %v1960, %v2136
    %v2145 = vadd.f32 %v1961, %v2141
    %v2146 = vld [vmem:[#allocation2 + $0x388] sm:$0x1]
    %v2147 = vld [vmem:[#allocation2 + $0x389] sm:$0x1]
    %v2148 = vld [vmem:[#allocation2 + $0x38a] sm:$0x1]
    %v2149 = vsel %vm133, %v2144, 0.0
    %2150 = vadd.xlane.f32.xlu0 %v2149
    %v2151 = vpop.xlane.xlu0 %2150
    %v2152 = vsel %vm133, %v2145, 0.0
    %2153 = vadd.xlane.f32.xlu0 %v2152
    %v2154 = vpop.xlane.xlu0 %2153
    %v2155 = vmul.f32 %v2151, 0.1
    %v2156 = vmul.f32 %v2154, 0.1
    %v2157 = vsub.f32 %v2144, %v2155
    %v2158 = vsub.f32 %v2145, %v2156
    %v2159 = vlaneseq
    %v2160 = vshrl.u32 %v2159, 7
    %v2161 = vsub.s32 0, %v2160
    %v2162 = vrot.slane %v2148, %v2161
    %v2163 = vmul.f32 %v2157, %v2162
    %v2164 = vmul.f32 %v2158, %v2162
    %v2165 = vmul.f32 %v2163, %v2163
    %v2166 = vmul.f32 %v2164, %v2164
    %v2167 = vsel %vm133, %v2165, 0.0
    %2168 = vadd.xlane.f32.xlu0 %v2167
    %v2169 = vpop.xlane.xlu0 %2168
    %v2170 = vsel %vm133, %v2166, 0.0
    %2171 = vadd.xlane.f32.xlu0 %v2170
    %v2172 = vpop.xlane.xlu0 %2171
    %v2173 = vmul.f32 %v2169, 0.1
    %v2174 = vmul.f32 %v2172, 0.1
    %v2175 = vadd.f32 %v2173, 1e-05
    %v2176 = vadd.f32 %v2174, 1e-05
    %v2177 = vrsqrt.pop %v2175
    %v2178 = vrsqrt.pop %v2176
    %v2179 = vmul.f32 %v2163, %v2177
    %v2180 = vmul.f32 %v2164, %v2178
    %v2181 = vlaneseq
    %v2182 = vshrl.u32 %v2181, 7
    %v2183 = vsub.s32 0, %v2182
    %v2184 = vrot.slane %v2146, %v2183
    %v2185 = vmul.f32 %v2179, %v2184
    %v2186 = vmul.f32 %v2180, %v2184
    %v2187 = vlaneseq
    %v2188 = vshrl.u32 %v2187, 7
    %v2189 = vsub.s32 0, %v2188
    %v2190 = vrot.slane %v2147, %v2189
    %v2191 = vadd.f32 %v2185, %v2190
    %v2192 = vadd.f32 %v2186, %v2190
    %v2193 = vld [vmem:[#allocation2 + $0x390] sm:$0xff]
    %v2194 = vld [vmem:[#allocation2 + $0x398] sm:$0xff]
    %v2195 = vld [vmem:[#allocation2 + $0x3a0] sm:$0xff]
    %v2196 = vld [vmem:[#allocation2 + $0x3a8] sm:$0xff]
    %v2197 = vld [vmem:[#allocation2 + $0x3b0] sm:$0x1]
    %v2198 = vlaneseq
    %v2199 = vshrl.u32 %v2198, 7
    %v2200 = vsub.s32 0, %v2199
    %v2201 = vrot.slane %v2197, %v2200
    %v2203 = vsel %vm133, %v2191, 0
    %v2206 = vsel %vm133, %v2192, 0
    %2208 = vmatprep.subr.mxu0 0.0
    %2209 = vmatpush1.msra.mxu0 0.0
    %2210 = vmatprep.subr.mxu0 0.0
    %2211 = vmatpush1.msra.mxu0 0.0
    %2212 = vmatprep.subr.mxu0 0.0
    %2213 = vmatpush1.msra.mxu0 0.0
    %2214 = vmatprep.subr.mxu0 0.0
    %2215 = vmatpush1.msra.mxu0 0.0
    %2216 = vmatprep.subr.mxu0 0.0
    %2217 = vmatpush1.msra.mxu0 0.0
    %2218 = vmatprep.subr.mxu0 0.0
    %2219 = vmatpush1.msra.mxu0 0.0
    %2220 = vmatprep.subr.mxu0 0.0
    %2221 = vmatpush1.msra.mxu0 0.0
    %2222 = vmatprep.subr.mxu0 0.0
    %2223 = vmatpush1.msra.mxu0 0.0
    %2224 = vmatprep.subr.mxu0 0.0
    %2225 = vmatpush1.msra.mxu0 0.0
    %2226 = vmatprep.subr.mxu0 0.0
    %2227 = vmatpush1.msra.mxu0 0.0
    %2228 = vmatprep.subr.mxu0 0.0
    %2229 = vmatpush1.msra.mxu0 0.0
    %2230 = vmatprep.subr.mxu0 0.0
    %2231 = vmatpush1.msra.mxu0 0.0
    %2232 = vmatprep.subr.mxu0 0.0
    %2233 = vmatpush1.msra.mxu0 %v2196
    %2234 = vmatprep.subr.mxu0 0.0
    %2235 = vmatpush1.msra.mxu0 %v2195
    %2236 = vmatprep.subr.mxu0 0.0
    %2237 = vmatpush1.msra.mxu0 %v2194
    %2238 = vmatprep.subr.mxu0 0.0
    %2239 = vmatpush1.msra.mxu0 %v2193
    %2240 = vmatprep.subr.mxu0 0.0
    %2241 = vmatpush2.msra.mxu0 0.0
    %2242 = vmatprep.subr.mxu0 0.0
    %2243 = vmatpush2.msra.mxu0 0.0
    %2244 = vmatprep.subr.mxu0 0.0
    %2245 = vmatpush2.msra.mxu0 0.0
    %2246 = vmatprep.subr.mxu0 0.0
    %2247 = vmatpush2.msra.mxu0 0.0
    %2248 = vmatprep.subr.mxu0 0.0
    %2249 = vmatpush2.msra.mxu0 0.0
    %2250 = vmatprep.subr.mxu0 0.0
    %2251 = vmatpush2.msra.mxu0 0.0
    %2252 = vmatprep.subr.mxu0 0.0
    %2253 = vmatpush2.msra.mxu0 0.0
    %2254 = vmatprep.subr.mxu0 0.0
    %2255 = vmatpush2.msra.mxu0 0.0
    %2256 = vmatprep.subr.mxu0 0.0
    %2257 = vmatpush2.msra.mxu0 0.0
    %2258 = vmatprep.subr.mxu0 0.0
    %2259 = vmatpush2.msra.mxu0 0.0
    %2260 = vmatprep.subr.mxu0 0.0
    %2261 = vmatpush2.msra.mxu0 0.0
    %2262 = vmatprep.subr.mxu0 0.0
    %2263 = vmatpush2.msra.mxu0 0.0
    %2264 = vmatprep.subr.mxu0 0.0
    %2265 = vmatpush2.msra.mxu0 0.0
    %2266 = vmatprep.subr.mxu0 0.0
    %2267 = vmatpush2.msra.mxu0 0.0
    %2268 = vmatprep.subr.mxu0 0.0
    %2269 = vmatpush2.msra.mxu0 0.0
    %2270 = vmatprep.subr.mxu0 0.0
    %2271 = vmatpush2.msra.mxu0 0.0
    %2272 = vmatprep.mubr.f32.mxu0 0.0
    %2273 = vmatmul.mubr.f32.gmra.mxu0 %v2203
    %v2274 = vpop.f32.mrf.mxu0
    %v2275 = vadd.f32 %v2201, %v2274
    %v2276 = vpop.f32.mrf.mxu0
    %2277 = vmatprep.mubr.f32.mxu0 0.0
    %2278 = vmatmul.mubr.f32.gmra.mxu0 %v2206
    %v2279 = vpop.f32.mrf.mxu0
    %v2280 = vadd.f32 %v2201, %v2279
    %v2281 = vpop.f32.mrf.mxu0
    %2282 = vdwg.mxu0
    %2285 = vrot.lane.b32.xlu0 %v2275, 118
    %v2286 = vpop.permute.xlu0 %2285
    %2287 = vrot.lane.b32.xlu0 %v2280, 118
    %v2288 = vpop.permute.xlu0 %2287
    %v2289 = vsel %vm531, %v2275, 0
    %v2291 = vsel %vm531, %v2280, 0
    %v2293 = vsel %vm531, %v2286, 0
    %v2295 = vsel %vm531, %v2288, 0
    %2297 = vmatprep.subr.mxu0 0.0
    %2298 = vmatpush1.xpose.msra.mxu0 0.0
    %2299 = vmatprep.subr.mxu0 0.0
    %2300 = vmatpush1.xpose.msra.mxu0 0.0
    %2301 = vmatprep.subr.mxu0 0.0
    %2302 = vmatpush1.xpose.msra.mxu0 0.0
    %2303 = vmatprep.subr.mxu0 0.0
    %2304 = vmatpush1.xpose.msra.mxu0 0.0
    %2305 = vmatprep.subr.mxu0 0.0
    %2306 = vmatpush1.xpose.msra.mxu0 0.0
    %2307 = vmatprep.subr.mxu0 0.0
    %2308 = vmatpush1.xpose.msra.mxu0 0.0
    %2309 = vmatprep.subr.mxu0 0.0
    %2310 = vmatpush1.xpose.msra.mxu0 0.0
    %2311 = vmatprep.subr.mxu0 0.0
    %2312 = vmatpush1.xpose.msra.mxu0 0.0
    %2313 = vmatprep.subr.mxu0 0.0
    %2314 = vmatpush1.xpose.msra.mxu0 0.0
    %2315 = vmatprep.subr.mxu0 0.0
    %2316 = vmatpush1.xpose.msra.mxu0 0.0
    %2317 = vmatprep.subr.mxu0 0.0
    %2318 = vmatpush1.xpose.msra.mxu0 0.0
    %2319 = vmatprep.subr.mxu0 0.0
    %2320 = vmatpush1.xpose.msra.mxu0 0.0
    %2321 = vmatprep.subr.mxu0 0.0
    %2322 = vmatpush1.xpose.msra.mxu0 0.0
    %2323 = vmatprep.subr.mxu0 0.0
    %2324 = vmatpush1.xpose.msra.mxu0 0.0
    %2325 = vmatprep.subr.mxu0 0.0
    %2326 = vmatpush1.xpose.msra.mxu0 %v2295
    %2327 = vmatprep.subr.mxu0 0.0
    %2328 = vmatpush1.xpose.msra.mxu0 %v2293
    %2329 = vmatprep.subr.mxu0 0.0
    %2330 = vmatpush2.xpose.msra.mxu0 0.0
    %2331 = vmatprep.subr.mxu0 0.0
    %2332 = vmatpush2.xpose.msra.mxu0 0.0
    %2333 = vmatprep.subr.mxu0 0.0
    %2334 = vmatpush2.xpose.msra.mxu0 0.0
    %2335 = vmatprep.subr.mxu0 0.0
    %2336 = vmatpush2.xpose.msra.mxu0 0.0
    %2337 = vmatprep.subr.mxu0 0.0
    %2338 = vmatpush2.xpose.msra.mxu0 0.0
    %2339 = vmatprep.subr.mxu0 0.0
    %2340 = vmatpush2.xpose.msra.mxu0 0.0
    %2341 = vmatprep.subr.mxu0 0.0
    %2342 = vmatpush2.xpose.msra.mxu0 0.0
    %2343 = vmatprep.subr.mxu0 0.0
    %2344 = vmatpush2.xpose.msra.mxu0 0.0
    %2345 = vmatprep.subr.mxu0 0.0
    %2346 = vmatpush2.xpose.msra.mxu0 0.0
    %2347 = vmatprep.subr.mxu0 0.0
    %2348 = vmatpush2.xpose.msra.mxu0 0.0
    %2349 = vmatprep.subr.mxu0 0.0
    %2350 = vmatpush2.xpose.msra.mxu0 0.0
    %2351 = vmatprep.subr.mxu0 0.0
    %2352 = vmatpush2.xpose.msra.mxu0 0.0
    %2353 = vmatprep.subr.mxu0 0.0
    %2354 = vmatpush2.xpose.msra.mxu0 0.0
    %2355 = vmatprep.subr.mxu0 0.0
    %2356 = vmatpush2.xpose.msra.mxu0 0.0
    %2357 = vmatprep.subr.mxu0 0.0
    %2358 = vmatpush2.xpose.msra.mxu0 0.0
    %2359 = vmatprep.subr.mxu0 0.0
    %2360 = vmatpush2.xpose.msra.mxu0 0.0
    %2361 = vmatprep.mubr.f32.mxu0 0.0
    %2362 = vmatmul.mubr.f32.gmra.mxu0 %v2289
    %v2363 = vpop.f32.mrf.mxu0
    %v2364 = vadd.f32 0.0, %v2363
    %v2365 = vpop.f32.mrf.mxu0
    %2366 = vmatprep.mubr.f32.mxu0 0.0
    %2367 = vmatmul.mubr.f32.gmra.mxu0 %v2291
    %v2368 = vpop.f32.mrf.mxu0
    %v2369 = vadd.f32 0.0, %v2368
    %v2370 = vpop.f32.mrf.mxu0
    %2371 = vdwg.mxu0
    %v2372 = vmul.f32 %v2364, 0.4472136
    %v2373 = vmul.f32 %v2369, 0.4472136
    %v2374 = vadd.f32 %v2372, %v523
    %v2375 = vadd.f32 %v2373, %v524
    %v2376 = vsel %vm619, %v2374, -inf
    %2377 = vmax.xlane.f32.xlu0 %v2376
    %v2378 = vpop.xlane.xlu0 %2377
    %v2379 = vsel %vm619, %v2375, -inf
    %2380 = vmax.xlane.f32.xlu0 %v2379
    %v2381 = vpop.xlane.xlu0 %2380
    %v2382 = vsub.f32 %v2374, %v2378
    %v2383 = vsub.f32 %v2375, %v2381
    %v2384 = vmul.f32 %v2382, 1.442695
    %v2385 = vpow.pop %v2384
    %v2386 = vmul.f32 %v2383, 1.442695
    %v2387 = vpow.pop %v2386
    %v2388 = vsel %vm619, %v2385, 0.0
    %2389 = vadd.xlane.f32.xlu0 %v2388
    %v2390 = vpop.xlane.xlu0 %2389
    %v2391 = vsel %vm619, %v2387, 0.0
    %2392 = vadd.xlane.f32.xlu0 %v2391
    %v2393 = vpop.xlane.xlu0 %2392
    %v2394 = vrcp.pop %v2390
    %v2395 = vmul.f32 %v2385, %v2394
    %v2396 = vrcp.pop %v2393
    %v2397 = vmul.f32 %v2387, %v2396
    %2398 = vrot.lane.b32.xlu0 %v2275, 108
    %v2399 = vpop.permute.xlu0 %2398
    %2400 = vrot.lane.b32.xlu0 %v2280, 108
    %v2401 = vpop.permute.xlu0 %2400
    %v2405 = vsel %vm619, %v2395, 0
    %v2408 = vsel %vm619, %v2397, 0
    %2410 = vmatprep.subr.mxu0 0.0
    %2411 = vmatpush1.msra.mxu0 0.0
    %2412 = vmatprep.subr.mxu0 0.0
    %2413 = vmatpush1.msra.mxu0 0.0
    %2414 = vmatprep.subr.mxu0 0.0
    %2415 = vmatpush1.msra.mxu0 0.0
    %2416 = vmatprep.subr.mxu0 0.0
    %2417 = vmatpush1.msra.mxu0 0.0
    %2418 = vmatprep.subr.mxu0 0.0
    %2419 = vmatpush1.msra.mxu0 0.0
    %2420 = vmatprep.subr.mxu0 0.0
    %2421 = vmatpush1.msra.mxu0 0.0
    %2422 = vmatprep.subr.mxu0 0.0
    %2423 = vmatpush1.msra.mxu0 0.0
    %2424 = vmatprep.subr.mxu0 0.0
    %2425 = vmatpush1.msra.mxu0 0.0
    %2426 = vmatprep.subr.mxu0 0.0
    %2427 = vmatpush1.msra.mxu0 0.0
    %2428 = vmatprep.subr.mxu0 0.0
    %2429 = vmatpush1.msra.mxu0 0.0
    %2430 = vmatprep.subr.mxu0 0.0
    %2431 = vmatpush1.msra.mxu0 0.0
    %2432 = vmatprep.subr.mxu0 0.0
    %2433 = vmatpush1.msra.mxu0 0.0
    %2434 = vmatprep.subr.mxu0 0.0
    %2435 = vmatpush1.msra.mxu0 0.0
    %2436 = vmatprep.subr.mxu0 0.0
    %2437 = vmatpush1.msra.mxu0 0.0
    %2438 = vmatprep.subr.mxu0 0.0
    %2439 = vmatpush1.msra.mxu0 %v2401
    %2440 = vmatprep.subr.mxu0 0.0
    %2441 = vmatpush1.msra.mxu0 %v2399
    %2442 = vmatprep.subr.mxu0 0.0
    %2443 = vmatpush2.msra.mxu0 0.0
    %2444 = vmatprep.subr.mxu0 0.0
    %2445 = vmatpush2.msra.mxu0 0.0
    %2446 = vmatprep.subr.mxu0 0.0
    %2447 = vmatpush2.msra.mxu0 0.0
    %2448 = vmatprep.subr.mxu0 0.0
    %2449 = vmatpush2.msra.mxu0 0.0
    %2450 = vmatprep.subr.mxu0 0.0
    %2451 = vmatpush2.msra.mxu0 0.0
    %2452 = vmatprep.subr.mxu0 0.0
    %2453 = vmatpush2.msra.mxu0 0.0
    %2454 = vmatprep.subr.mxu0 0.0
    %2455 = vmatpush2.msra.mxu0 0.0
    %2456 = vmatprep.subr.mxu0 0.0
    %2457 = vmatpush2.msra.mxu0 0.0
    %2458 = vmatprep.subr.mxu0 0.0
    %2459 = vmatpush2.msra.mxu0 0.0
    %2460 = vmatprep.subr.mxu0 0.0
    %2461 = vmatpush2.msra.mxu0 0.0
    %2462 = vmatprep.subr.mxu0 0.0
    %2463 = vmatpush2.msra.mxu0 0.0
    %2464 = vmatprep.subr.mxu0 0.0
    %2465 = vmatpush2.msra.mxu0 0.0
    %2466 = vmatprep.subr.mxu0 0.0
    %2467 = vmatpush2.msra.mxu0 0.0
    %2468 = vmatprep.subr.mxu0 0.0
    %2469 = vmatpush2.msra.mxu0 0.0
    %2470 = vmatprep.subr.mxu0 0.0
    %2471 = vmatpush2.msra.mxu0 0.0
    %2472 = vmatprep.subr.mxu0 0.0
    %2473 = vmatpush2.msra.mxu0 0.0
    %2474 = vmatprep.mubr.f32.mxu0 0.0
    %2475 = vmatmul.mubr.f32.gmra.mxu0 %v2405
    %v2476 = vpop.f32.mrf.mxu0
    %v2477 = vadd.f32 0.0, %v2476
    %v2478 = vpop.f32.mrf.mxu0
    %2479 = vmatprep.mubr.f32.mxu0 0.0
    %2480 = vmatmul.mubr.f32.gmra.mxu0 %v2408
    %v2481 = vpop.f32.mrf.mxu0
    %v2482 = vadd.f32 0.0, %v2481
    %v2483 = vpop.f32.mrf.mxu0
    %2484 = vdwg.mxu0
    %2485 = vrot.lane.b32.xlu0 %v2275, 123
    %v2486 = vpop.permute.xlu0 %2485
    %2487 = vrot.lane.b32.xlu0 %v2280, 123
    %v2488 = vpop.permute.xlu0 %2487
    %2489 = vrot.lane.b32.xlu0 %v2275, 113
    %v2490 = vpop.permute.xlu0 %2489
    %2491 = vrot.lane.b32.xlu0 %v2280, 113
    %v2492 = vpop.permute.xlu0 %2491
    %v2493 = vsel %vm531, %v2486, 0
    %v2495 = vsel %vm531, %v2488, 0
    %v2497 = vsel %vm531, %v2490, 0
    %v2499 = vsel %vm531, %v2492, 0
    %2501 = vmatprep.subr.mxu0 0.0
    %2502 = vmatpush1.xpose.msra.mxu0 0.0
    %2503 = vmatprep.subr.mxu0 0.0
    %2504 = vmatpush1.xpose.msra.mxu0 0.0
    %2505 = vmatprep.subr.mxu0 0.0
    %2506 = vmatpush1.xpose.msra.mxu0 0.0
    %2507 = vmatprep.subr.mxu0 0.0
    %2508 = vmatpush1.xpose.msra.mxu0 0.0
    %2509 = vmatprep.subr.mxu0 0.0
    %2510 = vmatpush1.xpose.msra.mxu0 0.0
    %2511 = vmatprep.subr.mxu0 0.0
    %2512 = vmatpush1.xpose.msra.mxu0 0.0
    %2513 = vmatprep.subr.mxu0 0.0
    %2514 = vmatpush1.xpose.msra.mxu0 0.0
    %2515 = vmatprep.subr.mxu0 0.0
    %2516 = vmatpush1.xpose.msra.mxu0 0.0
    %2517 = vmatprep.subr.mxu0 0.0
    %2518 = vmatpush1.xpose.msra.mxu0 0.0
    %2519 = vmatprep.subr.mxu0 0.0
    %2520 = vmatpush1.xpose.msra.mxu0 0.0
    %2521 = vmatprep.subr.mxu0 0.0
    %2522 = vmatpush1.xpose.msra.mxu0 0.0
    %2523 = vmatprep.subr.mxu0 0.0
    %2524 = vmatpush1.xpose.msra.mxu0 0.0
    %2525 = vmatprep.subr.mxu0 0.0
    %2526 = vmatpush1.xpose.msra.mxu0 0.0
    %2527 = vmatprep.subr.mxu0 0.0
    %2528 = vmatpush1.xpose.msra.mxu0 0.0
    %2529 = vmatprep.subr.mxu0 0.0
    %2530 = vmatpush1.xpose.msra.mxu0 %v2499
    %2531 = vmatprep.subr.mxu0 0.0
    %2532 = vmatpush1.xpose.msra.mxu0 %v2497
    %2533 = vmatprep.subr.mxu0 0.0
    %2534 = vmatpush2.xpose.msra.mxu0 0.0
    %2535 = vmatprep.subr.mxu0 0.0
    %2536 = vmatpush2.xpose.msra.mxu0 0.0
    %2537 = vmatprep.subr.mxu0 0.0
    %2538 = vmatpush2.xpose.msra.mxu0 0.0
    %2539 = vmatprep.subr.mxu0 0.0
    %2540 = vmatpush2.xpose.msra.mxu0 0.0
    %2541 = vmatprep.subr.mxu0 0.0
    %2542 = vmatpush2.xpose.msra.mxu0 0.0
    %2543 = vmatprep.subr.mxu0 0.0
    %2544 = vmatpush2.xpose.msra.mxu0 0.0
    %2545 = vmatprep.subr.mxu0 0.0
    %2546 = vmatpush2.xpose.msra.mxu0 0.0
    %2547 = vmatprep.subr.mxu0 0.0
    %2548 = vmatpush2.xpose.msra.mxu0 0.0
    %2549 = vmatprep.subr.mxu0 0.0
    %2550 = vmatpush2.xpose.msra.mxu0 0.0
    %2551 = vmatprep.subr.mxu0 0.0
    %2552 = vmatpush2.xpose.msra.mxu0 0.0
    %2553 = vmatprep.subr.mxu0 0.0
    %2554 = vmatpush2.xpose.msra.mxu0 0.0
    %2555 = vmatprep.subr.mxu0 0.0
    %2556 = vmatpush2.xpose.msra.mxu0 0.0
    %2557 = vmatprep.subr.mxu0 0.0
    %2558 = vmatpush2.xpose.msra.mxu0 0.0
    %2559 = vmatprep.subr.mxu0 0.0
    %2560 = vmatpush2.xpose.msra.mxu0 0.0
    %2561 = vmatprep.subr.mxu0 0.0
    %2562 = vmatpush2.xpose.msra.mxu0 0.0
    %2563 = vmatprep.subr.mxu0 0.0
    %2564 = vmatpush2.xpose.msra.mxu0 0.0
    %2565 = vmatprep.mubr.f32.mxu0 0.0
    %2566 = vmatmul.mubr.f32.gmra.mxu0 %v2493
    %v2567 = vpop.f32.mrf.mxu0
    %v2568 = vadd.f32 0.0, %v2567
    %v2569 = vpop.f32.mrf.mxu0
    %2570 = vmatprep.mubr.f32.mxu0 0.0
    %2571 = vmatmul.mubr.f32.gmra.mxu0 %v2495
    %v2572 = vpop.f32.mrf.mxu0
    %v2573 = vadd.f32 0.0, %v2572
    %v2574 = vpop.f32.mrf.mxu0
    %2575 = vdwg.mxu0
    %v2576 = vmul.f32 %v2568, 0.4472136
    %v2577 = vmul.f32 %v2573, 0.4472136
    %v2578 = vadd.f32 %v2576, %v523
    %v2579 = vadd.f32 %v2577, %v524
    %v2580 = vsel %vm619, %v2578, -inf
    %2581 = vmax.xlane.f32.xlu0 %v2580
    %v2582 = vpop.xlane.xlu0 %2581
    %v2583 = vsel %vm619, %v2579, -inf
    %2584 = vmax.xlane.f32.xlu0 %v2583
    %v2585 = vpop.xlane.xlu0 %2584
    %v2586 = vsub.f32 %v2578, %v2582
    %v2587 = vsub.f32 %v2579, %v2585
    %v2588 = vmul.f32 %v2586, 1.442695
    %v2589 = vpow.pop %v2588
    %v2590 = vmul.f32 %v2587, 1.442695
    %v2591 = vpow.pop %v2590
    %v2592 = vsel %vm619, %v2589, 0.0
    %2593 = vadd.xlane.f32.xlu0 %v2592
    %v2594 = vpop.xlane.xlu0 %2593
    %v2595 = vsel %vm619, %v2591, 0.0
    %2596 = vadd.xlane.f32.xlu0 %v2595
    %v2597 = vpop.xlane.xlu0 %2596
    %v2598 = vrcp.pop %v2594
    %v2599 = vmul.f32 %v2589, %v2598
    %v2600 = vrcp.pop %v2597
    %v2601 = vmul.f32 %v2591, %v2600
    %2602 = vrot.lane.b32.xlu0 %v2275, 103
    %v2603 = vpop.permute.xlu0 %2602
    %2604 = vrot.lane.b32.xlu0 %v2280, 103
    %v2605 = vpop.permute.xlu0 %2604
    %v2609 = vsel %vm619, %v2599, 0
    %v2612 = vsel %vm619, %v2601, 0
    %2614 = vmatprep.subr.mxu0 0.0
    %2615 = vmatpush1.msra.mxu0 0.0
    %2616 = vmatprep.subr.mxu0 0.0
    %2617 = vmatpush1.msra.mxu0 0.0
    %2618 = vmatprep.subr.mxu0 0.0
    %2619 = vmatpush1.msra.mxu0 0.0
    %2620 = vmatprep.subr.mxu0 0.0
    %2621 = vmatpush1.msra.mxu0 0.0
    %2622 = vmatprep.subr.mxu0 0.0
    %2623 = vmatpush1.msra.mxu0 0.0
    %2624 = vmatprep.subr.mxu0 0.0
    %2625 = vmatpush1.msra.mxu0 0.0
    %2626 = vmatprep.subr.mxu0 0.0
    %2627 = vmatpush1.msra.mxu0 0.0
    %2628 = vmatprep.subr.mxu0 0.0
    %2629 = vmatpush1.msra.mxu0 0.0
    %2630 = vmatprep.subr.mxu0 0.0
    %2631 = vmatpush1.msra.mxu0 0.0
    %2632 = vmatprep.subr.mxu0 0.0
    %2633 = vmatpush1.msra.mxu0 0.0
    %2634 = vmatprep.subr.mxu0 0.0
    %2635 = vmatpush1.msra.mxu0 0.0
    %2636 = vmatprep.subr.mxu0 0.0
    %2637 = vmatpush1.msra.mxu0 0.0
    %2638 = vmatprep.subr.mxu0 0.0
    %2639 = vmatpush1.msra.mxu0 0.0
    %2640 = vmatprep.subr.mxu0 0.0
    %2641 = vmatpush1.msra.mxu0 0.0
    %2642 = vmatprep.subr.mxu0 0.0
    %2643 = vmatpush1.msra.mxu0 %v2605
    %2644 = vmatprep.subr.mxu0 0.0
    %2645 = vmatpush1.msra.mxu0 %v2603
    %2646 = vmatprep.subr.mxu0 0.0
    %2647 = vmatpush2.msra.mxu0 0.0
    %2648 = vmatprep.subr.mxu0 0.0
    %2649 = vmatpush2.msra.mxu0 0.0
    %2650 = vmatprep.subr.mxu0 0.0
    %2651 = vmatpush2.msra.mxu0 0.0
    %2652 = vmatprep.subr.mxu0 0.0
    %2653 = vmatpush2.msra.mxu0 0.0
    %2654 = vmatprep.subr.mxu0 0.0
    %2655 = vmatpush2.msra.mxu0 0.0
    %2656 = vmatprep.subr.mxu0 0.0
    %2657 = vmatpush2.msra.mxu0 0.0
    %2658 = vmatprep.subr.mxu0 0.0
    %2659 = vmatpush2.msra.mxu0 0.0
    %2660 = vmatprep.subr.mxu0 0.0
    %2661 = vmatpush2.msra.mxu0 0.0
    %2662 = vmatprep.subr.mxu0 0.0
    %2663 = vmatpush2.msra.mxu0 0.0
    %2664 = vmatprep.subr.mxu0 0.0
    %2665 = vmatpush2.msra.mxu0 0.0
    %2666 = vmatprep.subr.mxu0 0.0
    %2667 = vmatpush2.msra.mxu0 0.0
    %2668 = vmatprep.subr.mxu0 0.0
    %2669 = vmatpush2.msra.mxu0 0.0
    %2670 = vmatprep.subr.mxu0 0.0
    %2671 = vmatpush2.msra.mxu0 0.0
    %2672 = vmatprep.subr.mxu0 0.0
    %2673 = vmatpush2.msra.mxu0 0.0
    %2674 = vmatprep.subr.mxu0 0.0
    %2675 = vmatpush2.msra.mxu0 0.0
    %2676 = vmatprep.subr.mxu0 0.0
    %2677 = vmatpush2.msra.mxu0 0.0
    %2678 = vmatprep.mubr.f32.mxu0 0.0
    %2679 = vmatmul.mubr.f32.gmra.mxu0 %v2609
    %v2680 = vpop.f32.mrf.mxu0
    %v2681 = vadd.f32 0.0, %v2680
    %v2682 = vpop.f32.mrf.mxu0
    %2683 = vmatprep.mubr.f32.mxu0 0.0
    %2684 = vmatmul.mubr.f32.gmra.mxu0 %v2612
    %v2685 = vpop.f32.mrf.mxu0
    %v2686 = vadd.f32 0.0, %v2685
    %v2687 = vpop.f32.mrf.mxu0
    %2688 = vdwg.mxu0
    %2691 = vrot.lane.b32.xlu0 %v2681, 5
    %v2692 = vpop.permute.xlu0 %2691
    %2693 = vrot.lane.b32.xlu0 %v2686, 5
    %v2694 = vpop.permute.xlu0 %2693
    %v2697 = vsel %vm531, %v2477, %v2692
    %v2698 = vsel %vm531, %v2482, %v2694
    %v2699 = vld [vmem:[#allocation2 + $0x3b8] sm:$0xff]
    %v2700 = vld [vmem:[#allocation2 + $0x3c0] sm:$0x3]
    %v2701 = vld [vmem:[#allocation2 + $0x3d8] sm:$0x1]
    %v2702 = vlaneseq
    %v2703 = vshrl.u32 %v2702, 7
    %v2704 = vsub.s32 0, %v2703
    %v2705 = vrot.slane %v2701, %v2704
    %v2707 = vsel %vm950, %v2697, 0
    %v2710 = vsel %vm950, %v2698, 0
    %v2713 = vsel %vm957, %v2700, 0
    %2715 = vmatprep.subr.mxu0 0.0
    %2716 = vmatpush1.msra.mxu0 0.0
    %2717 = vmatprep.subr.mxu0 0.0
    %2718 = vmatpush1.msra.mxu0 0.0
    %2719 = vmatprep.subr.mxu0 0.0
    %2720 = vmatpush1.msra.mxu0 0.0
    %2721 = vmatprep.subr.mxu0 0.0
    %2722 = vmatpush1.msra.mxu0 0.0
    %2723 = vmatprep.subr.mxu0 0.0
    %2724 = vmatpush1.msra.mxu0 0.0
    %2725 = vmatprep.subr.mxu0 0.0
    %2726 = vmatpush1.msra.mxu0 0.0
    %2727 = vmatprep.subr.mxu0 0.0
    %2728 = vmatpush1.msra.mxu0 0.0
    %2729 = vmatprep.subr.mxu0 0.0
    %2730 = vmatpush1.msra.mxu0 0.0
    %2731 = vmatprep.subr.mxu0 0.0
    %2732 = vmatpush1.msra.mxu0 0.0
    %2733 = vmatprep.subr.mxu0 0.0
    %2734 = vmatpush1.msra.mxu0 0.0
    %2735 = vmatprep.subr.mxu0 0.0
    %2736 = vmatpush1.msra.mxu0 0.0
    %2737 = vmatprep.subr.mxu0 0.0
    %2738 = vmatpush1.msra.mxu0 0.0
    %2739 = vmatprep.subr.mxu0 0.0
    %2740 = vmatpush1.msra.mxu0 0.0
    %2741 = vmatprep.subr.mxu0 0.0
    %2742 = vmatpush1.msra.mxu0 0.0
    %2743 = vmatprep.subr.mxu0 0.0
    %2744 = vmatpush1.msra.mxu0 %v2713
    %2745 = vmatprep.subr.mxu0 0.0
    %2746 = vmatpush1.msra.mxu0 %v2699
    %2747 = vmatprep.subr.mxu0 0.0
    %2748 = vmatpush2.msra.mxu0 0.0
    %2749 = vmatprep.subr.mxu0 0.0
    %2750 = vmatpush2.msra.mxu0 0.0
    %2751 = vmatprep.subr.mxu0 0.0
    %2752 = vmatpush2.msra.mxu0 0.0
    %2753 = vmatprep.subr.mxu0 0.0
    %2754 = vmatpush2.msra.mxu0 0.0
    %2755 = vmatprep.subr.mxu0 0.0
    %2756 = vmatpush2.msra.mxu0 0.0
    %2757 = vmatprep.subr.mxu0 0.0
    %2758 = vmatpush2.msra.mxu0 0.0
    %2759 = vmatprep.subr.mxu0 0.0
    %2760 = vmatpush2.msra.mxu0 0.0
    %2761 = vmatprep.subr.mxu0 0.0
    %2762 = vmatpush2.msra.mxu0 0.0
    %2763 = vmatprep.subr.mxu0 0.0
    %2764 = vmatpush2.msra.mxu0 0.0
    %2765 = vmatprep.subr.mxu0 0.0
    %2766 = vmatpush2.msra.mxu0 0.0
    %2767 = vmatprep.subr.mxu0 0.0
    %2768 = vmatpush2.msra.mxu0 0.0
    %2769 = vmatprep.subr.mxu0 0.0
    %2770 = vmatpush2.msra.mxu0 0.0
    %2771 = vmatprep.subr.mxu0 0.0
    %2772 = vmatpush2.msra.mxu0 0.0
    %2773 = vmatprep.subr.mxu0 0.0
    %2774 = vmatpush2.msra.mxu0 0.0
    %2775 = vmatprep.subr.mxu0 0.0
    %2776 = vmatpush2.msra.mxu0 0.0
    %2777 = vmatprep.subr.mxu0 0.0
    %2778 = vmatpush2.msra.mxu0 0.0
    %2779 = vmatprep.mubr.f32.mxu0 0.0
    %2780 = vmatmul.mubr.f32.gmra.mxu0 %v2707
    %v2781 = vpop.f32.mrf.mxu0
    %v2782 = vadd.f32 %v2705, %v2781
    %v2783 = vpop.f32.mrf.mxu0
    %2784 = vmatprep.mubr.f32.mxu0 0.0
    %2785 = vmatmul.mubr.f32.gmra.mxu0 %v2710
    %v2786 = vpop.f32.mrf.mxu0
    %v2787 = vadd.f32 %v2705, %v2786
    %v2788 = vpop.f32.mrf.mxu0
    %2789 = vdwg.mxu0
    %v2790 = vadd.f32 %v2191, %v2782
    %v2791 = vadd.f32 %v2192, %v2787
    %v2792 = vld [vmem:[#allocation2 + $0x430] sm:$0x1]
    %v2793 = vld [vmem:[#allocation2 + $0x431] sm:$0x1]
    %v2794 = vld [vmem:[#allocation2 + $0x432] sm:$0x1]
    %v2795 = vsel %vm133, %v2790, 0.0
    %2796 = vadd.xlane.f32.xlu0 %v2795
    %v2797 = vpop.xlane.xlu0 %2796
    %v2798 = vsel %vm133, %v2791, 0.0
    %2799 = vadd.xlane.f32.xlu0 %v2798
    %v2800 = vpop.xlane.xlu0 %2799
    %v2801 = vmul.f32 %v2797, 0.1
    %v2802 = vmul.f32 %v2800, 0.1
    %v2803 = vsub.f32 %v2790, %v2801
    %v2804 = vsub.f32 %v2791, %v2802
    %v2805 = vlaneseq
    %v2806 = vshrl.u32 %v2805, 7
    %v2807 = vsub.s32 0, %v2806
    %v2808 = vrot.slane %v2794, %v2807
    %v2809 = vmul.f32 %v2803, %v2808
    %v2810 = vmul.f32 %v2804, %v2808
    %v2811 = vmul.f32 %v2809, %v2809
    %v2812 = vmul.f32 %v2810, %v2810
    %v2813 = vsel %vm133, %v2811, 0.0
    %2814 = vadd.xlane.f32.xlu0 %v2813
    %v2815 = vpop.xlane.xlu0 %2814
    %v2816 = vsel %vm133, %v2812, 0.0
    %2817 = vadd.xlane.f32.xlu0 %v2816
    %v2818 = vpop.xlane.xlu0 %2817
    %v2819 = vmul.f32 %v2815, 0.1
    %v2820 = vmul.f32 %v2818, 0.1
    %v2821 = vadd.f32 %v2819, 1e-05
    %v2822 = vadd.f32 %v2820, 1e-05
    %v2823 = vrsqrt.pop %v2821
    %v2824 = vrsqrt.pop %v2822
    %v2825 = vmul.f32 %v2809, %v2823
    %v2826 = vmul.f32 %v2810, %v2824
    %v2827 = vlaneseq
    %v2828 = vshrl.u32 %v2827, 7
    %v2829 = vsub.s32 0, %v2828
    %v2830 = vrot.slane %v2792, %v2829
    %v2831 = vmul.f32 %v2825, %v2830
    %v2832 = vmul.f32 %v2826, %v2830
    %v2833 = vlaneseq
    %v2834 = vshrl.u32 %v2833, 7
    %v2835 = vsub.s32 0, %v2834
    %v2836 = vrot.slane %v2793, %v2835
    %v2837 = vadd.f32 %v2831, %v2836
    %v2838 = vadd.f32 %v2832, %v2836
    %v2839 = vld [vmem:[#allocation2 + $0x3e0] sm:$0xff]
    %v2840 = vld [vmem:[#allocation2 + $0x3e8] sm:$0xff]
    %v2841 = vld [vmem:[#allocation2 + $0x3f0] sm:$0xff]
    %v2842 = vld [vmem:[#allocation2 + $0x3f8] sm:$0xff]
    %v2843 = vld [vmem:[#allocation2 + $0x400] sm:$0x1]
    %v2844 = vlaneseq
    %v2845 = vshrl.u32 %v2844, 7
    %v2846 = vsub.s32 0, %v2845
    %v2847 = vrot.slane %v2843, %v2846
    %v2849 = vsel %vm133, %v2837, 0
    %v2852 = vsel %vm133, %v2838, 0
    %2854 = vmatprep.subr.mxu0 0.0
    %2855 = vmatpush1.msra.mxu0 0.0
    %2856 = vmatprep.subr.mxu0 0.0
    %2857 = vmatpush1.msra.mxu0 0.0
    %2858 = vmatprep.subr.mxu0 0.0
    %2859 = vmatpush1.msra.mxu0 0.0
    %2860 = vmatprep.subr.mxu0 0.0
    %2861 = vmatpush1.msra.mxu0 0.0
    %2862 = vmatprep.subr.mxu0 0.0
    %2863 = vmatpush1.msra.mxu0 0.0
    %2864 = vmatprep.subr.mxu0 0.0
    %2865 = vmatpush1.msra.mxu0 0.0
    %2866 = vmatprep.subr.mxu0 0.0
    %2867 = vmatpush1.msra.mxu0 0.0
    %2868 = vmatprep.subr.mxu0 0.0
    %2869 = vmatpush1.msra.mxu0 0.0
    %2870 = vmatprep.subr.mxu0 0.0
    %2871 = vmatpush1.msra.mxu0 0.0
    %2872 = vmatprep.subr.mxu0 0.0
    %2873 = vmatpush1.msra.mxu0 0.0
    %2874 = vmatprep.subr.mxu0 0.0
    %2875 = vmatpush1.msra.mxu0 0.0
    %2876 = vmatprep.subr.mxu0 0.0
    %2877 = vmatpush1.msra.mxu0 0.0
    %2878 = vmatprep.subr.mxu0 0.0
    %2879 = vmatpush1.msra.mxu0 %v2842
    %2880 = vmatprep.subr.mxu0 0.0
    %2881 = vmatpush1.msra.mxu0 %v2841
    %2882 = vmatprep.subr.mxu0 0.0
    %2883 = vmatpush1.msra.mxu0 %v2840
    %2884 = vmatprep.subr.mxu0 0.0
    %2885 = vmatpush1.msra.mxu0 %v2839
    %2886 = vmatprep.subr.mxu0 0.0
    %2887 = vmatpush2.msra.mxu0 0.0
    %2888 = vmatprep.subr.mxu0 0.0
    %2889 = vmatpush2.msra.mxu0 0.0
    %2890 = vmatprep.subr.mxu0 0.0
    %2891 = vmatpush2.msra.mxu0 0.0
    %2892 = vmatprep.subr.mxu0 0.0
    %2893 = vmatpush2.msra.mxu0 0.0
    %2894 = vmatprep.subr.mxu0 0.0
    %2895 = vmatpush2.msra.mxu0 0.0
    %2896 = vmatprep.subr.mxu0 0.0
    %2897 = vmatpush2.msra.mxu0 0.0
    %2898 = vmatprep.subr.mxu0 0.0
    %2899 = vmatpush2.msra.mxu0 0.0
    %2900 = vmatprep.subr.mxu0 0.0
    %2901 = vmatpush2.msra.mxu0 0.0
    %2902 = vmatprep.subr.mxu0 0.0
    %2903 = vmatpush2.msra.mxu0 0.0
    %2904 = vmatprep.subr.mxu0 0.0
    %2905 = vmatpush2.msra.mxu0 0.0
    %2906 = vmatprep.subr.mxu0 0.0
    %2907 = vmatpush2.msra.mxu0 0.0
    %2908 = vmatprep.subr.mxu0 0.0
    %2909 = vmatpush2.msra.mxu0 0.0
    %2910 = vmatprep.subr.mxu0 0.0
    %2911 = vmatpush2.msra.mxu0 0.0
    %2912 = vmatprep.subr.mxu0 0.0
    %2913 = vmatpush2.msra.mxu0 0.0
    %2914 = vmatprep.subr.mxu0 0.0
    %2915 = vmatpush2.msra.mxu0 0.0
    %2916 = vmatprep.subr.mxu0 0.0
    %2917 = vmatpush2.msra.mxu0 0.0
    %2918 = vmatprep.mubr.f32.mxu0 0.0
    %2919 = vmatmul.mubr.f32.gmra.mxu0 %v2849
    %v2920 = vpop.f32.mrf.mxu0
    %v2921 = vadd.f32 %v2847, %v2920
    %v2922 = vpop.f32.mrf.mxu0
    %2923 = vmatprep.mubr.f32.mxu0 0.0
    %2924 = vmatmul.mubr.f32.gmra.mxu0 %v2852
    %v2925 = vpop.f32.mrf.mxu0
    %v2926 = vadd.f32 %v2847, %v2925
    %v2927 = vpop.f32.mrf.mxu0
    %2928 = vdwg.mxu0
    %v2929 = vmax.f32 %v2921, 0.0
    %v2930 = vmax.f32 %v2926, 0.0
    %v2931 = vld [vmem:[#allocation2 + $0x408] sm:$0xff]
    %v2932 = vld [vmem:[#allocation2 + $0x410] sm:$0xff]
    %v2933 = vld [vmem:[#allocation2 + $0x418] sm:$0xff]
    %v2934 = vld [vmem:[#allocation2 + $0x420] sm:$0xff]
    %v2935 = vld [vmem:[#allocation2 + $0x428] sm:$0x1]
    %v2936 = vlaneseq
    %v2937 = vshrl.u32 %v2936, 7
    %v2938 = vsub.s32 0, %v2937
    %v2939 = vrot.slane %v2935, %v2938
    %v2941 = vsel %vm133, %v2929, 0
    %v2944 = vsel %vm133, %v2930, 0
    %2946 = vmatprep.subr.mxu0 0.0
    %2947 = vmatpush1.msra.mxu0 0.0
    %2948 = vmatprep.subr.mxu0 0.0
    %2949 = vmatpush1.msra.mxu0 0.0
    %2950 = vmatprep.subr.mxu0 0.0
    %2951 = vmatpush1.msra.mxu0 0.0
    %2952 = vmatprep.subr.mxu0 0.0
    %2953 = vmatpush1.msra.mxu0 0.0
    %2954 = vmatprep.subr.mxu0 0.0
    %2955 = vmatpush1.msra.mxu0 0.0
    %2956 = vmatprep.subr.mxu0 0.0
    %2957 = vmatpush1.msra.mxu0 0.0
    %2958 = vmatprep.subr.mxu0 0.0
    %2959 = vmatpush1.msra.mxu0 0.0
    %2960 = vmatprep.subr.mxu0 0.0
    %2961 = vmatpush1.msra.mxu0 0.0
    %2962 = vmatprep.subr.mxu0 0.0
    %2963 = vmatpush1.msra.mxu0 0.0
    %2964 = vmatprep.subr.mxu0 0.0
    %2965 = vmatpush1.msra.mxu0 0.0
    %2966 = vmatprep.subr.mxu0 0.0
    %2967 = vmatpush1.msra.mxu0 0.0
    %2968 = vmatprep.subr.mxu0 0.0
    %2969 = vmatpush1.msra.mxu0 0.0
    %2970 = vmatprep.subr.mxu0 0.0
    %2971 = vmatpush1.msra.mxu0 %v2934
    %2972 = vmatprep.subr.mxu0 0.0
    %2973 = vmatpush1.msra.mxu0 %v2933
    %2974 = vmatprep.subr.mxu0 0.0
    %2975 = vmatpush1.msra.mxu0 %v2932
    %2976 = vmatprep.subr.mxu0 0.0
    %2977 = vmatpush1.msra.mxu0 %v2931
    %2978 = vmatprep.subr.mxu0 0.0
    %2979 = vmatpush2.msra.mxu0 0.0
    %2980 = vmatprep.subr.mxu0 0.0
    %2981 = vmatpush2.msra.mxu0 0.0
    %2982 = vmatprep.subr.mxu0 0.0
    %2983 = vmatpush2.msra.mxu0 0.0
    %2984 = vmatprep.subr.mxu0 0.0
    %2985 = vmatpush2.msra.mxu0 0.0
    %2986 = vmatprep.subr.mxu0 0.0
    %2987 = vmatpush2.msra.mxu0 0.0
    %2988 = vmatprep.subr.mxu0 0.0
    %2989 = vmatpush2.msra.mxu0 0.0
    %2990 = vmatprep.subr.mxu0 0.0
    %2991 = vmatpush2.msra.mxu0 0.0
    %2992 = vmatprep.subr.mxu0 0.0
    %2993 = vmatpush2.msra.mxu0 0.0
    %2994 = vmatprep.subr.mxu0 0.0
    %2995 = vmatpush2.msra.mxu0 0.0
    %2996 = vmatprep.subr.mxu0 0.0
    %2997 = vmatpush2.msra.mxu0 0.0
    %2998 = vmatprep.subr.mxu0 0.0
    %2999 = vmatpush2.msra.mxu0 0.0
    %3000 = vmatprep.subr.mxu0 0.0
    %3001 = vmatpush2.msra.mxu0 0.0
    %3002 = vmatprep.subr.mxu0 0.0
    %3003 = vmatpush2.msra.mxu0 0.0
    %3004 = vmatprep.subr.mxu0 0.0
    %3005 = vmatpush2.msra.mxu0 0.0
    %3006 = vmatprep.subr.mxu0 0.0
    %3007 = vmatpush2.msra.mxu0 0.0
    %3008 = vmatprep.subr.mxu0 0.0
    %3009 = vmatpush2.msra.mxu0 0.0
    %3010 = vmatprep.mubr.f32.mxu0 0.0
    %3011 = vmatmul.mubr.f32.gmra.mxu0 %v2941
    %v3012 = vpop.f32.mrf.mxu0
    %v3013 = vadd.f32 %v2939, %v3012
    %v3014 = vpop.f32.mrf.mxu0
    %3015 = vmatprep.mubr.f32.mxu0 0.0
    %3016 = vmatmul.mubr.f32.gmra.mxu0 %v2944
    %v3017 = vpop.f32.mrf.mxu0
    %v3018 = vadd.f32 %v2939, %v3017
    %v3019 = vpop.f32.mrf.mxu0
    %3020 = vdwg.mxu0
    %v3021 = vadd.f32 %v2837, %v3013
    %v3022 = vadd.f32 %v2838, %v3018
    %v3023 = vld [vmem:[#allocation2 + $0x438] sm:$0x1]
    %v3024 = vld [vmem:[#allocation2 + $0x439] sm:$0x1]
    %v3025 = vld [vmem:[#allocation2 + $0x43a] sm:$0x1]
    %v3026 = vsel %vm133, %v3021, 0.0
    %3027 = vadd.xlane.f32.xlu0 %v3026
    %v3028 = vpop.xlane.xlu0 %3027
    %v3029 = vsel %vm133, %v3022, 0.0
    %3030 = vadd.xlane.f32.xlu0 %v3029
    %v3031 = vpop.xlane.xlu0 %3030
    %v3032 = vmul.f32 %v3028, 0.1
    %v3033 = vmul.f32 %v3031, 0.1
    %v3034 = vsub.f32 %v3021, %v3032
    %v3035 = vsub.f32 %v3022, %v3033
    %v3036 = vlaneseq
    %v3037 = vshrl.u32 %v3036, 7
    %v3038 = vsub.s32 0, %v3037
    %v3039 = vrot.slane %v3025, %v3038
    %v3040 = vmul.f32 %v3034, %v3039
    %v3041 = vmul.f32 %v3035, %v3039
    %v3042 = vmul.f32 %v3040, %v3040
    %v3043 = vmul.f32 %v3041, %v3041
    %v3044 = vsel %vm133, %v3042, 0.0
    %3045 = vadd.xlane.f32.xlu0 %v3044
    %v3046 = vpop.xlane.xlu0 %3045
    %v3047 = vsel %vm133, %v3043, 0.0
    %3048 = vadd.xlane.f32.xlu0 %v3047
    %v3049 = vpop.xlane.xlu0 %3048
    %v3050 = vmul.f32 %v3046, 0.1
    %v3051 = vmul.f32 %v3049, 0.1
    %v3052 = vadd.f32 %v3050, 1e-05
    %v3053 = vadd.f32 %v3051, 1e-05
    %v3054 = vrsqrt.pop %v3052
    %v3055 = vrsqrt.pop %v3053
    %v3056 = vmul.f32 %v3040, %v3054
    %v3057 = vmul.f32 %v3041, %v3055
    %v3058 = vlaneseq
    %v3059 = vshrl.u32 %v3058, 7
    %v3060 = vsub.s32 0, %v3059
    %v3061 = vrot.slane %v3023, %v3060
    %v3062 = vmul.f32 %v3056, %v3061
    %v3063 = vmul.f32 %v3057, %v3061
    %v3064 = vlaneseq
    %v3065 = vshrl.u32 %v3064, 7
    %v3066 = vsub.s32 0, %v3065
    %v3067 = vrot.slane %v3024, %v3066
    %v3068 = vadd.f32 %v3062, %v3067
    %v3069 = vadd.f32 %v3063, %v3067
    %v3070 = vld [vmem:[#allocation2 + $0x440] sm:$0xff]
    %v3071 = vld [vmem:[#allocation2 + $0x448] sm:$0xff]
    %v3072 = vld [vmem:[#allocation2 + $0x450] sm:$0xff]
    %v3073 = vld [vmem:[#allocation2 + $0x458] sm:$0xff]
    %v3074 = vld [vmem:[#allocation2 + $0x460] sm:$0x1]
    %v3075 = vlaneseq
    %v3076 = vshrl.u32 %v3075, 7
    %v3077 = vsub.s32 0, %v3076
    %v3078 = vrot.slane %v3074, %v3077
    %v3080 = vsel %vm133, %v394, 0
    %v3083 = vsel %vm133, %v399, 0
    %3085 = vmatprep.subr.mxu0 0.0
    %3086 = vmatpush1.msra.mxu0 0.0
    %3087 = vmatprep.subr.mxu0 0.0
    %3088 = vmatpush1.msra.mxu0 0.0
    %3089 = vmatprep.subr.mxu0 0.0
    %3090 = vmatpush1.msra.mxu0 0.0
    %3091 = vmatprep.subr.mxu0 0.0
    %3092 = vmatpush1.msra.mxu0 0.0
    %3093 = vmatprep.subr.mxu0 0.0
    %3094 = vmatpush1.msra.mxu0 0.0
    %3095 = vmatprep.subr.mxu0 0.0
    %3096 = vmatpush1.msra.mxu0 0.0
    %3097 = vmatprep.subr.mxu0 0.0
    %3098 = vmatpush1.msra.mxu0 0.0
    %3099 = vmatprep.subr.mxu0 0.0
    %3100 = vmatpush1.msra.mxu0 0.0
    %3101 = vmatprep.subr.mxu0 0.0
    %3102 = vmatpush1.msra.mxu0 0.0
    %3103 = vmatprep.subr.mxu0 0.0
    %3104 = vmatpush1.msra.mxu0 0.0
    %3105 = vmatprep.subr.mxu0 0.0
    %3106 = vmatpush1.msra.mxu0 0.0
    %3107 = vmatprep.subr.mxu0 0.0
    %3108 = vmatpush1.msra.mxu0 0.0
    %3109 = vmatprep.subr.mxu0 0.0
    %3110 = vmatpush1.msra.mxu0 %v3073
    %3111 = vmatprep.subr.mxu0 0.0
    %3112 = vmatpush1.msra.mxu0 %v3072
    %3113 = vmatprep.subr.mxu0 0.0
    %3114 = vmatpush1.msra.mxu0 %v3071
    %3115 = vmatprep.subr.mxu0 0.0
    %3116 = vmatpush1.msra.mxu0 %v3070
    %3117 = vmatprep.subr.mxu0 0.0
    %3118 = vmatpush2.msra.mxu0 0.0
    %3119 = vmatprep.subr.mxu0 0.0
    %3120 = vmatpush2.msra.mxu0 0.0
    %3121 = vmatprep.subr.mxu0 0.0
    %3122 = vmatpush2.msra.mxu0 0.0
    %3123 = vmatprep.subr.mxu0 0.0
    %3124 = vmatpush2.msra.mxu0 0.0
    %3125 = vmatprep.subr.mxu0 0.0
    %3126 = vmatpush2.msra.mxu0 0.0
    %3127 = vmatprep.subr.mxu0 0.0
    %3128 = vmatpush2.msra.mxu0 0.0
    %3129 = vmatprep.subr.mxu0 0.0
    %3130 = vmatpush2.msra.mxu0 0.0
    %3131 = vmatprep.subr.mxu0 0.0
    %3132 = vmatpush2.msra.mxu0 0.0
    %3133 = vmatprep.subr.mxu0 0.0
    %3134 = vmatpush2.msra.mxu0 0.0
    %3135 = vmatprep.subr.mxu0 0.0
    %3136 = vmatpush2.msra.mxu0 0.0
    %3137 = vmatprep.subr.mxu0 0.0
    %3138 = vmatpush2.msra.mxu0 0.0
    %3139 = vmatprep.subr.mxu0 0.0
    %3140 = vmatpush2.msra.mxu0 0.0
    %3141 = vmatprep.subr.mxu0 0.0
    %3142 = vmatpush2.msra.mxu0 0.0
    %3143 = vmatprep.subr.mxu0 0.0
    %3144 = vmatpush2.msra.mxu0 0.0
    %3145 = vmatprep.subr.mxu0 0.0
    %3146 = vmatpush2.msra.mxu0 0.0
    %3147 = vmatprep.subr.mxu0 0.0
    %3148 = vmatpush2.msra.mxu0 0.0
    %3149 = vmatprep.mubr.f32.mxu0 0.0
    %3150 = vmatmul.mubr.f32.gmra.mxu0 %v3080
    %v3151 = vpop.f32.mrf.mxu0
    %v3152 = vadd.f32 %v3078, %v3151
    %v3153 = vpop.f32.mrf.mxu0
    %3154 = vmatprep.mubr.f32.mxu0 0.0
    %3155 = vmatmul.mubr.f32.gmra.mxu0 %v3083
    %v3156 = vpop.f32.mrf.mxu0
    %v3157 = vadd.f32 %v3078, %v3156
    %v3158 = vpop.f32.mrf.mxu0
    %3159 = vdwg.mxu0
    %3162 = vrot.lane.b32.xlu0 %v3152, 118
    %v3163 = vpop.permute.xlu0 %3162
    %3164 = vrot.lane.b32.xlu0 %v3157, 118
    %v3165 = vpop.permute.xlu0 %3164
    %v3166 = vsel %vm531, %v3152, 0
    %v3168 = vsel %vm531, %v3157, 0
    %v3170 = vsel %vm531, %v3163, 0
    %v3172 = vsel %vm531, %v3165, 0
    %3174 = vmatprep.subr.mxu0 0.0
    %3175 = vmatpush1.xpose.msra.mxu0 0.0
    %3176 = vmatprep.subr.mxu0 0.0
    %3177 = vmatpush1.xpose.msra.mxu0 0.0
    %3178 = vmatprep.subr.mxu0 0.0
    %3179 = vmatpush1.xpose.msra.mxu0 0.0
    %3180 = vmatprep.subr.mxu0 0.0
    %3181 = vmatpush1.xpose.msra.mxu0 0.0
    %3182 = vmatprep.subr.mxu0 0.0
    %3183 = vmatpush1.xpose.msra.mxu0 0.0
    %3184 = vmatprep.subr.mxu0 0.0
    %3185 = vmatpush1.xpose.msra.mxu0 0.0
    %3186 = vmatprep.subr.mxu0 0.0
    %3187 = vmatpush1.xpose.msra.mxu0 0.0
    %3188 = vmatprep.subr.mxu0 0.0
    %3189 = vmatpush1.xpose.msra.mxu0 0.0
    %3190 = vmatprep.subr.mxu0 0.0
    %3191 = vmatpush1.xpose.msra.mxu0 0.0
    %3192 = vmatprep.subr.mxu0 0.0
    %3193 = vmatpush1.xpose.msra.mxu0 0.0
    %3194 = vmatprep.subr.mxu0 0.0
    %3195 = vmatpush1.xpose.msra.mxu0 0.0
    %3196 = vmatprep.subr.mxu0 0.0
    %3197 = vmatpush1.xpose.msra.mxu0 0.0
    %3198 = vmatprep.subr.mxu0 0.0
    %3199 = vmatpush1.xpose.msra.mxu0 0.0
    %3200 = vmatprep.subr.mxu0 0.0
    %3201 = vmatpush1.xpose.msra.mxu0 0.0
    %3202 = vmatprep.subr.mxu0 0.0
    %3203 = vmatpush1.xpose.msra.mxu0 %v3172
    %3204 = vmatprep.subr.mxu0 0.0
    %3205 = vmatpush1.xpose.msra.mxu0 %v3170
    %3206 = vmatprep.subr.mxu0 0.0
    %3207 = vmatpush2.xpose.msra.mxu0 0.0
    %3208 = vmatprep.subr.mxu0 0.0
    %3209 = vmatpush2.xpose.msra.mxu0 0.0
    %3210 = vmatprep.subr.mxu0 0.0
    %3211 = vmatpush2.xpose.msra.mxu0 0.0
    %3212 = vmatprep.subr.mxu0 0.0
    %3213 = vmatpush2.xpose.msra.mxu0 0.0
    %3214 = vmatprep.subr.mxu0 0.0
    %3215 = vmatpush2.xpose.msra.mxu0 0.0
    %3216 = vmatprep.subr.mxu0 0.0
    %3217 = vmatpush2.xpose.msra.mxu0 0.0
    %3218 = vmatprep.subr.mxu0 0.0
    %3219 = vmatpush2.xpose.msra.mxu0 0.0
    %3220 = vmatprep.subr.mxu0 0.0
    %3221 = vmatpush2.xpose.msra.mxu0 0.0
    %3222 = vmatprep.subr.mxu0 0.0
    %3223 = vmatpush2.xpose.msra.mxu0 0.0
    %3224 = vmatprep.subr.mxu0 0.0
    %3225 = vmatpush2.xpose.msra.mxu0 0.0
    %3226 = vmatprep.subr.mxu0 0.0
    %3227 = vmatpush2.xpose.msra.mxu0 0.0
    %3228 = vmatprep.subr.mxu0 0.0
    %3229 = vmatpush2.xpose.msra.mxu0 0.0
    %3230 = vmatprep.subr.mxu0 0.0
    %3231 = vmatpush2.xpose.msra.mxu0 0.0
    %3232 = vmatprep.subr.mxu0 0.0
    %3233 = vmatpush2.xpose.msra.mxu0 0.0
    %3234 = vmatprep.subr.mxu0 0.0
    %3235 = vmatpush2.xpose.msra.mxu0 0.0
    %3236 = vmatprep.subr.mxu0 0.0
    %3237 = vmatpush2.xpose.msra.mxu0 0.0
    %3238 = vmatprep.mubr.f32.mxu0 0.0
    %3239 = vmatmul.mubr.f32.gmra.mxu0 %v3166
    %v3240 = vpop.f32.mrf.mxu0
    %v3241 = vadd.f32 0.0, %v3240
    %v3242 = vpop.f32.mrf.mxu0
    %3243 = vmatprep.mubr.f32.mxu0 0.0
    %3244 = vmatmul.mubr.f32.gmra.mxu0 %v3168
    %v3245 = vpop.f32.mrf.mxu0
    %v3246 = vadd.f32 0.0, %v3245
    %v3247 = vpop.f32.mrf.mxu0
    %3248 = vdwg.mxu0
    %v3249 = vmul.f32 %v3241, 0.4472136
    %v3250 = vmul.f32 %v3246, 0.4472136
    %v3251 = vadd.f32 %v3249, %v523
    %v3252 = vadd.f32 %v3250, %v524
    %v3253 = vsel %vm619, %v3251, -inf
    %3254 = vmax.xlane.f32.xlu0 %v3253
    %v3255 = vpop.xlane.xlu0 %3254
    %v3256 = vsel %vm619, %v3252, -inf
    %3257 = vmax.xlane.f32.xlu0 %v3256
    %v3258 = vpop.xlane.xlu0 %3257
    %v3259 = vsub.f32 %v3251, %v3255
    %v3260 = vsub.f32 %v3252, %v3258
    %v3261 = vmul.f32 %v3259, 1.442695
    %v3262 = vpow.pop %v3261
    %v3263 = vmul.f32 %v3260, 1.442695
    %v3264 = vpow.pop %v3263
    %v3265 = vsel %vm619, %v3262, 0.0
    %3266 = vadd.xlane.f32.xlu0 %v3265
    %v3267 = vpop.xlane.xlu0 %3266
    %v3268 = vsel %vm619, %v3264, 0.0
    %3269 = vadd.xlane.f32.xlu0 %v3268
    %v3270 = vpop.xlane.xlu0 %3269
    %v3271 = vrcp.pop %v3267
    %v3272 = vmul.f32 %v3262, %v3271
    %v3273 = vrcp.pop %v3270
    %v3274 = vmul.f32 %v3264, %v3273
    %3275 = vrot.lane.b32.xlu0 %v3152, 108
    %v3276 = vpop.permute.xlu0 %3275
    %3277 = vrot.lane.b32.xlu0 %v3157, 108
    %v3278 = vpop.permute.xlu0 %3277
    %v3282 = vsel %vm619, %v3272, 0
    %v3285 = vsel %vm619, %v3274, 0
    %3287 = vmatprep.subr.mxu0 0.0
    %3288 = vmatpush1.msra.mxu0 0.0
    %3289 = vmatprep.subr.mxu0 0.0
    %3290 = vmatpush1.msra.mxu0 0.0
    %3291 = vmatprep.subr.mxu0 0.0
    %3292 = vmatpush1.msra.mxu0 0.0
    %3293 = vmatprep.subr.mxu0 0.0
    %3294 = vmatpush1.msra.mxu0 0.0
    %3295 = vmatprep.subr.mxu0 0.0
    %3296 = vmatpush1.msra.mxu0 0.0
    %3297 = vmatprep.subr.mxu0 0.0
    %3298 = vmatpush1.msra.mxu0 0.0
    %3299 = vmatprep.subr.mxu0 0.0
    %3300 = vmatpush1.msra.mxu0 0.0
    %3301 = vmatprep.subr.mxu0 0.0
    %3302 = vmatpush1.msra.mxu0 0.0
    %3303 = vmatprep.subr.mxu0 0.0
    %3304 = vmatpush1.msra.mxu0 0.0
    %3305 = vmatprep.subr.mxu0 0.0
    %3306 = vmatpush1.msra.mxu0 0.0
    %3307 = vmatprep.subr.mxu0 0.0
    %3308 = vmatpush1.msra.mxu0 0.0
    %3309 = vmatprep.subr.mxu0 0.0
    %3310 = vmatpush1.msra.mxu0 0.0
    %3311 = vmatprep.subr.mxu0 0.0
    %3312 = vmatpush1.msra.mxu0 0.0
    %3313 = vmatprep.subr.mxu0 0.0
    %3314 = vmatpush1.msra.mxu0 0.0
    %3315 = vmatprep.subr.mxu0 0.0
    %3316 = vmatpush1.msra.mxu0 %v3278
    %3317 = vmatprep.subr.mxu0 0.0
    %3318 = vmatpush1.msra.mxu0 %v3276
    %3319 = vmatprep.subr.mxu0 0.0
    %3320 = vmatpush2.msra.mxu0 0.0
    %3321 = vmatprep.subr.mxu0 0.0
    %3322 = vmatpush2.msra.mxu0 0.0
    %3323 = vmatprep.subr.mxu0 0.0
    %3324 = vmatpush2.msra.mxu0 0.0
    %3325 = vmatprep.subr.mxu0 0.0
    %3326 = vmatpush2.msra.mxu0 0.0
    %3327 = vmatprep.subr.mxu0 0.0
    %3328 = vmatpush2.msra.mxu0 0.0
    %3329 = vmatprep.subr.mxu0 0.0
    %3330 = vmatpush2.msra.mxu0 0.0
    %3331 = vmatprep.subr.mxu0 0.0
    %3332 = vmatpush2.msra.mxu0 0.0
    %3333 = vmatprep.subr.mxu0 0.0
    %3334 = vmatpush2.msra.mxu0 0.0
    %3335 = vmatprep.subr.mxu0 0.0
    %3336 = vmatpush2.msra.mxu0 0.0
    %3337 = vmatprep.subr.mxu0 0.0
    %3338 = vmatpush2.msra.mxu0 0.0
    %3339 = vmatprep.subr.mxu0 0.0
    %3340 = vmatpush2.msra.mxu0 0.0
    %3341 = vmatprep.subr.mxu0 0.0
    %3342 = vmatpush2.msra.mxu0 0.0
    %3343 = vmatprep.subr.mxu0 0.0
    %3344 = vmatpush2.msra.mxu0 0.0
    %3345 = vmatprep.subr.mxu0 0.0
    %3346 = vmatpush2.msra.mxu0 0.0
    %3347 = vmatprep.subr.mxu0 0.0
    %3348 = vmatpush2.msra.mxu0 0.0
    %3349 = vmatprep.subr.mxu0 0.0
    %3350 = vmatpush2.msra.mxu0 0.0
    %3351 = vmatprep.mubr.f32.mxu0 0.0
    %3352 = vmatmul.mubr.f32.gmra.mxu0 %v3282
    %v3353 = vpop.f32.mrf.mxu0
    %v3354 = vadd.f32 0.0, %v3353
    %v3355 = vpop.f32.mrf.mxu0
    %3356 = vmatprep.mubr.f32.mxu0 0.0
    %3357 = vmatmul.mubr.f32.gmra.mxu0 %v3285
    %v3358 = vpop.f32.mrf.mxu0
    %v3359 = vadd.f32 0.0, %v3358
    %v3360 = vpop.f32.mrf.mxu0
    %3361 = vdwg.mxu0
    %3362 = vrot.lane.b32.xlu0 %v3152, 123
    %v3363 = vpop.permute.xlu0 %3362
    %3364 = vrot.lane.b32.xlu0 %v3157, 123
    %v3365 = vpop.permute.xlu0 %3364
    %3366 = vrot.lane.b32.xlu0 %v3152, 113
    %v3367 = vpop.permute.xlu0 %3366
    %3368 = vrot.lane.b32.xlu0 %v3157, 113
    %v3369 = vpop.permute.xlu0 %3368
    %v3370 = vsel %vm531, %v3363, 0
    %v3372 = vsel %vm531, %v3365, 0
    %v3374 = vsel %vm531, %v3367, 0
    %v3376 = vsel %vm531, %v3369, 0
    %3378 = vmatprep.subr.mxu0 0.0
    %3379 = vmatpush1.xpose.msra.mxu0 0.0
    %3380 = vmatprep.subr.mxu0 0.0
    %3381 = vmatpush1.xpose.msra.mxu0 0.0
    %3382 = vmatprep.subr.mxu0 0.0
    %3383 = vmatpush1.xpose.msra.mxu0 0.0
    %3384 = vmatprep.subr.mxu0 0.0
    %3385 = vmatpush1.xpose.msra.mxu0 0.0
    %3386 = vmatprep.subr.mxu0 0.0
    %3387 = vmatpush1.xpose.msra.mxu0 0.0
    %3388 = vmatprep.subr.mxu0 0.0
    %3389 = vmatpush1.xpose.msra.mxu0 0.0
    %3390 = vmatprep.subr.mxu0 0.0
    %3391 = vmatpush1.xpose.msra.mxu0 0.0
    %3392 = vmatprep.subr.mxu0 0.0
    %3393 = vmatpush1.xpose.msra.mxu0 0.0
    %3394 = vmatprep.subr.mxu0 0.0
    %3395 = vmatpush1.xpose.msra.mxu0 0.0
    %3396 = vmatprep.subr.mxu0 0.0
    %3397 = vmatpush1.xpose.msra.mxu0 0.0
    %3398 = vmatprep.subr.mxu0 0.0
    %3399 = vmatpush1.xpose.msra.mxu0 0.0
    %3400 = vmatprep.subr.mxu0 0.0
    %3401 = vmatpush1.xpose.msra.mxu0 0.0
    %3402 = vmatprep.subr.mxu0 0.0
    %3403 = vmatpush1.xpose.msra.mxu0 0.0
    %3404 = vmatprep.subr.mxu0 0.0
    %3405 = vmatpush1.xpose.msra.mxu0 0.0
    %3406 = vmatprep.subr.mxu0 0.0
    %3407 = vmatpush1.xpose.msra.mxu0 %v3376
    %3408 = vmatprep.subr.mxu0 0.0
    %3409 = vmatpush1.xpose.msra.mxu0 %v3374
    %3410 = vmatprep.subr.mxu0 0.0
    %3411 = vmatpush2.xpose.msra.mxu0 0.0
    %3412 = vmatprep.subr.mxu0 0.0
    %3413 = vmatpush2.xpose.msra.mxu0 0.0
    %3414 = vmatprep.subr.mxu0 0.0
    %3415 = vmatpush2.xpose.msra.mxu0 0.0
    %3416 = vmatprep.subr.mxu0 0.0
    %3417 = vmatpush2.xpose.msra.mxu0 0.0
    %3418 = vmatprep.subr.mxu0 0.0
    %3419 = vmatpush2.xpose.msra.mxu0 0.0
    %3420 = vmatprep.subr.mxu0 0.0
    %3421 = vmatpush2.xpose.msra.mxu0 0.0
    %3422 = vmatprep.subr.mxu0 0.0
    %3423 = vmatpush2.xpose.msra.mxu0 0.0
    %3424 = vmatprep.subr.mxu0 0.0
    %3425 = vmatpush2.xpose.msra.mxu0 0.0
    %3426 = vmatprep.subr.mxu0 0.0
    %3427 = vmatpush2.xpose.msra.mxu0 0.0
    %3428 = vmatprep.subr.mxu0 0.0
    %3429 = vmatpush2.xpose.msra.mxu0 0.0
    %3430 = vmatprep.subr.mxu0 0.0
    %3431 = vmatpush2.xpose.msra.mxu0 0.0
    %3432 = vmatprep.subr.mxu0 0.0
    %3433 = vmatpush2.xpose.msra.mxu0 0.0
    %3434 = vmatprep.subr.mxu0 0.0
    %3435 = vmatpush2.xpose.msra.mxu0 0.0
    %3436 = vmatprep.subr.mxu0 0.0
    %3437 = vmatpush2.xpose.msra.mxu0 0.0
    %3438 = vmatprep.subr.mxu0 0.0
    %3439 = vmatpush2.xpose.msra.mxu0 0.0
    %3440 = vmatprep.subr.mxu0 0.0
    %3441 = vmatpush2.xpose.msra.mxu0 0.0
    %3442 = vmatprep.mubr.f32.mxu0 0.0
    %3443 = vmatmul.mubr.f32.gmra.mxu0 %v3370
    %v3444 = vpop.f32.mrf.mxu0
    %v3445 = vadd.f32 0.0, %v3444
    %v3446 = vpop.f32.mrf.mxu0
    %3447 = vmatprep.mubr.f32.mxu0 0.0
    %3448 = vmatmul.mubr.f32.gmra.mxu0 %v3372
    %v3449 = vpop.f32.mrf.mxu0
    %v3450 = vadd.f32 0.0, %v3449
    %v3451 = vpop.f32.mrf.mxu0
    %3452 = vdwg.mxu0
    %v3453 = vmul.f32 %v3445, 0.4472136
    %v3454 = vmul.f32 %v3450, 0.4472136
    %v3455 = vadd.f32 %v3453, %v523
    %v3456 = vadd.f32 %v3454, %v524
    %v3457 = vsel %vm619, %v3455, -inf
    %3458 = vmax.xlane.f32.xlu0 %v3457
    %v3459 = vpop.xlane.xlu0 %3458
    %v3460 = vsel %vm619, %v3456, -inf
    %3461 = vmax.xlane.f32.xlu0 %v3460
    %v3462 = vpop.xlane.xlu0 %3461
    %v3463 = vsub.f32 %v3455, %v3459
    %v3464 = vsub.f32 %v3456, %v3462
    %v3465 = vmul.f32 %v3463, 1.442695
    %v3466 = vpow.pop %v3465
    %v3467 = vmul.f32 %v3464, 1.442695
    %v3468 = vpow.pop %v3467
    %v3469 = vsel %vm619, %v3466, 0.0
    %3470 = vadd.xlane.f32.xlu0 %v3469
    %v3471 = vpop.xlane.xlu0 %3470
    %v3472 = vsel %vm619, %v3468, 0.0
    %3473 = vadd.xlane.f32.xlu0 %v3472
    %v3474 = vpop.xlane.xlu0 %3473
    %v3475 = vrcp.pop %v3471
    %v3476 = vmul.f32 %v3466, %v3475
    %v3477 = vrcp.pop %v3474
    %v3478 = vmul.f32 %v3468, %v3477
    %3479 = vrot.lane.b32.xlu0 %v3152, 103
    %v3480 = vpop.permute.xlu0 %3479
    %3481 = vrot.lane.b32.xlu0 %v3157, 103
    %v3482 = vpop.permute.xlu0 %3481
    %v3486 = vsel %vm619, %v3476, 0
    %v3489 = vsel %vm619, %v3478, 0
    %3491 = vmatprep.subr.mxu0 0.0
    %3492 = vmatpush1.msra.mxu0 0.0
    %3493 = vmatprep.subr.mxu0 0.0
    %3494 = vmatpush1.msra.mxu0 0.0
    %3495 = vmatprep.subr.mxu0 0.0
    %3496 = vmatpush1.msra.mxu0 0.0
    %3497 = vmatprep.subr.mxu0 0.0
    %3498 = vmatpush1.msra.mxu0 0.0
    %3499 = vmatprep.subr.mxu0 0.0
    %3500 = vmatpush1.msra.mxu0 0.0
    %3501 = vmatprep.subr.mxu0 0.0
    %3502 = vmatpush1.msra.mxu0 0.0
    %3503 = vmatprep.subr.mxu0 0.0
    %3504 = vmatpush1.msra.mxu0 0.0
    %3505 = vmatprep.subr.mxu0 0.0
    %3506 = vmatpush1.msra.mxu0 0.0
    %3507 = vmatprep.subr.mxu0 0.0
    %3508 = vmatpush1.msra.mxu0 0.0
    %3509 = vmatprep.subr.mxu0 0.0
    %3510 = vmatpush1.msra.mxu0 0.0
    %3511 = vmatprep.subr.mxu0 0.0
    %3512 = vmatpush1.msra.mxu0 0.0
    %3513 = vmatprep.subr.mxu0 0.0
    %3514 = vmatpush1.msra.mxu0 0.0
    %3515 = vmatprep.subr.mxu0 0.0
    %3516 = vmatpush1.msra.mxu0 0.0
    %3517 = vmatprep.subr.mxu0 0.0
    %3518 = vmatpush1.msra.mxu0 0.0
    %3519 = vmatprep.subr.mxu0 0.0
    %3520 = vmatpush1.msra.mxu0 %v3482
    %3521 = vmatprep.subr.mxu0 0.0
    %3522 = vmatpush1.msra.mxu0 %v3480
    %3523 = vmatprep.subr.mxu0 0.0
    %3524 = vmatpush2.msra.mxu0 0.0
    %3525 = vmatprep.subr.mxu0 0.0
    %3526 = vmatpush2.msra.mxu0 0.0
    %3527 = vmatprep.subr.mxu0 0.0
    %3528 = vmatpush2.msra.mxu0 0.0
    %3529 = vmatprep.subr.mxu0 0.0
    %3530 = vmatpush2.msra.mxu0 0.0
    %3531 = vmatprep.subr.mxu0 0.0
    %3532 = vmatpush2.msra.mxu0 0.0
    %3533 = vmatprep.subr.mxu0 0.0
    %3534 = vmatpush2.msra.mxu0 0.0
    %3535 = vmatprep.subr.mxu0 0.0
    %3536 = vmatpush2.msra.mxu0 0.0
    %3537 = vmatprep.subr.mxu0 0.0
    %3538 = vmatpush2.msra.mxu0 0.0
    %3539 = vmatprep.subr.mxu0 0.0
    %3540 = vmatpush2.msra.mxu0 0.0
    %3541 = vmatprep.subr.mxu0 0.0
    %3542 = vmatpush2.msra.mxu0 0.0
    %3543 = vmatprep.subr.mxu0 0.0
    %3544 = vmatpush2.msra.mxu0 0.0
    %3545 = vmatprep.subr.mxu0 0.0
    %3546 = vmatpush2.msra.mxu0 0.0
    %3547 = vmatprep.subr.mxu0 0.0
    %3548 = vmatpush2.msra.mxu0 0.0
    %3549 = vmatprep.subr.mxu0 0.0
    %3550 = vmatpush2.msra.mxu0 0.0
    %3551 = vmatprep.subr.mxu0 0.0
    %3552 = vmatpush2.msra.mxu0 0.0
    %3553 = vmatprep.subr.mxu0 0.0
    %3554 = vmatpush2.msra.mxu0 0.0
    %3555 = vmatprep.mubr.f32.mxu0 0.0
    %3556 = vmatmul.mubr.f32.gmra.mxu0 %v3486
    %v3557 = vpop.f32.mrf.mxu0
    %v3558 = vadd.f32 0.0, %v3557
    %v3559 = vpop.f32.mrf.mxu0
    %3560 = vmatprep.mubr.f32.mxu0 0.0
    %3561 = vmatmul.mubr.f32.gmra.mxu0 %v3489
    %v3562 = vpop.f32.mrf.mxu0
    %v3563 = vadd.f32 0.0, %v3562
    %v3564 = vpop.f32.mrf.mxu0
    %3565 = vdwg.mxu0
    %3568 = vrot.lane.b32.xlu0 %v3558, 5
    %v3569 = vpop.permute.xlu0 %3568
    %3570 = vrot.lane.b32.xlu0 %v3563, 5
    %v3571 = vpop.permute.xlu0 %3570
    %v3574 = vsel %vm531, %v3354, %v3569
    %v3575 = vsel %vm531, %v3359, %v3571
    %v3576 = vld [vmem:[#allocation2 + $0x468] sm:$0xff]
    %v3577 = vld [vmem:[#allocation2 + $0x470] sm:$0x3]
    %v3578 = vld [vmem:[#allocation2 + $0x488] sm:$0x1]
    %v3579 = vlaneseq
    %v3580 = vshrl.u32 %v3579, 7
    %v3581 = vsub.s32 0, %v3580
    %v3582 = vrot.slane %v3578, %v3581
    %v3584 = vsel %vm950, %v3574, 0
    %v3587 = vsel %vm950, %v3575, 0
    %v3590 = vsel %vm957, %v3577, 0
    %3592 = vmatprep.subr.mxu0 0.0
    %3593 = vmatpush1.msra.mxu0 0.0
    %3594 = vmatprep.subr.mxu0 0.0
    %3595 = vmatpush1.msra.mxu0 0.0
    %3596 = vmatprep.subr.mxu0 0.0
    %3597 = vmatpush1.msra.mxu0 0.0
    %3598 = vmatprep.subr.mxu0 0.0
    %3599 = vmatpush1.msra.mxu0 0.0
    %3600 = vmatprep.subr.mxu0 0.0
    %3601 = vmatpush1.msra.mxu0 0.0
    %3602 = vmatprep.subr.mxu0 0.0
    %3603 = vmatpush1.msra.mxu0 0.0
    %3604 = vmatprep.subr.mxu0 0.0
    %3605 = vmatpush1.msra.mxu0 0.0
    %3606 = vmatprep.subr.mxu0 0.0
    %3607 = vmatpush1.msra.mxu0 0.0
    %3608 = vmatprep.subr.mxu0 0.0
    %3609 = vmatpush1.msra.mxu0 0.0
    %3610 = vmatprep.subr.mxu0 0.0
    %3611 = vmatpush1.msra.mxu0 0.0
    %3612 = vmatprep.subr.mxu0 0.0
    %3613 = vmatpush1.msra.mxu0 0.0
    %3614 = vmatprep.subr.mxu0 0.0
    %3615 = vmatpush1.msra.mxu0 0.0
    %3616 = vmatprep.subr.mxu0 0.0
    %3617 = vmatpush1.msra.mxu0 0.0
    %3618 = vmatprep.subr.mxu0 0.0
    %3619 = vmatpush1.msra.mxu0 0.0
    %3620 = vmatprep.subr.mxu0 0.0
    %3621 = vmatpush1.msra.mxu0 %v3590
    %3622 = vmatprep.subr.mxu0 0.0
    %3623 = vmatpush1.msra.mxu0 %v3576
    %3624 = vmatprep.subr.mxu0 0.0
    %3625 = vmatpush2.msra.mxu0 0.0
    %3626 = vmatprep.subr.mxu0 0.0
    %3627 = vmatpush2.msra.mxu0 0.0
    %3628 = vmatprep.subr.mxu0 0.0
    %3629 = vmatpush2.msra.mxu0 0.0
    %3630 = vmatprep.subr.mxu0 0.0
    %3631 = vmatpush2.msra.mxu0 0.0
    %3632 = vmatprep.subr.mxu0 0.0
    %3633 = vmatpush2.msra.mxu0 0.0
    %3634 = vmatprep.subr.mxu0 0.0
    %3635 = vmatpush2.msra.mxu0 0.0
    %3636 = vmatprep.subr.mxu0 0.0
    %3637 = vmatpush2.msra.mxu0 0.0
    %3638 = vmatprep.subr.mxu0 0.0
    %3639 = vmatpush2.msra.mxu0 0.0
    %3640 = vmatprep.subr.mxu0 0.0
    %3641 = vmatpush2.msra.mxu0 0.0
    %3642 = vmatprep.subr.mxu0 0.0
    %3643 = vmatpush2.msra.mxu0 0.0
    %3644 = vmatprep.subr.mxu0 0.0
    %3645 = vmatpush2.msra.mxu0 0.0
    %3646 = vmatprep.subr.mxu0 0.0
    %3647 = vmatpush2.msra.mxu0 0.0
    %3648 = vmatprep.subr.mxu0 0.0
    %3649 = vmatpush2.msra.mxu0 0.0
    %3650 = vmatprep.subr.mxu0 0.0
    %3651 = vmatpush2.msra.mxu0 0.0
    %3652 = vmatprep.subr.mxu0 0.0
    %3653 = vmatpush2.msra.mxu0 0.0
    %3654 = vmatprep.subr.mxu0 0.0
    %3655 = vmatpush2.msra.mxu0 0.0
    %3656 = vmatprep.mubr.f32.mxu0 0.0
    %3657 = vmatmul.mubr.f32.gmra.mxu0 %v3584
    %v3658 = vpop.f32.mrf.mxu0
    %v3659 = vadd.f32 %v3582, %v3658
    %v3660 = vpop.f32.mrf.mxu0
    %3661 = vmatprep.mubr.f32.mxu0 0.0
    %3662 = vmatmul.mubr.f32.gmra.mxu0 %v3587
    %v3663 = vpop.f32.mrf.mxu0
    %v3664 = vadd.f32 %v3582, %v3663
    %v3665 = vpop.f32.mrf.mxu0
    %3666 = vdwg.mxu0
    %v3667 = vadd.f32 %v394, %v3659
    %v3668 = vadd.f32 %v399, %v3664
    %v3669 = vld [vmem:[#allocation2 + $0x530] sm:$0x1]
    %v3670 = vld [vmem:[#allocation2 + $0x531] sm:$0x1]
    %v3671 = vld [vmem:[#allocation2 + $0x532] sm:$0x1]
    %v3672 = vsel %vm133, %v3667, 0.0
    %3673 = vadd.xlane.f32.xlu0 %v3672
    %v3674 = vpop.xlane.xlu0 %3673
    %v3675 = vsel %vm133, %v3668, 0.0
    %3676 = vadd.xlane.f32.xlu0 %v3675
    %v3677 = vpop.xlane.xlu0 %3676
    %v3678 = vmul.f32 %v3674, 0.1
    %v3679 = vmul.f32 %v3677, 0.1
    %v3680 = vsub.f32 %v3667, %v3678
    %v3681 = vsub.f32 %v3668, %v3679
    %v3682 = vlaneseq
    %v3683 = vshrl.u32 %v3682, 7
    %v3684 = vsub.s32 0, %v3683
    %v3685 = vrot.slane %v3671, %v3684
    %v3686 = vmul.f32 %v3680, %v3685
    %v3687 = vmul.f32 %v3681, %v3685
    %v3688 = vmul.f32 %v3686, %v3686
    %v3689 = vmul.f32 %v3687, %v3687
    %v3690 = vsel %vm133, %v3688, 0.0
    %3691 = vadd.xlane.f32.xlu0 %v3690
    %v3692 = vpop.xlane.xlu0 %3691
    %v3693 = vsel %vm133, %v3689, 0.0
    %3694 = vadd.xlane.f32.xlu0 %v3693
    %v3695 = vpop.xlane.xlu0 %3694
    %v3696 = vmul.f32 %v3692, 0.1
    %v3697 = vmul.f32 %v3695, 0.1
    %v3698 = vadd.f32 %v3696, 1e-05
    %v3699 = vadd.f32 %v3697, 1e-05
    %v3700 = vrsqrt.pop %v3698
    %v3701 = vrsqrt.pop %v3699
    %v3702 = vmul.f32 %v3686, %v3700
    %v3703 = vmul.f32 %v3687, %v3701
    %v3704 = vlaneseq
    %v3705 = vshrl.u32 %v3704, 7
    %v3706 = vsub.s32 0, %v3705
    %v3707 = vrot.slane %v3669, %v3706
    %v3708 = vmul.f32 %v3702, %v3707
    %v3709 = vmul.f32 %v3703, %v3707
    %v3710 = vlaneseq
    %v3711 = vshrl.u32 %v3710, 7
    %v3712 = vsub.s32 0, %v3711
    %v3713 = vrot.slane %v3670, %v3712
    %v3714 = vadd.f32 %v3708, %v3713
    %v3715 = vadd.f32 %v3709, %v3713
    %v3716 = vld [vmem:[#allocation2 + $0x490] sm:$0xff]
    %v3717 = vld [vmem:[#allocation2 + $0x498] sm:$0xff]
    %v3718 = vld [vmem:[#allocation2 + $0x4a0] sm:$0xff]
    %v3719 = vld [vmem:[#allocation2 + $0x4a8] sm:$0xff]
    %v3720 = vld [vmem:[#allocation2 + $0x4b0] sm:$0x1]
    %v3721 = vlaneseq
    %v3722 = vshrl.u32 %v3721, 7
    %v3723 = vsub.s32 0, %v3722
    %v3724 = vrot.slane %v3720, %v3723
    %v3726 = vsel %vm133, %v3714, 0
    %v3729 = vsel %vm133, %v3715, 0
    %3731 = vmatprep.subr.mxu0 0.0
    %3732 = vmatpush1.msra.mxu0 0.0
    %3733 = vmatprep.subr.mxu0 0.0
    %3734 = vmatpush1.msra.mxu0 0.0
    %3735 = vmatprep.subr.mxu0 0.0
    %3736 = vmatpush1.msra.mxu0 0.0
    %3737 = vmatprep.subr.mxu0 0.0
    %3738 = vmatpush1.msra.mxu0 0.0
    %3739 = vmatprep.subr.mxu0 0.0
    %3740 = vmatpush1.msra.mxu0 0.0
    %3741 = vmatprep.subr.mxu0 0.0
    %3742 = vmatpush1.msra.mxu0 0.0
    %3743 = vmatprep.subr.mxu0 0.0
    %3744 = vmatpush1.msra.mxu0 0.0
    %3745 = vmatprep.subr.mxu0 0.0
    %3746 = vmatpush1.msra.mxu0 0.0
    %3747 = vmatprep.subr.mxu0 0.0
    %3748 = vmatpush1.msra.mxu0 0.0
    %3749 = vmatprep.subr.mxu0 0.0
    %3750 = vmatpush1.msra.mxu0 0.0
    %3751 = vmatprep.subr.mxu0 0.0
    %3752 = vmatpush1.msra.mxu0 0.0
    %3753 = vmatprep.subr.mxu0 0.0
    %3754 = vmatpush1.msra.mxu0 0.0
    %3755 = vmatprep.subr.mxu0 0.0
    %3756 = vmatpush1.msra.mxu0 %v3719
    %3757 = vmatprep.subr.mxu0 0.0
    %3758 = vmatpush1.msra.mxu0 %v3718
    %3759 = vmatprep.subr.mxu0 0.0
    %3760 = vmatpush1.msra.mxu0 %v3717
    %3761 = vmatprep.subr.mxu0 0.0
    %3762 = vmatpush1.msra.mxu0 %v3716
    %3763 = vmatprep.subr.mxu0 0.0
    %3764 = vmatpush2.msra.mxu0 0.0
    %3765 = vmatprep.subr.mxu0 0.0
    %3766 = vmatpush2.msra.mxu0 0.0
    %3767 = vmatprep.subr.mxu0 0.0
    %3768 = vmatpush2.msra.mxu0 0.0
    %3769 = vmatprep.subr.mxu0 0.0
    %3770 = vmatpush2.msra.mxu0 0.0
    %3771 = vmatprep.subr.mxu0 0.0
    %3772 = vmatpush2.msra.mxu0 0.0
    %3773 = vmatprep.subr.mxu0 0.0
    %3774 = vmatpush2.msra.mxu0 0.0
    %3775 = vmatprep.subr.mxu0 0.0
    %3776 = vmatpush2.msra.mxu0 0.0
    %3777 = vmatprep.subr.mxu0 0.0
    %3778 = vmatpush2.msra.mxu0 0.0
    %3779 = vmatprep.subr.mxu0 0.0
    %3780 = vmatpush2.msra.mxu0 0.0
    %3781 = vmatprep.subr.mxu0 0.0
    %3782 = vmatpush2.msra.mxu0 0.0
    %3783 = vmatprep.subr.mxu0 0.0
    %3784 = vmatpush2.msra.mxu0 0.0
    %3785 = vmatprep.subr.mxu0 0.0
    %3786 = vmatpush2.msra.mxu0 0.0
    %3787 = vmatprep.subr.mxu0 0.0
    %3788 = vmatpush2.msra.mxu0 0.0
    %3789 = vmatprep.subr.mxu0 0.0
    %3790 = vmatpush2.msra.mxu0 0.0
    %3791 = vmatprep.subr.mxu0 0.0
    %3792 = vmatpush2.msra.mxu0 0.0
    %3793 = vmatprep.subr.mxu0 0.0
    %3794 = vmatpush2.msra.mxu0 0.0
    %3795 = vmatprep.mubr.f32.mxu0 0.0
    %3796 = vmatmul.mubr.f32.gmra.mxu0 %v3726
    %v3797 = vpop.f32.mrf.mxu0
    %v3798 = vadd.f32 %v3724, %v3797
    %v3799 = vpop.f32.mrf.mxu0
    %3800 = vmatprep.mubr.f32.mxu0 0.0
    %3801 = vmatmul.mubr.f32.gmra.mxu0 %v3729
    %v3802 = vpop.f32.mrf.mxu0
    %v3803 = vadd.f32 %v3724, %v3802
    %v3804 = vpop.f32.mrf.mxu0
    %3805 = vdwg.mxu0
    %v3807 = vsel %vm133, %v3068, 0
    %v3810 = vsel %vm133, %v3069, 0
    %3812 = vmatprep.subr.mxu0 0.0
    %3813 = vmatpush1.msra.mxu0 0.0
    %3814 = vmatprep.subr.mxu0 0.0
    %3815 = vmatpush1.msra.mxu0 0.0
    %3816 = vmatprep.subr.mxu0 0.0
    %3817 = vmatpush1.msra.mxu0 0.0
    %3818 = vmatprep.subr.mxu0 0.0
    %3819 = vmatpush1.msra.mxu0 0.0
    %3820 = vmatprep.subr.mxu0 0.0
    %3821 = vmatpush1.msra.mxu0 0.0
    %3822 = vmatprep.subr.mxu0 0.0
    %3823 = vmatpush1.msra.mxu0 0.0
    %3824 = vmatprep.subr.mxu0 0.0
    %3825 = vmatpush1.msra.mxu0 0.0
    %3826 = vmatprep.subr.mxu0 0.0
    %3827 = vmatpush1.msra.mxu0 0.0
    %3828 = vmatprep.subr.mxu0 0.0
    %3829 = vmatpush1.msra.mxu0 0.0
    %3830 = vmatprep.subr.mxu0 0.0
    %3831 = vmatpush1.msra.mxu0 0.0
    %3832 = vmatprep.subr.mxu0 0.0
    %3833 = vmatpush1.msra.mxu0 0.0
    %3834 = vmatprep.subr.mxu0 0.0
    %3835 = vmatpush1.msra.mxu0 0.0
    %3836 = vmatprep.subr.mxu0 0.0
    %3837 = vmatpush1.msra.mxu0 %v3719
    %3838 = vmatprep.subr.mxu0 0.0
    %3839 = vmatpush1.msra.mxu0 %v3718
    %3840 = vmatprep.subr.mxu0 0.0
    %3841 = vmatpush1.msra.mxu0 %v3717
    %3842 = vmatprep.subr.mxu0 0.0
    %3843 = vmatpush1.msra.mxu0 %v3716
    %3844 = vmatprep.subr.mxu0 0.0
    %3845 = vmatpush2.msra.mxu0 0.0
    %3846 = vmatprep.subr.mxu0 0.0
    %3847 = vmatpush2.msra.mxu0 0.0
    %3848 = vmatprep.subr.mxu0 0.0
    %3849 = vmatpush2.msra.mxu0 0.0
    %3850 = vmatprep.subr.mxu0 0.0
    %3851 = vmatpush2.msra.mxu0 0.0
    %3852 = vmatprep.subr.mxu0 0.0
    %3853 = vmatpush2.msra.mxu0 0.0
    %3854 = vmatprep.subr.mxu0 0.0
    %3855 = vmatpush2.msra.mxu0 0.0
    %3856 = vmatprep.subr.mxu0 0.0
    %3857 = vmatpush2.msra.mxu0 0.0
    %3858 = vmatprep.subr.mxu0 0.0
    %3859 = vmatpush2.msra.mxu0 0.0
    %3860 = vmatprep.subr.mxu0 0.0
    %3861 = vmatpush2.msra.mxu0 0.0
    %3862 = vmatprep.subr.mxu0 0.0
    %3863 = vmatpush2.msra.mxu0 0.0
    %3864 = vmatprep.subr.mxu0 0.0
    %3865 = vmatpush2.msra.mxu0 0.0
    %3866 = vmatprep.subr.mxu0 0.0
    %3867 = vmatpush2.msra.mxu0 0.0
    %3868 = vmatprep.subr.mxu0 0.0
    %3869 = vmatpush2.msra.mxu0 0.0
    %3870 = vmatprep.subr.mxu0 0.0
    %3871 = vmatpush2.msra.mxu0 0.0
    %3872 = vmatprep.subr.mxu0 0.0
    %3873 = vmatpush2.msra.mxu0 0.0
    %3874 = vmatprep.subr.mxu0 0.0
    %3875 = vmatpush2.msra.mxu0 0.0
    %3876 = vmatprep.mubr.f32.mxu0 0.0
    %3877 = vmatmul.mubr.f32.gmra.mxu0 %v3807
    %v3878 = vpop.f32.mrf.mxu0
    %v3879 = vadd.f32 %v3724, %v3878
    %v3880 = vpop.f32.mrf.mxu0
    %3881 = vmatprep.mubr.f32.mxu0 0.0
    %3882 = vmatmul.mubr.f32.gmra.mxu0 %v3810
    %v3883 = vpop.f32.mrf.mxu0
    %v3884 = vadd.f32 %v3724, %v3883
    %v3885 = vpop.f32.mrf.mxu0
    %3886 = vdwg.mxu0
    %3889 = vrot.lane.b32.xlu0 %v3879, 118
    %v3890 = vpop.permute.xlu0 %3889
    %3891 = vrot.lane.b32.xlu0 %v3884, 118
    %v3892 = vpop.permute.xlu0 %3891
    %v3894 = vsel %vm531, %v3798, 0
    %v3897 = vsel %vm531, %v3803, 0
    %v3899 = vsel %vm531, %v3890, 0
    %v3901 = vsel %vm531, %v3892, 0
    %3903 = vmatprep.subr.mxu0 0.0
    %3904 = vmatpush1.xpose.msra.mxu0 0.0
    %3905 = vmatprep.subr.mxu0 0.0
    %3906 = vmatpush1.xpose.msra.mxu0 0.0
    %3907 = vmatprep.subr.mxu0 0.0
    %3908 = vmatpush1.xpose.msra.mxu0 0.0
    %3909 = vmatprep.subr.mxu0 0.0
    %3910 = vmatpush1.xpose.msra.mxu0 0.0
    %3911 = vmatprep.subr.mxu0 0.0
    %3912 = vmatpush1.xpose.msra.mxu0 0.0
    %3913 = vmatprep.subr.mxu0 0.0
    %3914 = vmatpush1.xpose.msra.mxu0 0.0
    %3915 = vmatprep.subr.mxu0 0.0
    %3916 = vmatpush1.xpose.msra.mxu0 0.0
    %3917 = vmatprep.subr.mxu0 0.0
    %3918 = vmatpush1.xpose.msra.mxu0 0.0
    %3919 = vmatprep.subr.mxu0 0.0
    %3920 = vmatpush1.xpose.msra.mxu0 0.0
    %3921 = vmatprep.subr.mxu0 0.0
    %3922 = vmatpush1.xpose.msra.mxu0 0.0
    %3923 = vmatprep.subr.mxu0 0.0
    %3924 = vmatpush1.xpose.msra.mxu0 0.0
    %3925 = vmatprep.subr.mxu0 0.0
    %3926 = vmatpush1.xpose.msra.mxu0 0.0
    %3927 = vmatprep.subr.mxu0 0.0
    %3928 = vmatpush1.xpose.msra.mxu0 0.0
    %3929 = vmatprep.subr.mxu0 0.0
    %3930 = vmatpush1.xpose.msra.mxu0 0.0
    %3931 = vmatprep.subr.mxu0 0.0
    %3932 = vmatpush1.xpose.msra.mxu0 %v3901
    %3933 = vmatprep.subr.mxu0 0.0
    %3934 = vmatpush1.xpose.msra.mxu0 %v3899
    %3935 = vmatprep.subr.mxu0 0.0
    %3936 = vmatpush2.xpose.msra.mxu0 0.0
    %3937 = vmatprep.subr.mxu0 0.0
    %3938 = vmatpush2.xpose.msra.mxu0 0.0
    %3939 = vmatprep.subr.mxu0 0.0
    %3940 = vmatpush2.xpose.msra.mxu0 0.0
    %3941 = vmatprep.subr.mxu0 0.0
    %3942 = vmatpush2.xpose.msra.mxu0 0.0
    %3943 = vmatprep.subr.mxu0 0.0
    %3944 = vmatpush2.xpose.msra.mxu0 0.0
    %3945 = vmatprep.subr.mxu0 0.0
    %3946 = vmatpush2.xpose.msra.mxu0 0.0
    %3947 = vmatprep.subr.mxu0 0.0
    %3948 = vmatpush2.xpose.msra.mxu0 0.0
    %3949 = vmatprep.subr.mxu0 0.0
    %3950 = vmatpush2.xpose.msra.mxu0 0.0
    %3951 = vmatprep.subr.mxu0 0.0
    %3952 = vmatpush2.xpose.msra.mxu0 0.0
    %3953 = vmatprep.subr.mxu0 0.0
    %3954 = vmatpush2.xpose.msra.mxu0 0.0
    %3955 = vmatprep.subr.mxu0 0.0
    %3956 = vmatpush2.xpose.msra.mxu0 0.0
    %3957 = vmatprep.subr.mxu0 0.0
    %3958 = vmatpush2.xpose.msra.mxu0 0.0
    %3959 = vmatprep.subr.mxu0 0.0
    %3960 = vmatpush2.xpose.msra.mxu0 0.0
    %3961 = vmatprep.subr.mxu0 0.0
    %3962 = vmatpush2.xpose.msra.mxu0 0.0
    %3963 = vmatprep.subr.mxu0 0.0
    %3964 = vmatpush2.xpose.msra.mxu0 0.0
    %3965 = vmatprep.subr.mxu0 0.0
    %3966 = vmatpush2.xpose.msra.mxu0 0.0
    %3967 = vmatprep.mubr.f32.mxu0 0.0
    %3968 = vmatmul.mubr.f32.gmra.mxu0 %v3894
    %v3969 = vpop.f32.mrf.mxu0
    %v3970 = vadd.f32 0.0, %v3969
    %v3971 = vpop.f32.mrf.mxu0
    %3972 = vmatprep.mubr.f32.mxu0 0.0
    %3973 = vmatmul.mubr.f32.gmra.mxu0 %v3897
    %v3974 = vpop.f32.mrf.mxu0
    %v3975 = vadd.f32 0.0, %v3974
    %v3976 = vpop.f32.mrf.mxu0
    %3977 = vdwg.mxu0
    %v3978 = vmul.f32 %v3970, 0.4472136
    %v3979 = vmul.f32 %v3975, 0.4472136
    %v3980 = vadd.f32 %v3978, %v523
    %v3981 = vadd.f32 %v3979, %v524
    %v3982 = vsel %vm619, %v3980, -inf
    %3983 = vmax.xlane.f32.xlu0 %v3982
    %v3984 = vpop.xlane.xlu0 %3983
    %v3985 = vsel %vm619, %v3981, -inf
    %3986 = vmax.xlane.f32.xlu0 %v3985
    %v3987 = vpop.xlane.xlu0 %3986
    %v3988 = vsub.f32 %v3980, %v3984
    %v3989 = vsub.f32 %v3981, %v3987
    %v3990 = vmul.f32 %v3988, 1.442695
    %v3991 = vpow.pop %v3990
    %v3992 = vmul.f32 %v3989, 1.442695
    %v3993 = vpow.pop %v3992
    %v3994 = vsel %vm619, %v3991, 0.0
    %3995 = vadd.xlane.f32.xlu0 %v3994
    %v3996 = vpop.xlane.xlu0 %3995
    %v3997 = vsel %vm619, %v3993, 0.0
    %3998 = vadd.xlane.f32.xlu0 %v3997
    %v3999 = vpop.xlane.xlu0 %3998
    %v4000 = vrcp.pop %v3996
    %v4001 = vmul.f32 %v3991, %v4000
    %v4002 = vrcp.pop %v3999
    %v4003 = vmul.f32 %v3993, %v4002
    %4004 = vrot.lane.b32.xlu0 %v3879, 108
    %v4005 = vpop.permute.xlu0 %4004
    %4006 = vrot.lane.b32.xlu0 %v3884, 108
    %v4007 = vpop.permute.xlu0 %4006
    %v4011 = vsel %vm619, %v4001, 0
    %v4014 = vsel %vm619, %v4003, 0
    %4016 = vmatprep.subr.mxu0 0.0
    %4017 = vmatpush1.msra.mxu0 0.0
    %4018 = vmatprep.subr.mxu0 0.0
    %4019 = vmatpush1.msra.mxu0 0.0
    %4020 = vmatprep.subr.mxu0 0.0
    %4021 = vmatpush1.msra.mxu0 0.0
    %4022 = vmatprep.subr.mxu0 0.0
    %4023 = vmatpush1.msra.mxu0 0.0
    %4024 = vmatprep.subr.mxu0 0.0
    %4025 = vmatpush1.msra.mxu0 0.0
    %4026 = vmatprep.subr.mxu0 0.0
    %4027 = vmatpush1.msra.mxu0 0.0
    %4028 = vmatprep.subr.mxu0 0.0
    %4029 = vmatpush1.msra.mxu0 0.0
    %4030 = vmatprep.subr.mxu0 0.0
    %4031 = vmatpush1.msra.mxu0 0.0
    %4032 = vmatprep.subr.mxu0 0.0
    %4033 = vmatpush1.msra.mxu0 0.0
    %4034 = vmatprep.subr.mxu0 0.0
    %4035 = vmatpush1.msra.mxu0 0.0
    %4036 = vmatprep.subr.mxu0 0.0
    %4037 = vmatpush1.msra.mxu0 0.0
    %4038 = vmatprep.subr.mxu0 0.0
    %4039 = vmatpush1.msra.mxu0 0.0
    %4040 = vmatprep.subr.mxu0 0.0
    %4041 = vmatpush1.msra.mxu0 0.0
    %4042 = vmatprep.subr.mxu0 0.0
    %4043 = vmatpush1.msra.mxu0 0.0
    %4044 = vmatprep.subr.mxu0 0.0
    %4045 = vmatpush1.msra.mxu0 %v4007
    %4046 = vmatprep.subr.mxu0 0.0
    %4047 = vmatpush1.msra.mxu0 %v4005
    %4048 = vmatprep.subr.mxu0 0.0
    %4049 = vmatpush2.msra.mxu0 0.0
    %4050 = vmatprep.subr.mxu0 0.0
    %4051 = vmatpush2.msra.mxu0 0.0
    %4052 = vmatprep.subr.mxu0 0.0
    %4053 = vmatpush2.msra.mxu0 0.0
    %4054 = vmatprep.subr.mxu0 0.0
    %4055 = vmatpush2.msra.mxu0 0.0
    %4056 = vmatprep.subr.mxu0 0.0
    %4057 = vmatpush2.msra.mxu0 0.0
    %4058 = vmatprep.subr.mxu0 0.0
    %4059 = vmatpush2.msra.mxu0 0.0
    %4060 = vmatprep.subr.mxu0 0.0
    %4061 = vmatpush2.msra.mxu0 0.0
    %4062 = vmatprep.subr.mxu0 0.0
    %4063 = vmatpush2.msra.mxu0 0.0
    %4064 = vmatprep.subr.mxu0 0.0
    %4065 = vmatpush2.msra.mxu0 0.0
    %4066 = vmatprep.subr.mxu0 0.0
    %4067 = vmatpush2.msra.mxu0 0.0
    %4068 = vmatprep.subr.mxu0 0.0
    %4069 = vmatpush2.msra.mxu0 0.0
    %4070 = vmatprep.subr.mxu0 0.0
    %4071 = vmatpush2.msra.mxu0 0.0
    %4072 = vmatprep.subr.mxu0 0.0
    %4073 = vmatpush2.msra.mxu0 0.0
    %4074 = vmatprep.subr.mxu0 0.0
    %4075 = vmatpush2.msra.mxu0 0.0
    %4076 = vmatprep.subr.mxu0 0.0
    %4077 = vmatpush2.msra.mxu0 0.0
    %4078 = vmatprep.subr.mxu0 0.0
    %4079 = vmatpush2.msra.mxu0 0.0
    %4080 = vmatprep.mubr.f32.mxu0 0.0
    %4081 = vmatmul.mubr.f32.gmra.mxu0 %v4011
    %v4082 = vpop.f32.mrf.mxu0
    %v4083 = vadd.f32 0.0, %v4082
    %v4084 = vpop.f32.mrf.mxu0
    %4085 = vmatprep.mubr.f32.mxu0 0.0
    %4086 = vmatmul.mubr.f32.gmra.mxu0 %v4014
    %v4087 = vpop.f32.mrf.mxu0
    %v4088 = vadd.f32 0.0, %v4087
    %v4089 = vpop.f32.mrf.mxu0
    %4090 = vdwg.mxu0
    %4091 = vrot.lane.b32.xlu0 %v3798, 123
    %v4092 = vpop.permute.xlu0 %4091
    %4093 = vrot.lane.b32.xlu0 %v3803, 123
    %v4094 = vpop.permute.xlu0 %4093
    %4095 = vrot.lane.b32.xlu0 %v3879, 113
    %v4096 = vpop.permute.xlu0 %4095
    %4097 = vrot.lane.b32.xlu0 %v3884, 113
    %v4098 = vpop.permute.xlu0 %4097
    %v4099 = vsel %vm531, %v4092, 0
    %v4101 = vsel %vm531, %v4094, 0
    %v4103 = vsel %vm531, %v4096, 0
    %v4105 = vsel %vm531, %v4098, 0
    %4107 = vmatprep.subr.mxu0 0.0
    %4108 = vmatpush1.xpose.msra.mxu0 0.0
    %4109 = vmatprep.subr.mxu0 0.0
    %4110 = vmatpush1.xpose.msra.mxu0 0.0
    %4111 = vmatprep.subr.mxu0 0.0
    %4112 = vmatpush1.xpose.msra.mxu0 0.0
    %4113 = vmatprep.subr.mxu0 0.0
    %4114 = vmatpush1.xpose.msra.mxu0 0.0
    %4115 = vmatprep.subr.mxu0 0.0
    %4116 = vmatpush1.xpose.msra.mxu0 0.0
    %4117 = vmatprep.subr.mxu0 0.0
    %4118 = vmatpush1.xpose.msra.mxu0 0.0
    %4119 = vmatprep.subr.mxu0 0.0
    %4120 = vmatpush1.xpose.msra.mxu0 0.0
    %4121 = vmatprep.subr.mxu0 0.0
    %4122 = vmatpush1.xpose.msra.mxu0 0.0
    %4123 = vmatprep.subr.mxu0 0.0
    %4124 = vmatpush1.xpose.msra.mxu0 0.0
    %4125 = vmatprep.subr.mxu0 0.0
    %4126 = vmatpush1.xpose.msra.mxu0 0.0
    %4127 = vmatprep.subr.mxu0 0.0
    %4128 = vmatpush1.xpose.msra.mxu0 0.0
    %4129 = vmatprep.subr.mxu0 0.0
    %4130 = vmatpush1.xpose.msra.mxu0 0.0
    %4131 = vmatprep.subr.mxu0 0.0
    %4132 = vmatpush1.xpose.msra.mxu0 0.0
    %4133 = vmatprep.subr.mxu0 0.0
    %4134 = vmatpush1.xpose.msra.mxu0 0.0
    %4135 = vmatprep.subr.mxu0 0.0
    %4136 = vmatpush1.xpose.msra.mxu0 %v4105
    %4137 = vmatprep.subr.mxu0 0.0
    %4138 = vmatpush1.xpose.msra.mxu0 %v4103
    %4139 = vmatprep.subr.mxu0 0.0
    %4140 = vmatpush2.xpose.msra.mxu0 0.0
    %4141 = vmatprep.subr.mxu0 0.0
    %4142 = vmatpush2.xpose.msra.mxu0 0.0
    %4143 = vmatprep.subr.mxu0 0.0
    %4144 = vmatpush2.xpose.msra.mxu0 0.0
    %4145 = vmatprep.subr.mxu0 0.0
    %4146 = vmatpush2.xpose.msra.mxu0 0.0
    %4147 = vmatprep.subr.mxu0 0.0
    %4148 = vmatpush2.xpose.msra.mxu0 0.0
    %4149 = vmatprep.subr.mxu0 0.0
    %4150 = vmatpush2.xpose.msra.mxu0 0.0
    %4151 = vmatprep.subr.mxu0 0.0
    %4152 = vmatpush2.xpose.msra.mxu0 0.0
    %4153 = vmatprep.subr.mxu0 0.0
    %4154 = vmatpush2.xpose.msra.mxu0 0.0
    %4155 = vmatprep.subr.mxu0 0.0
    %4156 = vmatpush2.xpose.msra.mxu0 0.0
    %4157 = vmatprep.subr.mxu0 0.0
    %4158 = vmatpush2.xpose.msra.mxu0 0.0
    %4159 = vmatprep.subr.mxu0 0.0
    %4160 = vmatpush2.xpose.msra.mxu0 0.0
    %4161 = vmatprep.subr.mxu0 0.0
    %4162 = vmatpush2.xpose.msra.mxu0 0.0
    %4163 = vmatprep.subr.mxu0 0.0
    %4164 = vmatpush2.xpose.msra.mxu0 0.0
    %4165 = vmatprep.subr.mxu0 0.0
    %4166 = vmatpush2.xpose.msra.mxu0 0.0
    %4167 = vmatprep.subr.mxu0 0.0
    %4168 = vmatpush2.xpose.msra.mxu0 0.0
    %4169 = vmatprep.subr.mxu0 0.0
    %4170 = vmatpush2.xpose.msra.mxu0 0.0
    %4171 = vmatprep.mubr.f32.mxu0 0.0
    %4172 = vmatmul.mubr.f32.gmra.mxu0 %v4099
    %v4173 = vpop.f32.mrf.mxu0
    %v4174 = vadd.f32 0.0, %v4173
    %v4175 = vpop.f32.mrf.mxu0
    %4176 = vmatprep.mubr.f32.mxu0 0.0
    %4177 = vmatmul.mubr.f32.gmra.mxu0 %v4101
    %v4178 = vpop.f32.mrf.mxu0
    %v4179 = vadd.f32 0.0, %v4178
    %v4180 = vpop.f32.mrf.mxu0
    %4181 = vdwg.mxu0
    %v4182 = vmul.f32 %v4174, 0.4472136
    %v4183 = vmul.f32 %v4179, 0.4472136
    %v4184 = vadd.f32 %v4182, %v523
    %v4185 = vadd.f32 %v4183, %v524
    %v4186 = vsel %vm619, %v4184, -inf
    %4187 = vmax.xlane.f32.xlu0 %v4186
    %v4188 = vpop.xlane.xlu0 %4187
    %v4189 = vsel %vm619, %v4185, -inf
    %4190 = vmax.xlane.f32.xlu0 %v4189
    %v4191 = vpop.xlane.xlu0 %4190
    %v4192 = vsub.f32 %v4184, %v4188
    %v4193 = vsub.f32 %v4185, %v4191
    %v4194 = vmul.f32 %v4192, 1.442695
    %v4195 = vpow.pop %v4194
    %v4196 = vmul.f32 %v4193, 1.442695
    %v4197 = vpow.pop %v4196
    %v4198 = vsel %vm619, %v4195, 0.0
    %4199 = vadd.xlane.f32.xlu0 %v4198
    %v4200 = vpop.xlane.xlu0 %4199
    %v4201 = vsel %vm619, %v4197, 0.0
    %4202 = vadd.xlane.f32.xlu0 %v4201
    %v4203 = vpop.xlane.xlu0 %4202
    %v4204 = vrcp.pop %v4200
    %v4205 = vmul.f32 %v4195, %v4204
    %v4206 = vrcp.pop %v4203
    %v4207 = vmul.f32 %v4197, %v4206
    %4208 = vrot.lane.b32.xlu0 %v3879, 103
    %v4209 = vpop.permute.xlu0 %4208
    %4210 = vrot.lane.b32.xlu0 %v3884, 103
    %v4211 = vpop.permute.xlu0 %4210
    %v4215 = vsel %vm619, %v4205, 0
    %v4218 = vsel %vm619, %v4207, 0
    %4220 = vmatprep.subr.mxu0 0.0
    %4221 = vmatpush1.msra.mxu0 0.0
    %4222 = vmatprep.subr.mxu0 0.0
    %4223 = vmatpush1.msra.mxu0 0.0
    %4224 = vmatprep.subr.mxu0 0.0
    %4225 = vmatpush1.msra.mxu0 0.0
    %4226 = vmatprep.subr.mxu0 0.0
    %4227 = vmatpush1.msra.mxu0 0.0
    %4228 = vmatprep.subr.mxu0 0.0
    %4229 = vmatpush1.msra.mxu0 0.0
    %4230 = vmatprep.subr.mxu0 0.0
    %4231 = vmatpush1.msra.mxu0 0.0
    %4232 = vmatprep.subr.mxu0 0.0
    %4233 = vmatpush1.msra.mxu0 0.0
    %4234 = vmatprep.subr.mxu0 0.0
    %4235 = vmatpush1.msra.mxu0 0.0
    %4236 = vmatprep.subr.mxu0 0.0
    %4237 = vmatpush1.msra.mxu0 0.0
    %4238 = vmatprep.subr.mxu0 0.0
    %4239 = vmatpush1.msra.mxu0 0.0
    %4240 = vmatprep.subr.mxu0 0.0
    %4241 = vmatpush1.msra.mxu0 0.0
    %4242 = vmatprep.subr.mxu0 0.0
    %4243 = vmatpush1.msra.mxu0 0.0
    %4244 = vmatprep.subr.mxu0 0.0
    %4245 = vmatpush1.msra.mxu0 0.0
    %4246 = vmatprep.subr.mxu0 0.0
    %4247 = vmatpush1.msra.mxu0 0.0
    %4248 = vmatprep.subr.mxu0 0.0
    %4249 = vmatpush1.msra.mxu0 %v4211
    %4250 = vmatprep.subr.mxu0 0.0
    %4251 = vmatpush1.msra.mxu0 %v4209
    %4252 = vmatprep.subr.mxu0 0.0
    %4253 = vmatpush2.msra.mxu0 0.0
    %4254 = vmatprep.subr.mxu0 0.0
    %4255 = vmatpush2.msra.mxu0 0.0
    %4256 = vmatprep.subr.mxu0 0.0
    %4257 = vmatpush2.msra.mxu0 0.0
    %4258 = vmatprep.subr.mxu0 0.0
    %4259 = vmatpush2.msra.mxu0 0.0
    %4260 = vmatprep.subr.mxu0 0.0
    %4261 = vmatpush2.msra.mxu0 0.0
    %4262 = vmatprep.subr.mxu0 0.0
    %4263 = vmatpush2.msra.mxu0 0.0
    %4264 = vmatprep.subr.mxu0 0.0
    %4265 = vmatpush2.msra.mxu0 0.0
    %4266 = vmatprep.subr.mxu0 0.0
    %4267 = vmatpush2.msra.mxu0 0.0
    %4268 = vmatprep.subr.mxu0 0.0
    %4269 = vmatpush2.msra.mxu0 0.0
    %4270 = vmatprep.subr.mxu0 0.0
    %4271 = vmatpush2.msra.mxu0 0.0
    %4272 = vmatprep.subr.mxu0 0.0
    %4273 = vmatpush2.msra.mxu0 0.0
    %4274 = vmatprep.subr.mxu0 0.0
    %4275 = vmatpush2.msra.mxu0 0.0
    %4276 = vmatprep.subr.mxu0 0.0
    %4277 = vmatpush2.msra.mxu0 0.0
    %4278 = vmatprep.subr.mxu0 0.0
    %4279 = vmatpush2.msra.mxu0 0.0
    %4280 = vmatprep.subr.mxu0 0.0
    %4281 = vmatpush2.msra.mxu0 0.0
    %4282 = vmatprep.subr.mxu0 0.0
    %4283 = vmatpush2.msra.mxu0 0.0
    %4284 = vmatprep.mubr.f32.mxu0 0.0
    %4285 = vmatmul.mubr.f32.gmra.mxu0 %v4215
    %v4286 = vpop.f32.mrf.mxu0
    %v4287 = vadd.f32 0.0, %v4286
    %v4288 = vpop.f32.mrf.mxu0
    %4289 = vmatprep.mubr.f32.mxu0 0.0
    %4290 = vmatmul.mubr.f32.gmra.mxu0 %v4218
    %v4291 = vpop.f32.mrf.mxu0
    %v4292 = vadd.f32 0.0, %v4291
    %v4293 = vpop.f32.mrf.mxu0
    %4294 = vdwg.mxu0
    %4297 = vrot.lane.b32.xlu0 %v4287, 5
    %v4298 = vpop.permute.xlu0 %4297
    %4299 = vrot.lane.b32.xlu0 %v4292, 5
    %v4300 = vpop.permute.xlu0 %4299
    %v4303 = vsel %vm531, %v4083, %v4298
    %v4304 = vsel %vm531, %v4088, %v4300
    %v4305 = vld [vmem:[#allocation2 + $0x4b8] sm:$0xff]
    %v4306 = vld [vmem:[#allocation2 + $0x4c0] sm:$0x3]
    %v4307 = vld [vmem:[#allocation2 + $0x4d8] sm:$0x1]
    %v4308 = vlaneseq
    %v4309 = vshrl.u32 %v4308, 7
    %v4310 = vsub.s32 0, %v4309
    %v4311 = vrot.slane %v4307, %v4310
    %v4313 = vsel %vm950, %v4303, 0
    %v4316 = vsel %vm950, %v4304, 0
    %v4319 = vsel %vm957, %v4306, 0
    %4321 = vmatprep.subr.mxu0 0.0
    %4322 = vmatpush1.msra.mxu0 0.0
    %4323 = vmatprep.subr.mxu0 0.0
    %4324 = vmatpush1.msra.mxu0 0.0
    %4325 = vmatprep.subr.mxu0 0.0
    %4326 = vmatpush1.msra.mxu0 0.0
    %4327 = vmatprep.subr.mxu0 0.0
    %4328 = vmatpush1.msra.mxu0 0.0
    %4329 = vmatprep.subr.mxu0 0.0
    %4330 = vmatpush1.msra.mxu0 0.0
    %4331 = vmatprep.subr.mxu0 0.0
    %4332 = vmatpush1.msra.mxu0 0.0
    %4333 = vmatprep.subr.mxu0 0.0
    %4334 = vmatpush1.msra.mxu0 0.0
    %4335 = vmatprep.subr.mxu0 0.0
    %4336 = vmatpush1.msra.mxu0 0.0
    %4337 = vmatprep.subr.mxu0 0.0
    %4338 = vmatpush1.msra.mxu0 0.0
    %4339 = vmatprep.subr.mxu0 0.0
    %4340 = vmatpush1.msra.mxu0 0.0
    %4341 = vmatprep.subr.mxu0 0.0
    %4342 = vmatpush1.msra.mxu0 0.0
    %4343 = vmatprep.subr.mxu0 0.0
    %4344 = vmatpush1.msra.mxu0 0.0
    %4345 = vmatprep.subr.mxu0 0.0
    %4346 = vmatpush1.msra.mxu0 0.0
    %4347 = vmatprep.subr.mxu0 0.0
    %4348 = vmatpush1.msra.mxu0 0.0
    %4349 = vmatprep.subr.mxu0 0.0
    %4350 = vmatpush1.msra.mxu0 %v4319
    %4351 = vmatprep.subr.mxu0 0.0
    %4352 = vmatpush1.msra.mxu0 %v4305
    %4353 = vmatprep.subr.mxu0 0.0
    %4354 = vmatpush2.msra.mxu0 0.0
    %4355 = vmatprep.subr.mxu0 0.0
    %4356 = vmatpush2.msra.mxu0 0.0
    %4357 = vmatprep.subr.mxu0 0.0
    %4358 = vmatpush2.msra.mxu0 0.0
    %4359 = vmatprep.subr.mxu0 0.0
    %4360 = vmatpush2.msra.mxu0 0.0
    %4361 = vmatprep.subr.mxu0 0.0
    %4362 = vmatpush2.msra.mxu0 0.0
    %4363 = vmatprep.subr.mxu0 0.0
    %4364 = vmatpush2.msra.mxu0 0.0
    %4365 = vmatprep.subr.mxu0 0.0
    %4366 = vmatpush2.msra.mxu0 0.0
    %4367 = vmatprep.subr.mxu0 0.0
    %4368 = vmatpush2.msra.mxu0 0.0
    %4369 = vmatprep.subr.mxu0 0.0
    %4370 = vmatpush2.msra.mxu0 0.0
    %4371 = vmatprep.subr.mxu0 0.0
    %4372 = vmatpush2.msra.mxu0 0.0
    %4373 = vmatprep.subr.mxu0 0.0
    %4374 = vmatpush2.msra.mxu0 0.0
    %4375 = vmatprep.subr.mxu0 0.0
    %4376 = vmatpush2.msra.mxu0 0.0
    %4377 = vmatprep.subr.mxu0 0.0
    %4378 = vmatpush2.msra.mxu0 0.0
    %4379 = vmatprep.subr.mxu0 0.0
    %4380 = vmatpush2.msra.mxu0 0.0
    %4381 = vmatprep.subr.mxu0 0.0
    %4382 = vmatpush2.msra.mxu0 0.0
    %4383 = vmatprep.subr.mxu0 0.0
    %4384 = vmatpush2.msra.mxu0 0.0
    %4385 = vmatprep.mubr.f32.mxu0 0.0
    %4386 = vmatmul.mubr.f32.gmra.mxu0 %v4313
    %v4387 = vpop.f32.mrf.mxu0
    %v4388 = vadd.f32 %v4311, %v4387
    %v4389 = vpop.f32.mrf.mxu0
    %4390 = vmatprep.mubr.f32.mxu0 0.0
    %4391 = vmatmul.mubr.f32.gmra.mxu0 %v4316
    %v4392 = vpop.f32.mrf.mxu0
    %v4393 = vadd.f32 %v4311, %v4392
    %v4394 = vpop.f32.mrf.mxu0
    %4395 = vdwg.mxu0
    %v4396 = vadd.f32 %v3714, %v4388
    %v4397 = vadd.f32 %v3715, %v4393
    %v4398 = vld [vmem:[#allocation2 + $0x538] sm:$0x1]
    %v4399 = vld [vmem:[#allocation2 + $0x539] sm:$0x1]
    %v4400 = vld [vmem:[#allocation2 + $0x53a] sm:$0x1]
    %v4401 = vsel %vm133, %v4396, 0.0
    %4402 = vadd.xlane.f32.xlu0 %v4401
    %v4403 = vpop.xlane.xlu0 %4402
    %v4404 = vsel %vm133, %v4397, 0.0
    %4405 = vadd.xlane.f32.xlu0 %v4404
    %v4406 = vpop.xlane.xlu0 %4405
    %v4407 = vmul.f32 %v4403, 0.1
    %v4408 = vmul.f32 %v4406, 0.1
    %v4409 = vsub.f32 %v4396, %v4407
    %v4410 = vsub.f32 %v4397, %v4408
    %v4411 = vlaneseq
    %v4412 = vshrl.u32 %v4411, 7
    %v4413 = vsub.s32 0, %v4412
    %v4414 = vrot.slane %v4400, %v4413
    %v4415 = vmul.f32 %v4409, %v4414
    %v4416 = vmul.f32 %v4410, %v4414
    %v4417 = vmul.f32 %v4415, %v4415
    %v4418 = vmul.f32 %v4416, %v4416
    %v4419 = vsel %vm133, %v4417, 0.0
    %4420 = vadd.xlane.f32.xlu0 %v4419
    %v4421 = vpop.xlane.xlu0 %4420
    %v4422 = vsel %vm133, %v4418, 0.0
    %4423 = vadd.xlane.f32.xlu0 %v4422
    %v4424 = vpop.xlane.xlu0 %4423
    %v4425 = vmul.f32 %v4421, 0.1
    %v4426 = vmul.f32 %v4424, 0.1
    %v4427 = vadd.f32 %v4425, 1e-05
    %v4428 = vadd.f32 %v4426, 1e-05
    %v4429 = vrsqrt.pop %v4427
    %v4430 = vrsqrt.pop %v4428
    %v4431 = vmul.f32 %v4415, %v4429
    %v4432 = vmul.f32 %v4416, %v4430
    %v4433 = vlaneseq
    %v4434 = vshrl.u32 %v4433, 7
    %v4435 = vsub.s32 0, %v4434
    %v4436 = vrot.slane %v4398, %v4435
    %v4437 = vmul.f32 %v4431, %v4436
    %v4438 = vmul.f32 %v4432, %v4436
    %v4439 = vlaneseq
    %v4440 = vshrl.u32 %v4439, 7
    %v4441 = vsub.s32 0, %v4440
    %v4442 = vrot.slane %v4399, %v4441
    %v4443 = vadd.f32 %v4437, %v4442
    %v4444 = vadd.f32 %v4438, %v4442
    %v4445 = vld [vmem:[#allocation2 + $0x4e0] sm:$0xff]
    %v4446 = vld [vmem:[#allocation2 + $0x4e8] sm:$0xff]
    %v4447 = vld [vmem:[#allocation2 + $0x4f0] sm:$0xff]
    %v4448 = vld [vmem:[#allocation2 + $0x4f8] sm:$0xff]
    %v4449 = vld [vmem:[#allocation2 + $0x500] sm:$0x1]
    %v4450 = vlaneseq
    %v4451 = vshrl.u32 %v4450, 7
    %v4452 = vsub.s32 0, %v4451
    %v4453 = vrot.slane %v4449, %v4452
    %v4455 = vsel %vm133, %v4443, 0
    %v4458 = vsel %vm133, %v4444, 0
    %4460 = vmatprep.subr.mxu0 0.0
    %4461 = vmatpush1.msra.mxu0 0.0
    %4462 = vmatprep.subr.mxu0 0.0
    %4463 = vmatpush1.msra.mxu0 0.0
    %4464 = vmatprep.subr.mxu0 0.0
    %4465 = vmatpush1.msra.mxu0 0.0
    %4466 = vmatprep.subr.mxu0 0.0
    %4467 = vmatpush1.msra.mxu0 0.0
    %4468 = vmatprep.subr.mxu0 0.0
    %4469 = vmatpush1.msra.mxu0 0.0
    %4470 = vmatprep.subr.mxu0 0.0
    %4471 = vmatpush1.msra.mxu0 0.0
    %4472 = vmatprep.subr.mxu0 0.0
    %4473 = vmatpush1.msra.mxu0 0.0
    %4474 = vmatprep.subr.mxu0 0.0
    %4475 = vmatpush1.msra.mxu0 0.0
    %4476 = vmatprep.subr.mxu0 0.0
    %4477 = vmatpush1.msra.mxu0 0.0
    %4478 = vmatprep.subr.mxu0 0.0
    %4479 = vmatpush1.msra.mxu0 0.0
    %4480 = vmatprep.subr.mxu0 0.0
    %4481 = vmatpush1.msra.mxu0 0.0
    %4482 = vmatprep.subr.mxu0 0.0
    %4483 = vmatpush1.msra.mxu0 0.0
    %4484 = vmatprep.subr.mxu0 0.0
    %4485 = vmatpush1.msra.mxu0 %v4448
    %4486 = vmatprep.subr.mxu0 0.0
    %4487 = vmatpush1.msra.mxu0 %v4447
    %4488 = vmatprep.subr.mxu0 0.0
    %4489 = vmatpush1.msra.mxu0 %v4446
    %4490 = vmatprep.subr.mxu0 0.0
    %4491 = vmatpush1.msra.mxu0 %v4445
    %4492 = vmatprep.subr.mxu0 0.0
    %4493 = vmatpush2.msra.mxu0 0.0
    %4494 = vmatprep.subr.mxu0 0.0
    %4495 = vmatpush2.msra.mxu0 0.0
    %4496 = vmatprep.subr.mxu0 0.0
    %4497 = vmatpush2.msra.mxu0 0.0
    %4498 = vmatprep.subr.mxu0 0.0
    %4499 = vmatpush2.msra.mxu0 0.0
    %4500 = vmatprep.subr.mxu0 0.0
    %4501 = vmatpush2.msra.mxu0 0.0
    %4502 = vmatprep.subr.mxu0 0.0
    %4503 = vmatpush2.msra.mxu0 0.0
    %4504 = vmatprep.subr.mxu0 0.0
    %4505 = vmatpush2.msra.mxu0 0.0
    %4506 = vmatprep.subr.mxu0 0.0
    %4507 = vmatpush2.msra.mxu0 0.0
    %4508 = vmatprep.subr.mxu0 0.0
    %4509 = vmatpush2.msra.mxu0 0.0
    %4510 = vmatprep.subr.mxu0 0.0
    %4511 = vmatpush2.msra.mxu0 0.0
    %4512 = vmatprep.subr.mxu0 0.0
    %4513 = vmatpush2.msra.mxu0 0.0
    %4514 = vmatprep.subr.mxu0 0.0
    %4515 = vmatpush2.msra.mxu0 0.0
    %4516 = vmatprep.subr.mxu0 0.0
    %4517 = vmatpush2.msra.mxu0 0.0
    %4518 = vmatprep.subr.mxu0 0.0
    %4519 = vmatpush2.msra.mxu0 0.0
    %4520 = vmatprep.subr.mxu0 0.0
    %4521 = vmatpush2.msra.mxu0 0.0
    %4522 = vmatprep.subr.mxu0 0.0
    %4523 = vmatpush2.msra.mxu0 0.0
    %4524 = vmatprep.mubr.f32.mxu0 0.0
    %4525 = vmatmul.mubr.f32.gmra.mxu0 %v4455
    %v4526 = vpop.f32.mrf.mxu0
    %v4527 = vadd.f32 %v4453, %v4526
    %v4528 = vpop.f32.mrf.mxu0
    %4529 = vmatprep.mubr.f32.mxu0 0.0
    %4530 = vmatmul.mubr.f32.gmra.mxu0 %v4458
    %v4531 = vpop.f32.mrf.mxu0
    %v4532 = vadd.f32 %v4453, %v4531
    %v4533 = vpop.f32.mrf.mxu0
    %4534 = vdwg.mxu0
    %v4535 = vmax.f32 %v4527, 0.0
    %v4536 = vmax.f32 %v4532, 0.0
    %v4537 = vld [vmem:[#allocation2 + $0x508] sm:$0xff]
    %v4538 = vld [vmem:[#allocation2 + $0x510] sm:$0xff]
    %v4539 = vld [vmem:[#allocation2 + $0x518] sm:$0xff]
    %v4540 = vld [vmem:[#allocation2 + $0x520] sm:$0xff]
    %v4541 = vld [vmem:[#allocation2 + $0x528] sm:$0x1]
    %v4542 = vlaneseq
    %v4543 = vshrl.u32 %v4542, 7
    %v4544 = vsub.s32 0, %v4543
    %v4545 = vrot.slane %v4541, %v4544
    %v4547 = vsel %vm133, %v4535, 0
    %v4550 = vsel %vm133, %v4536, 0
    %4552 = vmatprep.subr.mxu0 0.0
    %4553 = vmatpush1.msra.mxu0 0.0
    %4554 = vmatprep.subr.mxu0 0.0
    %4555 = vmatpush1.msra.mxu0 0.0
    %4556 = vmatprep.subr.mxu0 0.0
    %4557 = vmatpush1.msra.mxu0 0.0
    %4558 = vmatprep.subr.mxu0 0.0
    %4559 = vmatpush1.msra.mxu0 0.0
    %4560 = vmatprep.subr.mxu0 0.0
    %4561 = vmatpush1.msra.mxu0 0.0
    %4562 = vmatprep.subr.mxu0 0.0
    %4563 = vmatpush1.msra.mxu0 0.0
    %4564 = vmatprep.subr.mxu0 0.0
    %4565 = vmatpush1.msra.mxu0 0.0
    %4566 = vmatprep.subr.mxu0 0.0
    %4567 = vmatpush1.msra.mxu0 0.0
    %4568 = vmatprep.subr.mxu0 0.0
    %4569 = vmatpush1.msra.mxu0 0.0
    %4570 = vmatprep.subr.mxu0 0.0
    %4571 = vmatpush1.msra.mxu0 0.0
    %4572 = vmatprep.subr.mxu0 0.0
    %4573 = vmatpush1.msra.mxu0 0.0
    %4574 = vmatprep.subr.mxu0 0.0
    %4575 = vmatpush1.msra.mxu0 0.0
    %4576 = vmatprep.subr.mxu0 0.0
    %4577 = vmatpush1.msra.mxu0 %v4540
    %4578 = vmatprep.subr.mxu0 0.0
    %4579 = vmatpush1.msra.mxu0 %v4539
    %4580 = vmatprep.subr.mxu0 0.0
    %4581 = vmatpush1.msra.mxu0 %v4538
    %4582 = vmatprep.subr.mxu0 0.0
    %4583 = vmatpush1.msra.mxu0 %v4537
    %4584 = vmatprep.subr.mxu0 0.0
    %4585 = vmatpush2.msra.mxu0 0.0
    %4586 = vmatprep.subr.mxu0 0.0
    %4587 = vmatpush2.msra.mxu0 0.0
    %4588 = vmatprep.subr.mxu0 0.0
    %4589 = vmatpush2.msra.mxu0 0.0
    %4590 = vmatprep.subr.mxu0 0.0
    %4591 = vmatpush2.msra.mxu0 0.0
    %4592 = vmatprep.subr.mxu0 0.0
    %4593 = vmatpush2.msra.mxu0 0.0
    %4594 = vmatprep.subr.mxu0 0.0
    %4595 = vmatpush2.msra.mxu0 0.0
    %4596 = vmatprep.subr.mxu0 0.0
    %4597 = vmatpush2.msra.mxu0 0.0
    %4598 = vmatprep.subr.mxu0 0.0
    %4599 = vmatpush2.msra.mxu0 0.0
    %4600 = vmatprep.subr.mxu0 0.0
    %4601 = vmatpush2.msra.mxu0 0.0
    %4602 = vmatprep.subr.mxu0 0.0
    %4603 = vmatpush2.msra.mxu0 0.0
    %4604 = vmatprep.subr.mxu0 0.0
    %4605 = vmatpush2.msra.mxu0 0.0
    %4606 = vmatprep.subr.mxu0 0.0
    %4607 = vmatpush2.msra.mxu0 0.0
    %4608 = vmatprep.subr.mxu0 0.0
    %4609 = vmatpush2.msra.mxu0 0.0
    %4610 = vmatprep.subr.mxu0 0.0
    %4611 = vmatpush2.msra.mxu0 0.0
    %4612 = vmatprep.subr.mxu0 0.0
    %4613 = vmatpush2.msra.mxu0 0.0
    %4614 = vmatprep.subr.mxu0 0.0
    %4615 = vmatpush2.msra.mxu0 0.0
    %4616 = vmatprep.mubr.f32.mxu0 0.0
    %4617 = vmatmul.mubr.f32.gmra.mxu0 %v4547
    %v4618 = vpop.f32.mrf.mxu0
    %v4619 = vadd.f32 %v4545, %v4618
    %v4620 = vpop.f32.mrf.mxu0
    %4621 = vmatprep.mubr.f32.mxu0 0.0
    %4622 = vmatmul.mubr.f32.gmra.mxu0 %v4550
    %v4623 = vpop.f32.mrf.mxu0
    %v4624 = vadd.f32 %v4545, %v4623
    %v4625 = vpop.f32.mrf.mxu0
    %4626 = vdwg.mxu0
    %v4627 = vadd.f32 %v4443, %v4619
    %v4628 = vadd.f32 %v4444, %v4624
    %v4629 = vld [vmem:[#allocation2 + $0x540] sm:$0x1]
    %v4630 = vld [vmem:[#allocation2 + $0x541] sm:$0x1]
    %v4631 = vld [vmem:[#allocation2 + $0x542] sm:$0x1]
    %v4632 = vsel %vm133, %v4627, 0.0
    %4633 = vadd.xlane.f32.xlu0 %v4632
    %v4634 = vpop.xlane.xlu0 %4633
    %v4635 = vsel %vm133, %v4628, 0.0
    %4636 = vadd.xlane.f32.xlu0 %v4635
    %v4637 = vpop.xlane.xlu0 %4636
    %v4638 = vmul.f32 %v4634, 0.1
    %v4639 = vmul.f32 %v4637, 0.1
    %v4640 = vsub.f32 %v4627, %v4638
    %v4641 = vsub.f32 %v4628, %v4639
    %v4642 = vlaneseq
    %v4643 = vshrl.u32 %v4642, 7
    %v4644 = vsub.s32 0, %v4643
    %v4645 = vrot.slane %v4631, %v4644
    %v4646 = vmul.f32 %v4640, %v4645
    %v4647 = vmul.f32 %v4641, %v4645
    %v4648 = vmul.f32 %v4646, %v4646
    %v4649 = vmul.f32 %v4647, %v4647
    %v4650 = vsel %vm133, %v4648, 0.0
    %4651 = vadd.xlane.f32.xlu0 %v4650
    %v4652 = vpop.xlane.xlu0 %4651
    %v4653 = vsel %vm133, %v4649, 0.0
    %4654 = vadd.xlane.f32.xlu0 %v4653
    %v4655 = vpop.xlane.xlu0 %4654
    %v4656 = vmul.f32 %v4652, 0.1
    %v4657 = vmul.f32 %v4655, 0.1
    %v4658 = vadd.f32 %v4656, 1e-05
    %v4659 = vadd.f32 %v4657, 1e-05
    %v4660 = vrsqrt.pop %v4658
    %v4661 = vrsqrt.pop %v4659
    %v4662 = vmul.f32 %v4646, %v4660
    %v4663 = vmul.f32 %v4647, %v4661
    %v4664 = vlaneseq
    %v4665 = vshrl.u32 %v4664, 7
    %v4666 = vsub.s32 0, %v4665
    %v4667 = vrot.slane %v4629, %v4666
    %v4668 = vmul.f32 %v4662, %v4667
    %v4669 = vmul.f32 %v4663, %v4667
    %v4670 = vlaneseq
    %v4671 = vshrl.u32 %v4670, 7
    %v4672 = vsub.s32 0, %v4671
    %v4673 = vrot.slane %v4630, %v4672
    %v4674 = vadd.f32 %v4668, %v4673
    %v4675 = vadd.f32 %v4669, %v4673
    %v4676 = vld [vmem:[#allocation2 + $0x548] sm:$0xff]
    %v4677 = vld [vmem:[#allocation2 + $0x550] sm:$0xff]
    %v4678 = vld [vmem:[#allocation2 + $0x558] sm:$0xff]
    %v4679 = vld [vmem:[#allocation2 + $0x560] sm:$0xff]
    %v4680 = vld [vmem:[#allocation2 + $0x568] sm:$0x1]
    %v4681 = vlaneseq
    %v4682 = vshrl.u32 %v4681, 7
    %v4683 = vsub.s32 0, %v4682
    %v4684 = vrot.slane %v4680, %v4683
    %v4686 = vsel %vm133, %v4674, 0
    %v4689 = vsel %vm133, %v4675, 0
    %4691 = vmatprep.subr.mxu0 0.0
    %4692 = vmatpush1.msra.mxu0 0.0
    %4693 = vmatprep.subr.mxu0 0.0
    %4694 = vmatpush1.msra.mxu0 0.0
    %4695 = vmatprep.subr.mxu0 0.0
    %4696 = vmatpush1.msra.mxu0 0.0
    %4697 = vmatprep.subr.mxu0 0.0
    %4698 = vmatpush1.msra.mxu0 0.0
    %4699 = vmatprep.subr.mxu0 0.0
    %4700 = vmatpush1.msra.mxu0 0.0
    %4701 = vmatprep.subr.mxu0 0.0
    %4702 = vmatpush1.msra.mxu0 0.0
    %4703 = vmatprep.subr.mxu0 0.0
    %4704 = vmatpush1.msra.mxu0 0.0
    %4705 = vmatprep.subr.mxu0 0.0
    %4706 = vmatpush1.msra.mxu0 0.0
    %4707 = vmatprep.subr.mxu0 0.0
    %4708 = vmatpush1.msra.mxu0 0.0
    %4709 = vmatprep.subr.mxu0 0.0
    %4710 = vmatpush1.msra.mxu0 0.0
    %4711 = vmatprep.subr.mxu0 0.0
    %4712 = vmatpush1.msra.mxu0 0.0
    %4713 = vmatprep.subr.mxu0 0.0
    %4714 = vmatpush1.msra.mxu0 0.0
    %4715 = vmatprep.subr.mxu0 0.0
    %4716 = vmatpush1.msra.mxu0 %v4679
    %4717 = vmatprep.subr.mxu0 0.0
    %4718 = vmatpush1.msra.mxu0 %v4678
    %4719 = vmatprep.subr.mxu0 0.0
    %4720 = vmatpush1.msra.mxu0 %v4677
    %4721 = vmatprep.subr.mxu0 0.0
    %4722 = vmatpush1.msra.mxu0 %v4676
    %4723 = vmatprep.subr.mxu0 0.0
    %4724 = vmatpush2.msra.mxu0 0.0
    %4725 = vmatprep.subr.mxu0 0.0
    %4726 = vmatpush2.msra.mxu0 0.0
    %4727 = vmatprep.subr.mxu0 0.0
    %4728 = vmatpush2.msra.mxu0 0.0
    %4729 = vmatprep.subr.mxu0 0.0
    %4730 = vmatpush2.msra.mxu0 0.0
    %4731 = vmatprep.subr.mxu0 0.0
    %4732 = vmatpush2.msra.mxu0 0.0
    %4733 = vmatprep.subr.mxu0 0.0
    %4734 = vmatpush2.msra.mxu0 0.0
    %4735 = vmatprep.subr.mxu0 0.0
    %4736 = vmatpush2.msra.mxu0 0.0
    %4737 = vmatprep.subr.mxu0 0.0
    %4738 = vmatpush2.msra.mxu0 0.0
    %4739 = vmatprep.subr.mxu0 0.0
    %4740 = vmatpush2.msra.mxu0 0.0
    %4741 = vmatprep.subr.mxu0 0.0
    %4742 = vmatpush2.msra.mxu0 0.0
    %4743 = vmatprep.subr.mxu0 0.0
    %4744 = vmatpush2.msra.mxu0 0.0
    %4745 = vmatprep.subr.mxu0 0.0
    %4746 = vmatpush2.msra.mxu0 0.0
    %4747 = vmatprep.subr.mxu0 0.0
    %4748 = vmatpush2.msra.mxu0 0.0
    %4749 = vmatprep.subr.mxu0 0.0
    %4750 = vmatpush2.msra.mxu0 0.0
    %4751 = vmatprep.subr.mxu0 0.0
    %4752 = vmatpush2.msra.mxu0 0.0
    %4753 = vmatprep.subr.mxu0 0.0
    %4754 = vmatpush2.msra.mxu0 0.0
    %4755 = vmatprep.mubr.f32.mxu0 0.0
    %4756 = vmatmul.mubr.f32.gmra.mxu0 %v4686
    %v4757 = vpop.f32.mrf.mxu0
    %v4758 = vadd.f32 %v4684, %v4757
    %v4759 = vpop.f32.mrf.mxu0
    %4760 = vmatprep.mubr.f32.mxu0 0.0
    %4761 = vmatmul.mubr.f32.gmra.mxu0 %v4689
    %v4762 = vpop.f32.mrf.mxu0
    %v4763 = vadd.f32 %v4684, %v4762
    %v4764 = vpop.f32.mrf.mxu0
    %4765 = vdwg.mxu0
    %4768 = vrot.lane.b32.xlu0 %v4758, 118
    %v4769 = vpop.permute.xlu0 %4768
    %4770 = vrot.lane.b32.xlu0 %v4763, 118
    %v4771 = vpop.permute.xlu0 %4770
    %v4772 = vsel %vm531, %v4758, 0
    %v4774 = vsel %vm531, %v4763, 0
    %v4776 = vsel %vm531, %v4769, 0
    %v4778 = vsel %vm531, %v4771, 0
    %4780 = vmatprep.subr.mxu0 0.0
    %4781 = vmatpush1.xpose.msra.mxu0 0.0
    %4782 = vmatprep.subr.mxu0 0.0
    %4783 = vmatpush1.xpose.msra.mxu0 0.0
    %4784 = vmatprep.subr.mxu0 0.0
    %4785 = vmatpush1.xpose.msra.mxu0 0.0
    %4786 = vmatprep.subr.mxu0 0.0
    %4787 = vmatpush1.xpose.msra.mxu0 0.0
    %4788 = vmatprep.subr.mxu0 0.0
    %4789 = vmatpush1.xpose.msra.mxu0 0.0
    %4790 = vmatprep.subr.mxu0 0.0
    %4791 = vmatpush1.xpose.msra.mxu0 0.0
    %4792 = vmatprep.subr.mxu0 0.0
    %4793 = vmatpush1.xpose.msra.mxu0 0.0
    %4794 = vmatprep.subr.mxu0 0.0
    %4795 = vmatpush1.xpose.msra.mxu0 0.0
    %4796 = vmatprep.subr.mxu0 0.0
    %4797 = vmatpush1.xpose.msra.mxu0 0.0
    %4798 = vmatprep.subr.mxu0 0.0
    %4799 = vmatpush1.xpose.msra.mxu0 0.0
    %4800 = vmatprep.subr.mxu0 0.0
    %4801 = vmatpush1.xpose.msra.mxu0 0.0
    %4802 = vmatprep.subr.mxu0 0.0
    %4803 = vmatpush1.xpose.msra.mxu0 0.0
    %4804 = vmatprep.subr.mxu0 0.0
    %4805 = vmatpush1.xpose.msra.mxu0 0.0
    %4806 = vmatprep.subr.mxu0 0.0
    %4807 = vmatpush1.xpose.msra.mxu0 0.0
    %4808 = vmatprep.subr.mxu0 0.0
    %4809 = vmatpush1.xpose.msra.mxu0 %v4778
    %4810 = vmatprep.subr.mxu0 0.0
    %4811 = vmatpush1.xpose.msra.mxu0 %v4776
    %4812 = vmatprep.subr.mxu0 0.0
    %4813 = vmatpush2.xpose.msra.mxu0 0.0
    %4814 = vmatprep.subr.mxu0 0.0
    %4815 = vmatpush2.xpose.msra.mxu0 0.0
    %4816 = vmatprep.subr.mxu0 0.0
    %4817 = vmatpush2.xpose.msra.mxu0 0.0
    %4818 = vmatprep.subr.mxu0 0.0
    %4819 = vmatpush2.xpose.msra.mxu0 0.0
    %4820 = vmatprep.subr.mxu0 0.0
    %4821 = vmatpush2.xpose.msra.mxu0 0.0
    %4822 = vmatprep.subr.mxu0 0.0
    %4823 = vmatpush2.xpose.msra.mxu0 0.0
    %4824 = vmatprep.subr.mxu0 0.0
    %4825 = vmatpush2.xpose.msra.mxu0 0.0
    %4826 = vmatprep.subr.mxu0 0.0
    %4827 = vmatpush2.xpose.msra.mxu0 0.0
    %4828 = vmatprep.subr.mxu0 0.0
    %4829 = vmatpush2.xpose.msra.mxu0 0.0
    %4830 = vmatprep.subr.mxu0 0.0
    %4831 = vmatpush2.xpose.msra.mxu0 0.0
    %4832 = vmatprep.subr.mxu0 0.0
    %4833 = vmatpush2.xpose.msra.mxu0 0.0
    %4834 = vmatprep.subr.mxu0 0.0
    %4835 = vmatpush2.xpose.msra.mxu0 0.0
    %4836 = vmatprep.subr.mxu0 0.0
    %4837 = vmatpush2.xpose.msra.mxu0 0.0
    %4838 = vmatprep.subr.mxu0 0.0
    %4839 = vmatpush2.xpose.msra.mxu0 0.0
    %4840 = vmatprep.subr.mxu0 0.0
    %4841 = vmatpush2.xpose.msra.mxu0 0.0
    %4842 = vmatprep.subr.mxu0 0.0
    %4843 = vmatpush2.xpose.msra.mxu0 0.0
    %4844 = vmatprep.mubr.f32.mxu0 0.0
    %4845 = vmatmul.mubr.f32.gmra.mxu0 %v4772
    %v4846 = vpop.f32.mrf.mxu0
    %v4847 = vadd.f32 0.0, %v4846
    %v4848 = vpop.f32.mrf.mxu0
    %4849 = vmatprep.mubr.f32.mxu0 0.0
    %4850 = vmatmul.mubr.f32.gmra.mxu0 %v4774
    %v4851 = vpop.f32.mrf.mxu0
    %v4852 = vadd.f32 0.0, %v4851
    %v4853 = vpop.f32.mrf.mxu0
    %4854 = vdwg.mxu0
    %v4855 = vmul.f32 %v4847, 0.4472136
    %v4856 = vmul.f32 %v4852, 0.4472136
    %v4857 = vadd.f32 %v4855, %v523
    %v4858 = vadd.f32 %v4856, %v524
    %v4859 = vsel %vm619, %v4857, -inf
    %4860 = vmax.xlane.f32.xlu0 %v4859
    %v4861 = vpop.xlane.xlu0 %4860
    %v4862 = vsel %vm619, %v4858, -inf
    %4863 = vmax.xlane.f32.xlu0 %v4862
    %v4864 = vpop.xlane.xlu0 %4863
    %v4865 = vsub.f32 %v4857, %v4861
    %v4866 = vsub.f32 %v4858, %v4864
    %v4867 = vmul.f32 %v4865, 1.442695
    %v4868 = vpow.pop %v4867
    %v4869 = vmul.f32 %v4866, 1.442695
    %v4870 = vpow.pop %v4869
    %v4871 = vsel %vm619, %v4868, 0.0
    %4872 = vadd.xlane.f32.xlu0 %v4871
    %v4873 = vpop.xlane.xlu0 %4872
    %v4874 = vsel %vm619, %v4870, 0.0
    %4875 = vadd.xlane.f32.xlu0 %v4874
    %v4876 = vpop.xlane.xlu0 %4875
    %v4877 = vrcp.pop %v4873
    %v4878 = vmul.f32 %v4868, %v4877
    %v4879 = vrcp.pop %v4876
    %v4880 = vmul.f32 %v4870, %v4879
    %4881 = vrot.lane.b32.xlu0 %v4758, 108
    %v4882 = vpop.permute.xlu0 %4881
    %4883 = vrot.lane.b32.xlu0 %v4763, 108
    %v4884 = vpop.permute.xlu0 %4883
    %v4888 = vsel %vm619, %v4878, 0
    %v4891 = vsel %vm619, %v4880, 0
    %4893 = vmatprep.subr.mxu0 0.0
    %4894 = vmatpush1.msra.mxu0 0.0
    %4895 = vmatprep.subr.mxu0 0.0
    %4896 = vmatpush1.msra.mxu0 0.0
    %4897 = vmatprep.subr.mxu0 0.0
    %4898 = vmatpush1.msra.mxu0 0.0
    %4899 = vmatprep.subr.mxu0 0.0
    %4900 = vmatpush1.msra.mxu0 0.0
    %4901 = vmatprep.subr.mxu0 0.0
    %4902 = vmatpush1.msra.mxu0 0.0
    %4903 = vmatprep.subr.mxu0 0.0
    %4904 = vmatpush1.msra.mxu0 0.0
    %4905 = vmatprep.subr.mxu0 0.0
    %4906 = vmatpush1.msra.mxu0 0.0
    %4907 = vmatprep.subr.mxu0 0.0
    %4908 = vmatpush1.msra.mxu0 0.0
    %4909 = vmatprep.subr.mxu0 0.0
    %4910 = vmatpush1.msra.mxu0 0.0
    %4911 = vmatprep.subr.mxu0 0.0
    %4912 = vmatpush1.msra.mxu0 0.0
    %4913 = vmatprep.subr.mxu0 0.0
    %4914 = vmatpush1.msra.mxu0 0.0
    %4915 = vmatprep.subr.mxu0 0.0
    %4916 = vmatpush1.msra.mxu0 0.0
    %4917 = vmatprep.subr.mxu0 0.0
    %4918 = vmatpush1.msra.mxu0 0.0
    %4919 = vmatprep.subr.mxu0 0.0
    %4920 = vmatpush1.msra.mxu0 0.0
    %4921 = vmatprep.subr.mxu0 0.0
    %4922 = vmatpush1.msra.mxu0 %v4884
    %4923 = vmatprep.subr.mxu0 0.0
    %4924 = vmatpush1.msra.mxu0 %v4882
    %4925 = vmatprep.subr.mxu0 0.0
    %4926 = vmatpush2.msra.mxu0 0.0
    %4927 = vmatprep.subr.mxu0 0.0
    %4928 = vmatpush2.msra.mxu0 0.0
    %4929 = vmatprep.subr.mxu0 0.0
    %4930 = vmatpush2.msra.mxu0 0.0
    %4931 = vmatprep.subr.mxu0 0.0
    %4932 = vmatpush2.msra.mxu0 0.0
    %4933 = vmatprep.subr.mxu0 0.0
    %4934 = vmatpush2.msra.mxu0 0.0
    %4935 = vmatprep.subr.mxu0 0.0
    %4936 = vmatpush2.msra.mxu0 0.0
    %4937 = vmatprep.subr.mxu0 0.0
    %4938 = vmatpush2.msra.mxu0 0.0
    %4939 = vmatprep.subr.mxu0 0.0
    %4940 = vmatpush2.msra.mxu0 0.0
    %4941 = vmatprep.subr.mxu0 0.0
    %4942 = vmatpush2.msra.mxu0 0.0
    %4943 = vmatprep.subr.mxu0 0.0
    %4944 = vmatpush2.msra.mxu0 0.0
    %4945 = vmatprep.subr.mxu0 0.0
    %4946 = vmatpush2.msra.mxu0 0.0
    %4947 = vmatprep.subr.mxu0 0.0
    %4948 = vmatpush2.msra.mxu0 0.0
    %4949 = vmatprep.subr.mxu0 0.0
    %4950 = vmatpush2.msra.mxu0 0.0
    %4951 = vmatprep.subr.mxu0 0.0
    %4952 = vmatpush2.msra.mxu0 0.0
    %4953 = vmatprep.subr.mxu0 0.0
    %4954 = vmatpush2.msra.mxu0 0.0
    %4955 = vmatprep.subr.mxu0 0.0
    %4956 = vmatpush2.msra.mxu0 0.0
    %4957 = vmatprep.mubr.f32.mxu0 0.0
    %4958 = vmatmul.mubr.f32.gmra.mxu0 %v4888
    %v4959 = vpop.f32.mrf.mxu0
    %v4960 = vadd.f32 0.0, %v4959
    %v4961 = vpop.f32.mrf.mxu0
    %4962 = vmatprep.mubr.f32.mxu0 0.0
    %4963 = vmatmul.mubr.f32.gmra.mxu0 %v4891
    %v4964 = vpop.f32.mrf.mxu0
    %v4965 = vadd.f32 0.0, %v4964
    %v4966 = vpop.f32.mrf.mxu0
    %4967 = vdwg.mxu0
    %4968 = vrot.lane.b32.xlu0 %v4758, 123
    %v4969 = vpop.permute.xlu0 %4968
    %4970 = vrot.lane.b32.xlu0 %v4763, 123
    %v4971 = vpop.permute.xlu0 %4970
    %4972 = vrot.lane.b32.xlu0 %v4758, 113
    %v4973 = vpop.permute.xlu0 %4972
    %4974 = vrot.lane.b32.xlu0 %v4763, 113
    %v4975 = vpop.permute.xlu0 %4974
    %v4976 = vsel %vm531, %v4969, 0
    %v4978 = vsel %vm531, %v4971, 0
    %v4980 = vsel %vm531, %v4973, 0
    %v4982 = vsel %vm531, %v4975, 0
    %4984 = vmatprep.subr.mxu0 0.0
    %4985 = vmatpush1.xpose.msra.mxu0 0.0
    %4986 = vmatprep.subr.mxu0 0.0
    %4987 = vmatpush1.xpose.msra.mxu0 0.0
    %4988 = vmatprep.subr.mxu0 0.0
    %4989 = vmatpush1.xpose.msra.mxu0 0.0
    %4990 = vmatprep.subr.mxu0 0.0
    %4991 = vmatpush1.xpose.msra.mxu0 0.0
    %4992 = vmatprep.subr.mxu0 0.0
    %4993 = vmatpush1.xpose.msra.mxu0 0.0
    %4994 = vmatprep.subr.mxu0 0.0
    %4995 = vmatpush1.xpose.msra.mxu0 0.0
    %4996 = vmatprep.subr.mxu0 0.0
    %4997 = vmatpush1.xpose.msra.mxu0 0.0
    %4998 = vmatprep.subr.mxu0 0.0
    %4999 = vmatpush1.xpose.msra.mxu0 0.0
    %5000 = vmatprep.subr.mxu0 0.0
    %5001 = vmatpush1.xpose.msra.mxu0 0.0
    %5002 = vmatprep.subr.mxu0 0.0
    %5003 = vmatpush1.xpose.msra.mxu0 0.0
    %5004 = vmatprep.subr.mxu0 0.0
    %5005 = vmatpush1.xpose.msra.mxu0 0.0
    %5006 = vmatprep.subr.mxu0 0.0
    %5007 = vmatpush1.xpose.msra.mxu0 0.0
    %5008 = vmatprep.subr.mxu0 0.0
    %5009 = vmatpush1.xpose.msra.mxu0 0.0
    %5010 = vmatprep.subr.mxu0 0.0
    %5011 = vmatpush1.xpose.msra.mxu0 0.0
    %5012 = vmatprep.subr.mxu0 0.0
    %5013 = vmatpush1.xpose.msra.mxu0 %v4982
    %5014 = vmatprep.subr.mxu0 0.0
    %5015 = vmatpush1.xpose.msra.mxu0 %v4980
    %5016 = vmatprep.subr.mxu0 0.0
    %5017 = vmatpush2.xpose.msra.mxu0 0.0
    %5018 = vmatprep.subr.mxu0 0.0
    %5019 = vmatpush2.xpose.msra.mxu0 0.0
    %5020 = vmatprep.subr.mxu0 0.0
    %5021 = vmatpush2.xpose.msra.mxu0 0.0
    %5022 = vmatprep.subr.mxu0 0.0
    %5023 = vmatpush2.xpose.msra.mxu0 0.0
    %5024 = vmatprep.subr.mxu0 0.0
    %5025 = vmatpush2.xpose.msra.mxu0 0.0
    %5026 = vmatprep.subr.mxu0 0.0
    %5027 = vmatpush2.xpose.msra.mxu0 0.0
    %5028 = vmatprep.subr.mxu0 0.0
    %5029 = vmatpush2.xpose.msra.mxu0 0.0
    %5030 = vmatprep.subr.mxu0 0.0
    %5031 = vmatpush2.xpose.msra.mxu0 0.0
    %5032 = vmatprep.subr.mxu0 0.0
    %5033 = vmatpush2.xpose.msra.mxu0 0.0
    %5034 = vmatprep.subr.mxu0 0.0
    %5035 = vmatpush2.xpose.msra.mxu0 0.0
    %5036 = vmatprep.subr.mxu0 0.0
    %5037 = vmatpush2.xpose.msra.mxu0 0.0
    %5038 = vmatprep.subr.mxu0 0.0
    %5039 = vmatpush2.xpose.msra.mxu0 0.0
    %5040 = vmatprep.subr.mxu0 0.0
    %5041 = vmatpush2.xpose.msra.mxu0 0.0
    %5042 = vmatprep.subr.mxu0 0.0
    %5043 = vmatpush2.xpose.msra.mxu0 0.0
    %5044 = vmatprep.subr.mxu0 0.0
    %5045 = vmatpush2.xpose.msra.mxu0 0.0
    %5046 = vmatprep.subr.mxu0 0.0
    %5047 = vmatpush2.xpose.msra.mxu0 0.0
    %5048 = vmatprep.mubr.f32.mxu0 0.0
    %5049 = vmatmul.mubr.f32.gmra.mxu0 %v4976
    %v5050 = vpop.f32.mrf.mxu0
    %v5051 = vadd.f32 0.0, %v5050
    %v5052 = vpop.f32.mrf.mxu0
    %5053 = vmatprep.mubr.f32.mxu0 0.0
    %5054 = vmatmul.mubr.f32.gmra.mxu0 %v4978
    %v5055 = vpop.f32.mrf.mxu0
    %v5056 = vadd.f32 0.0, %v5055
    %v5057 = vpop.f32.mrf.mxu0
    %5058 = vdwg.mxu0
    %v5059 = vmul.f32 %v5051, 0.4472136
    %v5060 = vmul.f32 %v5056, 0.4472136
    %v5061 = vadd.f32 %v5059, %v523
    %v5062 = vadd.f32 %v5060, %v524
    %v5063 = vsel %vm619, %v5061, -inf
    %5064 = vmax.xlane.f32.xlu0 %v5063
    %v5065 = vpop.xlane.xlu0 %5064
    %v5066 = vsel %vm619, %v5062, -inf
    %5067 = vmax.xlane.f32.xlu0 %v5066
    %v5068 = vpop.xlane.xlu0 %5067
    %v5069 = vsub.f32 %v5061, %v5065
    %v5070 = vsub.f32 %v5062, %v5068
    %v5071 = vmul.f32 %v5069, 1.442695
    %v5072 = vpow.pop %v5071
    %v5073 = vmul.f32 %v5070, 1.442695
    %v5074 = vpow.pop %v5073
    %v5075 = vsel %vm619, %v5072, 0.0
    %5076 = vadd.xlane.f32.xlu0 %v5075
    %v5077 = vpop.xlane.xlu0 %5076
    %v5078 = vsel %vm619, %v5074, 0.0
    %5079 = vadd.xlane.f32.xlu0 %v5078
    %v5080 = vpop.xlane.xlu0 %5079
    %v5081 = vrcp.pop %v5077
    %v5082 = vmul.f32 %v5072, %v5081
    %v5083 = vrcp.pop %v5080
    %v5084 = vmul.f32 %v5074, %v5083
    %5085 = vrot.lane.b32.xlu0 %v4758, 103
    %v5086 = vpop.permute.xlu0 %5085
    %5087 = vrot.lane.b32.xlu0 %v4763, 103
    %v5088 = vpop.permute.xlu0 %5087
    %v5092 = vsel %vm619, %v5082, 0
    %v5095 = vsel %vm619, %v5084, 0
    %5097 = vmatprep.subr.mxu0 0.0
    %5098 = vmatpush1.msra.mxu0 0.0
    %5099 = vmatprep.subr.mxu0 0.0
    %5100 = vmatpush1.msra.mxu0 0.0
    %5101 = vmatprep.subr.mxu0 0.0
    %5102 = vmatpush1.msra.mxu0 0.0
    %5103 = vmatprep.subr.mxu0 0.0
    %5104 = vmatpush1.msra.mxu0 0.0
    %5105 = vmatprep.subr.mxu0 0.0
    %5106 = vmatpush1.msra.mxu0 0.0
    %5107 = vmatprep.subr.mxu0 0.0
    %5108 = vmatpush1.msra.mxu0 0.0
    %5109 = vmatprep.subr.mxu0 0.0
    %5110 = vmatpush1.msra.mxu0 0.0
    %5111 = vmatprep.subr.mxu0 0.0
    %5112 = vmatpush1.msra.mxu0 0.0
    %5113 = vmatprep.subr.mxu0 0.0
    %5114 = vmatpush1.msra.mxu0 0.0
    %5115 = vmatprep.subr.mxu0 0.0
    %5116 = vmatpush1.msra.mxu0 0.0
    %5117 = vmatprep.subr.mxu0 0.0
    %5118 = vmatpush1.msra.mxu0 0.0
    %5119 = vmatprep.subr.mxu0 0.0
    %5120 = vmatpush1.msra.mxu0 0.0
    %5121 = vmatprep.subr.mxu0 0.0
    %5122 = vmatpush1.msra.mxu0 0.0
    %5123 = vmatprep.subr.mxu0 0.0
    %5124 = vmatpush1.msra.mxu0 0.0
    %5125 = vmatprep.subr.mxu0 0.0
    %5126 = vmatpush1.msra.mxu0 %v5088
    %5127 = vmatprep.subr.mxu0 0.0
    %5128 = vmatpush1.msra.mxu0 %v5086
    %5129 = vmatprep.subr.mxu0 0.0
    %5130 = vmatpush2.msra.mxu0 0.0
    %5131 = vmatprep.subr.mxu0 0.0
    %5132 = vmatpush2.msra.mxu0 0.0
    %5133 = vmatprep.subr.mxu0 0.0
    %5134 = vmatpush2.msra.mxu0 0.0
    %5135 = vmatprep.subr.mxu0 0.0
    %5136 = vmatpush2.msra.mxu0 0.0
    %5137 = vmatprep.subr.mxu0 0.0
    %5138 = vmatpush2.msra.mxu0 0.0
    %5139 = vmatprep.subr.mxu0 0.0
    %5140 = vmatpush2.msra.mxu0 0.0
    %5141 = vmatprep.subr.mxu0 0.0
    %5142 = vmatpush2.msra.mxu0 0.0
    %5143 = vmatprep.subr.mxu0 0.0
    %5144 = vmatpush2.msra.mxu0 0.0
    %5145 = vmatprep.subr.mxu0 0.0
    %5146 = vmatpush2.msra.mxu0 0.0
    %5147 = vmatprep.subr.mxu0 0.0
    %5148 = vmatpush2.msra.mxu0 0.0
    %5149 = vmatprep.subr.mxu0 0.0
    %5150 = vmatpush2.msra.mxu0 0.0
    %5151 = vmatprep.subr.mxu0 0.0
    %5152 = vmatpush2.msra.mxu0 0.0
    %5153 = vmatprep.subr.mxu0 0.0
    %5154 = vmatpush2.msra.mxu0 0.0
    %5155 = vmatprep.subr.mxu0 0.0
    %5156 = vmatpush2.msra.mxu0 0.0
    %5157 = vmatprep.subr.mxu0 0.0
    %5158 = vmatpush2.msra.mxu0 0.0
    %5159 = vmatprep.subr.mxu0 0.0
    %5160 = vmatpush2.msra.mxu0 0.0
    %5161 = vmatprep.mubr.f32.mxu0 0.0
    %5162 = vmatmul.mubr.f32.gmra.mxu0 %v5092
    %v5163 = vpop.f32.mrf.mxu0
    %v5164 = vadd.f32 0.0, %v5163
    %v5165 = vpop.f32.mrf.mxu0
    %5166 = vmatprep.mubr.f32.mxu0 0.0
    %5167 = vmatmul.mubr.f32.gmra.mxu0 %v5095
    %v5168 = vpop.f32.mrf.mxu0
    %v5169 = vadd.f32 0.0, %v5168
    %v5170 = vpop.f32.mrf.mxu0
    %5171 = vdwg.mxu0
    %5174 = vrot.lane.b32.xlu0 %v5164, 5
    %v5175 = vpop.permute.xlu0 %5174
    %5176 = vrot.lane.b32.xlu0 %v5169, 5
    %v5177 = vpop.permute.xlu0 %5176
    %v5180 = vsel %vm531, %v4960, %v5175
    %v5181 = vsel %vm531, %v4965, %v5177
    %v5182 = vld [vmem:[#allocation2 + $0x570] sm:$0xff]
    %v5183 = vld [vmem:[#allocation2 + $0x578] sm:$0x3]
    %v5184 = vld [vmem:[#allocation2 + $0x590] sm:$0x1]
    %v5185 = vlaneseq
    %v5186 = vshrl.u32 %v5185, 7
    %v5187 = vsub.s32 0, %v5186
    %v5188 = vrot.slane %v5184, %v5187
    %v5190 = vsel %vm950, %v5180, 0
    %v5193 = vsel %vm950, %v5181, 0
    %v5196 = vsel %vm957, %v5183, 0
    %5198 = vmatprep.subr.mxu0 0.0
    %5199 = vmatpush1.msra.mxu0 0.0
    %5200 = vmatprep.subr.mxu0 0.0
    %5201 = vmatpush1.msra.mxu0 0.0
    %5202 = vmatprep.subr.mxu0 0.0
    %5203 = vmatpush1.msra.mxu0 0.0
    %5204 = vmatprep.subr.mxu0 0.0
    %5205 = vmatpush1.msra.mxu0 0.0
    %5206 = vmatprep.subr.mxu0 0.0
    %5207 = vmatpush1.msra.mxu0 0.0
    %5208 = vmatprep.subr.mxu0 0.0
    %5209 = vmatpush1.msra.mxu0 0.0
    %5210 = vmatprep.subr.mxu0 0.0
    %5211 = vmatpush1.msra.mxu0 0.0
    %5212 = vmatprep.subr.mxu0 0.0
    %5213 = vmatpush1.msra.mxu0 0.0
    %5214 = vmatprep.subr.mxu0 0.0
    %5215 = vmatpush1.msra.mxu0 0.0
    %5216 = vmatprep.subr.mxu0 0.0
    %5217 = vmatpush1.msra.mxu0 0.0
    %5218 = vmatprep.subr.mxu0 0.0
    %5219 = vmatpush1.msra.mxu0 0.0
    %5220 = vmatprep.subr.mxu0 0.0
    %5221 = vmatpush1.msra.mxu0 0.0
    %5222 = vmatprep.subr.mxu0 0.0
    %5223 = vmatpush1.msra.mxu0 0.0
    %5224 = vmatprep.subr.mxu0 0.0
    %5225 = vmatpush1.msra.mxu0 0.0
    %5226 = vmatprep.subr.mxu0 0.0
    %5227 = vmatpush1.msra.mxu0 %v5196
    %5228 = vmatprep.subr.mxu0 0.0
    %5229 = vmatpush1.msra.mxu0 %v5182
    %5230 = vmatprep.subr.mxu0 0.0
    %5231 = vmatpush2.msra.mxu0 0.0
    %5232 = vmatprep.subr.mxu0 0.0
    %5233 = vmatpush2.msra.mxu0 0.0
    %5234 = vmatprep.subr.mxu0 0.0
    %5235 = vmatpush2.msra.mxu0 0.0
    %5236 = vmatprep.subr.mxu0 0.0
    %5237 = vmatpush2.msra.mxu0 0.0
    %5238 = vmatprep.subr.mxu0 0.0
    %5239 = vmatpush2.msra.mxu0 0.0
    %5240 = vmatprep.subr.mxu0 0.0
    %5241 = vmatpush2.msra.mxu0 0.0
    %5242 = vmatprep.subr.mxu0 0.0
    %5243 = vmatpush2.msra.mxu0 0.0
    %5244 = vmatprep.subr.mxu0 0.0
    %5245 = vmatpush2.msra.mxu0 0.0
    %5246 = vmatprep.subr.mxu0 0.0
    %5247 = vmatpush2.msra.mxu0 0.0
    %5248 = vmatprep.subr.mxu0 0.0
    %5249 = vmatpush2.msra.mxu0 0.0
    %5250 = vmatprep.subr.mxu0 0.0
    %5251 = vmatpush2.msra.mxu0 0.0
    %5252 = vmatprep.subr.mxu0 0.0
    %5253 = vmatpush2.msra.mxu0 0.0
    %5254 = vmatprep.subr.mxu0 0.0
    %5255 = vmatpush2.msra.mxu0 0.0
    %5256 = vmatprep.subr.mxu0 0.0
    %5257 = vmatpush2.msra.mxu0 0.0
    %5258 = vmatprep.subr.mxu0 0.0
    %5259 = vmatpush2.msra.mxu0 0.0
    %5260 = vmatprep.subr.mxu0 0.0
    %5261 = vmatpush2.msra.mxu0 0.0
    %5262 = vmatprep.mubr.f32.mxu0 0.0
    %5263 = vmatmul.mubr.f32.gmra.mxu0 %v5190
    %v5264 = vpop.f32.mrf.mxu0
    %v5265 = vadd.f32 %v5188, %v5264
    %v5266 = vpop.f32.mrf.mxu0
    %5267 = vmatprep.mubr.f32.mxu0 0.0
    %5268 = vmatmul.mubr.f32.gmra.mxu0 %v5193
    %v5269 = vpop.f32.mrf.mxu0
    %v5270 = vadd.f32 %v5188, %v5269
    %v5271 = vpop.f32.mrf.mxu0
    %5272 = vdwg.mxu0
    %v5273 = vadd.f32 %v4674, %v5265
    %v5274 = vadd.f32 %v4675, %v5270
    %v5275 = vld [vmem:[#allocation2 + $0x638] sm:$0x1]
    %v5276 = vld [vmem:[#allocation2 + $0x639] sm:$0x1]
    %v5277 = vld [vmem:[#allocation2 + $0x63a] sm:$0x1]
    %v5278 = vsel %vm133, %v5273, 0.0
    %5279 = vadd.xlane.f32.xlu0 %v5278
    %v5280 = vpop.xlane.xlu0 %5279
    %v5281 = vsel %vm133, %v5274, 0.0
    %5282 = vadd.xlane.f32.xlu0 %v5281
    %v5283 = vpop.xlane.xlu0 %5282
    %v5284 = vmul.f32 %v5280, 0.1
    %v5285 = vmul.f32 %v5283, 0.1
    %v5286 = vsub.f32 %v5273, %v5284
    %v5287 = vsub.f32 %v5274, %v5285
    %v5288 = vlaneseq
    %v5289 = vshrl.u32 %v5288, 7
    %v5290 = vsub.s32 0, %v5289
    %v5291 = vrot.slane %v5277, %v5290
    %v5292 = vmul.f32 %v5286, %v5291
    %v5293 = vmul.f32 %v5287, %v5291
    %v5294 = vmul.f32 %v5292, %v5292
    %v5295 = vmul.f32 %v5293, %v5293
    %v5296 = vsel %vm133, %v5294, 0.0
    %5297 = vadd.xlane.f32.xlu0 %v5296
    %v5298 = vpop.xlane.xlu0 %5297
    %v5299 = vsel %vm133, %v5295, 0.0
    %5300 = vadd.xlane.f32.xlu0 %v5299
    %v5301 = vpop.xlane.xlu0 %5300
    %v5302 = vmul.f32 %v5298, 0.1
    %v5303 = vmul.f32 %v5301, 0.1
    %v5304 = vadd.f32 %v5302, 1e-05
    %v5305 = vadd.f32 %v5303, 1e-05
    %v5306 = vrsqrt.pop %v5304
    %v5307 = vrsqrt.pop %v5305
    %v5308 = vmul.f32 %v5292, %v5306
    %v5309 = vmul.f32 %v5293, %v5307
    %v5310 = vlaneseq
    %v5311 = vshrl.u32 %v5310, 7
    %v5312 = vsub.s32 0, %v5311
    %v5313 = vrot.slane %v5275, %v5312
    %v5314 = vmul.f32 %v5308, %v5313
    %v5315 = vmul.f32 %v5309, %v5313
    %v5316 = vlaneseq
    %v5317 = vshrl.u32 %v5316, 7
    %v5318 = vsub.s32 0, %v5317
    %v5319 = vrot.slane %v5276, %v5318
    %v5320 = vadd.f32 %v5314, %v5319
    %v5321 = vadd.f32 %v5315, %v5319
    %v5322 = vld [vmem:[#allocation2 + $0x598] sm:$0xff]
    %v5323 = vld [vmem:[#allocation2 + $0x5a0] sm:$0xff]
    %v5324 = vld [vmem:[#allocation2 + $0x5a8] sm:$0xff]
    %v5325 = vld [vmem:[#allocation2 + $0x5b0] sm:$0xff]
    %v5326 = vld [vmem:[#allocation2 + $0x5b8] sm:$0x1]
    %v5327 = vlaneseq
    %v5328 = vshrl.u32 %v5327, 7
    %v5329 = vsub.s32 0, %v5328
    %v5330 = vrot.slane %v5326, %v5329
    %v5332 = vsel %vm133, %v5320, 0
    %v5335 = vsel %vm133, %v5321, 0
    %5337 = vmatprep.subr.mxu0 0.0
    %5338 = vmatpush1.msra.mxu0 0.0
    %5339 = vmatprep.subr.mxu0 0.0
    %5340 = vmatpush1.msra.mxu0 0.0
    %5341 = vmatprep.subr.mxu0 0.0
    %5342 = vmatpush1.msra.mxu0 0.0
    %5343 = vmatprep.subr.mxu0 0.0
    %5344 = vmatpush1.msra.mxu0 0.0
    %5345 = vmatprep.subr.mxu0 0.0
    %5346 = vmatpush1.msra.mxu0 0.0
    %5347 = vmatprep.subr.mxu0 0.0
    %5348 = vmatpush1.msra.mxu0 0.0
    %5349 = vmatprep.subr.mxu0 0.0
    %5350 = vmatpush1.msra.mxu0 0.0
    %5351 = vmatprep.subr.mxu0 0.0
    %5352 = vmatpush1.msra.mxu0 0.0
    %5353 = vmatprep.subr.mxu0 0.0
    %5354 = vmatpush1.msra.mxu0 0.0
    %5355 = vmatprep.subr.mxu0 0.0
    %5356 = vmatpush1.msra.mxu0 0.0
    %5357 = vmatprep.subr.mxu0 0.0
    %5358 = vmatpush1.msra.mxu0 0.0
    %5359 = vmatprep.subr.mxu0 0.0
    %5360 = vmatpush1.msra.mxu0 0.0
    %5361 = vmatprep.subr.mxu0 0.0
    %5362 = vmatpush1.msra.mxu0 %v5325
    %5363 = vmatprep.subr.mxu0 0.0
    %5364 = vmatpush1.msra.mxu0 %v5324
    %5365 = vmatprep.subr.mxu0 0.0
    %5366 = vmatpush1.msra.mxu0 %v5323
    %5367 = vmatprep.subr.mxu0 0.0
    %5368 = vmatpush1.msra.mxu0 %v5322
    %5369 = vmatprep.subr.mxu0 0.0
    %5370 = vmatpush2.msra.mxu0 0.0
    %5371 = vmatprep.subr.mxu0 0.0
    %5372 = vmatpush2.msra.mxu0 0.0
    %5373 = vmatprep.subr.mxu0 0.0
    %5374 = vmatpush2.msra.mxu0 0.0
    %5375 = vmatprep.subr.mxu0 0.0
    %5376 = vmatpush2.msra.mxu0 0.0
    %5377 = vmatprep.subr.mxu0 0.0
    %5378 = vmatpush2.msra.mxu0 0.0
    %5379 = vmatprep.subr.mxu0 0.0
    %5380 = vmatpush2.msra.mxu0 0.0
    %5381 = vmatprep.subr.mxu0 0.0
    %5382 = vmatpush2.msra.mxu0 0.0
    %5383 = vmatprep.subr.mxu0 0.0
    %5384 = vmatpush2.msra.mxu0 0.0
    %5385 = vmatprep.subr.mxu0 0.0
    %5386 = vmatpush2.msra.mxu0 0.0
    %5387 = vmatprep.subr.mxu0 0.0
    %5388 = vmatpush2.msra.mxu0 0.0
    %5389 = vmatprep.subr.mxu0 0.0
    %5390 = vmatpush2.msra.mxu0 0.0
    %5391 = vmatprep.subr.mxu0 0.0
    %5392 = vmatpush2.msra.mxu0 0.0
    %5393 = vmatprep.subr.mxu0 0.0
    %5394 = vmatpush2.msra.mxu0 0.0
    %5395 = vmatprep.subr.mxu0 0.0
    %5396 = vmatpush2.msra.mxu0 0.0
    %5397 = vmatprep.subr.mxu0 0.0
    %5398 = vmatpush2.msra.mxu0 0.0
    %5399 = vmatprep.subr.mxu0 0.0
    %5400 = vmatpush2.msra.mxu0 0.0
    %5401 = vmatprep.mubr.f32.mxu0 0.0
    %5402 = vmatmul.mubr.f32.gmra.mxu0 %v5332
    %v5403 = vpop.f32.mrf.mxu0
    %v5404 = vadd.f32 %v5330, %v5403
    %v5405 = vpop.f32.mrf.mxu0
    %5406 = vmatprep.mubr.f32.mxu0 0.0
    %5407 = vmatmul.mubr.f32.gmra.mxu0 %v5335
    %v5408 = vpop.f32.mrf.mxu0
    %v5409 = vadd.f32 %v5330, %v5408
    %v5410 = vpop.f32.mrf.mxu0
    %5411 = vdwg.mxu0
    %5412 = vmatprep.subr.mxu0 0.0
    %5413 = vmatpush1.msra.mxu0 0.0
    %5414 = vmatprep.subr.mxu0 0.0
    %5415 = vmatpush1.msra.mxu0 0.0
    %5416 = vmatprep.subr.mxu0 0.0
    %5417 = vmatpush1.msra.mxu0 0.0
    %5418 = vmatprep.subr.mxu0 0.0
    %5419 = vmatpush1.msra.mxu0 0.0
    %5420 = vmatprep.subr.mxu0 0.0
    %5421 = vmatpush1.msra.mxu0 0.0
    %5422 = vmatprep.subr.mxu0 0.0
    %5423 = vmatpush1.msra.mxu0 0.0
    %5424 = vmatprep.subr.mxu0 0.0
    %5425 = vmatpush1.msra.mxu0 0.0
    %5426 = vmatprep.subr.mxu0 0.0
    %5427 = vmatpush1.msra.mxu0 0.0
    %5428 = vmatprep.subr.mxu0 0.0
    %5429 = vmatpush1.msra.mxu0 0.0
    %5430 = vmatprep.subr.mxu0 0.0
    %5431 = vmatpush1.msra.mxu0 0.0
    %5432 = vmatprep.subr.mxu0 0.0
    %5433 = vmatpush1.msra.mxu0 0.0
    %5434 = vmatprep.subr.mxu0 0.0
    %5435 = vmatpush1.msra.mxu0 0.0
    %5436 = vmatprep.subr.mxu0 0.0
    %5437 = vmatpush1.msra.mxu0 %v5325
    %5438 = vmatprep.subr.mxu0 0.0
    %5439 = vmatpush1.msra.mxu0 %v5324
    %5440 = vmatprep.subr.mxu0 0.0
    %5441 = vmatpush1.msra.mxu0 %v5323
    %5442 = vmatprep.subr.mxu0 0.0
    %5443 = vmatpush1.msra.mxu0 %v5322
    %5444 = vmatprep.subr.mxu0 0.0
    %5445 = vmatpush2.msra.mxu0 0.0
    %5446 = vmatprep.subr.mxu0 0.0
    %5447 = vmatpush2.msra.mxu0 0.0
    %5448 = vmatprep.subr.mxu0 0.0
    %5449 = vmatpush2.msra.mxu0 0.0
    %5450 = vmatprep.subr.mxu0 0.0
    %5451 = vmatpush2.msra.mxu0 0.0
    %5452 = vmatprep.subr.mxu0 0.0
    %5453 = vmatpush2.msra.mxu0 0.0
    %5454 = vmatprep.subr.mxu0 0.0
    %5455 = vmatpush2.msra.mxu0 0.0
    %5456 = vmatprep.subr.mxu0 0.0
    %5457 = vmatpush2.msra.mxu0 0.0
    %5458 = vmatprep.subr.mxu0 0.0
    %5459 = vmatpush2.msra.mxu0 0.0
    %5460 = vmatprep.subr.mxu0 0.0
    %5461 = vmatpush2.msra.mxu0 0.0
    %5462 = vmatprep.subr.mxu0 0.0
    %5463 = vmatpush2.msra.mxu0 0.0
    %5464 = vmatprep.subr.mxu0 0.0
    %5465 = vmatpush2.msra.mxu0 0.0
    %5466 = vmatprep.subr.mxu0 0.0
    %5467 = vmatpush2.msra.mxu0 0.0
    %5468 = vmatprep.subr.mxu0 0.0
    %5469 = vmatpush2.msra.mxu0 0.0
    %5470 = vmatprep.subr.mxu0 0.0
    %5471 = vmatpush2.msra.mxu0 0.0
    %5472 = vmatprep.subr.mxu0 0.0
    %5473 = vmatpush2.msra.mxu0 0.0
    %5474 = vmatprep.subr.mxu0 0.0
    %5475 = vmatpush2.msra.mxu0 0.0
    %5476 = vmatprep.mubr.f32.mxu0 0.0
    %5477 = vmatmul.mubr.f32.gmra.mxu0 %v3807
    %v5478 = vpop.f32.mrf.mxu0
    %v5479 = vadd.f32 %v5330, %v5478
    %v5480 = vpop.f32.mrf.mxu0
    %5481 = vmatprep.mubr.f32.mxu0 0.0
    %5482 = vmatmul.mubr.f32.gmra.mxu0 %v3810
    %v5483 = vpop.f32.mrf.mxu0
    %v5484 = vadd.f32 %v5330, %v5483
    %v5485 = vpop.f32.mrf.mxu0
    %5486 = vdwg.mxu0
    %5489 = vrot.lane.b32.xlu0 %v5479, 118
    %v5490 = vpop.permute.xlu0 %5489
    %5491 = vrot.lane.b32.xlu0 %v5484, 118
    %v5492 = vpop.permute.xlu0 %5491
    %v5494 = vsel %vm531, %v5404, 0
    %v5497 = vsel %vm531, %v5409, 0
    %v5499 = vsel %vm531, %v5490, 0
    %v5501 = vsel %vm531, %v5492, 0
    %5503 = vmatprep.subr.mxu0 0.0
    %5504 = vmatpush1.xpose.msra.mxu0 0.0
    %5505 = vmatprep.subr.mxu0 0.0
    %5506 = vmatpush1.xpose.msra.mxu0 0.0
    %5507 = vmatprep.subr.mxu0 0.0
    %5508 = vmatpush1.xpose.msra.mxu0 0.0
    %5509 = vmatprep.subr.mxu0 0.0
    %5510 = vmatpush1.xpose.msra.mxu0 0.0
    %5511 = vmatprep.subr.mxu0 0.0
    %5512 = vmatpush1.xpose.msra.mxu0 0.0
    %5513 = vmatprep.subr.mxu0 0.0
    %5514 = vmatpush1.xpose.msra.mxu0 0.0
    %5515 = vmatprep.subr.mxu0 0.0
    %5516 = vmatpush1.xpose.msra.mxu0 0.0
    %5517 = vmatprep.subr.mxu0 0.0
    %5518 = vmatpush1.xpose.msra.mxu0 0.0
    %5519 = vmatprep.subr.mxu0 0.0
    %5520 = vmatpush1.xpose.msra.mxu0 0.0
    %5521 = vmatprep.subr.mxu0 0.0
    %5522 = vmatpush1.xpose.msra.mxu0 0.0
    %5523 = vmatprep.subr.mxu0 0.0
    %5524 = vmatpush1.xpose.msra.mxu0 0.0
    %5525 = vmatprep.subr.mxu0 0.0
    %5526 = vmatpush1.xpose.msra.mxu0 0.0
    %5527 = vmatprep.subr.mxu0 0.0
    %5528 = vmatpush1.xpose.msra.mxu0 0.0
    %5529 = vmatprep.subr.mxu0 0.0
    %5530 = vmatpush1.xpose.msra.mxu0 0.0
    %5531 = vmatprep.subr.mxu0 0.0
    %5532 = vmatpush1.xpose.msra.mxu0 %v5501
    %5533 = vmatprep.subr.mxu0 0.0
    %5534 = vmatpush1.xpose.msra.mxu0 %v5499
    %5535 = vmatprep.subr.mxu0 0.0
    %5536 = vmatpush2.xpose.msra.mxu0 0.0
    %5537 = vmatprep.subr.mxu0 0.0
    %5538 = vmatpush2.xpose.msra.mxu0 0.0
    %5539 = vmatprep.subr.mxu0 0.0
    %5540 = vmatpush2.xpose.msra.mxu0 0.0
    %5541 = vmatprep.subr.mxu0 0.0
    %5542 = vmatpush2.xpose.msra.mxu0 0.0
    %5543 = vmatprep.subr.mxu0 0.0
    %5544 = vmatpush2.xpose.msra.mxu0 0.0
    %5545 = vmatprep.subr.mxu0 0.0
    %5546 = vmatpush2.xpose.msra.mxu0 0.0
    %5547 = vmatprep.subr.mxu0 0.0
    %5548 = vmatpush2.xpose.msra.mxu0 0.0
    %5549 = vmatprep.subr.mxu0 0.0
    %5550 = vmatpush2.xpose.msra.mxu0 0.0
    %5551 = vmatprep.subr.mxu0 0.0
    %5552 = vmatpush2.xpose.msra.mxu0 0.0
    %5553 = vmatprep.subr.mxu0 0.0
    %5554 = vmatpush2.xpose.msra.mxu0 0.0
    %5555 = vmatprep.subr.mxu0 0.0
    %5556 = vmatpush2.xpose.msra.mxu0 0.0
    %5557 = vmatprep.subr.mxu0 0.0
    %5558 = vmatpush2.xpose.msra.mxu0 0.0
    %5559 = vmatprep.subr.mxu0 0.0
    %5560 = vmatpush2.xpose.msra.mxu0 0.0
    %5561 = vmatprep.subr.mxu0 0.0
    %5562 = vmatpush2.xpose.msra.mxu0 0.0
    %5563 = vmatprep.subr.mxu0 0.0
    %5564 = vmatpush2.xpose.msra.mxu0 0.0
    %5565 = vmatprep.subr.mxu0 0.0
    %5566 = vmatpush2.xpose.msra.mxu0 0.0
    %5567 = vmatprep.mubr.f32.mxu0 0.0
    %5568 = vmatmul.mubr.f32.gmra.mxu0 %v5494
    %v5569 = vpop.f32.mrf.mxu0
    %v5570 = vadd.f32 0.0, %v5569
    %v5571 = vpop.f32.mrf.mxu0
    %5572 = vmatprep.mubr.f32.mxu0 0.0
    %5573 = vmatmul.mubr.f32.gmra.mxu0 %v5497
    %v5574 = vpop.f32.mrf.mxu0
    %v5575 = vadd.f32 0.0, %v5574
    %v5576 = vpop.f32.mrf.mxu0
    %5577 = vdwg.mxu0
    %v5578 = vmul.f32 %v5570, 0.4472136
    %v5579 = vmul.f32 %v5575, 0.4472136
    %v5580 = vadd.f32 %v5578, %v523
    %v5581 = vadd.f32 %v5579, %v524
    %v5582 = vsel %vm619, %v5580, -inf
    %5583 = vmax.xlane.f32.xlu0 %v5582
    %v5584 = vpop.xlane.xlu0 %5583
    %v5585 = vsel %vm619, %v5581, -inf
    %5586 = vmax.xlane.f32.xlu0 %v5585
    %v5587 = vpop.xlane.xlu0 %5586
    %v5588 = vsub.f32 %v5580, %v5584
    %v5589 = vsub.f32 %v5581, %v5587
    %v5590 = vmul.f32 %v5588, 1.442695
    %v5591 = vpow.pop %v5590
    %v5592 = vmul.f32 %v5589, 1.442695
    %v5593 = vpow.pop %v5592
    %v5594 = vsel %vm619, %v5591, 0.0
    %5595 = vadd.xlane.f32.xlu0 %v5594
    %v5596 = vpop.xlane.xlu0 %5595
    %v5597 = vsel %vm619, %v5593, 0.0
    %5598 = vadd.xlane.f32.xlu0 %v5597
    %v5599 = vpop.xlane.xlu0 %5598
    %v5600 = vrcp.pop %v5596
    %v5601 = vmul.f32 %v5591, %v5600
    %v5602 = vrcp.pop %v5599
    %v5603 = vmul.f32 %v5593, %v5602
    %5604 = vrot.lane.b32.xlu0 %v5479, 108
    %v5605 = vpop.permute.xlu0 %5604
    %5606 = vrot.lane.b32.xlu0 %v5484, 108
    %v5607 = vpop.permute.xlu0 %5606
    %v5611 = vsel %vm619, %v5601, 0
    %v5614 = vsel %vm619, %v5603, 0
    %5616 = vmatprep.subr.mxu0 0.0
    %5617 = vmatpush1.msra.mxu0 0.0
    %5618 = vmatprep.subr.mxu0 0.0
    %5619 = vmatpush1.msra.mxu0 0.0
    %5620 = vmatprep.subr.mxu0 0.0
    %5621 = vmatpush1.msra.mxu0 0.0
    %5622 = vmatprep.subr.mxu0 0.0
    %5623 = vmatpush1.msra.mxu0 0.0
    %5624 = vmatprep.subr.mxu0 0.0
    %5625 = vmatpush1.msra.mxu0 0.0
    %5626 = vmatprep.subr.mxu0 0.0
    %5627 = vmatpush1.msra.mxu0 0.0
    %5628 = vmatprep.subr.mxu0 0.0
    %5629 = vmatpush1.msra.mxu0 0.0
    %5630 = vmatprep.subr.mxu0 0.0
    %5631 = vmatpush1.msra.mxu0 0.0
    %5632 = vmatprep.subr.mxu0 0.0
    %5633 = vmatpush1.msra.mxu0 0.0
    %5634 = vmatprep.subr.mxu0 0.0
    %5635 = vmatpush1.msra.mxu0 0.0
    %5636 = vmatprep.subr.mxu0 0.0
    %5637 = vmatpush1.msra.mxu0 0.0
    %5638 = vmatprep.subr.mxu0 0.0
    %5639 = vmatpush1.msra.mxu0 0.0
    %5640 = vmatprep.subr.mxu0 0.0
    %5641 = vmatpush1.msra.mxu0 0.0
    %5642 = vmatprep.subr.mxu0 0.0
    %5643 = vmatpush1.msra.mxu0 0.0
    %5644 = vmatprep.subr.mxu0 0.0
    %5645 = vmatpush1.msra.mxu0 %v5607
    %5646 = vmatprep.subr.mxu0 0.0
    %5647 = vmatpush1.msra.mxu0 %v5605
    %5648 = vmatprep.subr.mxu0 0.0
    %5649 = vmatpush2.msra.mxu0 0.0
    %5650 = vmatprep.subr.mxu0 0.0
    %5651 = vmatpush2.msra.mxu0 0.0
    %5652 = vmatprep.subr.mxu0 0.0
    %5653 = vmatpush2.msra.mxu0 0.0
    %5654 = vmatprep.subr.mxu0 0.0
    %5655 = vmatpush2.msra.mxu0 0.0
    %5656 = vmatprep.subr.mxu0 0.0
    %5657 = vmatpush2.msra.mxu0 0.0
    %5658 = vmatprep.subr.mxu0 0.0
    %5659 = vmatpush2.msra.mxu0 0.0
    %5660 = vmatprep.subr.mxu0 0.0
    %5661 = vmatpush2.msra.mxu0 0.0
    %5662 = vmatprep.subr.mxu0 0.0
    %5663 = vmatpush2.msra.mxu0 0.0
    %5664 = vmatprep.subr.mxu0 0.0
    %5665 = vmatpush2.msra.mxu0 0.0
    %5666 = vmatprep.subr.mxu0 0.0
    %5667 = vmatpush2.msra.mxu0 0.0
    %5668 = vmatprep.subr.mxu0 0.0
    %5669 = vmatpush2.msra.mxu0 0.0
    %5670 = vmatprep.subr.mxu0 0.0
    %5671 = vmatpush2.msra.mxu0 0.0
    %5672 = vmatprep.subr.mxu0 0.0
    %5673 = vmatpush2.msra.mxu0 0.0
    %5674 = vmatprep.subr.mxu0 0.0
    %5675 = vmatpush2.msra.mxu0 0.0
    %5676 = vmatprep.subr.mxu0 0.0
    %5677 = vmatpush2.msra.mxu0 0.0
    %5678 = vmatprep.subr.mxu0 0.0
    %5679 = vmatpush2.msra.mxu0 0.0
    %5680 = vmatprep.mubr.f32.mxu0 0.0
    %5681 = vmatmul.mubr.f32.gmra.mxu0 %v5611
    %v5682 = vpop.f32.mrf.mxu0
    %v5683 = vadd.f32 0.0, %v5682
    %v5684 = vpop.f32.mrf.mxu0
    %5685 = vmatprep.mubr.f32.mxu0 0.0
    %5686 = vmatmul.mubr.f32.gmra.mxu0 %v5614
    %v5687 = vpop.f32.mrf.mxu0
    %v5688 = vadd.f32 0.0, %v5687
    %v5689 = vpop.f32.mrf.mxu0
    %5690 = vdwg.mxu0
    %5691 = vrot.lane.b32.xlu0 %v5404, 123
    %v5692 = vpop.permute.xlu0 %5691
    %5693 = vrot.lane.b32.xlu0 %v5409, 123
    %v5694 = vpop.permute.xlu0 %5693
    %5695 = vrot.lane.b32.xlu0 %v5479, 113
    %v5696 = vpop.permute.xlu0 %5695
    %5697 = vrot.lane.b32.xlu0 %v5484, 113
    %v5698 = vpop.permute.xlu0 %5697
    %v5699 = vsel %vm531, %v5692, 0
    %v5701 = vsel %vm531, %v5694, 0
    %v5703 = vsel %vm531, %v5696, 0
    %v5705 = vsel %vm531, %v5698, 0
    %5707 = vmatprep.subr.mxu0 0.0
    %5708 = vmatpush1.xpose.msra.mxu0 0.0
    %5709 = vmatprep.subr.mxu0 0.0
    %5710 = vmatpush1.xpose.msra.mxu0 0.0
    %5711 = vmatprep.subr.mxu0 0.0
    %5712 = vmatpush1.xpose.msra.mxu0 0.0
    %5713 = vmatprep.subr.mxu0 0.0
    %5714 = vmatpush1.xpose.msra.mxu0 0.0
    %5715 = vmatprep.subr.mxu0 0.0
    %5716 = vmatpush1.xpose.msra.mxu0 0.0
    %5717 = vmatprep.subr.mxu0 0.0
    %5718 = vmatpush1.xpose.msra.mxu0 0.0
    %5719 = vmatprep.subr.mxu0 0.0
    %5720 = vmatpush1.xpose.msra.mxu0 0.0
    %5721 = vmatprep.subr.mxu0 0.0
    %5722 = vmatpush1.xpose.msra.mxu0 0.0
    %5723 = vmatprep.subr.mxu0 0.0
    %5724 = vmatpush1.xpose.msra.mxu0 0.0
    %5725 = vmatprep.subr.mxu0 0.0
    %5726 = vmatpush1.xpose.msra.mxu0 0.0
    %5727 = vmatprep.subr.mxu0 0.0
    %5728 = vmatpush1.xpose.msra.mxu0 0.0
    %5729 = vmatprep.subr.mxu0 0.0
    %5730 = vmatpush1.xpose.msra.mxu0 0.0
    %5731 = vmatprep.subr.mxu0 0.0
    %5732 = vmatpush1.xpose.msra.mxu0 0.0
    %5733 = vmatprep.subr.mxu0 0.0
    %5734 = vmatpush1.xpose.msra.mxu0 0.0
    %5735 = vmatprep.subr.mxu0 0.0
    %5736 = vmatpush1.xpose.msra.mxu0 %v5705
    %5737 = vmatprep.subr.mxu0 0.0
    %5738 = vmatpush1.xpose.msra.mxu0 %v5703
    %5739 = vmatprep.subr.mxu0 0.0
    %5740 = vmatpush2.xpose.msra.mxu0 0.0
    %5741 = vmatprep.subr.mxu0 0.0
    %5742 = vmatpush2.xpose.msra.mxu0 0.0
    %5743 = vmatprep.subr.mxu0 0.0
    %5744 = vmatpush2.xpose.msra.mxu0 0.0
    %5745 = vmatprep.subr.mxu0 0.0
    %5746 = vmatpush2.xpose.msra.mxu0 0.0
    %5747 = vmatprep.subr.mxu0 0.0
    %5748 = vmatpush2.xpose.msra.mxu0 0.0
    %5749 = vmatprep.subr.mxu0 0.0
    %5750 = vmatpush2.xpose.msra.mxu0 0.0
    %5751 = vmatprep.subr.mxu0 0.0
    %5752 = vmatpush2.xpose.msra.mxu0 0.0
    %5753 = vmatprep.subr.mxu0 0.0
    %5754 = vmatpush2.xpose.msra.mxu0 0.0
    %5755 = vmatprep.subr.mxu0 0.0
    %5756 = vmatpush2.xpose.msra.mxu0 0.0
    %5757 = vmatprep.subr.mxu0 0.0
    %5758 = vmatpush2.xpose.msra.mxu0 0.0
    %5759 = vmatprep.subr.mxu0 0.0
    %5760 = vmatpush2.xpose.msra.mxu0 0.0
    %5761 = vmatprep.subr.mxu0 0.0
    %5762 = vmatpush2.xpose.msra.mxu0 0.0
    %5763 = vmatprep.subr.mxu0 0.0
    %5764 = vmatpush2.xpose.msra.mxu0 0.0
    %5765 = vmatprep.subr.mxu0 0.0
    %5766 = vmatpush2.xpose.msra.mxu0 0.0
    %5767 = vmatprep.subr.mxu0 0.0
    %5768 = vmatpush2.xpose.msra.mxu0 0.0
    %5769 = vmatprep.subr.mxu0 0.0
    %5770 = vmatpush2.xpose.msra.mxu0 0.0
    %5771 = vmatprep.mubr.f32.mxu0 0.0
    %5772 = vmatmul.mubr.f32.gmra.mxu0 %v5699
    %v5773 = vpop.f32.mrf.mxu0
    %v5774 = vadd.f32 0.0, %v5773
    %v5775 = vpop.f32.mrf.mxu0
    %5776 = vmatprep.mubr.f32.mxu0 0.0
    %5777 = vmatmul.mubr.f32.gmra.mxu0 %v5701
    %v5778 = vpop.f32.mrf.mxu0
    %v5779 = vadd.f32 0.0, %v5778
    %v5780 = vpop.f32.mrf.mxu0
    %5781 = vdwg.mxu0
    %v5782 = vmul.f32 %v5774, 0.4472136
    %v5783 = vmul.f32 %v5779, 0.4472136
    %v5784 = vadd.f32 %v5782, %v523
    %v5785 = vadd.f32 %v5783, %v524
    %v5786 = vsel %vm619, %v5784, -inf
    %5787 = vmax.xlane.f32.xlu0 %v5786
    %v5788 = vpop.xlane.xlu0 %5787
    %v5789 = vsel %vm619, %v5785, -inf
    %5790 = vmax.xlane.f32.xlu0 %v5789
    %v5791 = vpop.xlane.xlu0 %5790
    %v5792 = vsub.f32 %v5784, %v5788
    %v5793 = vsub.f32 %v5785, %v5791
    %v5794 = vmul.f32 %v5792, 1.442695
    %v5795 = vpow.pop %v5794
    %v5796 = vmul.f32 %v5793, 1.442695
    %v5797 = vpow.pop %v5796
    %v5798 = vsel %vm619, %v5795, 0.0
    %5799 = vadd.xlane.f32.xlu0 %v5798
    %v5800 = vpop.xlane.xlu0 %5799
    %v5801 = vsel %vm619, %v5797, 0.0
    %5802 = vadd.xlane.f32.xlu0 %v5801
    %v5803 = vpop.xlane.xlu0 %5802
    %v5804 = vrcp.pop %v5800
    %v5805 = vmul.f32 %v5795, %v5804
    %v5806 = vrcp.pop %v5803
    %v5807 = vmul.f32 %v5797, %v5806
    %5808 = vrot.lane.b32.xlu0 %v5479, 103
    %v5809 = vpop.permute.xlu0 %5808
    %5810 = vrot.lane.b32.xlu0 %v5484, 103
    %v5811 = vpop.permute.xlu0 %5810
    %v5815 = vsel %vm619, %v5805, 0
    %v5818 = vsel %vm619, %v5807, 0
    %5820 = vmatprep.subr.mxu0 0.0
    %5821 = vmatpush1.msra.mxu0 0.0
    %5822 = vmatprep.subr.mxu0 0.0
    %5823 = vmatpush1.msra.mxu0 0.0
    %5824 = vmatprep.subr.mxu0 0.0
    %5825 = vmatpush1.msra.mxu0 0.0
    %5826 = vmatprep.subr.mxu0 0.0
    %5827 = vmatpush1.msra.mxu0 0.0
    %5828 = vmatprep.subr.mxu0 0.0
    %5829 = vmatpush1.msra.mxu0 0.0
    %5830 = vmatprep.subr.mxu0 0.0
    %5831 = vmatpush1.msra.mxu0 0.0
    %5832 = vmatprep.subr.mxu0 0.0
    %5833 = vmatpush1.msra.mxu0 0.0
    %5834 = vmatprep.subr.mxu0 0.0
    %5835 = vmatpush1.msra.mxu0 0.0
    %5836 = vmatprep.subr.mxu0 0.0
    %5837 = vmatpush1.msra.mxu0 0.0
    %5838 = vmatprep.subr.mxu0 0.0
    %5839 = vmatpush1.msra.mxu0 0.0
    %5840 = vmatprep.subr.mxu0 0.0
    %5841 = vmatpush1.msra.mxu0 0.0
    %5842 = vmatprep.subr.mxu0 0.0
    %5843 = vmatpush1.msra.mxu0 0.0
    %5844 = vmatprep.subr.mxu0 0.0
    %5845 = vmatpush1.msra.mxu0 0.0
    %5846 = vmatprep.subr.mxu0 0.0
    %5847 = vmatpush1.msra.mxu0 0.0
    %5848 = vmatprep.subr.mxu0 0.0
    %5849 = vmatpush1.msra.mxu0 %v5811
    %5850 = vmatprep.subr.mxu0 0.0
    %5851 = vmatpush1.msra.mxu0 %v5809
    %5852 = vmatprep.subr.mxu0 0.0
    %5853 = vmatpush2.msra.mxu0 0.0
    %5854 = vmatprep.subr.mxu0 0.0
    %5855 = vmatpush2.msra.mxu0 0.0
    %5856 = vmatprep.subr.mxu0 0.0
    %5857 = vmatpush2.msra.mxu0 0.0
    %5858 = vmatprep.subr.mxu0 0.0
    %5859 = vmatpush2.msra.mxu0 0.0
    %5860 = vmatprep.subr.mxu0 0.0
    %5861 = vmatpush2.msra.mxu0 0.0
    %5862 = vmatprep.subr.mxu0 0.0
    %5863 = vmatpush2.msra.mxu0 0.0
    %5864 = vmatprep.subr.mxu0 0.0
    %5865 = vmatpush2.msra.mxu0 0.0
    %5866 = vmatprep.subr.mxu0 0.0
    %5867 = vmatpush2.msra.mxu0 0.0
    %5868 = vmatprep.subr.mxu0 0.0
    %5869 = vmatpush2.msra.mxu0 0.0
    %5870 = vmatprep.subr.mxu0 0.0
    %5871 = vmatpush2.msra.mxu0 0.0
    %5872 = vmatprep.subr.mxu0 0.0
    %5873 = vmatpush2.msra.mxu0 0.0
    %5874 = vmatprep.subr.mxu0 0.0
    %5875 = vmatpush2.msra.mxu0 0.0
    %5876 = vmatprep.subr.mxu0 0.0
    %5877 = vmatpush2.msra.mxu0 0.0
    %5878 = vmatprep.subr.mxu0 0.0
    %5879 = vmatpush2.msra.mxu0 0.0
    %5880 = vmatprep.subr.mxu0 0.0
    %5881 = vmatpush2.msra.mxu0 0.0
    %5882 = vmatprep.subr.mxu0 0.0
    %5883 = vmatpush2.msra.mxu0 0.0
    %5884 = vmatprep.mubr.f32.mxu0 0.0
    %5885 = vmatmul.mubr.f32.gmra.mxu0 %v5815
    %v5886 = vpop.f32.mrf.mxu0
    %v5887 = vadd.f32 0.0, %v5886
    %v5888 = vpop.f32.mrf.mxu0
    %5889 = vmatprep.mubr.f32.mxu0 0.0
    %5890 = vmatmul.mubr.f32.gmra.mxu0 %v5818
    %v5891 = vpop.f32.mrf.mxu0
    %v5892 = vadd.f32 0.0, %v5891
    %v5893 = vpop.f32.mrf.mxu0
    %5894 = vdwg.mxu0
    %5897 = vrot.lane.b32.xlu0 %v5887, 5
    %v5898 = vpop.permute.xlu0 %5897
    %5899 = vrot.lane.b32.xlu0 %v5892, 5
    %v5900 = vpop.permute.xlu0 %5899
    %v5903 = vsel %vm531, %v5683, %v5898
    %v5904 = vsel %vm531, %v5688, %v5900
    %v5905 = vld [vmem:[#allocation2 + $0x5c0] sm:$0xff]
    %v5906 = vld [vmem:[#allocation2 + $0x5c8] sm:$0x3]
    %v5907 = vld [vmem:[#allocation2 + $0x5e0] sm:$0x1]
    %v5908 = vlaneseq
    %v5909 = vshrl.u32 %v5908, 7
    %v5910 = vsub.s32 0, %v5909
    %v5911 = vrot.slane %v5907, %v5910
    %v5913 = vsel %vm950, %v5903, 0
    %v5916 = vsel %vm950, %v5904, 0
    %v5919 = vsel %vm957, %v5906, 0
    %5921 = vmatprep.subr.mxu0 0.0
    %5922 = vmatpush1.msra.mxu0 0.0
    %5923 = vmatprep.subr.mxu0 0.0
    %5924 = vmatpush1.msra.mxu0 0.0
    %5925 = vmatprep.subr.mxu0 0.0
    %5926 = vmatpush1.msra.mxu0 0.0
    %5927 = vmatprep.subr.mxu0 0.0
    %5928 = vmatpush1.msra.mxu0 0.0
    %5929 = vmatprep.subr.mxu0 0.0
    %5930 = vmatpush1.msra.mxu0 0.0
    %5931 = vmatprep.subr.mxu0 0.0
    %5932 = vmatpush1.msra.mxu0 0.0
    %5933 = vmatprep.subr.mxu0 0.0
    %5934 = vmatpush1.msra.mxu0 0.0
    %5935 = vmatprep.subr.mxu0 0.0
    %5936 = vmatpush1.msra.mxu0 0.0
    %5937 = vmatprep.subr.mxu0 0.0
    %5938 = vmatpush1.msra.mxu0 0.0
    %5939 = vmatprep.subr.mxu0 0.0
    %5940 = vmatpush1.msra.mxu0 0.0
    %5941 = vmatprep.subr.mxu0 0.0
    %5942 = vmatpush1.msra.mxu0 0.0
    %5943 = vmatprep.subr.mxu0 0.0
    %5944 = vmatpush1.msra.mxu0 0.0
    %5945 = vmatprep.subr.mxu0 0.0
    %5946 = vmatpush1.msra.mxu0 0.0
    %5947 = vmatprep.subr.mxu0 0.0
    %5948 = vmatpush1.msra.mxu0 0.0
    %5949 = vmatprep.subr.mxu0 0.0
    %5950 = vmatpush1.msra.mxu0 %v5919
    %5951 = vmatprep.subr.mxu0 0.0
    %5952 = vmatpush1.msra.mxu0 %v5905
    %5953 = vmatprep.subr.mxu0 0.0
    %5954 = vmatpush2.msra.mxu0 0.0
    %5955 = vmatprep.subr.mxu0 0.0
    %5956 = vmatpush2.msra.mxu0 0.0
    %5957 = vmatprep.subr.mxu0 0.0
    %5958 = vmatpush2.msra.mxu0 0.0
    %5959 = vmatprep.subr.mxu0 0.0
    %5960 = vmatpush2.msra.mxu0 0.0
    %5961 = vmatprep.subr.mxu0 0.0
    %5962 = vmatpush2.msra.mxu0 0.0
    %5963 = vmatprep.subr.mxu0 0.0
    %5964 = vmatpush2.msra.mxu0 0.0
    %5965 = vmatprep.subr.mxu0 0.0
    %5966 = vmatpush2.msra.mxu0 0.0
    %5967 = vmatprep.subr.mxu0 0.0
    %5968 = vmatpush2.msra.mxu0 0.0
    %5969 = vmatprep.subr.mxu0 0.0
    %5970 = vmatpush2.msra.mxu0 0.0
    %5971 = vmatprep.subr.mxu0 0.0
    %5972 = vmatpush2.msra.mxu0 0.0
    %5973 = vmatprep.subr.mxu0 0.0
    %5974 = vmatpush2.msra.mxu0 0.0
    %5975 = vmatprep.subr.mxu0 0.0
    %5976 = vmatpush2.msra.mxu0 0.0
    %5977 = vmatprep.subr.mxu0 0.0
    %5978 = vmatpush2.msra.mxu0 0.0
    %5979 = vmatprep.subr.mxu0 0.0
    %5980 = vmatpush2.msra.mxu0 0.0
    %5981 = vmatprep.subr.mxu0 0.0
    %5982 = vmatpush2.msra.mxu0 0.0
    %5983 = vmatprep.subr.mxu0 0.0
    %5984 = vmatpush2.msra.mxu0 0.0
    %5985 = vmatprep.mubr.f32.mxu0 0.0
    %5986 = vmatmul.mubr.f32.gmra.mxu0 %v5913
    %v5987 = vpop.f32.mrf.mxu0
    %v5988 = vadd.f32 %v5911, %v5987
    %v5989 = vpop.f32.mrf.mxu0
    %5990 = vmatprep.mubr.f32.mxu0 0.0
    %5991 = vmatmul.mubr.f32.gmra.mxu0 %v5916
    %v5992 = vpop.f32.mrf.mxu0
    %v5993 = vadd.f32 %v5911, %v5992
    %v5994 = vpop.f32.mrf.mxu0
    %5995 = vdwg.mxu0
    %v5996 = vadd.f32 %v5320, %v5988
    %v5997 = vadd.f32 %v5321, %v5993
    %v5998 = vld [vmem:[#allocation2 + $0x640] sm:$0x1]
    %v5999 = vld [vmem:[#allocation2 + $0x641] sm:$0x1]
    %v6000 = vld [vmem:[#allocation2 + $0x642] sm:$0x1]
    %v6001 = vsel %vm133, %v5996, 0.0
    %6002 = vadd.xlane.f32.xlu0 %v6001
    %v6003 = vpop.xlane.xlu0 %6002
    %v6004 = vsel %vm133, %v5997, 0.0
    %6005 = vadd.xlane.f32.xlu0 %v6004
    %v6006 = vpop.xlane.xlu0 %6005
    %v6007 = vmul.f32 %v6003, 0.1
    %v6008 = vmul.f32 %v6006, 0.1
    %v6009 = vsub.f32 %v5996, %v6007
    %v6010 = vsub.f32 %v5997, %v6008
    %v6011 = vlaneseq
    %v6012 = vshrl.u32 %v6011, 7
    %v6013 = vsub.s32 0, %v6012
    %v6014 = vrot.slane %v6000, %v6013
    %v6015 = vmul.f32 %v6009, %v6014
    %v6016 = vmul.f32 %v6010, %v6014
    %v6017 = vmul.f32 %v6015, %v6015
    %v6018 = vmul.f32 %v6016, %v6016
    %v6019 = vsel %vm133, %v6017, 0.0
    %6020 = vadd.xlane.f32.xlu0 %v6019
    %v6021 = vpop.xlane.xlu0 %6020
    %v6022 = vsel %vm133, %v6018, 0.0
    %6023 = vadd.xlane.f32.xlu0 %v6022
    %v6024 = vpop.xlane.xlu0 %6023
    %v6025 = vmul.f32 %v6021, 0.1
    %v6026 = vmul.f32 %v6024, 0.1
    %v6027 = vadd.f32 %v6025, 1e-05
    %v6028 = vadd.f32 %v6026, 1e-05
    %v6029 = vrsqrt.pop %v6027
    %v6030 = vrsqrt.pop %v6028
    %v6031 = vmul.f32 %v6015, %v6029
    %v6032 = vmul.f32 %v6016, %v6030
    %v6033 = vlaneseq
    %v6034 = vshrl.u32 %v6033, 7
    %v6035 = vsub.s32 0, %v6034
    %v6036 = vrot.slane %v5998, %v6035
    %v6037 = vmul.f32 %v6031, %v6036
    %v6038 = vmul.f32 %v6032, %v6036
    %v6039 = vlaneseq
    %v6040 = vshrl.u32 %v6039, 7
    %v6041 = vsub.s32 0, %v6040
    %v6042 = vrot.slane %v5999, %v6041
    %v6043 = vadd.f32 %v6037, %v6042
    %v6044 = vadd.f32 %v6038, %v6042
    %v6045 = vld [vmem:[#allocation2 + $0x5e8] sm:$0xff]
    %v6046 = vld [vmem:[#allocation2 + $0x5f0] sm:$0xff]
    %v6047 = vld [vmem:[#allocation2 + $0x5f8] sm:$0xff]
    %v6048 = vld [vmem:[#allocation2 + $0x600] sm:$0xff]
    %v6049 = vld [vmem:[#allocation2 + $0x608] sm:$0x1]
    %v6050 = vlaneseq
    %v6051 = vshrl.u32 %v6050, 7
    %v6052 = vsub.s32 0, %v6051
    %v6053 = vrot.slane %v6049, %v6052
    %v6055 = vsel %vm133, %v6043, 0
    %v6058 = vsel %vm133, %v6044, 0
    %6060 = vmatprep.subr.mxu0 0.0
    %6061 = vmatpush1.msra.mxu0 0.0
    %6062 = vmatprep.subr.mxu0 0.0
    %6063 = vmatpush1.msra.mxu0 0.0
    %6064 = vmatprep.subr.mxu0 0.0
    %6065 = vmatpush1.msra.mxu0 0.0
    %6066 = vmatprep.subr.mxu0 0.0
    %6067 = vmatpush1.msra.mxu0 0.0
    %6068 = vmatprep.subr.mxu0 0.0
    %6069 = vmatpush1.msra.mxu0 0.0
    %6070 = vmatprep.subr.mxu0 0.0
    %6071 = vmatpush1.msra.mxu0 0.0
    %6072 = vmatprep.subr.mxu0 0.0
    %6073 = vmatpush1.msra.mxu0 0.0
    %6074 = vmatprep.subr.mxu0 0.0
    %6075 = vmatpush1.msra.mxu0 0.0
    %6076 = vmatprep.subr.mxu0 0.0
    %6077 = vmatpush1.msra.mxu0 0.0
    %6078 = vmatprep.subr.mxu0 0.0
    %6079 = vmatpush1.msra.mxu0 0.0
    %6080 = vmatprep.subr.mxu0 0.0
    %6081 = vmatpush1.msra.mxu0 0.0
    %6082 = vmatprep.subr.mxu0 0.0
    %6083 = vmatpush1.msra.mxu0 0.0
    %6084 = vmatprep.subr.mxu0 0.0
    %6085 = vmatpush1.msra.mxu0 %v6048
    %6086 = vmatprep.subr.mxu0 0.0
    %6087 = vmatpush1.msra.mxu0 %v6047
    %6088 = vmatprep.subr.mxu0 0.0
    %6089 = vmatpush1.msra.mxu0 %v6046
    %6090 = vmatprep.subr.mxu0 0.0
    %6091 = vmatpush1.msra.mxu0 %v6045
    %6092 = vmatprep.subr.mxu0 0.0
    %6093 = vmatpush2.msra.mxu0 0.0
    %6094 = vmatprep.subr.mxu0 0.0
    %6095 = vmatpush2.msra.mxu0 0.0
    %6096 = vmatprep.subr.mxu0 0.0
    %6097 = vmatpush2.msra.mxu0 0.0
    %6098 = vmatprep.subr.mxu0 0.0
    %6099 = vmatpush2.msra.mxu0 0.0
    %6100 = vmatprep.subr.mxu0 0.0
    %6101 = vmatpush2.msra.mxu0 0.0
    %6102 = vmatprep.subr.mxu0 0.0
    %6103 = vmatpush2.msra.mxu0 0.0
    %6104 = vmatprep.subr.mxu0 0.0
    %6105 = vmatpush2.msra.mxu0 0.0
    %6106 = vmatprep.subr.mxu0 0.0
    %6107 = vmatpush2.msra.mxu0 0.0
    %6108 = vmatprep.subr.mxu0 0.0
    %6109 = vmatpush2.msra.mxu0 0.0
    %6110 = vmatprep.subr.mxu0 0.0
    %6111 = vmatpush2.msra.mxu0 0.0
    %6112 = vmatprep.subr.mxu0 0.0
    %6113 = vmatpush2.msra.mxu0 0.0
    %6114 = vmatprep.subr.mxu0 0.0
    %6115 = vmatpush2.msra.mxu0 0.0
    %6116 = vmatprep.subr.mxu0 0.0
    %6117 = vmatpush2.msra.mxu0 0.0
    %6118 = vmatprep.subr.mxu0 0.0
    %6119 = vmatpush2.msra.mxu0 0.0
    %6120 = vmatprep.subr.mxu0 0.0
    %6121 = vmatpush2.msra.mxu0 0.0
    %6122 = vmatprep.subr.mxu0 0.0
    %6123 = vmatpush2.msra.mxu0 0.0
    %6124 = vmatprep.mubr.f32.mxu0 0.0
    %6125 = vmatmul.mubr.f32.gmra.mxu0 %v6055
    %v6126 = vpop.f32.mrf.mxu0
    %v6127 = vadd.f32 %v6053, %v6126
    %v6128 = vpop.f32.mrf.mxu0
    %6129 = vmatprep.mubr.f32.mxu0 0.0
    %6130 = vmatmul.mubr.f32.gmra.mxu0 %v6058
    %v6131 = vpop.f32.mrf.mxu0
    %v6132 = vadd.f32 %v6053, %v6131
    %v6133 = vpop.f32.mrf.mxu0
    %6134 = vdwg.mxu0
    %v6135 = vmax.f32 %v6127, 0.0
    %v6136 = vmax.f32 %v6132, 0.0
    %v6137 = vld [vmem:[#allocation2 + $0x610] sm:$0xff]
    %v6138 = vld [vmem:[#allocation2 + $0x618] sm:$0xff]
    %v6139 = vld [vmem:[#allocation2 + $0x620] sm:$0xff]
    %v6140 = vld [vmem:[#allocation2 + $0x628] sm:$0xff]
    %v6141 = vld [vmem:[#allocation2 + $0x630] sm:$0x1]
    %v6142 = vlaneseq
    %v6143 = vshrl.u32 %v6142, 7
    %v6144 = vsub.s32 0, %v6143
    %v6145 = vrot.slane %v6141, %v6144
    %v6147 = vsel %vm133, %v6135, 0
    %v6150 = vsel %vm133, %v6136, 0
    %6152 = vmatprep.subr.mxu0 0.0
    %6153 = vmatpush1.msra.mxu0 0.0
    %6154 = vmatprep.subr.mxu0 0.0
    %6155 = vmatpush1.msra.mxu0 0.0
    %6156 = vmatprep.subr.mxu0 0.0
    %6157 = vmatpush1.msra.mxu0 0.0
    %6158 = vmatprep.subr.mxu0 0.0
    %6159 = vmatpush1.msra.mxu0 0.0
    %6160 = vmatprep.subr.mxu0 0.0
    %6161 = vmatpush1.msra.mxu0 0.0
    %6162 = vmatprep.subr.mxu0 0.0
    %6163 = vmatpush1.msra.mxu0 0.0
    %6164 = vmatprep.subr.mxu0 0.0
    %6165 = vmatpush1.msra.mxu0 0.0
    %6166 = vmatprep.subr.mxu0 0.0
    %6167 = vmatpush1.msra.mxu0 0.0
    %6168 = vmatprep.subr.mxu0 0.0
    %6169 = vmatpush1.msra.mxu0 0.0
    %6170 = vmatprep.subr.mxu0 0.0
    %6171 = vmatpush1.msra.mxu0 0.0
    %6172 = vmatprep.subr.mxu0 0.0
    %6173 = vmatpush1.msra.mxu0 0.0
    %6174 = vmatprep.subr.mxu0 0.0
    %6175 = vmatpush1.msra.mxu0 0.0
    %6176 = vmatprep.subr.mxu0 0.0
    %6177 = vmatpush1.msra.mxu0 %v6140
    %6178 = vmatprep.subr.mxu0 0.0
    %6179 = vmatpush1.msra.mxu0 %v6139
    %6180 = vmatprep.subr.mxu0 0.0
    %6181 = vmatpush1.msra.mxu0 %v6138
    %6182 = vmatprep.subr.mxu0 0.0
    %6183 = vmatpush1.msra.mxu0 %v6137
    %6184 = vmatprep.subr.mxu0 0.0
    %6185 = vmatpush2.msra.mxu0 0.0
    %6186 = vmatprep.subr.mxu0 0.0
    %6187 = vmatpush2.msra.mxu0 0.0
    %6188 = vmatprep.subr.mxu0 0.0
    %6189 = vmatpush2.msra.mxu0 0.0
    %6190 = vmatprep.subr.mxu0 0.0
    %6191 = vmatpush2.msra.mxu0 0.0
    %6192 = vmatprep.subr.mxu0 0.0
    %6193 = vmatpush2.msra.mxu0 0.0
    %6194 = vmatprep.subr.mxu0 0.0
    %6195 = vmatpush2.msra.mxu0 0.0
    %6196 = vmatprep.subr.mxu0 0.0
    %6197 = vmatpush2.msra.mxu0 0.0
    %6198 = vmatprep.subr.mxu0 0.0
    %6199 = vmatpush2.msra.mxu0 0.0
    %6200 = vmatprep.subr.mxu0 0.0
    %6201 = vmatpush2.msra.mxu0 0.0
    %6202 = vmatprep.subr.mxu0 0.0
    %6203 = vmatpush2.msra.mxu0 0.0
    %6204 = vmatprep.subr.mxu0 0.0
    %6205 = vmatpush2.msra.mxu0 0.0
    %6206 = vmatprep.subr.mxu0 0.0
    %6207 = vmatpush2.msra.mxu0 0.0
    %6208 = vmatprep.subr.mxu0 0.0
    %6209 = vmatpush2.msra.mxu0 0.0
    %6210 = vmatprep.subr.mxu0 0.0
    %6211 = vmatpush2.msra.mxu0 0.0
    %6212 = vmatprep.subr.mxu0 0.0
    %6213 = vmatpush2.msra.mxu0 0.0
    %6214 = vmatprep.subr.mxu0 0.0
    %6215 = vmatpush2.msra.mxu0 0.0
    %6216 = vmatprep.mubr.f32.mxu0 0.0
    %6217 = vmatmul.mubr.f32.gmra.mxu0 %v6147
    %v6218 = vpop.f32.mrf.mxu0
    %v6219 = vadd.f32 %v6145, %v6218
    %v6220 = vpop.f32.mrf.mxu0
    %6221 = vmatprep.mubr.f32.mxu0 0.0
    %6222 = vmatmul.mubr.f32.gmra.mxu0 %v6150
    %v6223 = vpop.f32.mrf.mxu0
    %v6224 = vadd.f32 %v6145, %v6223
    %v6225 = vpop.f32.mrf.mxu0
    %6226 = vdwg.mxu0
    %v6227 = vadd.f32 %v6043, %v6219
    %v6228 = vadd.f32 %v6044, %v6224
    %v6229 = vld [vmem:[#allocation2 + $0x648] sm:$0x1]
    %v6230 = vld [vmem:[#allocation2 + $0x649] sm:$0x1]
    %v6231 = vld [vmem:[#allocation2 + $0x64a] sm:$0x1]
    %v6232 = vsel %vm133, %v6227, 0.0
    %6233 = vadd.xlane.f32.xlu0 %v6232
    %v6234 = vpop.xlane.xlu0 %6233
    %v6235 = vsel %vm133, %v6228, 0.0
    %6236 = vadd.xlane.f32.xlu0 %v6235
    %v6237 = vpop.xlane.xlu0 %6236
    %v6238 = vmul.f32 %v6234, 0.1
    %v6239 = vmul.f32 %v6237, 0.1
    %v6240 = vsub.f32 %v6227, %v6238
    %v6241 = vsub.f32 %v6228, %v6239
    %v6242 = vlaneseq
    %v6243 = vshrl.u32 %v6242, 7
    %v6244 = vsub.s32 0, %v6243
    %v6245 = vrot.slane %v6231, %v6244
    %v6246 = vmul.f32 %v6240, %v6245
    %v6247 = vmul.f32 %v6241, %v6245
    %v6248 = vmul.f32 %v6246, %v6246
    %v6249 = vmul.f32 %v6247, %v6247
    %v6250 = vsel %vm133, %v6248, 0.0
    %6251 = vadd.xlane.f32.xlu0 %v6250
    %v6252 = vpop.xlane.xlu0 %6251
    %v6253 = vsel %vm133, %v6249, 0.0
    %6254 = vadd.xlane.f32.xlu0 %v6253
    %v6255 = vpop.xlane.xlu0 %6254
    %v6256 = vmul.f32 %v6252, 0.1
    %v6257 = vmul.f32 %v6255, 0.1
    %v6258 = vadd.f32 %v6256, 1e-05
    %v6259 = vadd.f32 %v6257, 1e-05
    %v6260 = vrsqrt.pop %v6258
    %v6261 = vrsqrt.pop %v6259
    %v6262 = vmul.f32 %v6246, %v6260
    %v6263 = vmul.f32 %v6247, %v6261
    %v6264 = vlaneseq
    %v6265 = vshrl.u32 %v6264, 7
    %v6266 = vsub.s32 0, %v6265
    %v6267 = vrot.slane %v6229, %v6266
    %v6268 = vmul.f32 %v6262, %v6267
    %v6269 = vmul.f32 %v6263, %v6267
    %v6270 = vlaneseq
    %v6271 = vshrl.u32 %v6270, 7
    %v6272 = vsub.s32 0, %v6271
    %v6273 = vrot.slane %v6230, %v6272
    %v6274 = vadd.f32 %v6268, %v6273
    %v6275 = vadd.f32 %v6269, %v6273
    %v6276 = vld [vmem:[#allocation2 + $0x650] sm:$0xff]
    %v6277 = vld [vmem:[#allocation2 + $0x658] sm:$0xff]
    %v6278 = vld [vmem:[#allocation2 + $0x660] sm:$0xff]
    %v6279 = vld [vmem:[#allocation2 + $0x668] sm:$0xff]
    %v6280 = vld [vmem:[#allocation2 + $0x670] sm:$0x1]
    %v6281 = vlaneseq
    %v6282 = vshrl.u32 %v6281, 7
    %v6283 = vsub.s32 0, %v6282
    %v6284 = vrot.slane %v6280, %v6283
    %v6286 = vsel %vm133, %v6274, 0
    %v6289 = vsel %vm133, %v6275, 0
    %6291 = vmatprep.subr.mxu0 0.0
    %6292 = vmatpush1.msra.mxu0 0.0
    %6293 = vmatprep.subr.mxu0 0.0
    %6294 = vmatpush1.msra.mxu0 0.0
    %6295 = vmatprep.subr.mxu0 0.0
    %6296 = vmatpush1.msra.mxu0 0.0
    %6297 = vmatprep.subr.mxu0 0.0
    %6298 = vmatpush1.msra.mxu0 0.0
    %6299 = vmatprep.subr.mxu0 0.0
    %6300 = vmatpush1.msra.mxu0 0.0
    %6301 = vmatprep.subr.mxu0 0.0
    %6302 = vmatpush1.msra.mxu0 0.0
    %6303 = vmatprep.subr.mxu0 0.0
    %6304 = vmatpush1.msra.mxu0 0.0
    %6305 = vmatprep.subr.mxu0 0.0
    %6306 = vmatpush1.msra.mxu0 0.0
    %6307 = vmatprep.subr.mxu0 0.0
    %6308 = vmatpush1.msra.mxu0 0.0
    %6309 = vmatprep.subr.mxu0 0.0
    %6310 = vmatpush1.msra.mxu0 0.0
    %6311 = vmatprep.subr.mxu0 0.0
    %6312 = vmatpush1.msra.mxu0 0.0
    %6313 = vmatprep.subr.mxu0 0.0
    %6314 = vmatpush1.msra.mxu0 0.0
    %6315 = vmatprep.subr.mxu0 0.0
    %6316 = vmatpush1.msra.mxu0 %v6279
    %6317 = vmatprep.subr.mxu0 0.0
    %6318 = vmatpush1.msra.mxu0 %v6278
    %6319 = vmatprep.subr.mxu0 0.0
    %6320 = vmatpush1.msra.mxu0 %v6277
    %6321 = vmatprep.subr.mxu0 0.0
    %6322 = vmatpush1.msra.mxu0 %v6276
    %6323 = vmatprep.subr.mxu0 0.0
    %6324 = vmatpush2.msra.mxu0 0.0
    %6325 = vmatprep.subr.mxu0 0.0
    %6326 = vmatpush2.msra.mxu0 0.0
    %6327 = vmatprep.subr.mxu0 0.0
    %6328 = vmatpush2.msra.mxu0 0.0
    %6329 = vmatprep.subr.mxu0 0.0
    %6330 = vmatpush2.msra.mxu0 0.0
    %6331 = vmatprep.subr.mxu0 0.0
    %6332 = vmatpush2.msra.mxu0 0.0
    %6333 = vmatprep.subr.mxu0 0.0
    %6334 = vmatpush2.msra.mxu0 0.0
    %6335 = vmatprep.subr.mxu0 0.0
    %6336 = vmatpush2.msra.mxu0 0.0
    %6337 = vmatprep.subr.mxu0 0.0
    %6338 = vmatpush2.msra.mxu0 0.0
    %6339 = vmatprep.subr.mxu0 0.0
    %6340 = vmatpush2.msra.mxu0 0.0
    %6341 = vmatprep.subr.mxu0 0.0
    %6342 = vmatpush2.msra.mxu0 0.0
    %6343 = vmatprep.subr.mxu0 0.0
    %6344 = vmatpush2.msra.mxu0 0.0
    %6345 = vmatprep.subr.mxu0 0.0
    %6346 = vmatpush2.msra.mxu0 0.0
    %6347 = vmatprep.subr.mxu0 0.0
    %6348 = vmatpush2.msra.mxu0 0.0
    %6349 = vmatprep.subr.mxu0 0.0
    %6350 = vmatpush2.msra.mxu0 0.0
    %6351 = vmatprep.subr.mxu0 0.0
    %6352 = vmatpush2.msra.mxu0 0.0
    %6353 = vmatprep.subr.mxu0 0.0
    %6354 = vmatpush2.msra.mxu0 0.0
    %6355 = vmatprep.mubr.f32.mxu0 0.0
    %6356 = vmatmul.mubr.f32.gmra.mxu0 %v6286
    %v6357 = vpop.f32.mrf.mxu0
    %v6358 = vadd.f32 %v6284, %v6357
    %v6359 = vpop.f32.mrf.mxu0
    %6360 = vmatprep.mubr.f32.mxu0 0.0
    %6361 = vmatmul.mubr.f32.gmra.mxu0 %v6289
    %v6362 = vpop.f32.mrf.mxu0
    %v6363 = vadd.f32 %v6284, %v6362
    %v6364 = vpop.f32.mrf.mxu0
    %6365 = vdwg.mxu0
    %6368 = vrot.lane.b32.xlu0 %v6358, 118
    %v6369 = vpop.permute.xlu0 %6368
    %6370 = vrot.lane.b32.xlu0 %v6363, 118
    %v6371 = vpop.permute.xlu0 %6370
    %v6372 = vsel %vm531, %v6358, 0
    %v6374 = vsel %vm531, %v6363, 0
    %v6376 = vsel %vm531, %v6369, 0
    %v6378 = vsel %vm531, %v6371, 0
    %6380 = vmatprep.subr.mxu0 0.0
    %6381 = vmatpush1.xpose.msra.mxu0 0.0
    %6382 = vmatprep.subr.mxu0 0.0
    %6383 = vmatpush1.xpose.msra.mxu0 0.0
    %6384 = vmatprep.subr.mxu0 0.0
    %6385 = vmatpush1.xpose.msra.mxu0 0.0
    %6386 = vmatprep.subr.mxu0 0.0
    %6387 = vmatpush1.xpose.msra.mxu0 0.0
    %6388 = vmatprep.subr.mxu0 0.0
    %6389 = vmatpush1.xpose.msra.mxu0 0.0
    %6390 = vmatprep.subr.mxu0 0.0
    %6391 = vmatpush1.xpose.msra.mxu0 0.0
    %6392 = vmatprep.subr.mxu0 0.0
    %6393 = vmatpush1.xpose.msra.mxu0 0.0
    %6394 = vmatprep.subr.mxu0 0.0
    %6395 = vmatpush1.xpose.msra.mxu0 0.0
    %6396 = vmatprep.subr.mxu0 0.0
    %6397 = vmatpush1.xpose.msra.mxu0 0.0
    %6398 = vmatprep.subr.mxu0 0.0
    %6399 = vmatpush1.xpose.msra.mxu0 0.0
    %6400 = vmatprep.subr.mxu0 0.0
    %6401 = vmatpush1.xpose.msra.mxu0 0.0
    %6402 = vmatprep.subr.mxu0 0.0
    %6403 = vmatpush1.xpose.msra.mxu0 0.0
    %6404 = vmatprep.subr.mxu0 0.0
    %6405 = vmatpush1.xpose.msra.mxu0 0.0
    %6406 = vmatprep.subr.mxu0 0.0
    %6407 = vmatpush1.xpose.msra.mxu0 0.0
    %6408 = vmatprep.subr.mxu0 0.0
    %6409 = vmatpush1.xpose.msra.mxu0 %v6378
    %6410 = vmatprep.subr.mxu0 0.0
    %6411 = vmatpush1.xpose.msra.mxu0 %v6376
    %6412 = vmatprep.subr.mxu0 0.0
    %6413 = vmatpush2.xpose.msra.mxu0 0.0
    %6414 = vmatprep.subr.mxu0 0.0
    %6415 = vmatpush2.xpose.msra.mxu0 0.0
    %6416 = vmatprep.subr.mxu0 0.0
    %6417 = vmatpush2.xpose.msra.mxu0 0.0
    %6418 = vmatprep.subr.mxu0 0.0
    %6419 = vmatpush2.xpose.msra.mxu0 0.0
    %6420 = vmatprep.subr.mxu0 0.0
    %6421 = vmatpush2.xpose.msra.mxu0 0.0
    %6422 = vmatprep.subr.mxu0 0.0
    %6423 = vmatpush2.xpose.msra.mxu0 0.0
    %6424 = vmatprep.subr.mxu0 0.0
    %6425 = vmatpush2.xpose.msra.mxu0 0.0
    %6426 = vmatprep.subr.mxu0 0.0
    %6427 = vmatpush2.xpose.msra.mxu0 0.0
    %6428 = vmatprep.subr.mxu0 0.0
    %6429 = vmatpush2.xpose.msra.mxu0 0.0
    %6430 = vmatprep.subr.mxu0 0.0
    %6431 = vmatpush2.xpose.msra.mxu0 0.0
    %6432 = vmatprep.subr.mxu0 0.0
    %6433 = vmatpush2.xpose.msra.mxu0 0.0
    %6434 = vmatprep.subr.mxu0 0.0
    %6435 = vmatpush2.xpose.msra.mxu0 0.0
    %6436 = vmatprep.subr.mxu0 0.0
    %6437 = vmatpush2.xpose.msra.mxu0 0.0
    %6438 = vmatprep.subr.mxu0 0.0
    %6439 = vmatpush2.xpose.msra.mxu0 0.0
    %6440 = vmatprep.subr.mxu0 0.0
    %6441 = vmatpush2.xpose.msra.mxu0 0.0
    %6442 = vmatprep.subr.mxu0 0.0
    %6443 = vmatpush2.xpose.msra.mxu0 0.0
    %6444 = vmatprep.mubr.f32.mxu0 0.0
    %6445 = vmatmul.mubr.f32.gmra.mxu0 %v6372
    %v6446 = vpop.f32.mrf.mxu0
    %v6447 = vadd.f32 0.0, %v6446
    %v6448 = vpop.f32.mrf.mxu0
    %6449 = vmatprep.mubr.f32.mxu0 0.0
    %6450 = vmatmul.mubr.f32.gmra.mxu0 %v6374
    %v6451 = vpop.f32.mrf.mxu0
    %v6452 = vadd.f32 0.0, %v6451
    %v6453 = vpop.f32.mrf.mxu0
    %6454 = vdwg.mxu0
    %v6455 = vmul.f32 %v6447, 0.4472136
    %v6456 = vmul.f32 %v6452, 0.4472136
    %v6457 = vadd.f32 %v6455, %v523
    %v6458 = vadd.f32 %v6456, %v524
    %v6459 = vsel %vm619, %v6457, -inf
    %6460 = vmax.xlane.f32.xlu0 %v6459
    %v6461 = vpop.xlane.xlu0 %6460
    %v6462 = vsel %vm619, %v6458, -inf
    %6463 = vmax.xlane.f32.xlu0 %v6462
    %v6464 = vpop.xlane.xlu0 %6463
    %v6465 = vsub.f32 %v6457, %v6461
    %v6466 = vsub.f32 %v6458, %v6464
    %v6467 = vmul.f32 %v6465, 1.442695
    %v6468 = vpow.pop %v6467
    %v6469 = vmul.f32 %v6466, 1.442695
    %v6470 = vpow.pop %v6469
    %v6471 = vsel %vm619, %v6468, 0.0
    %6472 = vadd.xlane.f32.xlu0 %v6471
    %v6473 = vpop.xlane.xlu0 %6472
    %v6474 = vsel %vm619, %v6470, 0.0
    %6475 = vadd.xlane.f32.xlu0 %v6474
    %v6476 = vpop.xlane.xlu0 %6475
    %v6477 = vrcp.pop %v6473
    %v6478 = vmul.f32 %v6468, %v6477
    %v6479 = vrcp.pop %v6476
    %v6480 = vmul.f32 %v6470, %v6479
    %6481 = vrot.lane.b32.xlu0 %v6358, 108
    %v6482 = vpop.permute.xlu0 %6481
    %6483 = vrot.lane.b32.xlu0 %v6363, 108
    %v6484 = vpop.permute.xlu0 %6483
    %v6488 = vsel %vm619, %v6478, 0
    %v6491 = vsel %vm619, %v6480, 0
    %6493 = vmatprep.subr.mxu0 0.0
    %6494 = vmatpush1.msra.mxu0 0.0
    %6495 = vmatprep.subr.mxu0 0.0
    %6496 = vmatpush1.msra.mxu0 0.0
    %6497 = vmatprep.subr.mxu0 0.0
    %6498 = vmatpush1.msra.mxu0 0.0
    %6499 = vmatprep.subr.mxu0 0.0
    %6500 = vmatpush1.msra.mxu0 0.0
    %6501 = vmatprep.subr.mxu0 0.0
    %6502 = vmatpush1.msra.mxu0 0.0
    %6503 = vmatprep.subr.mxu0 0.0
    %6504 = vmatpush1.msra.mxu0 0.0
    %6505 = vmatprep.subr.mxu0 0.0
    %6506 = vmatpush1.msra.mxu0 0.0
    %6507 = vmatprep.subr.mxu0 0.0
    %6508 = vmatpush1.msra.mxu0 0.0
    %6509 = vmatprep.subr.mxu0 0.0
    %6510 = vmatpush1.msra.mxu0 0.0
    %6511 = vmatprep.subr.mxu0 0.0
    %6512 = vmatpush1.msra.mxu0 0.0
    %6513 = vmatprep.subr.mxu0 0.0
    %6514 = vmatpush1.msra.mxu0 0.0
    %6515 = vmatprep.subr.mxu0 0.0
    %6516 = vmatpush1.msra.mxu0 0.0
    %6517 = vmatprep.subr.mxu0 0.0
    %6518 = vmatpush1.msra.mxu0 0.0
    %6519 = vmatprep.subr.mxu0 0.0
    %6520 = vmatpush1.msra.mxu0 0.0
    %6521 = vmatprep.subr.mxu0 0.0
    %6522 = vmatpush1.msra.mxu0 %v6484
    %6523 = vmatprep.subr.mxu0 0.0
    %6524 = vmatpush1.msra.mxu0 %v6482
    %6525 = vmatprep.subr.mxu0 0.0
    %6526 = vmatpush2.msra.mxu0 0.0
    %6527 = vmatprep.subr.mxu0 0.0
    %6528 = vmatpush2.msra.mxu0 0.0
    %6529 = vmatprep.subr.mxu0 0.0
    %6530 = vmatpush2.msra.mxu0 0.0
    %6531 = vmatprep.subr.mxu0 0.0
    %6532 = vmatpush2.msra.mxu0 0.0
    %6533 = vmatprep.subr.mxu0 0.0
    %6534 = vmatpush2.msra.mxu0 0.0
    %6535 = vmatprep.subr.mxu0 0.0
    %6536 = vmatpush2.msra.mxu0 0.0
    %6537 = vmatprep.subr.mxu0 0.0
    %6538 = vmatpush2.msra.mxu0 0.0
    %6539 = vmatprep.subr.mxu0 0.0
    %6540 = vmatpush2.msra.mxu0 0.0
    %6541 = vmatprep.subr.mxu0 0.0
    %6542 = vmatpush2.msra.mxu0 0.0
    %6543 = vmatprep.subr.mxu0 0.0
    %6544 = vmatpush2.msra.mxu0 0.0
    %6545 = vmatprep.subr.mxu0 0.0
    %6546 = vmatpush2.msra.mxu0 0.0
    %6547 = vmatprep.subr.mxu0 0.0
    %6548 = vmatpush2.msra.mxu0 0.0
    %6549 = vmatprep.subr.mxu0 0.0
    %6550 = vmatpush2.msra.mxu0 0.0
    %6551 = vmatprep.subr.mxu0 0.0
    %6552 = vmatpush2.msra.mxu0 0.0
    %6553 = vmatprep.subr.mxu0 0.0
    %6554 = vmatpush2.msra.mxu0 0.0
    %6555 = vmatprep.subr.mxu0 0.0
    %6556 = vmatpush2.msra.mxu0 0.0
    %6557 = vmatprep.mubr.f32.mxu0 0.0
    %6558 = vmatmul.mubr.f32.gmra.mxu0 %v6488
    %v6559 = vpop.f32.mrf.mxu0
    %v6560 = vadd.f32 0.0, %v6559
    %v6561 = vpop.f32.mrf.mxu0
    %6562 = vmatprep.mubr.f32.mxu0 0.0
    %6563 = vmatmul.mubr.f32.gmra.mxu0 %v6491
    %v6564 = vpop.f32.mrf.mxu0
    %v6565 = vadd.f32 0.0, %v6564
    %v6566 = vpop.f32.mrf.mxu0
    %6567 = vdwg.mxu0
    %6568 = vrot.lane.b32.xlu0 %v6358, 123
    %v6569 = vpop.permute.xlu0 %6568
    %6570 = vrot.lane.b32.xlu0 %v6363, 123
    %v6571 = vpop.permute.xlu0 %6570
    %6572 = vrot.lane.b32.xlu0 %v6358, 113
    %v6573 = vpop.permute.xlu0 %6572
    %6574 = vrot.lane.b32.xlu0 %v6363, 113
    %v6575 = vpop.permute.xlu0 %6574
    %v6576 = vsel %vm531, %v6569, 0
    %v6578 = vsel %vm531, %v6571, 0
    %v6580 = vsel %vm531, %v6573, 0
    %v6582 = vsel %vm531, %v6575, 0
    %6584 = vmatprep.subr.mxu0 0.0
    %6585 = vmatpush1.xpose.msra.mxu0 0.0
    %6586 = vmatprep.subr.mxu0 0.0
    %6587 = vmatpush1.xpose.msra.mxu0 0.0
    %6588 = vmatprep.subr.mxu0 0.0
    %6589 = vmatpush1.xpose.msra.mxu0 0.0
    %6590 = vmatprep.subr.mxu0 0.0
    %6591 = vmatpush1.xpose.msra.mxu0 0.0
    %6592 = vmatprep.subr.mxu0 0.0
    %6593 = vmatpush1.xpose.msra.mxu0 0.0
    %6594 = vmatprep.subr.mxu0 0.0
    %6595 = vmatpush1.xpose.msra.mxu0 0.0
    %6596 = vmatprep.subr.mxu0 0.0
    %6597 = vmatpush1.xpose.msra.mxu0 0.0
    %6598 = vmatprep.subr.mxu0 0.0
    %6599 = vmatpush1.xpose.msra.mxu0 0.0
    %6600 = vmatprep.subr.mxu0 0.0
    %6601 = vmatpush1.xpose.msra.mxu0 0.0
    %6602 = vmatprep.subr.mxu0 0.0
    %6603 = vmatpush1.xpose.msra.mxu0 0.0
    %6604 = vmatprep.subr.mxu0 0.0
    %6605 = vmatpush1.xpose.msra.mxu0 0.0
    %6606 = vmatprep.subr.mxu0 0.0
    %6607 = vmatpush1.xpose.msra.mxu0 0.0
    %6608 = vmatprep.subr.mxu0 0.0
    %6609 = vmatpush1.xpose.msra.mxu0 0.0
    %6610 = vmatprep.subr.mxu0 0.0
    %6611 = vmatpush1.xpose.msra.mxu0 0.0
    %6612 = vmatprep.subr.mxu0 0.0
    %6613 = vmatpush1.xpose.msra.mxu0 %v6582
    %6614 = vmatprep.subr.mxu0 0.0
    %6615 = vmatpush1.xpose.msra.mxu0 %v6580
    %6616 = vmatprep.subr.mxu0 0.0
    %6617 = vmatpush2.xpose.msra.mxu0 0.0
    %6618 = vmatprep.subr.mxu0 0.0
    %6619 = vmatpush2.xpose.msra.mxu0 0.0
    %6620 = vmatprep.subr.mxu0 0.0
    %6621 = vmatpush2.xpose.msra.mxu0 0.0
    %6622 = vmatprep.subr.mxu0 0.0
    %6623 = vmatpush2.xpose.msra.mxu0 0.0
    %6624 = vmatprep.subr.mxu0 0.0
    %6625 = vmatpush2.xpose.msra.mxu0 0.0
    %6626 = vmatprep.subr.mxu0 0.0
    %6627 = vmatpush2.xpose.msra.mxu0 0.0
    %6628 = vmatprep.subr.mxu0 0.0
    %6629 = vmatpush2.xpose.msra.mxu0 0.0
    %6630 = vmatprep.subr.mxu0 0.0
    %6631 = vmatpush2.xpose.msra.mxu0 0.0
    %6632 = vmatprep.subr.mxu0 0.0
    %6633 = vmatpush2.xpose.msra.mxu0 0.0
    %6634 = vmatprep.subr.mxu0 0.0
    %6635 = vmatpush2.xpose.msra.mxu0 0.0
    %6636 = vmatprep.subr.mxu0 0.0
    %6637 = vmatpush2.xpose.msra.mxu0 0.0
    %6638 = vmatprep.subr.mxu0 0.0
    %6639 = vmatpush2.xpose.msra.mxu0 0.0
    %6640 = vmatprep.subr.mxu0 0.0
    %6641 = vmatpush2.xpose.msra.mxu0 0.0
    %6642 = vmatprep.subr.mxu0 0.0
    %6643 = vmatpush2.xpose.msra.mxu0 0.0
    %6644 = vmatprep.subr.mxu0 0.0
    %6645 = vmatpush2.xpose.msra.mxu0 0.0
    %6646 = vmatprep.subr.mxu0 0.0
    %6647 = vmatpush2.xpose.msra.mxu0 0.0
    %6648 = vmatprep.mubr.f32.mxu0 0.0
    %6649 = vmatmul.mubr.f32.gmra.mxu0 %v6576
    %v6650 = vpop.f32.mrf.mxu0
    %v6651 = vadd.f32 0.0, %v6650
    %v6652 = vpop.f32.mrf.mxu0
    %6653 = vmatprep.mubr.f32.mxu0 0.0
    %6654 = vmatmul.mubr.f32.gmra.mxu0 %v6578
    %v6655 = vpop.f32.mrf.mxu0
    %v6656 = vadd.f32 0.0, %v6655
    %v6657 = vpop.f32.mrf.mxu0
    %6658 = vdwg.mxu0
    %v6659 = vmul.f32 %v6651, 0.4472136
    %v6660 = vmul.f32 %v6656, 0.4472136
    %v6661 = vadd.f32 %v6659, %v523
    %v6662 = vadd.f32 %v6660, %v524
    %v6663 = vsel %vm619, %v6661, -inf
    %6664 = vmax.xlane.f32.xlu0 %v6663
    %v6665 = vpop.xlane.xlu0 %6664
    %v6666 = vsel %vm619, %v6662, -inf
    %6667 = vmax.xlane.f32.xlu0 %v6666
    %v6668 = vpop.xlane.xlu0 %6667
    %v6669 = vsub.f32 %v6661, %v6665
    %v6670 = vsub.f32 %v6662, %v6668
    %v6671 = vmul.f32 %v6669, 1.442695
    %v6672 = vpow.pop %v6671
    %v6673 = vmul.f32 %v6670, 1.442695
    %v6674 = vpow.pop %v6673
    %v6675 = vsel %vm619, %v6672, 0.0
    %6676 = vadd.xlane.f32.xlu0 %v6675
    %v6677 = vpop.xlane.xlu0 %6676
    %v6678 = vsel %vm619, %v6674, 0.0
    %6679 = vadd.xlane.f32.xlu0 %v6678
    %v6680 = vpop.xlane.xlu0 %6679
    %v6681 = vrcp.pop %v6677
    %v6682 = vmul.f32 %v6672, %v6681
    %v6683 = vrcp.pop %v6680
    %v6684 = vmul.f32 %v6674, %v6683
    %6685 = vrot.lane.b32.xlu0 %v6358, 103
    %v6686 = vpop.permute.xlu0 %6685
    %6687 = vrot.lane.b32.xlu0 %v6363, 103
    %v6688 = vpop.permute.xlu0 %6687
    %v6692 = vsel %vm619, %v6682, 0
    %v6695 = vsel %vm619, %v6684, 0
    %6697 = vmatprep.subr.mxu0 0.0
    %6698 = vmatpush1.msra.mxu0 0.0
    %6699 = vmatprep.subr.mxu0 0.0
    %6700 = vmatpush1.msra.mxu0 0.0
    %6701 = vmatprep.subr.mxu0 0.0
    %6702 = vmatpush1.msra.mxu0 0.0
    %6703 = vmatprep.subr.mxu0 0.0
    %6704 = vmatpush1.msra.mxu0 0.0
    %6705 = vmatprep.subr.mxu0 0.0
    %6706 = vmatpush1.msra.mxu0 0.0
    %6707 = vmatprep.subr.mxu0 0.0
    %6708 = vmatpush1.msra.mxu0 0.0
    %6709 = vmatprep.subr.mxu0 0.0
    %6710 = vmatpush1.msra.mxu0 0.0
    %6711 = vmatprep.subr.mxu0 0.0
    %6712 = vmatpush1.msra.mxu0 0.0
    %6713 = vmatprep.subr.mxu0 0.0
    %6714 = vmatpush1.msra.mxu0 0.0
    %6715 = vmatprep.subr.mxu0 0.0
    %6716 = vmatpush1.msra.mxu0 0.0
    %6717 = vmatprep.subr.mxu0 0.0
    %6718 = vmatpush1.msra.mxu0 0.0
    %6719 = vmatprep.subr.mxu0 0.0
    %6720 = vmatpush1.msra.mxu0 0.0
    %6721 = vmatprep.subr.mxu0 0.0
    %6722 = vmatpush1.msra.mxu0 0.0
    %6723 = vmatprep.subr.mxu0 0.0
    %6724 = vmatpush1.msra.mxu0 0.0
    %6725 = vmatprep.subr.mxu0 0.0
    %6726 = vmatpush1.msra.mxu0 %v6688
    %6727 = vmatprep.subr.mxu0 0.0
    %6728 = vmatpush1.msra.mxu0 %v6686
    %6729 = vmatprep.subr.mxu0 0.0
    %6730 = vmatpush2.msra.mxu0 0.0
    %6731 = vmatprep.subr.mxu0 0.0
    %6732 = vmatpush2.msra.mxu0 0.0
    %6733 = vmatprep.subr.mxu0 0.0
    %6734 = vmatpush2.msra.mxu0 0.0
    %6735 = vmatprep.subr.mxu0 0.0
    %6736 = vmatpush2.msra.mxu0 0.0
    %6737 = vmatprep.subr.mxu0 0.0
    %6738 = vmatpush2.msra.mxu0 0.0
    %6739 = vmatprep.subr.mxu0 0.0
    %6740 = vmatpush2.msra.mxu0 0.0
    %6741 = vmatprep.subr.mxu0 0.0
    %6742 = vmatpush2.msra.mxu0 0.0
    %6743 = vmatprep.subr.mxu0 0.0
    %6744 = vmatpush2.msra.mxu0 0.0
    %6745 = vmatprep.subr.mxu0 0.0
    %6746 = vmatpush2.msra.mxu0 0.0
    %6747 = vmatprep.subr.mxu0 0.0
    %6748 = vmatpush2.msra.mxu0 0.0
    %6749 = vmatprep.subr.mxu0 0.0
    %6750 = vmatpush2.msra.mxu0 0.0
    %6751 = vmatprep.subr.mxu0 0.0
    %6752 = vmatpush2.msra.mxu0 0.0
    %6753 = vmatprep.subr.mxu0 0.0
    %6754 = vmatpush2.msra.mxu0 0.0
    %6755 = vmatprep.subr.mxu0 0.0
    %6756 = vmatpush2.msra.mxu0 0.0
    %6757 = vmatprep.subr.mxu0 0.0
    %6758 = vmatpush2.msra.mxu0 0.0
    %6759 = vmatprep.subr.mxu0 0.0
    %6760 = vmatpush2.msra.mxu0 0.0
    %6761 = vmatprep.mubr.f32.mxu0 0.0
    %6762 = vmatmul.mubr.f32.gmra.mxu0 %v6692
    %v6763 = vpop.f32.mrf.mxu0
    %v6764 = vadd.f32 0.0, %v6763
    %v6765 = vpop.f32.mrf.mxu0
    %6766 = vmatprep.mubr.f32.mxu0 0.0
    %6767 = vmatmul.mubr.f32.gmra.mxu0 %v6695
    %v6768 = vpop.f32.mrf.mxu0
    %v6769 = vadd.f32 0.0, %v6768
    %v6770 = vpop.f32.mrf.mxu0
    %6771 = vdwg.mxu0
    %6774 = vrot.lane.b32.xlu0 %v6764, 5
    %v6775 = vpop.permute.xlu0 %6774
    %6776 = vrot.lane.b32.xlu0 %v6769, 5
    %v6777 = vpop.permute.xlu0 %6776
    %v6780 = vsel %vm531, %v6560, %v6775
    %v6781 = vsel %vm531, %v6565, %v6777
    %v6782 = vld [vmem:[#allocation2 + $0x678] sm:$0xff]
    %v6783 = vld [vmem:[#allocation2 + $0x680] sm:$0x3]
    %v6784 = vld [vmem:[#allocation2 + $0x698] sm:$0x1]
    %v6785 = vlaneseq
    %v6786 = vshrl.u32 %v6785, 7
    %v6787 = vsub.s32 0, %v6786
    %v6788 = vrot.slane %v6784, %v6787
    %v6790 = vsel %vm950, %v6780, 0
    %v6793 = vsel %vm950, %v6781, 0
    %v6796 = vsel %vm957, %v6783, 0
    %6798 = vmatprep.subr.mxu0 0.0
    %6799 = vmatpush1.msra.mxu0 0.0
    %6800 = vmatprep.subr.mxu0 0.0
    %6801 = vmatpush1.msra.mxu0 0.0
    %6802 = vmatprep.subr.mxu0 0.0
    %6803 = vmatpush1.msra.mxu0 0.0
    %6804 = vmatprep.subr.mxu0 0.0
    %6805 = vmatpush1.msra.mxu0 0.0
    %6806 = vmatprep.subr.mxu0 0.0
    %6807 = vmatpush1.msra.mxu0 0.0
    %6808 = vmatprep.subr.mxu0 0.0
    %6809 = vmatpush1.msra.mxu0 0.0
    %6810 = vmatprep.subr.mxu0 0.0
    %6811 = vmatpush1.msra.mxu0 0.0
    %6812 = vmatprep.subr.mxu0 0.0
    %6813 = vmatpush1.msra.mxu0 0.0
    %6814 = vmatprep.subr.mxu0 0.0
    %6815 = vmatpush1.msra.mxu0 0.0
    %6816 = vmatprep.subr.mxu0 0.0
    %6817 = vmatpush1.msra.mxu0 0.0
    %6818 = vmatprep.subr.mxu0 0.0
    %6819 = vmatpush1.msra.mxu0 0.0
    %6820 = vmatprep.subr.mxu0 0.0
    %6821 = vmatpush1.msra.mxu0 0.0
    %6822 = vmatprep.subr.mxu0 0.0
    %6823 = vmatpush1.msra.mxu0 0.0
    %6824 = vmatprep.subr.mxu0 0.0
    %6825 = vmatpush1.msra.mxu0 0.0
    %6826 = vmatprep.subr.mxu0 0.0
    %6827 = vmatpush1.msra.mxu0 %v6796
    %6828 = vmatprep.subr.mxu0 0.0
    %6829 = vmatpush1.msra.mxu0 %v6782
    %6830 = vmatprep.subr.mxu0 0.0
    %6831 = vmatpush2.msra.mxu0 0.0
    %6832 = vmatprep.subr.mxu0 0.0
    %6833 = vmatpush2.msra.mxu0 0.0
    %6834 = vmatprep.subr.mxu0 0.0
    %6835 = vmatpush2.msra.mxu0 0.0
    %6836 = vmatprep.subr.mxu0 0.0
    %6837 = vmatpush2.msra.mxu0 0.0
    %6838 = vmatprep.subr.mxu0 0.0
    %6839 = vmatpush2.msra.mxu0 0.0
    %6840 = vmatprep.subr.mxu0 0.0
    %6841 = vmatpush2.msra.mxu0 0.0
    %6842 = vmatprep.subr.mxu0 0.0
    %6843 = vmatpush2.msra.mxu0 0.0
    %6844 = vmatprep.subr.mxu0 0.0
    %6845 = vmatpush2.msra.mxu0 0.0
    %6846 = vmatprep.subr.mxu0 0.0
    %6847 = vmatpush2.msra.mxu0 0.0
    %6848 = vmatprep.subr.mxu0 0.0
    %6849 = vmatpush2.msra.mxu0 0.0
    %6850 = vmatprep.subr.mxu0 0.0
    %6851 = vmatpush2.msra.mxu0 0.0
    %6852 = vmatprep.subr.mxu0 0.0
    %6853 = vmatpush2.msra.mxu0 0.0
    %6854 = vmatprep.subr.mxu0 0.0
    %6855 = vmatpush2.msra.mxu0 0.0
    %6856 = vmatprep.subr.mxu0 0.0
    %6857 = vmatpush2.msra.mxu0 0.0
    %6858 = vmatprep.subr.mxu0 0.0
    %6859 = vmatpush2.msra.mxu0 0.0
    %6860 = vmatprep.subr.mxu0 0.0
    %6861 = vmatpush2.msra.mxu0 0.0
    %6862 = vmatprep.mubr.f32.mxu0 0.0
    %6863 = vmatmul.mubr.f32.gmra.mxu0 %v6790
    %v6864 = vpop.f32.mrf.mxu0
    %v6865 = vadd.f32 %v6788, %v6864
    %v6866 = vpop.f32.mrf.mxu0
    %6867 = vmatprep.mubr.f32.mxu0 0.0
    %6868 = vmatmul.mubr.f32.gmra.mxu0 %v6793
    %v6869 = vpop.f32.mrf.mxu0
    %v6870 = vadd.f32 %v6788, %v6869
    %v6871 = vpop.f32.mrf.mxu0
    %6872 = vdwg.mxu0
    %v6873 = vadd.f32 %v6274, %v6865
    %v6874 = vadd.f32 %v6275, %v6870
    %v6875 = vld [vmem:[#allocation2 + $0x740] sm:$0x1]
    %v6876 = vld [vmem:[#allocation2 + $0x741] sm:$0x1]
    %v6877 = vld [vmem:[#allocation2 + $0x742] sm:$0x1]
    %v6878 = vsel %vm133, %v6873, 0.0
    %6879 = vadd.xlane.f32.xlu0 %v6878
    %v6880 = vpop.xlane.xlu0 %6879
    %v6881 = vsel %vm133, %v6874, 0.0
    %6882 = vadd.xlane.f32.xlu0 %v6881
    %v6883 = vpop.xlane.xlu0 %6882
    %v6884 = vmul.f32 %v6880, 0.1
    %v6885 = vmul.f32 %v6883, 0.1
    %v6886 = vsub.f32 %v6873, %v6884
    %v6887 = vsub.f32 %v6874, %v6885
    %v6888 = vlaneseq
    %v6889 = vshrl.u32 %v6888, 7
    %v6890 = vsub.s32 0, %v6889
    %v6891 = vrot.slane %v6877, %v6890
    %v6892 = vmul.f32 %v6886, %v6891
    %v6893 = vmul.f32 %v6887, %v6891
    %v6894 = vmul.f32 %v6892, %v6892
    %v6895 = vmul.f32 %v6893, %v6893
    %v6896 = vsel %vm133, %v6894, 0.0
    %6897 = vadd.xlane.f32.xlu0 %v6896
    %v6898 = vpop.xlane.xlu0 %6897
    %v6899 = vsel %vm133, %v6895, 0.0
    %6900 = vadd.xlane.f32.xlu0 %v6899
    %v6901 = vpop.xlane.xlu0 %6900
    %v6902 = vmul.f32 %v6898, 0.1
    %v6903 = vmul.f32 %v6901, 0.1
    %v6904 = vadd.f32 %v6902, 1e-05
    %v6905 = vadd.f32 %v6903, 1e-05
    %v6906 = vrsqrt.pop %v6904
    %v6907 = vrsqrt.pop %v6905
    %v6908 = vmul.f32 %v6892, %v6906
    %v6909 = vmul.f32 %v6893, %v6907
    %v6910 = vlaneseq
    %v6911 = vshrl.u32 %v6910, 7
    %v6912 = vsub.s32 0, %v6911
    %v6913 = vrot.slane %v6875, %v6912
    %v6914 = vmul.f32 %v6908, %v6913
    %v6915 = vmul.f32 %v6909, %v6913
    %v6916 = vlaneseq
    %v6917 = vshrl.u32 %v6916, 7
    %v6918 = vsub.s32 0, %v6917
    %v6919 = vrot.slane %v6876, %v6918
    %v6920 = vadd.f32 %v6914, %v6919
    %v6921 = vadd.f32 %v6915, %v6919
    %v6922 = vld [vmem:[#allocation2 + $0x6a0] sm:$0xff]
    %v6923 = vld [vmem:[#allocation2 + $0x6a8] sm:$0xff]
    %v6924 = vld [vmem:[#allocation2 + $0x6b0] sm:$0xff]
    %v6925 = vld [vmem:[#allocation2 + $0x6b8] sm:$0xff]
    %v6926 = vld [vmem:[#allocation2 + $0x6c0] sm:$0x1]
    %v6927 = vlaneseq
    %v6928 = vshrl.u32 %v6927, 7
    %v6929 = vsub.s32 0, %v6928
    %v6930 = vrot.slane %v6926, %v6929
    %v6932 = vsel %vm133, %v6920, 0
    %v6935 = vsel %vm133, %v6921, 0
    %6937 = vmatprep.subr.mxu0 0.0
    %6938 = vmatpush1.msra.mxu0 0.0
    %6939 = vmatprep.subr.mxu0 0.0
    %6940 = vmatpush1.msra.mxu0 0.0
    %6941 = vmatprep.subr.mxu0 0.0
    %6942 = vmatpush1.msra.mxu0 0.0
    %6943 = vmatprep.subr.mxu0 0.0
    %6944 = vmatpush1.msra.mxu0 0.0
    %6945 = vmatprep.subr.mxu0 0.0
    %6946 = vmatpush1.msra.mxu0 0.0
    %6947 = vmatprep.subr.mxu0 0.0
    %6948 = vmatpush1.msra.mxu0 0.0
    %6949 = vmatprep.subr.mxu0 0.0
    %6950 = vmatpush1.msra.mxu0 0.0
    %6951 = vmatprep.subr.mxu0 0.0
    %6952 = vmatpush1.msra.mxu0 0.0
    %6953 = vmatprep.subr.mxu0 0.0
    %6954 = vmatpush1.msra.mxu0 0.0
    %6955 = vmatprep.subr.mxu0 0.0
    %6956 = vmatpush1.msra.mxu0 0.0
    %6957 = vmatprep.subr.mxu0 0.0
    %6958 = vmatpush1.msra.mxu0 0.0
    %6959 = vmatprep.subr.mxu0 0.0
    %6960 = vmatpush1.msra.mxu0 0.0
    %6961 = vmatprep.subr.mxu0 0.0
    %6962 = vmatpush1.msra.mxu0 %v6925
    %6963 = vmatprep.subr.mxu0 0.0
    %6964 = vmatpush1.msra.mxu0 %v6924
    %6965 = vmatprep.subr.mxu0 0.0
    %6966 = vmatpush1.msra.mxu0 %v6923
    %6967 = vmatprep.subr.mxu0 0.0
    %6968 = vmatpush1.msra.mxu0 %v6922
    %6969 = vmatprep.subr.mxu0 0.0
    %6970 = vmatpush2.msra.mxu0 0.0
    %6971 = vmatprep.subr.mxu0 0.0
    %6972 = vmatpush2.msra.mxu0 0.0
    %6973 = vmatprep.subr.mxu0 0.0
    %6974 = vmatpush2.msra.mxu0 0.0
    %6975 = vmatprep.subr.mxu0 0.0
    %6976 = vmatpush2.msra.mxu0 0.0
    %6977 = vmatprep.subr.mxu0 0.0
    %6978 = vmatpush2.msra.mxu0 0.0
    %6979 = vmatprep.subr.mxu0 0.0
    %6980 = vmatpush2.msra.mxu0 0.0
    %6981 = vmatprep.subr.mxu0 0.0
    %6982 = vmatpush2.msra.mxu0 0.0
    %6983 = vmatprep.subr.mxu0 0.0
    %6984 = vmatpush2.msra.mxu0 0.0
    %6985 = vmatprep.subr.mxu0 0.0
    %6986 = vmatpush2.msra.mxu0 0.0
    %6987 = vmatprep.subr.mxu0 0.0
    %6988 = vmatpush2.msra.mxu0 0.0
    %6989 = vmatprep.subr.mxu0 0.0
    %6990 = vmatpush2.msra.mxu0 0.0
    %6991 = vmatprep.subr.mxu0 0.0
    %6992 = vmatpush2.msra.mxu0 0.0
    %6993 = vmatprep.subr.mxu0 0.0
    %6994 = vmatpush2.msra.mxu0 0.0
    %6995 = vmatprep.subr.mxu0 0.0
    %6996 = vmatpush2.msra.mxu0 0.0
    %6997 = vmatprep.subr.mxu0 0.0
    %6998 = vmatpush2.msra.mxu0 0.0
    %6999 = vmatprep.subr.mxu0 0.0
    %7000 = vmatpush2.msra.mxu0 0.0
    %7001 = vmatprep.mubr.f32.mxu0 0.0
    %7002 = vmatmul.mubr.f32.gmra.mxu0 %v6932
    %v7003 = vpop.f32.mrf.mxu0
    %v7004 = vadd.f32 %v6930, %v7003
    %v7005 = vpop.f32.mrf.mxu0
    %7006 = vmatprep.mubr.f32.mxu0 0.0
    %7007 = vmatmul.mubr.f32.gmra.mxu0 %v6935
    %v7008 = vpop.f32.mrf.mxu0
    %v7009 = vadd.f32 %v6930, %v7008
    %v7010 = vpop.f32.mrf.mxu0
    %7011 = vdwg.mxu0
    %7012 = vmatprep.subr.mxu0 0.0
    %7013 = vmatpush1.msra.mxu0 0.0
    %7014 = vmatprep.subr.mxu0 0.0
    %7015 = vmatpush1.msra.mxu0 0.0
    %7016 = vmatprep.subr.mxu0 0.0
    %7017 = vmatpush1.msra.mxu0 0.0
    %7018 = vmatprep.subr.mxu0 0.0
    %7019 = vmatpush1.msra.mxu0 0.0
    %7020 = vmatprep.subr.mxu0 0.0
    %7021 = vmatpush1.msra.mxu0 0.0
    %7022 = vmatprep.subr.mxu0 0.0
    %7023 = vmatpush1.msra.mxu0 0.0
    %7024 = vmatprep.subr.mxu0 0.0
    %7025 = vmatpush1.msra.mxu0 0.0
    %7026 = vmatprep.subr.mxu0 0.0
    %7027 = vmatpush1.msra.mxu0 0.0
    %7028 = vmatprep.subr.mxu0 0.0
    %7029 = vmatpush1.msra.mxu0 0.0
    %7030 = vmatprep.subr.mxu0 0.0
    %7031 = vmatpush1.msra.mxu0 0.0
    %7032 = vmatprep.subr.mxu0 0.0
    %7033 = vmatpush1.msra.mxu0 0.0
    %7034 = vmatprep.subr.mxu0 0.0
    %7035 = vmatpush1.msra.mxu0 0.0
    %7036 = vmatprep.subr.mxu0 0.0
    %7037 = vmatpush1.msra.mxu0 %v6925
    %7038 = vmatprep.subr.mxu0 0.0
    %7039 = vmatpush1.msra.mxu0 %v6924
    %7040 = vmatprep.subr.mxu0 0.0
    %7041 = vmatpush1.msra.mxu0 %v6923
    %7042 = vmatprep.subr.mxu0 0.0
    %7043 = vmatpush1.msra.mxu0 %v6922
    %7044 = vmatprep.subr.mxu0 0.0
    %7045 = vmatpush2.msra.mxu0 0.0
    %7046 = vmatprep.subr.mxu0 0.0
    %7047 = vmatpush2.msra.mxu0 0.0
    %7048 = vmatprep.subr.mxu0 0.0
    %7049 = vmatpush2.msra.mxu0 0.0
    %7050 = vmatprep.subr.mxu0 0.0
    %7051 = vmatpush2.msra.mxu0 0.0
    %7052 = vmatprep.subr.mxu0 0.0
    %7053 = vmatpush2.msra.mxu0 0.0
    %7054 = vmatprep.subr.mxu0 0.0
    %7055 = vmatpush2.msra.mxu0 0.0
    %7056 = vmatprep.subr.mxu0 0.0
    %7057 = vmatpush2.msra.mxu0 0.0
    %7058 = vmatprep.subr.mxu0 0.0
    %7059 = vmatpush2.msra.mxu0 0.0
    %7060 = vmatprep.subr.mxu0 0.0
    %7061 = vmatpush2.msra.mxu0 0.0
    %7062 = vmatprep.subr.mxu0 0.0
    %7063 = vmatpush2.msra.mxu0 0.0
    %7064 = vmatprep.subr.mxu0 0.0
    %7065 = vmatpush2.msra.mxu0 0.0
    %7066 = vmatprep.subr.mxu0 0.0
    %7067 = vmatpush2.msra.mxu0 0.0
    %7068 = vmatprep.subr.mxu0 0.0
    %7069 = vmatpush2.msra.mxu0 0.0
    %7070 = vmatprep.subr.mxu0 0.0
    %7071 = vmatpush2.msra.mxu0 0.0
    %7072 = vmatprep.subr.mxu0 0.0
    %7073 = vmatpush2.msra.mxu0 0.0
    %7074 = vmatprep.subr.mxu0 0.0
    %7075 = vmatpush2.msra.mxu0 0.0
    %7076 = vmatprep.mubr.f32.mxu0 0.0
    %7077 = vmatmul.mubr.f32.gmra.mxu0 %v3807
    %v7078 = vpop.f32.mrf.mxu0
    %v7079 = vadd.f32 %v6930, %v7078
    %v7080 = vpop.f32.mrf.mxu0
    %7081 = vmatprep.mubr.f32.mxu0 0.0
    %7082 = vmatmul.mubr.f32.gmra.mxu0 %v3810
    %v7083 = vpop.f32.mrf.mxu0
    %v7084 = vadd.f32 %v6930, %v7083
    %v7085 = vpop.f32.mrf.mxu0
    %7086 = vdwg.mxu0
    %7089 = vrot.lane.b32.xlu0 %v7079, 118
    %v7090 = vpop.permute.xlu0 %7089
    %7091 = vrot.lane.b32.xlu0 %v7084, 118
    %v7092 = vpop.permute.xlu0 %7091
    %v7094 = vsel %vm531, %v7004, 0
    %v7097 = vsel %vm531, %v7009, 0
    %v7099 = vsel %vm531, %v7090, 0
    %v7101 = vsel %vm531, %v7092, 0
    %7103 = vmatprep.subr.mxu0 0.0
    %7104 = vmatpush1.xpose.msra.mxu0 0.0
    %7105 = vmatprep.subr.mxu0 0.0
    %7106 = vmatpush1.xpose.msra.mxu0 0.0
    %7107 = vmatprep.subr.mxu0 0.0
    %7108 = vmatpush1.xpose.msra.mxu0 0.0
    %7109 = vmatprep.subr.mxu0 0.0
    %7110 = vmatpush1.xpose.msra.mxu0 0.0
    %7111 = vmatprep.subr.mxu0 0.0
    %7112 = vmatpush1.xpose.msra.mxu0 0.0
    %7113 = vmatprep.subr.mxu0 0.0
    %7114 = vmatpush1.xpose.msra.mxu0 0.0
    %7115 = vmatprep.subr.mxu0 0.0
    %7116 = vmatpush1.xpose.msra.mxu0 0.0
    %7117 = vmatprep.subr.mxu0 0.0
    %7118 = vmatpush1.xpose.msra.mxu0 0.0
    %7119 = vmatprep.subr.mxu0 0.0
    %7120 = vmatpush1.xpose.msra.mxu0 0.0
    %7121 = vmatprep.subr.mxu0 0.0
    %7122 = vmatpush1.xpose.msra.mxu0 0.0
    %7123 = vmatprep.subr.mxu0 0.0
    %7124 = vmatpush1.xpose.msra.mxu0 0.0
    %7125 = vmatprep.subr.mxu0 0.0
    %7126 = vmatpush1.xpose.msra.mxu0 0.0
    %7127 = vmatprep.subr.mxu0 0.0
    %7128 = vmatpush1.xpose.msra.mxu0 0.0
    %7129 = vmatprep.subr.mxu0 0.0
    %7130 = vmatpush1.xpose.msra.mxu0 0.0
    %7131 = vmatprep.subr.mxu0 0.0
    %7132 = vmatpush1.xpose.msra.mxu0 %v7101
    %7133 = vmatprep.subr.mxu0 0.0
    %7134 = vmatpush1.xpose.msra.mxu0 %v7099
    %7135 = vmatprep.subr.mxu0 0.0
    %7136 = vmatpush2.xpose.msra.mxu0 0.0
    %7137 = vmatprep.subr.mxu0 0.0
    %7138 = vmatpush2.xpose.msra.mxu0 0.0
    %7139 = vmatprep.subr.mxu0 0.0
    %7140 = vmatpush2.xpose.msra.mxu0 0.0
    %7141 = vmatprep.subr.mxu0 0.0
    %7142 = vmatpush2.xpose.msra.mxu0 0.0
    %7143 = vmatprep.subr.mxu0 0.0
    %7144 = vmatpush2.xpose.msra.mxu0 0.0
    %7145 = vmatprep.subr.mxu0 0.0
    %7146 = vmatpush2.xpose.msra.mxu0 0.0
    %7147 = vmatprep.subr.mxu0 0.0
    %7148 = vmatpush2.xpose.msra.mxu0 0.0
    %7149 = vmatprep.subr.mxu0 0.0
    %7150 = vmatpush2.xpose.msra.mxu0 0.0
    %7151 = vmatprep.subr.mxu0 0.0
    %7152 = vmatpush2.xpose.msra.mxu0 0.0
    %7153 = vmatprep.subr.mxu0 0.0
    %7154 = vmatpush2.xpose.msra.mxu0 0.0
    %7155 = vmatprep.subr.mxu0 0.0
    %7156 = vmatpush2.xpose.msra.mxu0 0.0
    %7157 = vmatprep.subr.mxu0 0.0
    %7158 = vmatpush2.xpose.msra.mxu0 0.0
    %7159 = vmatprep.subr.mxu0 0.0
    %7160 = vmatpush2.xpose.msra.mxu0 0.0
    %7161 = vmatprep.subr.mxu0 0.0
    %7162 = vmatpush2.xpose.msra.mxu0 0.0
    %7163 = vmatprep.subr.mxu0 0.0
    %7164 = vmatpush2.xpose.msra.mxu0 0.0
    %7165 = vmatprep.subr.mxu0 0.0
    %7166 = vmatpush2.xpose.msra.mxu0 0.0
    %7167 = vmatprep.mubr.f32.mxu0 0.0
    %7168 = vmatmul.mubr.f32.gmra.mxu0 %v7094
    %v7169 = vpop.f32.mrf.mxu0
    %v7170 = vadd.f32 0.0, %v7169
    %v7171 = vpop.f32.mrf.mxu0
    %7172 = vmatprep.mubr.f32.mxu0 0.0
    %7173 = vmatmul.mubr.f32.gmra.mxu0 %v7097
    %v7174 = vpop.f32.mrf.mxu0
    %v7175 = vadd.f32 0.0, %v7174
    %v7176 = vpop.f32.mrf.mxu0
    %7177 = vdwg.mxu0
    %v7178 = vmul.f32 %v7170, 0.4472136
    %v7179 = vmul.f32 %v7175, 0.4472136
    %v7180 = vadd.f32 %v7178, %v523
    %v7181 = vadd.f32 %v7179, %v524
    %v7182 = vsel %vm619, %v7180, -inf
    %7183 = vmax.xlane.f32.xlu0 %v7182
    %v7184 = vpop.xlane.xlu0 %7183
    %v7185 = vsel %vm619, %v7181, -inf
    %7186 = vmax.xlane.f32.xlu0 %v7185
    %v7187 = vpop.xlane.xlu0 %7186
    %v7188 = vsub.f32 %v7180, %v7184
    %v7189 = vsub.f32 %v7181, %v7187
    %v7190 = vmul.f32 %v7188, 1.442695
    %v7191 = vpow.pop %v7190
    %v7192 = vmul.f32 %v7189, 1.442695
    %v7193 = vpow.pop %v7192
    %v7194 = vsel %vm619, %v7191, 0.0
    %7195 = vadd.xlane.f32.xlu0 %v7194
    %v7196 = vpop.xlane.xlu0 %7195
    %v7197 = vsel %vm619, %v7193, 0.0
    %7198 = vadd.xlane.f32.xlu0 %v7197
    %v7199 = vpop.xlane.xlu0 %7198
    %v7200 = vrcp.pop %v7196
    %v7201 = vmul.f32 %v7191, %v7200
    %v7202 = vrcp.pop %v7199
    %v7203 = vmul.f32 %v7193, %v7202
    %7204 = vrot.lane.b32.xlu0 %v7079, 108
    %v7205 = vpop.permute.xlu0 %7204
    %7206 = vrot.lane.b32.xlu0 %v7084, 108
    %v7207 = vpop.permute.xlu0 %7206
    %v7211 = vsel %vm619, %v7201, 0
    %v7214 = vsel %vm619, %v7203, 0
    %7216 = vmatprep.subr.mxu0 0.0
    %7217 = vmatpush1.msra.mxu0 0.0
    %7218 = vmatprep.subr.mxu0 0.0
    %7219 = vmatpush1.msra.mxu0 0.0
    %7220 = vmatprep.subr.mxu0 0.0
    %7221 = vmatpush1.msra.mxu0 0.0
    %7222 = vmatprep.subr.mxu0 0.0
    %7223 = vmatpush1.msra.mxu0 0.0
    %7224 = vmatprep.subr.mxu0 0.0
    %7225 = vmatpush1.msra.mxu0 0.0
    %7226 = vmatprep.subr.mxu0 0.0
    %7227 = vmatpush1.msra.mxu0 0.0
    %7228 = vmatprep.subr.mxu0 0.0
    %7229 = vmatpush1.msra.mxu0 0.0
    %7230 = vmatprep.subr.mxu0 0.0
    %7231 = vmatpush1.msra.mxu0 0.0
    %7232 = vmatprep.subr.mxu0 0.0
    %7233 = vmatpush1.msra.mxu0 0.0
    %7234 = vmatprep.subr.mxu0 0.0
    %7235 = vmatpush1.msra.mxu0 0.0
    %7236 = vmatprep.subr.mxu0 0.0
    %7237 = vmatpush1.msra.mxu0 0.0
    %7238 = vmatprep.subr.mxu0 0.0
    %7239 = vmatpush1.msra.mxu0 0.0
    %7240 = vmatprep.subr.mxu0 0.0
    %7241 = vmatpush1.msra.mxu0 0.0
    %7242 = vmatprep.subr.mxu0 0.0
    %7243 = vmatpush1.msra.mxu0 0.0
    %7244 = vmatprep.subr.mxu0 0.0
    %7245 = vmatpush1.msra.mxu0 %v7207
    %7246 = vmatprep.subr.mxu0 0.0
    %7247 = vmatpush1.msra.mxu0 %v7205
    %7248 = vmatprep.subr.mxu0 0.0
    %7249 = vmatpush2.msra.mxu0 0.0
    %7250 = vmatprep.subr.mxu0 0.0
    %7251 = vmatpush2.msra.mxu0 0.0
    %7252 = vmatprep.subr.mxu0 0.0
    %7253 = vmatpush2.msra.mxu0 0.0
    %7254 = vmatprep.subr.mxu0 0.0
    %7255 = vmatpush2.msra.mxu0 0.0
    %7256 = vmatprep.subr.mxu0 0.0
    %7257 = vmatpush2.msra.mxu0 0.0
    %7258 = vmatprep.subr.mxu0 0.0
    %7259 = vmatpush2.msra.mxu0 0.0
    %7260 = vmatprep.subr.mxu0 0.0
    %7261 = vmatpush2.msra.mxu0 0.0
    %7262 = vmatprep.subr.mxu0 0.0
    %7263 = vmatpush2.msra.mxu0 0.0
    %7264 = vmatprep.subr.mxu0 0.0
    %7265 = vmatpush2.msra.mxu0 0.0
    %7266 = vmatprep.subr.mxu0 0.0
    %7267 = vmatpush2.msra.mxu0 0.0
    %7268 = vmatprep.subr.mxu0 0.0
    %7269 = vmatpush2.msra.mxu0 0.0
    %7270 = vmatprep.subr.mxu0 0.0
    %7271 = vmatpush2.msra.mxu0 0.0
    %7272 = vmatprep.subr.mxu0 0.0
    %7273 = vmatpush2.msra.mxu0 0.0
    %7274 = vmatprep.subr.mxu0 0.0
    %7275 = vmatpush2.msra.mxu0 0.0
    %7276 = vmatprep.subr.mxu0 0.0
    %7277 = vmatpush2.msra.mxu0 0.0
    %7278 = vmatprep.subr.mxu0 0.0
    %7279 = vmatpush2.msra.mxu0 0.0
    %7280 = vmatprep.mubr.f32.mxu0 0.0
    %7281 = vmatmul.mubr.f32.gmra.mxu0 %v7211
    %v7282 = vpop.f32.mrf.mxu0
    %v7283 = vadd.f32 0.0, %v7282
    %v7284 = vpop.f32.mrf.mxu0
    %7285 = vmatprep.mubr.f32.mxu0 0.0
    %7286 = vmatmul.mubr.f32.gmra.mxu0 %v7214
    %v7287 = vpop.f32.mrf.mxu0
    %v7288 = vadd.f32 0.0, %v7287
    %v7289 = vpop.f32.mrf.mxu0
    %7290 = vdwg.mxu0
    %7291 = vrot.lane.b32.xlu0 %v7004, 123
    %v7292 = vpop.permute.xlu0 %7291
    %7293 = vrot.lane.b32.xlu0 %v7009, 123
    %v7294 = vpop.permute.xlu0 %7293
    %7295 = vrot.lane.b32.xlu0 %v7079, 113
    %v7296 = vpop.permute.xlu0 %7295
    %7297 = vrot.lane.b32.xlu0 %v7084, 113
    %v7298 = vpop.permute.xlu0 %7297
    %v7299 = vsel %vm531, %v7292, 0
    %v7301 = vsel %vm531, %v7294, 0
    %v7303 = vsel %vm531, %v7296, 0
    %v7305 = vsel %vm531, %v7298, 0
    %7307 = vmatprep.subr.mxu0 0.0
    %7308 = vmatpush1.xpose.msra.mxu0 0.0
    %7309 = vmatprep.subr.mxu0 0.0
    %7310 = vmatpush1.xpose.msra.mxu0 0.0
    %7311 = vmatprep.subr.mxu0 0.0
    %7312 = vmatpush1.xpose.msra.mxu0 0.0
    %7313 = vmatprep.subr.mxu0 0.0
    %7314 = vmatpush1.xpose.msra.mxu0 0.0
    %7315 = vmatprep.subr.mxu0 0.0
    %7316 = vmatpush1.xpose.msra.mxu0 0.0
    %7317 = vmatprep.subr.mxu0 0.0
    %7318 = vmatpush1.xpose.msra.mxu0 0.0
    %7319 = vmatprep.subr.mxu0 0.0
    %7320 = vmatpush1.xpose.msra.mxu0 0.0
    %7321 = vmatprep.subr.mxu0 0.0
    %7322 = vmatpush1.xpose.msra.mxu0 0.0
    %7323 = vmatprep.subr.mxu0 0.0
    %7324 = vmatpush1.xpose.msra.mxu0 0.0
    %7325 = vmatprep.subr.mxu0 0.0
    %7326 = vmatpush1.xpose.msra.mxu0 0.0
    %7327 = vmatprep.subr.mxu0 0.0
    %7328 = vmatpush1.xpose.msra.mxu0 0.0
    %7329 = vmatprep.subr.mxu0 0.0
    %7330 = vmatpush1.xpose.msra.mxu0 0.0
    %7331 = vmatprep.subr.mxu0 0.0
    %7332 = vmatpush1.xpose.msra.mxu0 0.0
    %7333 = vmatprep.subr.mxu0 0.0
    %7334 = vmatpush1.xpose.msra.mxu0 0.0
    %7335 = vmatprep.subr.mxu0 0.0
    %7336 = vmatpush1.xpose.msra.mxu0 %v7305
    %7337 = vmatprep.subr.mxu0 0.0
    %7338 = vmatpush1.xpose.msra.mxu0 %v7303
    %7339 = vmatprep.subr.mxu0 0.0
    %7340 = vmatpush2.xpose.msra.mxu0 0.0
    %7341 = vmatprep.subr.mxu0 0.0
    %7342 = vmatpush2.xpose.msra.mxu0 0.0
    %7343 = vmatprep.subr.mxu0 0.0
    %7344 = vmatpush2.xpose.msra.mxu0 0.0
    %7345 = vmatprep.subr.mxu0 0.0
    %7346 = vmatpush2.xpose.msra.mxu0 0.0
    %7347 = vmatprep.subr.mxu0 0.0
    %7348 = vmatpush2.xpose.msra.mxu0 0.0
    %7349 = vmatprep.subr.mxu0 0.0
    %7350 = vmatpush2.xpose.msra.mxu0 0.0
    %7351 = vmatprep.subr.mxu0 0.0
    %7352 = vmatpush2.xpose.msra.mxu0 0.0
    %7353 = vmatprep.subr.mxu0 0.0
    %7354 = vmatpush2.xpose.msra.mxu0 0.0
    %7355 = vmatprep.subr.mxu0 0.0
    %7356 = vmatpush2.xpose.msra.mxu0 0.0
    %7357 = vmatprep.subr.mxu0 0.0
    %7358 = vmatpush2.xpose.msra.mxu0 0.0
    %7359 = vmatprep.subr.mxu0 0.0
    %7360 = vmatpush2.xpose.msra.mxu0 0.0
    %7361 = vmatprep.subr.mxu0 0.0
    %7362 = vmatpush2.xpose.msra.mxu0 0.0
    %7363 = vmatprep.subr.mxu0 0.0
    %7364 = vmatpush2.xpose.msra.mxu0 0.0
    %7365 = vmatprep.subr.mxu0 0.0
    %7366 = vmatpush2.xpose.msra.mxu0 0.0
    %7367 = vmatprep.subr.mxu0 0.0
    %7368 = vmatpush2.xpose.msra.mxu0 0.0
    %7369 = vmatprep.subr.mxu0 0.0
    %7370 = vmatpush2.xpose.msra.mxu0 0.0
    %7371 = vmatprep.mubr.f32.mxu0 0.0
    %7372 = vmatmul.mubr.f32.gmra.mxu0 %v7299
    %v7373 = vpop.f32.mrf.mxu0
    %v7374 = vadd.f32 0.0, %v7373
    %v7375 = vpop.f32.mrf.mxu0
    %7376 = vmatprep.mubr.f32.mxu0 0.0
    %7377 = vmatmul.mubr.f32.gmra.mxu0 %v7301
    %v7378 = vpop.f32.mrf.mxu0
    %v7379 = vadd.f32 0.0, %v7378
    %v7380 = vpop.f32.mrf.mxu0
    %7381 = vdwg.mxu0
    %v7382 = vmul.f32 %v7374, 0.4472136
    %v7383 = vmul.f32 %v7379, 0.4472136
    %v7384 = vadd.f32 %v7382, %v523
    %v7385 = vadd.f32 %v7383, %v524
    %v7386 = vsel %vm619, %v7384, -inf
    %7387 = vmax.xlane.f32.xlu0 %v7386
    %v7388 = vpop.xlane.xlu0 %7387
    %v7389 = vsel %vm619, %v7385, -inf
    %7390 = vmax.xlane.f32.xlu0 %v7389
    %v7391 = vpop.xlane.xlu0 %7390
    %v7392 = vsub.f32 %v7384, %v7388
    %v7393 = vsub.f32 %v7385, %v7391
    %v7394 = vmul.f32 %v7392, 1.442695
    %v7395 = vpow.pop %v7394
    %v7396 = vmul.f32 %v7393, 1.442695
    %v7397 = vpow.pop %v7396
    %v7398 = vsel %vm619, %v7395, 0.0
    %7399 = vadd.xlane.f32.xlu0 %v7398
    %v7400 = vpop.xlane.xlu0 %7399
    %v7401 = vsel %vm619, %v7397, 0.0
    %7402 = vadd.xlane.f32.xlu0 %v7401
    %v7403 = vpop.xlane.xlu0 %7402
    %v7404 = vrcp.pop %v7400
    %v7405 = vmul.f32 %v7395, %v7404
    %v7406 = vrcp.pop %v7403
    %v7407 = vmul.f32 %v7397, %v7406
    %7408 = vrot.lane.b32.xlu0 %v7079, 103
    %v7409 = vpop.permute.xlu0 %7408
    %7410 = vrot.lane.b32.xlu0 %v7084, 103
    %v7411 = vpop.permute.xlu0 %7410
    %v7415 = vsel %vm619, %v7405, 0
    %v7418 = vsel %vm619, %v7407, 0
    %7420 = vmatprep.subr.mxu0 0.0
    %7421 = vmatpush1.msra.mxu0 0.0
    %7422 = vmatprep.subr.mxu0 0.0
    %7423 = vmatpush1.msra.mxu0 0.0
    %7424 = vmatprep.subr.mxu0 0.0
    %7425 = vmatpush1.msra.mxu0 0.0
    %7426 = vmatprep.subr.mxu0 0.0
    %7427 = vmatpush1.msra.mxu0 0.0
    %7428 = vmatprep.subr.mxu0 0.0
    %7429 = vmatpush1.msra.mxu0 0.0
    %7430 = vmatprep.subr.mxu0 0.0
    %7431 = vmatpush1.msra.mxu0 0.0
    %7432 = vmatprep.subr.mxu0 0.0
    %7433 = vmatpush1.msra.mxu0 0.0
    %7434 = vmatprep.subr.mxu0 0.0
    %7435 = vmatpush1.msra.mxu0 0.0
    %7436 = vmatprep.subr.mxu0 0.0
    %7437 = vmatpush1.msra.mxu0 0.0
    %7438 = vmatprep.subr.mxu0 0.0
    %7439 = vmatpush1.msra.mxu0 0.0
    %7440 = vmatprep.subr.mxu0 0.0
    %7441 = vmatpush1.msra.mxu0 0.0
    %7442 = vmatprep.subr.mxu0 0.0
    %7443 = vmatpush1.msra.mxu0 0.0
    %7444 = vmatprep.subr.mxu0 0.0
    %7445 = vmatpush1.msra.mxu0 0.0
    %7446 = vmatprep.subr.mxu0 0.0
    %7447 = vmatpush1.msra.mxu0 0.0
    %7448 = vmatprep.subr.mxu0 0.0
    %7449 = vmatpush1.msra.mxu0 %v7411
    %7450 = vmatprep.subr.mxu0 0.0
    %7451 = vmatpush1.msra.mxu0 %v7409
    %7452 = vmatprep.subr.mxu0 0.0
    %7453 = vmatpush2.msra.mxu0 0.0
    %7454 = vmatprep.subr.mxu0 0.0
    %7455 = vmatpush2.msra.mxu0 0.0
    %7456 = vmatprep.subr.mxu0 0.0
    %7457 = vmatpush2.msra.mxu0 0.0
    %7458 = vmatprep.subr.mxu0 0.0
    %7459 = vmatpush2.msra.mxu0 0.0
    %7460 = vmatprep.subr.mxu0 0.0
    %7461 = vmatpush2.msra.mxu0 0.0
    %7462 = vmatprep.subr.mxu0 0.0
    %7463 = vmatpush2.msra.mxu0 0.0
    %7464 = vmatprep.subr.mxu0 0.0
    %7465 = vmatpush2.msra.mxu0 0.0
    %7466 = vmatprep.subr.mxu0 0.0
    %7467 = vmatpush2.msra.mxu0 0.0
    %7468 = vmatprep.subr.mxu0 0.0
    %7469 = vmatpush2.msra.mxu0 0.0
    %7470 = vmatprep.subr.mxu0 0.0
    %7471 = vmatpush2.msra.mxu0 0.0
    %7472 = vmatprep.subr.mxu0 0.0
    %7473 = vmatpush2.msra.mxu0 0.0
    %7474 = vmatprep.subr.mxu0 0.0
    %7475 = vmatpush2.msra.mxu0 0.0
    %7476 = vmatprep.subr.mxu0 0.0
    %7477 = vmatpush2.msra.mxu0 0.0
    %7478 = vmatprep.subr.mxu0 0.0
    %7479 = vmatpush2.msra.mxu0 0.0
    %7480 = vmatprep.subr.mxu0 0.0
    %7481 = vmatpush2.msra.mxu0 0.0
    %7482 = vmatprep.subr.mxu0 0.0
    %7483 = vmatpush2.msra.mxu0 0.0
    %7484 = vmatprep.mubr.f32.mxu0 0.0
    %7485 = vmatmul.mubr.f32.gmra.mxu0 %v7415
    %v7486 = vpop.f32.mrf.mxu0
    %v7487 = vadd.f32 0.0, %v7486
    %v7488 = vpop.f32.mrf.mxu0
    %7489 = vmatprep.mubr.f32.mxu0 0.0
    %7490 = vmatmul.mubr.f32.gmra.mxu0 %v7418
    %v7491 = vpop.f32.mrf.mxu0
    %v7492 = vadd.f32 0.0, %v7491
    %v7493 = vpop.f32.mrf.mxu0
    %7494 = vdwg.mxu0
    %7497 = vrot.lane.b32.xlu0 %v7487, 5
    %v7498 = vpop.permute.xlu0 %7497
    %7499 = vrot.lane.b32.xlu0 %v7492, 5
    %v7500 = vpop.permute.xlu0 %7499
    %v7503 = vsel %vm531, %v7283, %v7498
    %v7504 = vsel %vm531, %v7288, %v7500
    %v7505 = vld [vmem:[#allocation2 + $0x6c8] sm:$0xff]
    %v7506 = vld [vmem:[#allocation2 + $0x6d0] sm:$0x3]
    %v7507 = vld [vmem:[#allocation2 + $0x6e8] sm:$0x1]
    %v7508 = vlaneseq
    %v7509 = vshrl.u32 %v7508, 7
    %v7510 = vsub.s32 0, %v7509
    %v7511 = vrot.slane %v7507, %v7510
    %v7513 = vsel %vm950, %v7503, 0
    %v7516 = vsel %vm950, %v7504, 0
    %v7519 = vsel %vm957, %v7506, 0
    %7521 = vmatprep.subr.mxu0 0.0
    %7522 = vmatpush1.msra.mxu0 0.0
    %7523 = vmatprep.subr.mxu0 0.0
    %7524 = vmatpush1.msra.mxu0 0.0
    %7525 = vmatprep.subr.mxu0 0.0
    %7526 = vmatpush1.msra.mxu0 0.0
    %7527 = vmatprep.subr.mxu0 0.0
    %7528 = vmatpush1.msra.mxu0 0.0
    %7529 = vmatprep.subr.mxu0 0.0
    %7530 = vmatpush1.msra.mxu0 0.0
    %7531 = vmatprep.subr.mxu0 0.0
    %7532 = vmatpush1.msra.mxu0 0.0
    %7533 = vmatprep.subr.mxu0 0.0
    %7534 = vmatpush1.msra.mxu0 0.0
    %7535 = vmatprep.subr.mxu0 0.0
    %7536 = vmatpush1.msra.mxu0 0.0
    %7537 = vmatprep.subr.mxu0 0.0
    %7538 = vmatpush1.msra.mxu0 0.0
    %7539 = vmatprep.subr.mxu0 0.0
    %7540 = vmatpush1.msra.mxu0 0.0
    %7541 = vmatprep.subr.mxu0 0.0
    %7542 = vmatpush1.msra.mxu0 0.0
    %7543 = vmatprep.subr.mxu0 0.0
    %7544 = vmatpush1.msra.mxu0 0.0
    %7545 = vmatprep.subr.mxu0 0.0
    %7546 = vmatpush1.msra.mxu0 0.0
    %7547 = vmatprep.subr.mxu0 0.0
    %7548 = vmatpush1.msra.mxu0 0.0
    %7549 = vmatprep.subr.mxu0 0.0
    %7550 = vmatpush1.msra.mxu0 %v7519
    %7551 = vmatprep.subr.mxu0 0.0
    %7552 = vmatpush1.msra.mxu0 %v7505
    %7553 = vmatprep.subr.mxu0 0.0
    %7554 = vmatpush2.msra.mxu0 0.0
    %7555 = vmatprep.subr.mxu0 0.0
    %7556 = vmatpush2.msra.mxu0 0.0
    %7557 = vmatprep.subr.mxu0 0.0
    %7558 = vmatpush2.msra.mxu0 0.0
    %7559 = vmatprep.subr.mxu0 0.0
    %7560 = vmatpush2.msra.mxu0 0.0
    %7561 = vmatprep.subr.mxu0 0.0
    %7562 = vmatpush2.msra.mxu0 0.0
    %7563 = vmatprep.subr.mxu0 0.0
    %7564 = vmatpush2.msra.mxu0 0.0
    %7565 = vmatprep.subr.mxu0 0.0
    %7566 = vmatpush2.msra.mxu0 0.0
    %7567 = vmatprep.subr.mxu0 0.0
    %7568 = vmatpush2.msra.mxu0 0.0
    %7569 = vmatprep.subr.mxu0 0.0
    %7570 = vmatpush2.msra.mxu0 0.0
    %7571 = vmatprep.subr.mxu0 0.0
    %7572 = vmatpush2.msra.mxu0 0.0
    %7573 = vmatprep.subr.mxu0 0.0
    %7574 = vmatpush2.msra.mxu0 0.0
    %7575 = vmatprep.subr.mxu0 0.0
    %7576 = vmatpush2.msra.mxu0 0.0
    %7577 = vmatprep.subr.mxu0 0.0
    %7578 = vmatpush2.msra.mxu0 0.0
    %7579 = vmatprep.subr.mxu0 0.0
    %7580 = vmatpush2.msra.mxu0 0.0
    %7581 = vmatprep.subr.mxu0 0.0
    %7582 = vmatpush2.msra.mxu0 0.0
    %7583 = vmatprep.subr.mxu0 0.0
    %7584 = vmatpush2.msra.mxu0 0.0
    %7585 = vmatprep.mubr.f32.mxu0 0.0
    %7586 = vmatmul.mubr.f32.gmra.mxu0 %v7513
    %v7587 = vpop.f32.mrf.mxu0
    %v7588 = vadd.f32 %v7511, %v7587
    %v7589 = vpop.f32.mrf.mxu0
    %7590 = vmatprep.mubr.f32.mxu0 0.0
    %7591 = vmatmul.mubr.f32.gmra.mxu0 %v7516
    %v7592 = vpop.f32.mrf.mxu0
    %v7593 = vadd.f32 %v7511, %v7592
    %v7594 = vpop.f32.mrf.mxu0
    %7595 = vdwg.mxu0
    %v7596 = vadd.f32 %v6920, %v7588
    %v7597 = vadd.f32 %v6921, %v7593
    %v7598 = vld [vmem:[#allocation2 + $0x748] sm:$0x1]
    %v7599 = vld [vmem:[#allocation2 + $0x749] sm:$0x1]
    %v7600 = vld [vmem:[#allocation2 + $0x74a] sm:$0x1]
    %v7601 = vsel %vm133, %v7596, 0.0
    %7602 = vadd.xlane.f32.xlu0 %v7601
    %v7603 = vpop.xlane.xlu0 %7602
    %v7604 = vsel %vm133, %v7597, 0.0
    %7605 = vadd.xlane.f32.xlu0 %v7604
    %v7606 = vpop.xlane.xlu0 %7605
    %v7607 = vmul.f32 %v7603, 0.1
    %v7608 = vmul.f32 %v7606, 0.1
    %v7609 = vsub.f32 %v7596, %v7607
    %v7610 = vsub.f32 %v7597, %v7608
    %v7611 = vlaneseq
    %v7612 = vshrl.u32 %v7611, 7
    %v7613 = vsub.s32 0, %v7612
    %v7614 = vrot.slane %v7600, %v7613
    %v7615 = vmul.f32 %v7609, %v7614
    %v7616 = vmul.f32 %v7610, %v7614
    %v7617 = vmul.f32 %v7615, %v7615
    %v7618 = vmul.f32 %v7616, %v7616
    %v7619 = vsel %vm133, %v7617, 0.0
    %7620 = vadd.xlane.f32.xlu0 %v7619
    %v7621 = vpop.xlane.xlu0 %7620
    %v7622 = vsel %vm133, %v7618, 0.0
    %7623 = vadd.xlane.f32.xlu0 %v7622
    %v7624 = vpop.xlane.xlu0 %7623
    %v7625 = vmul.f32 %v7621, 0.1
    %v7626 = vmul.f32 %v7624, 0.1
    %v7627 = vadd.f32 %v7625, 1e-05
    %v7628 = vadd.f32 %v7626, 1e-05
    %v7629 = vrsqrt.pop %v7627
    %v7630 = vrsqrt.pop %v7628
    %v7631 = vmul.f32 %v7615, %v7629
    %v7632 = vmul.f32 %v7616, %v7630
    %v7633 = vlaneseq
    %v7634 = vshrl.u32 %v7633, 7
    %v7635 = vsub.s32 0, %v7634
    %v7636 = vrot.slane %v7598, %v7635
    %v7637 = vmul.f32 %v7631, %v7636
    %v7638 = vmul.f32 %v7632, %v7636
    %v7639 = vlaneseq
    %v7640 = vshrl.u32 %v7639, 7
    %v7641 = vsub.s32 0, %v7640
    %v7642 = vrot.slane %v7599, %v7641
    %v7643 = vadd.f32 %v7637, %v7642
    %v7644 = vadd.f32 %v7638, %v7642
    %v7645 = vld [vmem:[#allocation2 + $0x6f0] sm:$0xff]
    %v7646 = vld [vmem:[#allocation2 + $0x6f8] sm:$0xff]
    %v7647 = vld [vmem:[#allocation2 + $0x700] sm:$0xff]
    %v7648 = vld [vmem:[#allocation2 + $0x708] sm:$0xff]
    %v7649 = vld [vmem:[#allocation2 + $0x710] sm:$0x1]
    %v7650 = vlaneseq
    %v7651 = vshrl.u32 %v7650, 7
    %v7652 = vsub.s32 0, %v7651
    %v7653 = vrot.slane %v7649, %v7652
    %v7655 = vsel %vm133, %v7643, 0
    %v7658 = vsel %vm133, %v7644, 0
    %7660 = vmatprep.subr.mxu0 0.0
    %7661 = vmatpush1.msra.mxu0 0.0
    %7662 = vmatprep.subr.mxu0 0.0
    %7663 = vmatpush1.msra.mxu0 0.0
    %7664 = vmatprep.subr.mxu0 0.0
    %7665 = vmatpush1.msra.mxu0 0.0
    %7666 = vmatprep.subr.mxu0 0.0
    %7667 = vmatpush1.msra.mxu0 0.0
    %7668 = vmatprep.subr.mxu0 0.0
    %7669 = vmatpush1.msra.mxu0 0.0
    %7670 = vmatprep.subr.mxu0 0.0
    %7671 = vmatpush1.msra.mxu0 0.0
    %7672 = vmatprep.subr.mxu0 0.0
    %7673 = vmatpush1.msra.mxu0 0.0
    %7674 = vmatprep.subr.mxu0 0.0
    %7675 = vmatpush1.msra.mxu0 0.0
    %7676 = vmatprep.subr.mxu0 0.0
    %7677 = vmatpush1.msra.mxu0 0.0
    %7678 = vmatprep.subr.mxu0 0.0
    %7679 = vmatpush1.msra.mxu0 0.0
    %7680 = vmatprep.subr.mxu0 0.0
    %7681 = vmatpush1.msra.mxu0 0.0
    %7682 = vmatprep.subr.mxu0 0.0
    %7683 = vmatpush1.msra.mxu0 0.0
    %7684 = vmatprep.subr.mxu0 0.0
    %7685 = vmatpush1.msra.mxu0 %v7648
    %7686 = vmatprep.subr.mxu0 0.0
    %7687 = vmatpush1.msra.mxu0 %v7647
    %7688 = vmatprep.subr.mxu0 0.0
    %7689 = vmatpush1.msra.mxu0 %v7646
    %7690 = vmatprep.subr.mxu0 0.0
    %7691 = vmatpush1.msra.mxu0 %v7645
    %7692 = vmatprep.subr.mxu0 0.0
    %7693 = vmatpush2.msra.mxu0 0.0
    %7694 = vmatprep.subr.mxu0 0.0
    %7695 = vmatpush2.msra.mxu0 0.0
    %7696 = vmatprep.subr.mxu0 0.0
    %7697 = vmatpush2.msra.mxu0 0.0
    %7698 = vmatprep.subr.mxu0 0.0
    %7699 = vmatpush2.msra.mxu0 0.0
    %7700 = vmatprep.subr.mxu0 0.0
    %7701 = vmatpush2.msra.mxu0 0.0
    %7702 = vmatprep.subr.mxu0 0.0
    %7703 = vmatpush2.msra.mxu0 0.0
    %7704 = vmatprep.subr.mxu0 0.0
    %7705 = vmatpush2.msra.mxu0 0.0
    %7706 = vmatprep.subr.mxu0 0.0
    %7707 = vmatpush2.msra.mxu0 0.0
    %7708 = vmatprep.subr.mxu0 0.0
    %7709 = vmatpush2.msra.mxu0 0.0
    %7710 = vmatprep.subr.mxu0 0.0
    %7711 = vmatpush2.msra.mxu0 0.0
    %7712 = vmatprep.subr.mxu0 0.0
    %7713 = vmatpush2.msra.mxu0 0.0
    %7714 = vmatprep.subr.mxu0 0.0
    %7715 = vmatpush2.msra.mxu0 0.0
    %7716 = vmatprep.subr.mxu0 0.0
    %7717 = vmatpush2.msra.mxu0 0.0
    %7718 = vmatprep.subr.mxu0 0.0
    %7719 = vmatpush2.msra.mxu0 0.0
    %7720 = vmatprep.subr.mxu0 0.0
    %7721 = vmatpush2.msra.mxu0 0.0
    %7722 = vmatprep.subr.mxu0 0.0
    %7723 = vmatpush2.msra.mxu0 0.0
    %7724 = vmatprep.mubr.f32.mxu0 0.0
    %7725 = vmatmul.mubr.f32.gmra.mxu0 %v7655
    %v7726 = vpop.f32.mrf.mxu0
    %v7727 = vadd.f32 %v7653, %v7726
    %v7728 = vpop.f32.mrf.mxu0
    %7729 = vmatprep.mubr.f32.mxu0 0.0
    %7730 = vmatmul.mubr.f32.gmra.mxu0 %v7658
    %v7731 = vpop.f32.mrf.mxu0
    %v7732 = vadd.f32 %v7653, %v7731
    %v7733 = vpop.f32.mrf.mxu0
    %7734 = vdwg.mxu0
    %v7735 = vmax.f32 %v7727, 0.0
    %v7736 = vmax.f32 %v7732, 0.0
    %v7737 = vld [vmem:[#allocation2 + $0x718] sm:$0xff]
    %v7738 = vld [vmem:[#allocation2 + $0x720] sm:$0xff]
    %v7739 = vld [vmem:[#allocation2 + $0x728] sm:$0xff]
    %v7740 = vld [vmem:[#allocation2 + $0x730] sm:$0xff]
    %v7741 = vld [vmem:[#allocation2 + $0x738] sm:$0x1]
    %v7742 = vlaneseq
    %v7743 = vshrl.u32 %v7742, 7
    %v7744 = vsub.s32 0, %v7743
    %v7745 = vrot.slane %v7741, %v7744
    %v7747 = vsel %vm133, %v7735, 0
    %v7750 = vsel %vm133, %v7736, 0
    %7752 = vmatprep.subr.mxu0 0.0
    %7753 = vmatpush1.msra.mxu0 0.0
    %7754 = vmatprep.subr.mxu0 0.0
    %7755 = vmatpush1.msra.mxu0 0.0
    %7756 = vmatprep.subr.mxu0 0.0
    %7757 = vmatpush1.msra.mxu0 0.0
    %7758 = vmatprep.subr.mxu0 0.0
    %7759 = vmatpush1.msra.mxu0 0.0
    %7760 = vmatprep.subr.mxu0 0.0
    %7761 = vmatpush1.msra.mxu0 0.0
    %7762 = vmatprep.subr.mxu0 0.0
    %7763 = vmatpush1.msra.mxu0 0.0
    %7764 = vmatprep.subr.mxu0 0.0
    %7765 = vmatpush1.msra.mxu0 0.0
    %7766 = vmatprep.subr.mxu0 0.0
    %7767 = vmatpush1.msra.mxu0 0.0
    %7768 = vmatprep.subr.mxu0 0.0
    %7769 = vmatpush1.msra.mxu0 0.0
    %7770 = vmatprep.subr.mxu0 0.0
    %7771 = vmatpush1.msra.mxu0 0.0
    %7772 = vmatprep.subr.mxu0 0.0
    %7773 = vmatpush1.msra.mxu0 0.0
    %7774 = vmatprep.subr.mxu0 0.0
    %7775 = vmatpush1.msra.mxu0 0.0
    %7776 = vmatprep.subr.mxu0 0.0
    %7777 = vmatpush1.msra.mxu0 %v7740
    %7778 = vmatprep.subr.mxu0 0.0
    %7779 = vmatpush1.msra.mxu0 %v7739
    %7780 = vmatprep.subr.mxu0 0.0
    %7781 = vmatpush1.msra.mxu0 %v7738
    %7782 = vmatprep.subr.mxu0 0.0
    %7783 = vmatpush1.msra.mxu0 %v7737
    %7784 = vmatprep.subr.mxu0 0.0
    %7785 = vmatpush2.msra.mxu0 0.0
    %7786 = vmatprep.subr.mxu0 0.0
    %7787 = vmatpush2.msra.mxu0 0.0
    %7788 = vmatprep.subr.mxu0 0.0
    %7789 = vmatpush2.msra.mxu0 0.0
    %7790 = vmatprep.subr.mxu0 0.0
    %7791 = vmatpush2.msra.mxu0 0.0
    %7792 = vmatprep.subr.mxu0 0.0
    %7793 = vmatpush2.msra.mxu0 0.0
    %7794 = vmatprep.subr.mxu0 0.0
    %7795 = vmatpush2.msra.mxu0 0.0
    %7796 = vmatprep.subr.mxu0 0.0
    %7797 = vmatpush2.msra.mxu0 0.0
    %7798 = vmatprep.subr.mxu0 0.0
    %7799 = vmatpush2.msra.mxu0 0.0
    %7800 = vmatprep.subr.mxu0 0.0
    %7801 = vmatpush2.msra.mxu0 0.0
    %7802 = vmatprep.subr.mxu0 0.0
    %7803 = vmatpush2.msra.mxu0 0.0
    %7804 = vmatprep.subr.mxu0 0.0
    %7805 = vmatpush2.msra.mxu0 0.0
    %7806 = vmatprep.subr.mxu0 0.0
    %7807 = vmatpush2.msra.mxu0 0.0
    %7808 = vmatprep.subr.mxu0 0.0
    %7809 = vmatpush2.msra.mxu0 0.0
    %7810 = vmatprep.subr.mxu0 0.0
    %7811 = vmatpush2.msra.mxu0 0.0
    %7812 = vmatprep.subr.mxu0 0.0
    %7813 = vmatpush2.msra.mxu0 0.0
    %7814 = vmatprep.subr.mxu0 0.0
    %7815 = vmatpush2.msra.mxu0 0.0
    %7816 = vmatprep.mubr.f32.mxu0 0.0
    %7817 = vmatmul.mubr.f32.gmra.mxu0 %v7747
    %v7818 = vpop.f32.mrf.mxu0
    %v7819 = vadd.f32 %v7745, %v7818
    %v7820 = vpop.f32.mrf.mxu0
    %7821 = vmatprep.mubr.f32.mxu0 0.0
    %7822 = vmatmul.mubr.f32.gmra.mxu0 %v7750
    %v7823 = vpop.f32.mrf.mxu0
    %v7824 = vadd.f32 %v7745, %v7823
    %v7825 = vpop.f32.mrf.mxu0
    %7826 = vdwg.mxu0
    %v7827 = vadd.f32 %v7643, %v7819
    %v7828 = vadd.f32 %v7644, %v7824
    %v7829 = vld [vmem:[#allocation2 + $0x750] sm:$0x1]
    %v7830 = vld [vmem:[#allocation2 + $0x751] sm:$0x1]
    %v7831 = vld [vmem:[#allocation2 + $0x752] sm:$0x1]
    %v7832 = vsel %vm133, %v7827, 0.0
    %7833 = vadd.xlane.f32.xlu0 %v7832
    %v7834 = vpop.xlane.xlu0 %7833
    %v7835 = vsel %vm133, %v7828, 0.0
    %7836 = vadd.xlane.f32.xlu0 %v7835
    %v7837 = vpop.xlane.xlu0 %7836
    %v7838 = vmul.f32 %v7834, 0.1
    %v7839 = vmul.f32 %v7837, 0.1
    %v7840 = vsub.f32 %v7827, %v7838
    %v7841 = vsub.f32 %v7828, %v7839
    %v7842 = vlaneseq
    %v7843 = vshrl.u32 %v7842, 7
    %v7844 = vsub.s32 0, %v7843
    %v7845 = vrot.slane %v7831, %v7844
    %v7846 = vmul.f32 %v7840, %v7845
    %v7847 = vmul.f32 %v7841, %v7845
    %v7848 = vmul.f32 %v7846, %v7846
    %v7849 = vmul.f32 %v7847, %v7847
    %v7850 = vsel %vm133, %v7848, 0.0
    %7851 = vadd.xlane.f32.xlu0 %v7850
    %v7852 = vpop.xlane.xlu0 %7851
    %v7853 = vsel %vm133, %v7849, 0.0
    %7854 = vadd.xlane.f32.xlu0 %v7853
    %v7855 = vpop.xlane.xlu0 %7854
    %v7856 = vmul.f32 %v7852, 0.1
    %v7857 = vmul.f32 %v7855, 0.1
    %v7858 = vadd.f32 %v7856, 1e-05
    %v7859 = vadd.f32 %v7857, 1e-05
    %v7860 = vrsqrt.pop %v7858
    %v7861 = vrsqrt.pop %v7859
    %v7862 = vmul.f32 %v7846, %v7860
    %v7863 = vmul.f32 %v7847, %v7861
    %v7864 = vlaneseq
    %v7865 = vshrl.u32 %v7864, 7
    %v7866 = vsub.s32 0, %v7865
    %v7867 = vrot.slane %v7829, %v7866
    %v7868 = vmul.f32 %v7862, %v7867
    %v7869 = vmul.f32 %v7863, %v7867
    %v7870 = vlaneseq
    %v7871 = vshrl.u32 %v7870, 7
    %v7872 = vsub.s32 0, %v7871
    %v7873 = vrot.slane %v7830, %v7872
    %v7874 = vadd.f32 %v7868, %v7873
    %v7875 = vadd.f32 %v7869, %v7873
    %v7876 = vld [vmem:[#allocation2 + $0xa0] sm:$0xff]
    %v7877 = vld [vmem:[#allocation2 + $0xa8] sm:$0xff]
    %v7878 = vld [vmem:[#allocation2 + $0xb0] sm:$0xff]
    %v7879 = vld [vmem:[#allocation2 + $0xb8] sm:$0xff]
    %v7880 = vld [vmem:[#allocation2 + $0xc0] sm:$0x1]
    %v7881 = vlaneseq
    %v7882 = vshrl.u32 %v7881, 7
    %v7883 = vsub.s32 0, %v7882
    %v7884 = vrot.slane %v7880, %v7883
    %v7886 = vsel %vm133, %v7874, 0
    %v7889 = vsel %vm133, %v7875, 0
    %7891 = vmatprep.subr.mxu0 0.0
    %7892 = vmatpush1.msra.mxu0 0.0
    %7893 = vmatprep.subr.mxu0 0.0
    %7894 = vmatpush1.msra.mxu0 0.0
    %7895 = vmatprep.subr.mxu0 0.0
    %7896 = vmatpush1.msra.mxu0 0.0
    %7897 = vmatprep.subr.mxu0 0.0
    %7898 = vmatpush1.msra.mxu0 0.0
    %7899 = vmatprep.subr.mxu0 0.0
    %7900 = vmatpush1.msra.mxu0 0.0
    %7901 = vmatprep.subr.mxu0 0.0
    %7902 = vmatpush1.msra.mxu0 0.0
    %7903 = vmatprep.subr.mxu0 0.0
    %7904 = vmatpush1.msra.mxu0 0.0
    %7905 = vmatprep.subr.mxu0 0.0
    %7906 = vmatpush1.msra.mxu0 0.0
    %7907 = vmatprep.subr.mxu0 0.0
    %7908 = vmatpush1.msra.mxu0 0.0
    %7909 = vmatprep.subr.mxu0 0.0
    %7910 = vmatpush1.msra.mxu0 0.0
    %7911 = vmatprep.subr.mxu0 0.0
    %7912 = vmatpush1.msra.mxu0 0.0
    %7913 = vmatprep.subr.mxu0 0.0
    %7914 = vmatpush1.msra.mxu0 0.0
    %7915 = vmatprep.subr.mxu0 0.0
    %7916 = vmatpush1.msra.mxu0 %v7879
    %7917 = vmatprep.subr.mxu0 0.0
    %7918 = vmatpush1.msra.mxu0 %v7878
    %7919 = vmatprep.subr.mxu0 0.0
    %7920 = vmatpush1.msra.mxu0 %v7877
    %7921 = vmatprep.subr.mxu0 0.0
    %7922 = vmatpush1.msra.mxu0 %v7876
    %7923 = vmatprep.subr.mxu0 0.0
    %7924 = vmatpush2.msra.mxu0 0.0
    %7925 = vmatprep.subr.mxu0 0.0
    %7926 = vmatpush2.msra.mxu0 0.0
    %7927 = vmatprep.subr.mxu0 0.0
    %7928 = vmatpush2.msra.mxu0 0.0
    %7929 = vmatprep.subr.mxu0 0.0
    %7930 = vmatpush2.msra.mxu0 0.0
    %7931 = vmatprep.subr.mxu0 0.0
    %7932 = vmatpush2.msra.mxu0 0.0
    %7933 = vmatprep.subr.mxu0 0.0
    %7934 = vmatpush2.msra.mxu0 0.0
    %7935 = vmatprep.subr.mxu0 0.0
    %7936 = vmatpush2.msra.mxu0 0.0
    %7937 = vmatprep.subr.mxu0 0.0
    %7938 = vmatpush2.msra.mxu0 0.0
    %7939 = vmatprep.subr.mxu0 0.0
    %7940 = vmatpush2.msra.mxu0 0.0
    %7941 = vmatprep.subr.mxu0 0.0
    %7942 = vmatpush2.msra.mxu0 0.0
    %7943 = vmatprep.subr.mxu0 0.0
    %7944 = vmatpush2.msra.mxu0 0.0
    %7945 = vmatprep.subr.mxu0 0.0
    %7946 = vmatpush2.msra.mxu0 0.0
    %7947 = vmatprep.subr.mxu0 0.0
    %7948 = vmatpush2.msra.mxu0 0.0
    %7949 = vmatprep.subr.mxu0 0.0
    %7950 = vmatpush2.msra.mxu0 0.0
    %7951 = vmatprep.subr.mxu0 0.0
    %7952 = vmatpush2.msra.mxu0 0.0
    %7953 = vmatprep.subr.mxu0 0.0
    %7954 = vmatpush2.msra.mxu0 0.0
    %7955 = vmatprep.mubr.f32.mxu0 0.0
    %7956 = vmatmul.mubr.f32.gmra.mxu0 %v7886
    %v7957 = vpop.f32.mrf.mxu0
    %v7958 = vadd.f32 %v7884, %v7957
    %v7959 = vpop.f32.mrf.mxu0
    %7960 = vmatprep.mubr.f32.mxu0 0.0
    %7961 = vmatmul.mubr.f32.gmra.mxu0 %v7889
    %v7962 = vpop.f32.mrf.mxu0
    %v7963 = vadd.f32 %v7884, %v7962
    %v7964 = vpop.f32.mrf.mxu0
    %7965 = vdwg.mxu0
    %v7966 = vmax.f32 %v7958, 0.0
    %v7967 = vmax.f32 %v7963, 0.0
    %v7968 = vld [vmem:[#allocation2 + $0xc8] sm:$0xff]
    %v7969 = vld [vmem:[#allocation2 + $0xd0] sm:$0xff]
    %v7970 = vld [vmem:[#allocation2 + $0xd8] sm:$0xff]
    %v7971 = vld [vmem:[#allocation2 + $0xe0] sm:$0xff]
    %v7972 = vld [vmem:[#allocation2 + $0xe8] sm:$0x1]
    %v7973 = vlaneseq
    %v7974 = vshrl.u32 %v7973, 7
    %v7975 = vsub.s32 0, %v7974
    %v7976 = vrot.slane %v7972, %v7975
    %v7978 = vsel %vm133, %v7966, 0
    %v7981 = vsel %vm133, %v7967, 0
    %7983 = vmatprep.subr.mxu0 0.0
    %7984 = vmatpush1.msra.mxu0 0.0
    %7985 = vmatprep.subr.mxu0 0.0
    %7986 = vmatpush1.msra.mxu0 0.0
    %7987 = vmatprep.subr.mxu0 0.0
    %7988 = vmatpush1.msra.mxu0 0.0
    %7989 = vmatprep.subr.mxu0 0.0
    %7990 = vmatpush1.msra.mxu0 0.0
    %7991 = vmatprep.subr.mxu0 0.0
    %7992 = vmatpush1.msra.mxu0 0.0
    %7993 = vmatprep.subr.mxu0 0.0
    %7994 = vmatpush1.msra.mxu0 0.0
    %7995 = vmatprep.subr.mxu0 0.0
    %7996 = vmatpush1.msra.mxu0 0.0
    %7997 = vmatprep.subr.mxu0 0.0
    %7998 = vmatpush1.msra.mxu0 0.0
    %7999 = vmatprep.subr.mxu0 0.0
    %8000 = vmatpush1.msra.mxu0 0.0
    %8001 = vmatprep.subr.mxu0 0.0
    %8002 = vmatpush1.msra.mxu0 0.0
    %8003 = vmatprep.subr.mxu0 0.0
    %8004 = vmatpush1.msra.mxu0 0.0
    %8005 = vmatprep.subr.mxu0 0.0
    %8006 = vmatpush1.msra.mxu0 0.0
    %8007 = vmatprep.subr.mxu0 0.0
    %8008 = vmatpush1.msra.mxu0 %v7971
    %8009 = vmatprep.subr.mxu0 0.0
    %8010 = vmatpush1.msra.mxu0 %v7970
    %8011 = vmatprep.subr.mxu0 0.0
    %8012 = vmatpush1.msra.mxu0 %v7969
    %8013 = vmatprep.subr.mxu0 0.0
    %8014 = vmatpush1.msra.mxu0 %v7968
    %8015 = vmatprep.subr.mxu0 0.0
    %8016 = vmatpush2.msra.mxu0 0.0
    %8017 = vmatprep.subr.mxu0 0.0
    %8018 = vmatpush2.msra.mxu0 0.0
    %8019 = vmatprep.subr.mxu0 0.0
    %8020 = vmatpush2.msra.mxu0 0.0
    %8021 = vmatprep.subr.mxu0 0.0
    %8022 = vmatpush2.msra.mxu0 0.0
    %8023 = vmatprep.subr.mxu0 0.0
    %8024 = vmatpush2.msra.mxu0 0.0
    %8025 = vmatprep.subr.mxu0 0.0
    %8026 = vmatpush2.msra.mxu0 0.0
    %8027 = vmatprep.subr.mxu0 0.0
    %8028 = vmatpush2.msra.mxu0 0.0
    %8029 = vmatprep.subr.mxu0 0.0
    %8030 = vmatpush2.msra.mxu0 0.0
    %8031 = vmatprep.subr.mxu0 0.0
    %8032 = vmatpush2.msra.mxu0 0.0
    %8033 = vmatprep.subr.mxu0 0.0
    %8034 = vmatpush2.msra.mxu0 0.0
    %8035 = vmatprep.subr.mxu0 0.0
    %8036 = vmatpush2.msra.mxu0 0.0
    %8037 = vmatprep.subr.mxu0 0.0
    %8038 = vmatpush2.msra.mxu0 0.0
    %8039 = vmatprep.subr.mxu0 0.0
    %8040 = vmatpush2.msra.mxu0 0.0
    %8041 = vmatprep.subr.mxu0 0.0
    %8042 = vmatpush2.msra.mxu0 0.0
    %8043 = vmatprep.subr.mxu0 0.0
    %8044 = vmatpush2.msra.mxu0 0.0
    %8045 = vmatprep.subr.mxu0 0.0
    %8046 = vmatpush2.msra.mxu0 0.0
    %8047 = vmatprep.mubr.f32.mxu0 0.0
    %8048 = vmatmul.mubr.f32.gmra.mxu0 %v7978
    %v8049 = vpop.f32.mrf.mxu0
    %v8050 = vadd.f32 %v7976, %v8049
    %v8051 = vpop.f32.mrf.mxu0
    %8052 = vmatprep.mubr.f32.mxu0 0.0
    %8053 = vmatmul.mubr.f32.gmra.mxu0 %v7981
    %v8054 = vpop.f32.mrf.mxu0
    %v8055 = vadd.f32 %v7976, %v8054
    %v8056 = vpop.f32.mrf.mxu0
    %8057 = vdwg.mxu0
    %v8058 = vmax.f32 %v8050, 0.0
    %v8059 = vmax.f32 %v8055, 0.0
    %v8060 = vld [vmem:[#allocation2 + $0xf0] sm:$0xff]
    %v8061 = vld [vmem:[#allocation2 + $0xf8] sm:$0xff]
    %v8062 = vld [vmem:[#allocation2 + $0x100] sm:$0xff]
    %v8063 = vld [vmem:[#allocation2 + $0x108] sm:$0xff]
    %v8064 = vld [vmem:[#allocation2 + $0x110] sm:$0x1]
    %v8065 = vlaneseq
    %v8066 = vshrl.u32 %v8065, 7
    %v8067 = vsub.s32 0, %v8066
    %v8068 = vrot.slane %v8064, %v8067
    %v8070 = vsel %vm133, %v8058, 0
    %v8073 = vsel %vm133, %v8059, 0
    %8075 = vmatprep.subr.mxu0 0.0
    %8076 = vmatpush1.msra.mxu0 0.0
    %8077 = vmatprep.subr.mxu0 0.0
    %8078 = vmatpush1.msra.mxu0 0.0
    %8079 = vmatprep.subr.mxu0 0.0
    %8080 = vmatpush1.msra.mxu0 0.0
    %8081 = vmatprep.subr.mxu0 0.0
    %8082 = vmatpush1.msra.mxu0 0.0
    %8083 = vmatprep.subr.mxu0 0.0
    %8084 = vmatpush1.msra.mxu0 0.0
    %8085 = vmatprep.subr.mxu0 0.0
    %8086 = vmatpush1.msra.mxu0 0.0
    %8087 = vmatprep.subr.mxu0 0.0
    %8088 = vmatpush1.msra.mxu0 0.0
    %8089 = vmatprep.subr.mxu0 0.0
    %8090 = vmatpush1.msra.mxu0 0.0
    %8091 = vmatprep.subr.mxu0 0.0
    %8092 = vmatpush1.msra.mxu0 0.0
    %8093 = vmatprep.subr.mxu0 0.0
    %8094 = vmatpush1.msra.mxu0 0.0
    %8095 = vmatprep.subr.mxu0 0.0
    %8096 = vmatpush1.msra.mxu0 0.0
    %8097 = vmatprep.subr.mxu0 0.0
    %8098 = vmatpush1.msra.mxu0 0.0
    %8099 = vmatprep.subr.mxu0 0.0
    %8100 = vmatpush1.msra.mxu0 %v8063
    %8101 = vmatprep.subr.mxu0 0.0
    %8102 = vmatpush1.msra.mxu0 %v8062
    %8103 = vmatprep.subr.mxu0 0.0
    %8104 = vmatpush1.msra.mxu0 %v8061
    %8105 = vmatprep.subr.mxu0 0.0
    %8106 = vmatpush1.msra.mxu0 %v8060
    %8107 = vmatprep.subr.mxu0 0.0
    %8108 = vmatpush2.msra.mxu0 0.0
    %8109 = vmatprep.subr.mxu0 0.0
    %8110 = vmatpush2.msra.mxu0 0.0
    %8111 = vmatprep.subr.mxu0 0.0
    %8112 = vmatpush2.msra.mxu0 0.0
    %8113 = vmatprep.subr.mxu0 0.0
    %8114 = vmatpush2.msra.mxu0 0.0
    %8115 = vmatprep.subr.mxu0 0.0
    %8116 = vmatpush2.msra.mxu0 0.0
    %8117 = vmatprep.subr.mxu0 0.0
    %8118 = vmatpush2.msra.mxu0 0.0
    %8119 = vmatprep.subr.mxu0 0.0
    %8120 = vmatpush2.msra.mxu0 0.0
    %8121 = vmatprep.subr.mxu0 0.0
    %8122 = vmatpush2.msra.mxu0 0.0
    %8123 = vmatprep.subr.mxu0 0.0
    %8124 = vmatpush2.msra.mxu0 0.0
    %8125 = vmatprep.subr.mxu0 0.0
    %8126 = vmatpush2.msra.mxu0 0.0
    %8127 = vmatprep.subr.mxu0 0.0
    %8128 = vmatpush2.msra.mxu0 0.0
    %8129 = vmatprep.subr.mxu0 0.0
    %8130 = vmatpush2.msra.mxu0 0.0
    %8131 = vmatprep.subr.mxu0 0.0
    %8132 = vmatpush2.msra.mxu0 0.0
    %8133 = vmatprep.subr.mxu0 0.0
    %8134 = vmatpush2.msra.mxu0 0.0
    %8135 = vmatprep.subr.mxu0 0.0
    %8136 = vmatpush2.msra.mxu0 0.0
    %8137 = vmatprep.subr.mxu0 0.0
    %8138 = vmatpush2.msra.mxu0 0.0
    %8139 = vmatprep.mubr.f32.mxu0 0.0
    %8140 = vmatmul.mubr.f32.gmra.mxu0 %v8070
    %v8141 = vpop.f32.mrf.mxu0
    %v8142 = vadd.f32 %v8068, %v8141
    %v8143 = vpop.f32.mrf.mxu0
    %8144 = vmatprep.mubr.f32.mxu0 0.0
    %8145 = vmatmul.mubr.f32.gmra.mxu0 %v8073
    %v8146 = vpop.f32.mrf.mxu0
    %v8147 = vadd.f32 %v8068, %v8146
    %v8148 = vpop.f32.mrf.mxu0
    %8149 = vdwg.mxu0
    %v8150 = vmax.f32 %v8142, 0.0
    %v8151 = vmax.f32 %v8147, 0.0
    %v8152 = vld [vmem:[#allocation2 + $0x118] sm:$0xff]
    %v8153 = vld [vmem:[#allocation2 + $0x120] sm:$0xff]
    %v8154 = vld [vmem:[#allocation2 + $0x128] sm:$0xff]
    %v8155 = vld [vmem:[#allocation2 + $0x130] sm:$0xff]
    %v8156 = vld [vmem:[#allocation2 + $0x138] sm:$0x1]
    %v8157 = vlaneseq
    %v8158 = vshrl.u32 %v8157, 7
    %v8159 = vsub.s32 0, %v8158
    %v8160 = vrot.slane %v8156, %v8159
    %v8162 = vsel %vm133, %v8150, 0
    %v8165 = vsel %vm133, %v8151, 0
    %8167 = vmatprep.subr.mxu0 0.0
    %8168 = vmatpush1.msra.mxu0 0.0
    %8169 = vmatprep.subr.mxu0 0.0
    %8170 = vmatpush1.msra.mxu0 0.0
    %8171 = vmatprep.subr.mxu0 0.0
    %8172 = vmatpush1.msra.mxu0 0.0
    %8173 = vmatprep.subr.mxu0 0.0
    %8174 = vmatpush1.msra.mxu0 0.0
    %8175 = vmatprep.subr.mxu0 0.0
    %8176 = vmatpush1.msra.mxu0 0.0
    %8177 = vmatprep.subr.mxu0 0.0
    %8178 = vmatpush1.msra.mxu0 0.0
    %8179 = vmatprep.subr.mxu0 0.0
    %8180 = vmatpush1.msra.mxu0 0.0
    %8181 = vmatprep.subr.mxu0 0.0
    %8182 = vmatpush1.msra.mxu0 0.0
    %8183 = vmatprep.subr.mxu0 0.0
    %8184 = vmatpush1.msra.mxu0 0.0
    %8185 = vmatprep.subr.mxu0 0.0
    %8186 = vmatpush1.msra.mxu0 0.0
    %8187 = vmatprep.subr.mxu0 0.0
    %8188 = vmatpush1.msra.mxu0 0.0
    %8189 = vmatprep.subr.mxu0 0.0
    %8190 = vmatpush1.msra.mxu0 0.0
    %8191 = vmatprep.subr.mxu0 0.0
    %8192 = vmatpush1.msra.mxu0 %v8155
    %8193 = vmatprep.subr.mxu0 0.0
    %8194 = vmatpush1.msra.mxu0 %v8154
    %8195 = vmatprep.subr.mxu0 0.0
    %8196 = vmatpush1.msra.mxu0 %v8153
    %8197 = vmatprep.subr.mxu0 0.0
    %8198 = vmatpush1.msra.mxu0 %v8152
    %8199 = vmatprep.subr.mxu0 0.0
    %8200 = vmatpush2.msra.mxu0 0.0
    %8201 = vmatprep.subr.mxu0 0.0
    %8202 = vmatpush2.msra.mxu0 0.0
    %8203 = vmatprep.subr.mxu0 0.0
    %8204 = vmatpush2.msra.mxu0 0.0
    %8205 = vmatprep.subr.mxu0 0.0
    %8206 = vmatpush2.msra.mxu0 0.0
    %8207 = vmatprep.subr.mxu0 0.0
    %8208 = vmatpush2.msra.mxu0 0.0
    %8209 = vmatprep.subr.mxu0 0.0
    %8210 = vmatpush2.msra.mxu0 0.0
    %8211 = vmatprep.subr.mxu0 0.0
    %8212 = vmatpush2.msra.mxu0 0.0
    %8213 = vmatprep.subr.mxu0 0.0
    %8214 = vmatpush2.msra.mxu0 0.0
    %8215 = vmatprep.subr.mxu0 0.0
    %8216 = vmatpush2.msra.mxu0 0.0
    %8217 = vmatprep.subr.mxu0 0.0
    %8218 = vmatpush2.msra.mxu0 0.0
    %8219 = vmatprep.subr.mxu0 0.0
    %8220 = vmatpush2.msra.mxu0 0.0
    %8221 = vmatprep.subr.mxu0 0.0
    %8222 = vmatpush2.msra.mxu0 0.0
    %8223 = vmatprep.subr.mxu0 0.0
    %8224 = vmatpush2.msra.mxu0 0.0
    %8225 = vmatprep.subr.mxu0 0.0
    %8226 = vmatpush2.msra.mxu0 0.0
    %8227 = vmatprep.subr.mxu0 0.0
    %8228 = vmatpush2.msra.mxu0 0.0
    %8229 = vmatprep.subr.mxu0 0.0
    %8230 = vmatpush2.msra.mxu0 0.0
    %8231 = vmatprep.mubr.f32.mxu0 0.0
    %8232 = vmatmul.mubr.f32.gmra.mxu0 %v8162
    %v8233 = vpop.f32.mrf.mxu0
    %v8234 = vadd.f32 %v8160, %v8233
    %v8235 = vpop.f32.mrf.mxu0
    %8236 = vmatprep.mubr.f32.mxu0 0.0
    %8237 = vmatmul.mubr.f32.gmra.mxu0 %v8165
    %v8238 = vpop.f32.mrf.mxu0
    %v8239 = vadd.f32 %v8160, %v8238
    %v8240 = vpop.f32.mrf.mxu0
    %8241 = vdwg.mxu0
    %v8242 = vld [vmem:[#allocation2 + $0x140] sm:$0xff]
    %v8243 = vld [vmem:[#allocation2 + $0x148] sm:$0xff]
    %v8244 = vld [vmem:[#allocation2 + $0x150] sm:$0xff]
    %v8245 = vld [vmem:[#allocation2 + $0x158] sm:$0xff]
    %v8246 = vld [vmem:[#allocation2 + $0x160] sm:$0x1]
    %v8247 = vlaneseq
    %v8248 = vshrl.u32 %v8247, 7
    %v8249 = vsub.s32 0, %v8248
    %v8250 = vrot.slane %v8246, %v8249
    %8251 = vmatprep.subr.mxu0 0.0
    %8252 = vmatpush1.msra.mxu0 0.0
    %8253 = vmatprep.subr.mxu0 0.0
    %8254 = vmatpush1.msra.mxu0 0.0
    %8255 = vmatprep.subr.mxu0 0.0
    %8256 = vmatpush1.msra.mxu0 0.0
    %8257 = vmatprep.subr.mxu0 0.0
    %8258 = vmatpush1.msra.mxu0 0.0
    %8259 = vmatprep.subr.mxu0 0.0
    %8260 = vmatpush1.msra.mxu0 0.0
    %8261 = vmatprep.subr.mxu0 0.0
    %8262 = vmatpush1.msra.mxu0 0.0
    %8263 = vmatprep.subr.mxu0 0.0
    %8264 = vmatpush1.msra.mxu0 0.0
    %8265 = vmatprep.subr.mxu0 0.0
    %8266 = vmatpush1.msra.mxu0 0.0
    %8267 = vmatprep.subr.mxu0 0.0
    %8268 = vmatpush1.msra.mxu0 0.0
    %8269 = vmatprep.subr.mxu0 0.0
    %8270 = vmatpush1.msra.mxu0 0.0
    %8271 = vmatprep.subr.mxu0 0.0
    %8272 = vmatpush1.msra.mxu0 0.0
    %8273 = vmatprep.subr.mxu0 0.0
    %8274 = vmatpush1.msra.mxu0 0.0
    %8275 = vmatprep.subr.mxu0 0.0
    %8276 = vmatpush1.msra.mxu0 %v8245
    %8277 = vmatprep.subr.mxu0 0.0
    %8278 = vmatpush1.msra.mxu0 %v8244
    %8279 = vmatprep.subr.mxu0 0.0
    %8280 = vmatpush1.msra.mxu0 %v8243
    %8281 = vmatprep.subr.mxu0 0.0
    %8282 = vmatpush1.msra.mxu0 %v8242
    %8283 = vmatprep.subr.mxu0 0.0
    %8284 = vmatpush2.msra.mxu0 0.0
    %8285 = vmatprep.subr.mxu0 0.0
    %8286 = vmatpush2.msra.mxu0 0.0
    %8287 = vmatprep.subr.mxu0 0.0
    %8288 = vmatpush2.msra.mxu0 0.0
    %8289 = vmatprep.subr.mxu0 0.0
    %8290 = vmatpush2.msra.mxu0 0.0
    %8291 = vmatprep.subr.mxu0 0.0
    %8292 = vmatpush2.msra.mxu0 0.0
    %8293 = vmatprep.subr.mxu0 0.0
    %8294 = vmatpush2.msra.mxu0 0.0
    %8295 = vmatprep.subr.mxu0 0.0
    %8296 = vmatpush2.msra.mxu0 0.0
    %8297 = vmatprep.subr.mxu0 0.0
    %8298 = vmatpush2.msra.mxu0 0.0
    %8299 = vmatprep.subr.mxu0 0.0
    %8300 = vmatpush2.msra.mxu0 0.0
    %8301 = vmatprep.subr.mxu0 0.0
    %8302 = vmatpush2.msra.mxu0 0.0
    %8303 = vmatprep.subr.mxu0 0.0
    %8304 = vmatpush2.msra.mxu0 0.0
    %8305 = vmatprep.subr.mxu0 0.0
    %8306 = vmatpush2.msra.mxu0 0.0
    %8307 = vmatprep.subr.mxu0 0.0
    %8308 = vmatpush2.msra.mxu0 0.0
    %8309 = vmatprep.subr.mxu0 0.0
    %8310 = vmatpush2.msra.mxu0 0.0
    %8311 = vmatprep.subr.mxu0 0.0
    %8312 = vmatpush2.msra.mxu0 0.0
    %8313 = vmatprep.subr.mxu0 0.0
    %8314 = vmatpush2.msra.mxu0 0.0
    %8315 = vmatprep.mubr.f32.mxu0 0.0
    %8316 = vmatmul.mubr.f32.gmra.mxu0 %v7886
    %v8317 = vpop.f32.mrf.mxu0
    %v8318 = vadd.f32 %v8250, %v8317
    %v8319 = vpop.f32.mrf.mxu0
    %8320 = vmatprep.mubr.f32.mxu0 0.0
    %8321 = vmatmul.mubr.f32.gmra.mxu0 %v7889
    %v8322 = vpop.f32.mrf.mxu0
    %v8323 = vadd.f32 %v8250, %v8322
    %v8324 = vpop.f32.mrf.mxu0
    %8325 = vdwg.mxu0
    %v8326 = vmax.f32 %v8318, 0.0
    %v8327 = vmax.f32 %v8323, 0.0
    %v8328 = vld [vmem:[#allocation2 + $0x168] sm:$0xff]
    %v8329 = vld [vmem:[#allocation2 + $0x170] sm:$0xff]
    %v8330 = vld [vmem:[#allocation2 + $0x178] sm:$0xff]
    %v8331 = vld [vmem:[#allocation2 + $0x180] sm:$0xff]
    %v8332 = vld [vmem:[#allocation2 + $0x188] sm:$0x1]
    %v8333 = vlaneseq
    %v8334 = vshrl.u32 %v8333, 7
    %v8335 = vsub.s32 0, %v8334
    %v8336 = vrot.slane %v8332, %v8335
    %v8338 = vsel %vm133, %v8326, 0
    %v8341 = vsel %vm133, %v8327, 0
    %8343 = vmatprep.subr.mxu0 0.0
    %8344 = vmatpush1.msra.mxu0 0.0
    %8345 = vmatprep.subr.mxu0 0.0
    %8346 = vmatpush1.msra.mxu0 0.0
    %8347 = vmatprep.subr.mxu0 0.0
    %8348 = vmatpush1.msra.mxu0 0.0
    %8349 = vmatprep.subr.mxu0 0.0
    %8350 = vmatpush1.msra.mxu0 0.0
    %8351 = vmatprep.subr.mxu0 0.0
    %8352 = vmatpush1.msra.mxu0 0.0
    %8353 = vmatprep.subr.mxu0 0.0
    %8354 = vmatpush1.msra.mxu0 0.0
    %8355 = vmatprep.subr.mxu0 0.0
    %8356 = vmatpush1.msra.mxu0 0.0
    %8357 = vmatprep.subr.mxu0 0.0
    %8358 = vmatpush1.msra.mxu0 0.0
    %8359 = vmatprep.subr.mxu0 0.0
    %8360 = vmatpush1.msra.mxu0 0.0
    %8361 = vmatprep.subr.mxu0 0.0
    %8362 = vmatpush1.msra.mxu0 0.0
    %8363 = vmatprep.subr.mxu0 0.0
    %8364 = vmatpush1.msra.mxu0 0.0
    %8365 = vmatprep.subr.mxu0 0.0
    %8366 = vmatpush1.msra.mxu0 0.0
    %8367 = vmatprep.subr.mxu0 0.0
    %8368 = vmatpush1.msra.mxu0 %v8331
    %8369 = vmatprep.subr.mxu0 0.0
    %8370 = vmatpush1.msra.mxu0 %v8330
    %8371 = vmatprep.subr.mxu0 0.0
    %8372 = vmatpush1.msra.mxu0 %v8329
    %8373 = vmatprep.subr.mxu0 0.0
    %8374 = vmatpush1.msra.mxu0 %v8328
    %8375 = vmatprep.subr.mxu0 0.0
    %8376 = vmatpush2.msra.mxu0 0.0
    %8377 = vmatprep.subr.mxu0 0.0
    %8378 = vmatpush2.msra.mxu0 0.0
    %8379 = vmatprep.subr.mxu0 0.0
    %8380 = vmatpush2.msra.mxu0 0.0
    %8381 = vmatprep.subr.mxu0 0.0
    %8382 = vmatpush2.msra.mxu0 0.0
    %8383 = vmatprep.subr.mxu0 0.0
    %8384 = vmatpush2.msra.mxu0 0.0
    %8385 = vmatprep.subr.mxu0 0.0
    %8386 = vmatpush2.msra.mxu0 0.0
    %8387 = vmatprep.subr.mxu0 0.0
    %8388 = vmatpush2.msra.mxu0 0.0
    %8389 = vmatprep.subr.mxu0 0.0
    %8390 = vmatpush2.msra.mxu0 0.0
    %8391 = vmatprep.subr.mxu0 0.0
    %8392 = vmatpush2.msra.mxu0 0.0
    %8393 = vmatprep.subr.mxu0 0.0
    %8394 = vmatpush2.msra.mxu0 0.0
    %8395 = vmatprep.subr.mxu0 0.0
    %8396 = vmatpush2.msra.mxu0 0.0
    %8397 = vmatprep.subr.mxu0 0.0
    %8398 = vmatpush2.msra.mxu0 0.0
    %8399 = vmatprep.subr.mxu0 0.0
    %8400 = vmatpush2.msra.mxu0 0.0
    %8401 = vmatprep.subr.mxu0 0.0
    %8402 = vmatpush2.msra.mxu0 0.0
    %8403 = vmatprep.subr.mxu0 0.0
    %8404 = vmatpush2.msra.mxu0 0.0
    %8405 = vmatprep.subr.mxu0 0.0
    %8406 = vmatpush2.msra.mxu0 0.0
    %8407 = vmatprep.mubr.f32.mxu0 0.0
    %8408 = vmatmul.mubr.f32.gmra.mxu0 %v8338
    %v8409 = vpop.f32.mrf.mxu0
    %v8410 = vadd.f32 %v8336, %v8409
    %v8411 = vpop.f32.mrf.mxu0
    %8412 = vmatprep.mubr.f32.mxu0 0.0
    %8413 = vmatmul.mubr.f32.gmra.mxu0 %v8341
    %v8414 = vpop.f32.mrf.mxu0
    %v8415 = vadd.f32 %v8336, %v8414
    %v8416 = vpop.f32.mrf.mxu0
    %8417 = vdwg.mxu0
    %v8418 = vmax.f32 %v8410, 0.0
    %v8419 = vmax.f32 %v8415, 0.0
    %v8420 = vld [vmem:[#allocation2 + $0x190] sm:$0xff]
    %v8421 = vld [vmem:[#allocation2 + $0x198] sm:$0xff]
    %v8422 = vld [vmem:[#allocation2 + $0x1a0] sm:$0xff]
    %v8423 = vld [vmem:[#allocation2 + $0x1a8] sm:$0xff]
    %v8424 = vld [vmem:[#allocation2 + $0x1b0] sm:$0x1]
    %v8425 = vlaneseq
    %v8426 = vshrl.u32 %v8425, 7
    %v8427 = vsub.s32 0, %v8426
    %v8428 = vrot.slane %v8424, %v8427
    %v8430 = vsel %vm133, %v8418, 0
    %v8433 = vsel %vm133, %v8419, 0
    %8435 = vmatprep.subr.mxu0 0.0
    %8436 = vmatpush1.msra.mxu0 0.0
    %8437 = vmatprep.subr.mxu0 0.0
    %8438 = vmatpush1.msra.mxu0 0.0
    %8439 = vmatprep.subr.mxu0 0.0
    %8440 = vmatpush1.msra.mxu0 0.0
    %8441 = vmatprep.subr.mxu0 0.0
    %8442 = vmatpush1.msra.mxu0 0.0
    %8443 = vmatprep.subr.mxu0 0.0
    %8444 = vmatpush1.msra.mxu0 0.0
    %8445 = vmatprep.subr.mxu0 0.0
    %8446 = vmatpush1.msra.mxu0 0.0
    %8447 = vmatprep.subr.mxu0 0.0
    %8448 = vmatpush1.msra.mxu0 0.0
    %8449 = vmatprep.subr.mxu0 0.0
    %8450 = vmatpush1.msra.mxu0 0.0
    %8451 = vmatprep.subr.mxu0 0.0
    %8452 = vmatpush1.msra.mxu0 0.0
    %8453 = vmatprep.subr.mxu0 0.0
    %8454 = vmatpush1.msra.mxu0 0.0
    %8455 = vmatprep.subr.mxu0 0.0
    %8456 = vmatpush1.msra.mxu0 0.0
    %8457 = vmatprep.subr.mxu0 0.0
    %8458 = vmatpush1.msra.mxu0 0.0
    %8459 = vmatprep.subr.mxu0 0.0
    %8460 = vmatpush1.msra.mxu0 %v8423
    %8461 = vmatprep.subr.mxu0 0.0
    %8462 = vmatpush1.msra.mxu0 %v8422
    %8463 = vmatprep.subr.mxu0 0.0
    %8464 = vmatpush1.msra.mxu0 %v8421
    %8465 = vmatprep.subr.mxu0 0.0
    %8466 = vmatpush1.msra.mxu0 %v8420
    %8467 = vmatprep.subr.mxu0 0.0
    %8468 = vmatpush2.msra.mxu0 0.0
    %8469 = vmatprep.subr.mxu0 0.0
    %8470 = vmatpush2.msra.mxu0 0.0
    %8471 = vmatprep.subr.mxu0 0.0
    %8472 = vmatpush2.msra.mxu0 0.0
    %8473 = vmatprep.subr.mxu0 0.0
    %8474 = vmatpush2.msra.mxu0 0.0
    %8475 = vmatprep.subr.mxu0 0.0
    %8476 = vmatpush2.msra.mxu0 0.0
    %8477 = vmatprep.subr.mxu0 0.0
    %8478 = vmatpush2.msra.mxu0 0.0
    %8479 = vmatprep.subr.mxu0 0.0
    %8480 = vmatpush2.msra.mxu0 0.0
    %8481 = vmatprep.subr.mxu0 0.0
    %8482 = vmatpush2.msra.mxu0 0.0
    %8483 = vmatprep.subr.mxu0 0.0
    %8484 = vmatpush2.msra.mxu0 0.0
    %8485 = vmatprep.subr.mxu0 0.0
    %8486 = vmatpush2.msra.mxu0 0.0
    %8487 = vmatprep.subr.mxu0 0.0
    %8488 = vmatpush2.msra.mxu0 0.0
    %8489 = vmatprep.subr.mxu0 0.0
    %8490 = vmatpush2.msra.mxu0 0.0
    %8491 = vmatprep.subr.mxu0 0.0
    %8492 = vmatpush2.msra.mxu0 0.0
    %8493 = vmatprep.subr.mxu0 0.0
    %8494 = vmatpush2.msra.mxu0 0.0
    %8495 = vmatprep.subr.mxu0 0.0
    %8496 = vmatpush2.msra.mxu0 0.0
    %8497 = vmatprep.subr.mxu0 0.0
    %8498 = vmatpush2.msra.mxu0 0.0
    %8499 = vmatprep.mubr.f32.mxu0 0.0
    %8500 = vmatmul.mubr.f32.gmra.mxu0 %v8430
    %v8501 = vpop.f32.mrf.mxu0
    %v8502 = vadd.f32 %v8428, %v8501
    %v8503 = vpop.f32.mrf.mxu0
    %8504 = vmatprep.mubr.f32.mxu0 0.0
    %8505 = vmatmul.mubr.f32.gmra.mxu0 %v8433
    %v8506 = vpop.f32.mrf.mxu0
    %v8507 = vadd.f32 %v8428, %v8506
    %v8508 = vpop.f32.mrf.mxu0
    %8509 = vdwg.mxu0
    %v8510 = vld [vmem:[#allocation2 + $0x1b8] sm:$0xff]
    %v8511 = vld [vmem:[#allocation2 + $0x1c0] sm:$0xff]
    %v8512 = vld [vmem:[#allocation2 + $0x1c8] sm:$0xff]
    %v8513 = vld [vmem:[#allocation2 + $0x1d0] sm:$0xff]
    %v8514 = vld [vmem:[#allocation2 + $0x1d8] sm:$0x1]
    %v8515 = vlaneseq
    %v8516 = vshrl.u32 %v8515, 7
    %v8517 = vsub.s32 0, %v8516
    %v8518 = vrot.slane %v8514, %v8517
    %8519 = vmatprep.subr.mxu0 0.0
    %8520 = vmatpush1.msra.mxu0 0.0
    %8521 = vmatprep.subr.mxu0 0.0
    %8522 = vmatpush1.msra.mxu0 0.0
    %8523 = vmatprep.subr.mxu0 0.0
    %8524 = vmatpush1.msra.mxu0 0.0
    %8525 = vmatprep.subr.mxu0 0.0
    %8526 = vmatpush1.msra.mxu0 0.0
    %8527 = vmatprep.subr.mxu0 0.0
    %8528 = vmatpush1.msra.mxu0 0.0
    %8529 = vmatprep.subr.mxu0 0.0
    %8530 = vmatpush1.msra.mxu0 0.0
    %8531 = vmatprep.subr.mxu0 0.0
    %8532 = vmatpush1.msra.mxu0 0.0
    %8533 = vmatprep.subr.mxu0 0.0
    %8534 = vmatpush1.msra.mxu0 0.0
    %8535 = vmatprep.subr.mxu0 0.0
    %8536 = vmatpush1.msra.mxu0 0.0
    %8537 = vmatprep.subr.mxu0 0.0
    %8538 = vmatpush1.msra.mxu0 0.0
    %8539 = vmatprep.subr.mxu0 0.0
    %8540 = vmatpush1.msra.mxu0 0.0
    %8541 = vmatprep.subr.mxu0 0.0
    %8542 = vmatpush1.msra.mxu0 0.0
    %8543 = vmatprep.subr.mxu0 0.0
    %8544 = vmatpush1.msra.mxu0 %v8513
    %8545 = vmatprep.subr.mxu0 0.0
    %8546 = vmatpush1.msra.mxu0 %v8512
    %8547 = vmatprep.subr.mxu0 0.0
    %8548 = vmatpush1.msra.mxu0 %v8511
    %8549 = vmatprep.subr.mxu0 0.0
    %8550 = vmatpush1.msra.mxu0 %v8510
    %8551 = vmatprep.subr.mxu0 0.0
    %8552 = vmatpush2.msra.mxu0 0.0
    %8553 = vmatprep.subr.mxu0 0.0
    %8554 = vmatpush2.msra.mxu0 0.0
    %8555 = vmatprep.subr.mxu0 0.0
    %8556 = vmatpush2.msra.mxu0 0.0
    %8557 = vmatprep.subr.mxu0 0.0
    %8558 = vmatpush2.msra.mxu0 0.0
    %8559 = vmatprep.subr.mxu0 0.0
    %8560 = vmatpush2.msra.mxu0 0.0
    %8561 = vmatprep.subr.mxu0 0.0
    %8562 = vmatpush2.msra.mxu0 0.0
    %8563 = vmatprep.subr.mxu0 0.0
    %8564 = vmatpush2.msra.mxu0 0.0
    %8565 = vmatprep.subr.mxu0 0.0
    %8566 = vmatpush2.msra.mxu0 0.0
    %8567 = vmatprep.subr.mxu0 0.0
    %8568 = vmatpush2.msra.mxu0 0.0
    %8569 = vmatprep.subr.mxu0 0.0
    %8570 = vmatpush2.msra.mxu0 0.0
    %8571 = vmatprep.subr.mxu0 0.0
    %8572 = vmatpush2.msra.mxu0 0.0
    %8573 = vmatprep.subr.mxu0 0.0
    %8574 = vmatpush2.msra.mxu0 0.0
    %8575 = vmatprep.subr.mxu0 0.0
    %8576 = vmatpush2.msra.mxu0 0.0
    %8577 = vmatprep.subr.mxu0 0.0
    %8578 = vmatpush2.msra.mxu0 0.0
    %8579 = vmatprep.subr.mxu0 0.0
    %8580 = vmatpush2.msra.mxu0 0.0
    %8581 = vmatprep.subr.mxu0 0.0
    %8582 = vmatpush2.msra.mxu0 0.0
    %8583 = vmatprep.mubr.f32.mxu0 0.0
    %8584 = vmatmul.mubr.f32.gmra.mxu0 %v7886
    %v8585 = vpop.f32.mrf.mxu0
    %v8586 = vadd.f32 %v8518, %v8585
    %v8587 = vpop.f32.mrf.mxu0
    %8588 = vmatprep.mubr.f32.mxu0 0.0
    %8589 = vmatmul.mubr.f32.gmra.mxu0 %v7889
    %v8590 = vpop.f32.mrf.mxu0
    %v8591 = vadd.f32 %v8518, %v8590
    %v8592 = vpop.f32.mrf.mxu0
    %8593 = vdwg.mxu0
    %v8594 = vmax.f32 %v8586, 0.0
    %v8595 = vmax.f32 %v8591, 0.0
    %v8596 = vld [vmem:[#allocation2 + $0x1e0] sm:$0xff]
    %v8597 = vld [vmem:[#allocation2 + $0x1e8] sm:$0xff]
    %v8598 = vld [vmem:[#allocation2 + $0x1f0] sm:$0xff]
    %v8599 = vld [vmem:[#allocation2 + $0x1f8] sm:$0xff]
    %v8600 = vld [vmem:[#allocation2 + $0x200] sm:$0x1]
    %v8601 = vlaneseq
    %v8602 = vshrl.u32 %v8601, 7
    %v8603 = vsub.s32 0, %v8602
    %v8604 = vrot.slane %v8600, %v8603
    %v8606 = vsel %vm133, %v8594, 0
    %v8609 = vsel %vm133, %v8595, 0
    %8611 = vmatprep.subr.mxu0 0.0
    %8612 = vmatpush1.msra.mxu0 0.0
    %8613 = vmatprep.subr.mxu0 0.0
    %8614 = vmatpush1.msra.mxu0 0.0
    %8615 = vmatprep.subr.mxu0 0.0
    %8616 = vmatpush1.msra.mxu0 0.0
    %8617 = vmatprep.subr.mxu0 0.0
    %8618 = vmatpush1.msra.mxu0 0.0
    %8619 = vmatprep.subr.mxu0 0.0
    %8620 = vmatpush1.msra.mxu0 0.0
    %8621 = vmatprep.subr.mxu0 0.0
    %8622 = vmatpush1.msra.mxu0 0.0
    %8623 = vmatprep.subr.mxu0 0.0
    %8624 = vmatpush1.msra.mxu0 0.0
    %8625 = vmatprep.subr.mxu0 0.0
    %8626 = vmatpush1.msra.mxu0 0.0
    %8627 = vmatprep.subr.mxu0 0.0
    %8628 = vmatpush1.msra.mxu0 0.0
    %8629 = vmatprep.subr.mxu0 0.0
    %8630 = vmatpush1.msra.mxu0 0.0
    %8631 = vmatprep.subr.mxu0 0.0
    %8632 = vmatpush1.msra.mxu0 0.0
    %8633 = vmatprep.subr.mxu0 0.0
    %8634 = vmatpush1.msra.mxu0 0.0
    %8635 = vmatprep.subr.mxu0 0.0
    %8636 = vmatpush1.msra.mxu0 %v8599
    %8637 = vmatprep.subr.mxu0 0.0
    %8638 = vmatpush1.msra.mxu0 %v8598
    %8639 = vmatprep.subr.mxu0 0.0
    %8640 = vmatpush1.msra.mxu0 %v8597
    %8641 = vmatprep.subr.mxu0 0.0
    %8642 = vmatpush1.msra.mxu0 %v8596
    %8643 = vmatprep.subr.mxu0 0.0
    %8644 = vmatpush2.msra.mxu0 0.0
    %8645 = vmatprep.subr.mxu0 0.0
    %8646 = vmatpush2.msra.mxu0 0.0
    %8647 = vmatprep.subr.mxu0 0.0
    %8648 = vmatpush2.msra.mxu0 0.0
    %8649 = vmatprep.subr.mxu0 0.0
    %8650 = vmatpush2.msra.mxu0 0.0
    %8651 = vmatprep.subr.mxu0 0.0
    %8652 = vmatpush2.msra.mxu0 0.0
    %8653 = vmatprep.subr.mxu0 0.0
    %8654 = vmatpush2.msra.mxu0 0.0
    %8655 = vmatprep.subr.mxu0 0.0
    %8656 = vmatpush2.msra.mxu0 0.0
    %8657 = vmatprep.subr.mxu0 0.0
    %8658 = vmatpush2.msra.mxu0 0.0
    %8659 = vmatprep.subr.mxu0 0.0
    %8660 = vmatpush2.msra.mxu0 0.0
    %8661 = vmatprep.subr.mxu0 0.0
    %8662 = vmatpush2.msra.mxu0 0.0
    %8663 = vmatprep.subr.mxu0 0.0
    %8664 = vmatpush2.msra.mxu0 0.0
    %8665 = vmatprep.subr.mxu0 0.0
    %8666 = vmatpush2.msra.mxu0 0.0
    %8667 = vmatprep.subr.mxu0 0.0
    %8668 = vmatpush2.msra.mxu0 0.0
    %8669 = vmatprep.subr.mxu0 0.0
    %8670 = vmatpush2.msra.mxu0 0.0
    %8671 = vmatprep.subr.mxu0 0.0
    %8672 = vmatpush2.msra.mxu0 0.0
    %8673 = vmatprep.subr.mxu0 0.0
    %8674 = vmatpush2.msra.mxu0 0.0
    %8675 = vmatprep.mubr.f32.mxu0 0.0
    %8676 = vmatmul.mubr.f32.gmra.mxu0 %v8606
    %v8677 = vpop.f32.mrf.mxu0
    %v8678 = vadd.f32 %v8604, %v8677
    %v8679 = vpop.f32.mrf.mxu0
    %8680 = vmatprep.mubr.f32.mxu0 0.0
    %8681 = vmatmul.mubr.f32.gmra.mxu0 %v8609
    %v8682 = vpop.f32.mrf.mxu0
    %v8683 = vadd.f32 %v8604, %v8682
    %v8684 = vpop.f32.mrf.mxu0
    %8685 = vdwg.mxu0
    %v8686 = vmax.f32 %v8678, 0.0
    %v8687 = vmax.f32 %v8683, 0.0
    %v8688 = vld [vmem:[#allocation2 + $0x208] sm:$0xff]
    %v8689 = vld [vmem:[#allocation2 + $0x210] sm:$0xff]
    %v8690 = vld [vmem:[#allocation2 + $0x218] sm:$0xff]
    %v8691 = vld [vmem:[#allocation2 + $0x220] sm:$0xff]
    %v8692 = vld [vmem:[#allocation2 + $0x228] sm:$0x1]
    %v8693 = vlaneseq
    %v8694 = vshrl.u32 %v8693, 7
    %v8695 = vsub.s32 0, %v8694
    %v8696 = vrot.slane %v8692, %v8695
    %v8698 = vsel %vm133, %v8686, 0
    %v8701 = vsel %vm133, %v8687, 0
    %8703 = vmatprep.subr.mxu0 0.0
    %8704 = vmatpush1.msra.mxu0 0.0
    %8705 = vmatprep.subr.mxu0 0.0
    %8706 = vmatpush1.msra.mxu0 0.0
    %8707 = vmatprep.subr.mxu0 0.0
    %8708 = vmatpush1.msra.mxu0 0.0
    %8709 = vmatprep.subr.mxu0 0.0
    %8710 = vmatpush1.msra.mxu0 0.0
    %8711 = vmatprep.subr.mxu0 0.0
    %8712 = vmatpush1.msra.mxu0 0.0
    %8713 = vmatprep.subr.mxu0 0.0
    %8714 = vmatpush1.msra.mxu0 0.0
    %8715 = vmatprep.subr.mxu0 0.0
    %8716 = vmatpush1.msra.mxu0 0.0
    %8717 = vmatprep.subr.mxu0 0.0
    %8718 = vmatpush1.msra.mxu0 0.0
    %8719 = vmatprep.subr.mxu0 0.0
    %8720 = vmatpush1.msra.mxu0 0.0
    %8721 = vmatprep.subr.mxu0 0.0
    %8722 = vmatpush1.msra.mxu0 0.0
    %8723 = vmatprep.subr.mxu0 0.0
    %8724 = vmatpush1.msra.mxu0 0.0
    %8725 = vmatprep.subr.mxu0 0.0
    %8726 = vmatpush1.msra.mxu0 0.0
    %8727 = vmatprep.subr.mxu0 0.0
    %8728 = vmatpush1.msra.mxu0 %v8691
    %8729 = vmatprep.subr.mxu0 0.0
    %8730 = vmatpush1.msra.mxu0 %v8690
    %8731 = vmatprep.subr.mxu0 0.0
    %8732 = vmatpush1.msra.mxu0 %v8689
    %8733 = vmatprep.subr.mxu0 0.0
    %8734 = vmatpush1.msra.mxu0 %v8688
    %8735 = vmatprep.subr.mxu0 0.0
    %8736 = vmatpush2.msra.mxu0 0.0
    %8737 = vmatprep.subr.mxu0 0.0
    %8738 = vmatpush2.msra.mxu0 0.0
    %8739 = vmatprep.subr.mxu0 0.0
    %8740 = vmatpush2.msra.mxu0 0.0
    %8741 = vmatprep.subr.mxu0 0.0
    %8742 = vmatpush2.msra.mxu0 0.0
    %8743 = vmatprep.subr.mxu0 0.0
    %8744 = vmatpush2.msra.mxu0 0.0
    %8745 = vmatprep.subr.mxu0 0.0
    %8746 = vmatpush2.msra.mxu0 0.0
    %8747 = vmatprep.subr.mxu0 0.0
    %8748 = vmatpush2.msra.mxu0 0.0
    %8749 = vmatprep.subr.mxu0 0.0
    %8750 = vmatpush2.msra.mxu0 0.0
    %8751 = vmatprep.subr.mxu0 0.0
    %8752 = vmatpush2.msra.mxu0 0.0
    %8753 = vmatprep.subr.mxu0 0.0
    %8754 = vmatpush2.msra.mxu0 0.0
    %8755 = vmatprep.subr.mxu0 0.0
    %8756 = vmatpush2.msra.mxu0 0.0
    %8757 = vmatprep.subr.mxu0 0.0
    %8758 = vmatpush2.msra.mxu0 0.0
    %8759 = vmatprep.subr.mxu0 0.0
    %8760 = vmatpush2.msra.mxu0 0.0
    %8761 = vmatprep.subr.mxu0 0.0
    %8762 = vmatpush2.msra.mxu0 0.0
    %8763 = vmatprep.subr.mxu0 0.0
    %8764 = vmatpush2.msra.mxu0 0.0
    %8765 = vmatprep.subr.mxu0 0.0
    %8766 = vmatpush2.msra.mxu0 0.0
    %8767 = vmatprep.mubr.f32.mxu0 0.0
    %8768 = vmatmul.mubr.f32.gmra.mxu0 %v8698
    %v8769 = vpop.f32.mrf.mxu0
    %v8770 = vadd.f32 %v8696, %v8769
    %v8771 = vpop.f32.mrf.mxu0
    %8772 = vmatprep.mubr.f32.mxu0 0.0
    %8773 = vmatmul.mubr.f32.gmra.mxu0 %v8701
    %v8774 = vpop.f32.mrf.mxu0
    %v8775 = vadd.f32 %v8696, %v8774
    %v8776 = vpop.f32.mrf.mxu0
    %8777 = vdwg.mxu0
    %v8778 = vadd.f32 %v8234, %v8502
    %v8779 = vadd.f32 %v8239, %v8507
    %v8780 = vadd.f32 %v8778, %v8770
    %v8781 = vadd.f32 %v8779, %v8775
    %8782 = vst.msk [vmem:[%s3] sm:$0xff] %vm133, %v8780
    %8783 = vst.msk [vmem:[%s3 + $0x8] sm:$0xff] %vm133, %v8781
    // Predicated region
    $region18: #{forward.1} parent=1 // pred_check
      _
    $region19: #{forward.1} parent=1 // pred_check_branch
      %8785 = sbr.rel (0) target = $region21
    $region20: #{forward.1} parent=1 // pred_region
      _
    $region21: #{forward.1} parent=1 // pred_fallthru
      _
    // Predicated region
    $region22: #{forward.1} parent=1 // pred_check
      _
    $region23: #{forward.1} parent=1 // pred_check_branch
      %8787 = sbr.rel (0) target = $region25
    $region24: #{forward.1} parent=1 // pred_region
      _
    $region25: #{forward.1} parent=1 // pred_fallthru
      _
    %8788 = vsyncpa [#allocation3], 1

</llo_original>
